<compile_context>
chip_gen: v7x
topology: tpu7x:2x2x1
jax: 0.10.0
libtpu: 0.0.40
codegen_flags: <defaults>
</compile_context>

<pallas_src>
import functools

import jax
import jax.numpy as jnp
from jax import lax
from jax.experimental import pallas as pl
from jax.experimental.pallas import tpu as pltpu


# ----------------------------------------------------------------------------
# Fused kernel
# ----------------------------------------------------------------------------
def _conv3x3_block(act, m_ref, s_ref, b_ref, *, tb):
    """3x3 "valid" conv + folded-BN + ReLU on a (H, TB, W*Cin) activation.

    act    : (H, TB, W*Cin) bf16; batch on sublanes, lanes ordered (w, cin), cin fastest.
    m_ref  : (3, W*Cin, OW*Cout) banded (Toeplitz) matrices, one per kernel row di (bf16).
    s_ref/b_ref : (1, OW*Cout) folded-BN scale/bias (f32, per channel tiled over OW).
    Returns (OH, TB, OW*Cout) float32.

    Leading-axis slices and the (OH, TB, K)->(OH*TB, K) merges are layout preserving
    because TB is a multiple of 16, so no relayout copies are generated.
    """
    h, _, k = act.shape
    oh = h - 2
    acc = jnp.dot(act[0:oh].reshape(oh * tb, k), m_ref[0],
                  preferred_element_type=jnp.float32)
    acc = acc + jnp.dot(act[1:1 + oh].reshape(oh * tb, k), m_ref[1],
                        preferred_element_type=jnp.float32)
    acc = acc + jnp.dot(act[2:2 + oh].reshape(oh * tb, k), m_ref[2],
                        preferred_element_type=jnp.float32)
    out = jnp.maximum(acc * s_ref[...] + b_ref[...], 0.0)
    return out.reshape(oh, tb, out.shape[-1])


def fused_net_kernel(x_ref,
                     m1_ref, s1_ref, b1_ref,
                     m2_ref, s2_ref, b2_ref,
                     wtb_ref, st_ref, bt_ref,
                     m3a_ref, s3a_ref, b3a_ref,
                     m3b_ref, s3b_ref, b3b_ref,
                     m3c_ref, s3c_ref, b3c_ref,
                     wg_ref, s5a_ref, b5a_ref,
                     w5b_ref, b5b_ref,
                     o_ref, *, tb):
    bf16 = jnp.bfloat16

    x0 = x_ref[...]                                                      # (28, TB, 28) bf16
    a1 = _conv3x3_block(x0, m1_ref, s1_ref, b1_ref, tb=tb)               # (26, TB, 208) f32
    a2 = _conv3x3_block(a1.astype(bf16), m2_ref, s2_ref, b2_ref, tb=tb)  # (24, TB, 384) f32

    # 2x2 max-pool (stride 2) fused with the 1x1 transition conv (16->8, BN, ReLU):
    #   * row pairs   : leading-axis max (no relayout)
    #   * column pairs: lane-shifted max while still ~384 lanes wide; the lane
    #     compaction (keep every other 16-lane group) is folded host-side into the
    #     block-sparse (368, 96) transition matrix -> one lane-dense matmul.
    a2p = a2.reshape(12, 2, tb, 384)
    rmax = jnp.maximum(a2p[:, 0], a2p[:, 1]).reshape(12 * tb, 384)       # (12*TB, 384)
    cmax = jnp.maximum(rmax[:, 0:368], rmax[:, 16:384])                  # lane l -> max(l, l+16)
    t = jnp.dot(cmax.astype(bf16), wtb_ref[...],
                preferred_element_type=jnp.float32)                      # (12*TB, 96)
    t = jnp.maximum(t * st_ref[...] + bt_ref[...], 0.0).reshape(12, tb, 96)

    a3 = _conv3x3_block(t.astype(bf16), m3a_ref, s3a_ref, b3a_ref, tb=tb)   # (10, TB, 120)
    a4 = _conv3x3_block(a3.astype(bf16), m3b_ref, s3b_ref, b3b_ref, tb=tb)  # (8,  TB, 128)
    a5 = _conv3x3_block(a4.astype(bf16), m3c_ref, s3c_ref, b3c_ref, tb=tb)  # (6,  TB, 120)

    # GAP + 1x1 conv 20->16: the 1/36 and the lane-wise spatial sum are folded into
    # wg; the remaining sum over the 6 height rows is 5 cheap VPU adds.  Head stays f32.
    r = jnp.dot(a5.reshape(6 * tb, 120), wg_ref[...],
                preferred_element_type=jnp.float32).reshape(6, tb, 16)
    g = r[0] + r[1] + r[2] + r[3] + r[4] + r[5]                          # (TB, 16)
    h = jnp.maximum(g * s5a_ref[...] + b5a_ref[...], 0.0)

    # 1x1 conv 16->10 (+bias) and log_softmax.
    logits = jnp.dot(h, w5b_ref[...], preferred_element_type=jnp.float32) + b5b_ref[...]
    m = jnp.max(logits, axis=-1, keepdims=True)
    lse = jnp.log(jnp.sum(jnp.exp(logits - m), axis=-1, keepdims=True)) + m
    o_ref[...] = logits - lse


# ----------------------------------------------------------------------------
# Host-side weight preprocessing
# ----------------------------------------------------------------------------
def _folded_bn(key, c, eps=1e-5):
    k1, k2, k3, k4 = jax.random.split(key, 4)
    gamma = 1.0 + 0.1 * jax.random.normal(k1, (c,), jnp.float32)
    beta = 0.1 * jax.random.normal(k2, (c,), jnp.float32)
    mean = 0.1 * jax.random.normal(k3, (c,), jnp.float32)
    var = 1.0 + 0.5 * jax.random.uniform(k4, (c,), jnp.float32)
    scale = gamma * jax.lax.rsqrt(var + eps)
    bias = beta - mean * scale
    return scale, bias


def _conv_tap_matrices(w, w_in):
    """w: (3, 3, Cin, Cout) -> (3, w_in*Cin, (w_in-2)*Cout) banded (Toeplitz) matrices.

    M_di[w*Cin+ci, ow*Cout+co] = w[di, w-ow, ci, co] if 0 <= w-ow <= 2 else 0.
    """
    _, _, cin, cout = w.shape
    ow = w_in - 2
    wi = jnp.arange(w_in)[:, None]
    oi = jnp.arange(ow)[None, :]
    dj = wi - oi
    valid = ((dj >= 0) & (dj <= 2)).astype(jnp.float32)
    djc = jnp.clip(dj, 0, 2)
    mats = []
    for di in range(3):
        blk = w[di][djc] * valid[:, :, None, None]          # (w_in, ow, cin, cout)
        mats.append(blk.transpose(0, 2, 1, 3).reshape(w_in * cin, ow * cout))
    return jnp.stack(mats, axis=0)


def _pool_transition_matrix(wt):
    """wt: (16, 8) 1x1 transition weights -> (368, 96) block-sparse matrix.

    Consumes the non-compacted column-max lanes (ow in 0..22, ci in 0..15; only the
    even-ow lane groups carry the 2x2 pool result) and produces the pooled +
    transitioned lanes (ow2 in 0..11, co in 0..7).  Rows for odd ow are zero.
    """
    ow = jnp.arange(23)
    ow2 = jnp.arange(12)
    sel = (ow[:, None] == 2 * ow2[None, :]).astype(jnp.float32)   # (23, 12)
    big = sel[:, None, :, None] * wt[None, :, None, :]            # (23, 16, 12, 8)
    return big.reshape(23 * 16, 12 * 8)


def _tile_lane(v, ow):
    """Per-channel vector (C,) -> per-lane (1, OW*C) for lanes ordered (ow, c)."""
    return jnp.tile(v, (ow,)).reshape(1, ow * v.shape[0])


def make_params(key):
    ks = jax.random.split(key, 16)
    cw = lambda k, kh, kw, ci, co: 0.1 * jax.random.normal(k, (kh, kw, ci, co), jnp.float32)

    raw = {}
    raw["w1"] = cw(ks[0], 3, 3, 1, 8);    raw["s1"], raw["b1"] = _folded_bn(ks[1], 8)
    raw["w2"] = cw(ks[2], 3, 3, 8, 16);   raw["s2"], raw["b2"] = _folded_bn(ks[3], 16)
    raw["wt"] = 0.1 * jax.random.normal(ks[4], (16, 8), jnp.float32)
    raw["st"], raw["bt"] = _folded_bn(ks[5], 8)
    raw["w3a"] = cw(ks[6], 3, 3, 8, 12);  raw["s3a"], raw["b3a"] = _folded_bn(ks[7], 12)
    raw["w3b"] = cw(ks[8], 3, 3, 12, 16); raw["s3b"], raw["b3b"] = _folded_bn(ks[9], 16)
    raw["w3c"] = cw(ks[10], 3, 3, 16, 20); raw["s3c"], raw["b3c"] = _folded_bn(ks[11], 20)
    raw["w5a"] = 0.1 * jax.random.normal(ks[12], (20, 16), jnp.float32)
    raw["s5a"], raw["b5a"] = _folded_bn(ks[13], 16)
    raw["w5b"] = 0.1 * jax.random.normal(ks[14], (16, 10), jnp.float32)
    raw["b5b"] = 0.1 * jax.random.normal(ks[15], (1, 10), jnp.float32)

    bf = jnp.bfloat16
    p = {
        # 3x3 conv Toeplitz matrices + 1x1 transition matrix: bf16 MXU operands.
        "m1": _conv_tap_matrices(raw["w1"], 28).astype(bf),
        "s1": _tile_lane(raw["s1"], 26), "b1": _tile_lane(raw["b1"], 26),
        "m2": _conv_tap_matrices(raw["w2"], 26).astype(bf),
        "s2": _tile_lane(raw["s2"], 24), "b2": _tile_lane(raw["b2"], 24),
        "wtb": _pool_transition_matrix(raw["wt"]).astype(bf),
        "st": _tile_lane(raw["st"], 12), "bt": _tile_lane(raw["bt"], 12),
        "m3a": _conv_tap_matrices(raw["w3a"], 12).astype(bf),
        "s3a": _tile_lane(raw["s3a"], 10), "b3a": _tile_lane(raw["b3a"], 10),
        "m3b": _conv_tap_matrices(raw["w3b"], 10).astype(bf),
        "s3b": _tile_lane(raw["s3b"], 8), "b3b": _tile_lane(raw["b3b"], 8),
        "m3c": _conv_tap_matrices(raw["w3c"], 8).astype(bf),
        "s3c": _tile_lane(raw["s3c"], 6), "b3c": _tile_lane(raw["b3c"], 6),
        # GAP (1/36, spatial lanes) folded into wg; tiny head matrices kept f32.
        "wg": jnp.tile(raw["w5a"], (6, 1)) / 36.0,
        "s5a": raw["s5a"].reshape(1, 16), "b5a": raw["b5a"].reshape(1, 16),
        "w5b": raw["w5b"], "b5b": raw["b5b"],
    }
    return p, raw


# ----------------------------------------------------------------------------
# Forward pass: one fused pallas_call, gridded over batch tiles
# ----------------------------------------------------------------------------
def _full_spec(arr):
    nd = arr.ndim
    return pl.BlockSpec(arr.shape, lambda i, _nd=nd: (0,) * _nd)


@jax.jit
def net_forward(x_nchw, params):
    n = x_nchw.shape[0]
    # Batch tile: 128 for realistic batches (amortizes per-grid-step overhead, big MXU
    # M dim, ~15 MiB peak VMEM -> fits the 32 MiB default scoped limit on v7x too);
    # multiple of 16 so all bf16 (OH, TB, K) <-> (OH*TB, K) reshapes stay layout
    # preserving.  Batches >= 256 give a >= 2-step grid for v7x's two TensorCores.
    tb = min(128, ((n + 15) // 16) * 16)
    n_pad = ((n + tb - 1) // tb) * tb

    # Input: NCHW (Cin=1) -> (H, N, W) bf16, batch on sublanes; half-size DMA and
    # no in-kernel transpose/relayout.  (Padded rows are zeros and get sliced off.)
    x = x_nchw.reshape(n, 28, 28).astype(jnp.bfloat16)
    if n_pad != n:
        x = jnp.pad(x, ((0, n_pad - n), (0, 0), (0, 0)))
    x = jnp.transpose(x, (1, 0, 2))                                   # (28, n_pad, 28)

    p = params
    weights = (p["m1"], p["s1"], p["b1"], p["m2"], p["s2"], p["b2"],
               p["wtb"], p["st"], p["bt"],
               p["m3a"], p["s3a"], p["b3a"], p["m3b"], p["s3b"], p["b3b"],
               p["m3c"], p["s3c"], p["b3c"],
               p["wg"], p["s5a"], p["b5a"], p["w5b"], p["b5b"])

    out = pl.pallas_call(
        functools.partial(fused_net_kernel, tb=tb),
        out_shape=jax.ShapeDtypeStruct((n_pad, 10), jnp.float32),
        grid=(n_pad // tb,),
        in_specs=[pl.BlockSpec((28, tb, 28), lambda i: (0, i, 0))]
                 + [_full_spec(w) for w in weights],
        out_specs=pl.BlockSpec((tb, 10), lambda i: (i, 0)),
        compiler_params=pltpu.CompilerParams(dimension_semantics=("parallel",)),
    )(x, *weights)
    return out[:n]


# ----------------------------------------------------------------------------
# Pure-JAX reference (same eval-mode semantics, f32) for validation
# ----------------------------------------------------------------------------
def reference_forward(x_nchw, raw):
    hp = lax.Precision.HIGHEST

    def conv(x, w):
        return lax.conv_general_dilated(
            x, w, (1, 1), "VALID",
            dimension_numbers=("NHWC", "HWIO", "NHWC"), precision=hp)

    def bn_relu(x, s, b):
        return jnp.maximum(x * s + b, 0.0)

    x = jnp.transpose(x_nchw, (0, 2, 3, 1)).astype(jnp.float32)
    x = bn_relu(conv(x, raw["w1"]), raw["s1"], raw["b1"])
    x = bn_relu(conv(x, raw["w2"]), raw["s2"], raw["b2"])
    x = lax.reduce_window(x, -jnp.inf, lax.max, (1, 2, 2, 1), (1, 2, 2, 1), "VALID")
    x = bn_relu(conv(x, raw["wt"].reshape(1, 1, 16, 8)), raw["st"], raw["bt"])
    x = bn_relu(conv(x, raw["w3a"]), raw["s3a"], raw["b3a"])
    x = bn_relu(conv(x, raw["w3b"]), raw["s3b"], raw["b3b"])
    x = bn_relu(conv(x, raw["w3c"]), raw["s3c"], raw["b3c"])
    g = jnp.mean(x, axis=(1, 2))                                         # GAP -> (N, 20)
    h = jnp.maximum(jnp.dot(g, raw["w5a"], precision=hp) * raw["s5a"] + raw["b5a"], 0.0)
    logits = jnp.dot(h, raw["w5b"], precision=hp) + raw["b5b"]
    return jax.nn.log_softmax(logits, axis=-1)


if __name__ == "__main__":
    key = jax.random.PRNGKey(0)
    pkey, xkey, xkey2 = jax.random.split(key, 3)
    params, raw = make_params(pkey)

    def run_and_check(x):
        out = jax.block_until_ready(net_forward(x, params))
        assert out.shape == (x.shape[0], 10)
        assert bool(jnp.all(jnp.isfinite(out)))
        # log_softmax rows must exponentiate-sum to 1 (computed in f32 in-kernel).
        assert bool(jnp.allclose(jnp.sum(jnp.exp(out), axis=-1), 1.0, atol=1e-3))
        # Compare against the f32 reference; tolerance relaxed vs. the old pure-f32
        # kernel because the matmul operands are now bf16 (f32 accumulation).
        ref = reference_forward(x, raw)
        max_err = float(jnp.max(jnp.abs(out - ref)))
        assert bool(jnp.allclose(out, ref, atol=5e-2, rtol=5e-2)), f"max_err={max_err}"
        return out

    # Small smoke test required by the harness: batch=2, 1x28x28 (fixed arch), grid=1.
    x_small = jax.random.normal(xkey, (2, 1, 28, 28), jnp.float32)
    run_and_check(x_small)

    # Exercise the performance path: batch=256 -> tb=128, 2-step "parallel" grid.
    x_big = jax.random.normal(xkey2, (256, 1, 28, 28), jnp.float32)
    run_and_check(x_big)

    print("KERNEL_OK")
</pallas_src>

<mosaic_0001>
module attributes {stable_mosaic.version = 11 : i64} {
  func.func @fused_net_kernel(%arg0: i32, %arg1: memref<28x16x28xbf16, #tpu.memory_space<vmem>>, %arg2: memref<3x28x208xbf16, #tpu.memory_space<vmem>>, %arg3: memref<1x208xf32, #tpu.memory_space<vmem>>, %arg4: memref<1x208xf32, #tpu.memory_space<vmem>>, %arg5: memref<3x208x384xbf16, #tpu.memory_space<vmem>>, %arg6: memref<1x384xf32, #tpu.memory_space<vmem>>, %arg7: memref<1x384xf32, #tpu.memory_space<vmem>>, %arg8: memref<368x96xbf16, #tpu.memory_space<vmem>>, %arg9: memref<1x96xf32, #tpu.memory_space<vmem>>, %arg10: memref<1x96xf32, #tpu.memory_space<vmem>>, %arg11: memref<3x96x120xbf16, #tpu.memory_space<vmem>>, %arg12: memref<1x120xf32, #tpu.memory_space<vmem>>, %arg13: memref<1x120xf32, #tpu.memory_space<vmem>>, %arg14: memref<3x120x128xbf16, #tpu.memory_space<vmem>>, %arg15: memref<1x128xf32, #tpu.memory_space<vmem>>, %arg16: memref<1x128xf32, #tpu.memory_space<vmem>>, %arg17: memref<3x128x120xbf16, #tpu.memory_space<vmem>>, %arg18: memref<1x120xf32, #tpu.memory_space<vmem>>, %arg19: memref<1x120xf32, #tpu.memory_space<vmem>>, %arg20: memref<120x16xf32, #tpu.memory_space<vmem>>, %arg21: memref<1x16xf32, #tpu.memory_space<vmem>>, %arg22: memref<1x16xf32, #tpu.memory_space<vmem>>, %arg23: memref<16x10xf32, #tpu.memory_space<vmem>>, %arg24: memref<1x10xf32, #tpu.memory_space<vmem>>, %arg25: memref<16x10xf32, #tpu.memory_space<vmem>>) attributes {dimension_semantics = [#tpu.dimension_semantics<parallel>], iteration_bounds = array<i64: 1>, scalar_prefetch = 0 : i64, scratch_operands = 0 : i64, tpu.core_type = #tpu.core_type<tc>, window_params = [{transform_indices = @transform_0, window_bounds = array<i64: 28, 16, 28>}, {pipeline_mode = #tpu.pipeline_mode<synchronous>, transform_indices = @transform_1, window_bounds = array<i64: 3, 28, 208>}, {pipeline_mode = #tpu.pipeline_mode<synchronous>, transform_indices = @transform_2, window_bounds = array<i64: 1, 208>}, {pipeline_mode = #tpu.pipeline_mode<synchronous>, transform_indices = @transform_3, window_bounds = array<i64: 1, 208>}, {pipeline_mode = #tpu.pipeline_mode<synchronous>, transform_indices = @transform_4, window_bounds = array<i64: 3, 208, 384>}, {pipeline_mode = #tpu.pipeline_mode<synchronous>, transform_indices = @transform_5, window_bounds = array<i64: 1, 384>}, {pipeline_mode = #tpu.pipeline_mode<synchronous>, transform_indices = @transform_6, window_bounds = array<i64: 1, 384>}, {pipeline_mode = #tpu.pipeline_mode<synchronous>, transform_indices = @transform_7, window_bounds = array<i64: 368, 96>}, {pipeline_mode = #tpu.pipeline_mode<synchronous>, transform_indices = @transform_8, window_bounds = array<i64: 1, 96>}, {pipeline_mode = #tpu.pipeline_mode<synchronous>, transform_indices = @transform_9, window_bounds = array<i64: 1, 96>}, {pipeline_mode = #tpu.pipeline_mode<synchronous>, transform_indices = @transform_10, window_bounds = array<i64: 3, 96, 120>}, {pipeline_mode = #tpu.pipeline_mode<synchronous>, transform_indices = @transform_11, window_bounds = array<i64: 1, 120>}, {pipeline_mode = #tpu.pipeline_mode<synchronous>, transform_indices = @transform_12, window_bounds = array<i64: 1, 120>}, {pipeline_mode = #tpu.pipeline_mode<synchronous>, transform_indices = @transform_13, window_bounds = array<i64: 3, 120, 128>}, {pipeline_mode = #tpu.pipeline_mode<synchronous>, transform_indices = @transform_14, window_bounds = array<i64: 1, 128>}, {pipeline_mode = #tpu.pipeline_mode<synchronous>, transform_indices = @transform_15, window_bounds = array<i64: 1, 128>}, {pipeline_mode = #tpu.pipeline_mode<synchronous>, transform_indices = @transform_16, window_bounds = array<i64: 3, 128, 120>}, {pipeline_mode = #tpu.pipeline_mode<synchronous>, transform_indices = @transform_17, window_bounds = array<i64: 1, 120>}, {pipeline_mode = #tpu.pipeline_mode<synchronous>, transform_indices = @transform_18, window_bounds = array<i64: 1, 120>}, {pipeline_mode = #tpu.pipeline_mode<synchronous>, transform_indices = @transform_19, window_bounds = array<i64: 120, 16>}, {pipeline_mode = #tpu.pipeline_mode<synchronous>, transform_indices = @transform_20, window_bounds = array<i64: 1, 16>}, {pipeline_mode = #tpu.pipeline_mode<synchronous>, transform_indices = @transform_21, window_bounds = array<i64: 1, 16>}, {pipeline_mode = #tpu.pipeline_mode<synchronous>, transform_indices = @transform_22, window_bounds = array<i64: 16, 10>}, {pipeline_mode = #tpu.pipeline_mode<synchronous>, transform_indices = @transform_23, window_bounds = array<i64: 1, 10>}, {transform_indices = @transform_24, window_bounds = array<i64: 16, 10>}]} {
    %c0 = arith.constant 0 : index
    %c0_0 = arith.constant 0 : index
    %c0_1 = arith.constant 0 : index
    %0 = vector.load %arg1[%c0, %c0_0, %c0_1] : memref<28x16x28xbf16, #tpu.memory_space<vmem>>, vector<28x16x28xbf16>
    %1 = vector.extract_strided_slice %0 {offsets = [0, 0, 0], sizes = [26, 16, 28], strides = [1, 1, 1]} : vector<28x16x28xbf16> to vector<26x16x28xbf16>
    %2 = vector.shape_cast %1 : vector<26x16x28xbf16> to vector<416x28xbf16>
    %c0_2 = arith.constant 0 : index
    %c0_3 = arith.constant 0 : index
    %c0_4 = arith.constant 0 : index
    %3 = vector.load %arg2[%c0_2, %c0_3, %c0_4] : memref<3x28x208xbf16, #tpu.memory_space<vmem>>, vector<1x28x208xbf16>
    %4 = vector.shape_cast %3 : vector<1x28x208xbf16> to vector<28x208xbf16>
    %cst = arith.constant dense<0.000000e+00> : vector<416x208xf32>
    %5 = tpu.matmul %2, %4, %cst {dimension_numbers = #tpu.dot_dimension_numbers<[1], [0], [0], [1], [0, 0, 1, 1], [], []>} : vector<416x28xbf16>, vector<28x208xbf16>, vector<416x208xf32> -> vector<416x208xf32>
    %6 = vector.extract_strided_slice %0 {offsets = [1, 0, 0], sizes = [26, 16, 28], strides = [1, 1, 1]} : vector<28x16x28xbf16> to vector<26x16x28xbf16>
    %7 = vector.shape_cast %6 : vector<26x16x28xbf16> to vector<416x28xbf16>
    %c1 = arith.constant 1 : index
    %c0_5 = arith.constant 0 : index
    %c0_6 = arith.constant 0 : index
    %8 = vector.load %arg2[%c1, %c0_5, %c0_6] : memref<3x28x208xbf16, #tpu.memory_space<vmem>>, vector<1x28x208xbf16>
    %9 = vector.shape_cast %8 : vector<1x28x208xbf16> to vector<28x208xbf16>
    %cst_7 = arith.constant dense<0.000000e+00> : vector<416x208xf32>
    %10 = tpu.matmul %7, %9, %cst_7 {dimension_numbers = #tpu.dot_dimension_numbers<[1], [0], [0], [1], [0, 0, 1, 1], [], []>} : vector<416x28xbf16>, vector<28x208xbf16>, vector<416x208xf32> -> vector<416x208xf32>
    %11 = arith.addf %5, %10 : vector<416x208xf32>
    %12 = vector.extract_strided_slice %0 {offsets = [2, 0, 0], sizes = [26, 16, 28], strides = [1, 1, 1]} : vector<28x16x28xbf16> to vector<26x16x28xbf16>
    %13 = vector.shape_cast %12 : vector<26x16x28xbf16> to vector<416x28xbf16>
    %c2 = arith.constant 2 : index
    %c0_8 = arith.constant 0 : index
    %c0_9 = arith.constant 0 : index
    %14 = vector.load %arg2[%c2, %c0_8, %c0_9] : memref<3x28x208xbf16, #tpu.memory_space<vmem>>, vector<1x28x208xbf16>
    %15 = vector.shape_cast %14 : vector<1x28x208xbf16> to vector<28x208xbf16>
    %cst_10 = arith.constant dense<0.000000e+00> : vector<416x208xf32>
    %16 = tpu.matmul %13, %15, %cst_10 {dimension_numbers = #tpu.dot_dimension_numbers<[1], [0], [0], [1], [0, 0, 1, 1], [], []>} : vector<416x28xbf16>, vector<28x208xbf16>, vector<416x208xf32> -> vector<416x208xf32>
    %17 = arith.addf %11, %16 : vector<416x208xf32>
    %c0_11 = arith.constant 0 : index
    %c0_12 = arith.constant 0 : index
    %18 = vector.load %arg3[%c0_11, %c0_12] : memref<1x208xf32, #tpu.memory_space<vmem>>, vector<1x208xf32>
    %19 = vector.broadcast %18 : vector<1x208xf32> to vector<416x208xf32>
    %20 = arith.mulf %17, %19 : vector<416x208xf32>
    %c0_13 = arith.constant 0 : index
    %c0_14 = arith.constant 0 : index
    %21 = vector.load %arg4[%c0_13, %c0_14] : memref<1x208xf32, #tpu.memory_space<vmem>>, vector<1x208xf32>
    %22 = vector.broadcast %21 : vector<1x208xf32> to vector<416x208xf32>
    %23 = arith.addf %20, %22 : vector<416x208xf32>
    %cst_15 = arith.constant 0.000000e+00 : f32
    %24 = vector.broadcast %cst_15 : f32 to vector<416x208xf32>
    %25 = arith.maximumf %23, %24 : vector<416x208xf32>
    %26 = vector.shape_cast %25 : vector<416x208xf32> to vector<26x16x208xf32>
    %27 = arith.truncf %26 : vector<26x16x208xf32> to vector<26x16x208xbf16>
    %28 = vector.extract_strided_slice %27 {offsets = [0, 0, 0], sizes = [24, 16, 208], strides = [1, 1, 1]} : vector<26x16x208xbf16> to vector<24x16x208xbf16>
    %29 = vector.shape_cast %28 : vector<24x16x208xbf16> to vector<384x208xbf16>
    %c0_16 = arith.constant 0 : index
    %c0_17 = arith.constant 0 : index
    %c0_18 = arith.constant 0 : index
    %30 = vector.load %arg5[%c0_16, %c0_17, %c0_18] : memref<3x208x384xbf16, #tpu.memory_space<vmem>>, vector<1x208x384xbf16>
    %31 = vector.shape_cast %30 : vector<1x208x384xbf16> to vector<208x384xbf16>
    %cst_19 = arith.constant dense<0.000000e+00> : vector<384x384xf32>
    %32 = tpu.matmul %29, %31, %cst_19 {dimension_numbers = #tpu.dot_dimension_numbers<[1], [0], [0], [1], [0, 0, 1, 1], [], []>} : vector<384x208xbf16>, vector<208x384xbf16>, vector<384x384xf32> -> vector<384x384xf32>
    %33 = vector.extract_strided_slice %27 {offsets = [1, 0, 0], sizes = [24, 16, 208], strides = [1, 1, 1]} : vector<26x16x208xbf16> to vector<24x16x208xbf16>
    %34 = vector.shape_cast %33 : vector<24x16x208xbf16> to vector<384x208xbf16>
    %c1_20 = arith.constant 1 : index
    %c0_21 = arith.constant 0 : index
    %c0_22 = arith.constant 0 : index
    %35 = vector.load %arg5[%c1_20, %c0_21, %c0_22] : memref<3x208x384xbf16, #tpu.memory_space<vmem>>, vector<1x208x384xbf16>
    %36 = vector.shape_cast %35 : vector<1x208x384xbf16> to vector<208x384xbf16>
    %cst_23 = arith.constant dense<0.000000e+00> : vector<384x384xf32>
    %37 = tpu.matmul %34, %36, %cst_23 {dimension_numbers = #tpu.dot_dimension_numbers<[1], [0], [0], [1], [0, 0, 1, 1], [], []>} : vector<384x208xbf16>, vector<208x384xbf16>, vector<384x384xf32> -> vector<384x384xf32>
    %38 = arith.addf %32, %37 : vector<384x384xf32>
    %39 = vector.extract_strided_slice %27 {offsets = [2, 0, 0], sizes = [24, 16, 208], strides = [1, 1, 1]} : vector<26x16x208xbf16> to vector<24x16x208xbf16>
    %40 = vector.shape_cast %39 : vector<24x16x208xbf16> to vector<384x208xbf16>
    %c2_24 = arith.constant 2 : index
    %c0_25 = arith.constant 0 : index
    %c0_26 = arith.constant 0 : index
    %41 = vector.load %arg5[%c2_24, %c0_25, %c0_26] : memref<3x208x384xbf16, #tpu.memory_space<vmem>>, vector<1x208x384xbf16>
    %42 = vector.shape_cast %41 : vector<1x208x384xbf16> to vector<208x384xbf16>
    %cst_27 = arith.constant dense<0.000000e+00> : vector<384x384xf32>
    %43 = tpu.matmul %40, %42, %cst_27 {dimension_numbers = #tpu.dot_dimension_numbers<[1], [0], [0], [1], [0, 0, 1, 1], [], []>} : vector<384x208xbf16>, vector<208x384xbf16>, vector<384x384xf32> -> vector<384x384xf32>
    %44 = arith.addf %38, %43 : vector<384x384xf32>
    %c0_28 = arith.constant 0 : index
    %c0_29 = arith.constant 0 : index
    %45 = vector.load %arg6[%c0_28, %c0_29] : memref<1x384xf32, #tpu.memory_space<vmem>>, vector<1x384xf32>
    %46 = vector.broadcast %45 : vector<1x384xf32> to vector<384x384xf32>
    %47 = arith.mulf %44, %46 : vector<384x384xf32>
    %c0_30 = arith.constant 0 : index
    %c0_31 = arith.constant 0 : index
    %48 = vector.load %arg7[%c0_30, %c0_31] : memref<1x384xf32, #tpu.memory_space<vmem>>, vector<1x384xf32>
    %49 = vector.broadcast %48 : vector<1x384xf32> to vector<384x384xf32>
    %50 = arith.addf %47, %49 : vector<384x384xf32>
    %cst_32 = arith.constant 0.000000e+00 : f32
    %51 = vector.broadcast %cst_32 : f32 to vector<384x384xf32>
    %52 = arith.maximumf %50, %51 : vector<384x384xf32>
    %53 = vector.shape_cast %52 : vector<384x384xf32> to vector<24x16x384xf32>
    %54 = vector.shape_cast %53 : vector<24x16x384xf32> to vector<12x2x16x384xf32>
    %55 = vector.extract_strided_slice %54 {offsets = [0, 0, 0, 0], sizes = [12, 1, 16, 384], strides = [1, 1, 1, 1]} : vector<12x2x16x384xf32> to vector<12x1x16x384xf32>
    %56 = vector.shape_cast %55 : vector<12x1x16x384xf32> to vector<12x16x384xf32>
    %57 = vector.extract_strided_slice %54 {offsets = [0, 1, 0, 0], sizes = [12, 1, 16, 384], strides = [1, 1, 1, 1]} : vector<12x2x16x384xf32> to vector<12x1x16x384xf32>
    %58 = vector.shape_cast %57 : vector<12x1x16x384xf32> to vector<12x16x384xf32>
    %59 = arith.maximumf %56, %58 : vector<12x16x384xf32>
    %60 = vector.shape_cast %59 : vector<12x16x384xf32> to vector<192x384xf32>
    %61 = vector.extract_strided_slice %60 {offsets = [0, 0], sizes = [192, 368], strides = [1, 1]} : vector<192x384xf32> to vector<192x368xf32>
    %62 = vector.extract_strided_slice %60 {offsets = [0, 16], sizes = [192, 368], strides = [1, 1]} : vector<192x384xf32> to vector<192x368xf32>
    %63 = arith.maximumf %61, %62 : vector<192x368xf32>
    %64 = arith.truncf %63 : vector<192x368xf32> to vector<192x368xbf16>
    %c0_33 = arith.constant 0 : index
    %c0_34 = arith.constant 0 : index
    %65 = vector.load %arg8[%c0_33, %c0_34] : memref<368x96xbf16, #tpu.memory_space<vmem>>, vector<368x96xbf16>
    %cst_35 = arith.constant dense<0.000000e+00> : vector<192x96xf32>
    %66 = tpu.matmul %64, %65, %cst_35 {dimension_numbers = #tpu.dot_dimension_numbers<[1], [0], [0], [1], [0, 0, 1, 1], [], []>} : vector<192x368xbf16>, vector<368x96xbf16>, vector<192x96xf32> -> vector<192x96xf32>
    %c0_36 = arith.constant 0 : index
    %c0_37 = arith.constant 0 : index
    %67 = vector.load %arg9[%c0_36, %c0_37] : memref<1x96xf32, #tpu.memory_space<vmem>>, vector<1x96xf32>
    %68 = vector.broadcast %67 : vector<1x96xf32> to vector<192x96xf32>
    %69 = arith.mulf %66, %68 : vector<192x96xf32>
    %c0_38 = arith.constant 0 : index
    %c0_39 = arith.constant 0 : index
    %70 = vector.load %arg10[%c0_38, %c0_39] : memref<1x96xf32, #tpu.memory_space<vmem>>, vector<1x96xf32>
    %71 = vector.broadcast %70 : vector<1x96xf32> to vector<192x96xf32>
    %72 = arith.addf %69, %71 : vector<192x96xf32>
    %cst_40 = arith.constant 0.000000e+00 : f32
    %73 = vector.broadcast %cst_40 : f32 to vector<192x96xf32>
    %74 = arith.maximumf %72, %73 : vector<192x96xf32>
    %75 = vector.shape_cast %74 : vector<192x96xf32> to vector<12x16x96xf32>
    %76 = arith.truncf %75 : vector<12x16x96xf32> to vector<12x16x96xbf16>
    %77 = vector.extract_strided_slice %76 {offsets = [0, 0, 0], sizes = [10, 16, 96], strides = [1, 1, 1]} : vector<12x16x96xbf16> to vector<10x16x96xbf16>
    %78 = vector.shape_cast %77 : vector<10x16x96xbf16> to vector<160x96xbf16>
    %c0_41 = arith.constant 0 : index
    %c0_42 = arith.constant 0 : index
    %c0_43 = arith.constant 0 : index
    %79 = vector.load %arg11[%c0_41, %c0_42, %c0_43] : memref<3x96x120xbf16, #tpu.memory_space<vmem>>, vector<1x96x120xbf16>
    %80 = vector.shape_cast %79 : vector<1x96x120xbf16> to vector<96x120xbf16>
    %cst_44 = arith.constant dense<0.000000e+00> : vector<160x120xf32>
    %81 = tpu.matmul %78, %80, %cst_44 {dimension_numbers = #tpu.dot_dimension_numbers<[1], [0], [0], [1], [0, 0, 1, 1], [], []>} : vector<160x96xbf16>, vector<96x120xbf16>, vector<160x120xf32> -> vector<160x120xf32>
    %82 = vector.extract_strided_slice %76 {offsets = [1, 0, 0], sizes = [10, 16, 96], strides = [1, 1, 1]} : vector<12x16x96xbf16> to vector<10x16x96xbf16>
    %83 = vector.shape_cast %82 : vector<10x16x96xbf16> to vector<160x96xbf16>
    %c1_45 = arith.constant 1 : index
    %c0_46 = arith.constant 0 : index
    %c0_47 = arith.constant 0 : index
    %84 = vector.load %arg11[%c1_45, %c0_46, %c0_47] : memref<3x96x120xbf16, #tpu.memory_space<vmem>>, vector<1x96x120xbf16>
    %85 = vector.shape_cast %84 : vector<1x96x120xbf16> to vector<96x120xbf16>
    %cst_48 = arith.constant dense<0.000000e+00> : vector<160x120xf32>
    %86 = tpu.matmul %83, %85, %cst_48 {dimension_numbers = #tpu.dot_dimension_numbers<[1], [0], [0], [1], [0, 0, 1, 1], [], []>} : vector<160x96xbf16>, vector<96x120xbf16>, vector<160x120xf32> -> vector<160x120xf32>
    %87 = arith.addf %81, %86 : vector<160x120xf32>
    %88 = vector.extract_strided_slice %76 {offsets = [2, 0, 0], sizes = [10, 16, 96], strides = [1, 1, 1]} : vector<12x16x96xbf16> to vector<10x16x96xbf16>
    %89 = vector.shape_cast %88 : vector<10x16x96xbf16> to vector<160x96xbf16>
    %c2_49 = arith.constant 2 : index
    %c0_50 = arith.constant 0 : index
    %c0_51 = arith.constant 0 : index
    %90 = vector.load %arg11[%c2_49, %c0_50, %c0_51] : memref<3x96x120xbf16, #tpu.memory_space<vmem>>, vector<1x96x120xbf16>
    %91 = vector.shape_cast %90 : vector<1x96x120xbf16> to vector<96x120xbf16>
    %cst_52 = arith.constant dense<0.000000e+00> : vector<160x120xf32>
    %92 = tpu.matmul %89, %91, %cst_52 {dimension_numbers = #tpu.dot_dimension_numbers<[1], [0], [0], [1], [0, 0, 1, 1], [], []>} : vector<160x96xbf16>, vector<96x120xbf16>, vector<160x120xf32> -> vector<160x120xf32>
    %93 = arith.addf %87, %92 : vector<160x120xf32>
    %c0_53 = arith.constant 0 : index
    %c0_54 = arith.constant 0 : index
    %94 = vector.load %arg12[%c0_53, %c0_54] : memref<1x120xf32, #tpu.memory_space<vmem>>, vector<1x120xf32>
    %95 = vector.broadcast %94 : vector<1x120xf32> to vector<160x120xf32>
    %96 = arith.mulf %93, %95 : vector<160x120xf32>
    %c0_55 = arith.constant 0 : index
    %c0_56 = arith.constant 0 : index
    %97 = vector.load %arg13[%c0_55, %c0_56] : memref<1x120xf32, #tpu.memory_space<vmem>>, vector<1x120xf32>
    %98 = vector.broadcast %97 : vector<1x120xf32> to vector<160x120xf32>
    %99 = arith.addf %96, %98 : vector<160x120xf32>
    %cst_57 = arith.constant 0.000000e+00 : f32
    %100 = vector.broadcast %cst_57 : f32 to vector<160x120xf32>
    %101 = arith.maximumf %99, %100 : vector<160x120xf32>
    %102 = vector.shape_cast %101 : vector<160x120xf32> to vector<10x16x120xf32>
    %103 = arith.truncf %102 : vector<10x16x120xf32> to vector<10x16x120xbf16>
    %104 = vector.extract_strided_slice %103 {offsets = [0, 0, 0], sizes = [8, 16, 120], strides = [1, 1, 1]} : vector<10x16x120xbf16> to vector<8x16x120xbf16>
    %105 = vector.shape_cast %104 : vector<8x16x120xbf16> to vector<128x120xbf16>
    %c0_58 = arith.constant 0 : index
    %c0_59 = arith.constant 0 : index
    %c0_60 = arith.constant 0 : index
    %106 = vector.load %arg14[%c0_58, %c0_59, %c0_60] : memref<3x120x128xbf16, #tpu.memory_space<vmem>>, vector<1x120x128xbf16>
    %107 = vector.shape_cast %106 : vector<1x120x128xbf16> to vector<120x128xbf16>
    %cst_61 = arith.constant dense<0.000000e+00> : vector<128x128xf32>
    %108 = tpu.matmul %105, %107, %cst_61 {dimension_numbers = #tpu.dot_dimension_numbers<[1], [0], [0], [1], [0, 0, 1, 1], [], []>} : vector<128x120xbf16>, vector<120x128xbf16>, vector<128x128xf32> -> vector<128x128xf32>
    %109 = vector.extract_strided_slice %103 {offsets = [1, 0, 0], sizes = [8, 16, 120], strides = [1, 1, 1]} : vector<10x16x120xbf16> to vector<8x16x120xbf16>
    %110 = vector.shape_cast %109 : vector<8x16x120xbf16> to vector<128x120xbf16>
    %c1_62 = arith.constant 1 : index
    %c0_63 = arith.constant 0 : index
    %c0_64 = arith.constant 0 : index
    %111 = vector.load %arg14[%c1_62, %c0_63, %c0_64] : memref<3x120x128xbf16, #tpu.memory_space<vmem>>, vector<1x120x128xbf16>
    %112 = vector.shape_cast %111 : vector<1x120x128xbf16> to vector<120x128xbf16>
    %cst_65 = arith.constant dense<0.000000e+00> : vector<128x128xf32>
    %113 = tpu.matmul %110, %112, %cst_65 {dimension_numbers = #tpu.dot_dimension_numbers<[1], [0], [0], [1], [0, 0, 1, 1], [], []>} : vector<128x120xbf16>, vector<120x128xbf16>, vector<128x128xf32> -> vector<128x128xf32>
    %114 = arith.addf %108, %113 : vector<128x128xf32>
    %115 = vector.extract_strided_slice %103 {offsets = [2, 0, 0], sizes = [8, 16, 120], strides = [1, 1, 1]} : vector<10x16x120xbf16> to vector<8x16x120xbf16>
    %116 = vector.shape_cast %115 : vector<8x16x120xbf16> to vector<128x120xbf16>
    %c2_66 = arith.constant 2 : index
    %c0_67 = arith.constant 0 : index
    %c0_68 = arith.constant 0 : index
    %117 = vector.load %arg14[%c2_66, %c0_67, %c0_68] : memref<3x120x128xbf16, #tpu.memory_space<vmem>>, vector<1x120x128xbf16>
    %118 = vector.shape_cast %117 : vector<1x120x128xbf16> to vector<120x128xbf16>
    %cst_69 = arith.constant dense<0.000000e+00> : vector<128x128xf32>
    %119 = tpu.matmul %116, %118, %cst_69 {dimension_numbers = #tpu.dot_dimension_numbers<[1], [0], [0], [1], [0, 0, 1, 1], [], []>} : vector<128x120xbf16>, vector<120x128xbf16>, vector<128x128xf32> -> vector<128x128xf32>
    %120 = arith.addf %114, %119 : vector<128x128xf32>
    %c0_70 = arith.constant 0 : index
    %c0_71 = arith.constant 0 : index
    %121 = vector.load %arg15[%c0_70, %c0_71] : memref<1x128xf32, #tpu.memory_space<vmem>>, vector<1x128xf32>
    %122 = vector.broadcast %121 : vector<1x128xf32> to vector<128x128xf32>
    %123 = arith.mulf %120, %122 : vector<128x128xf32>
    %c0_72 = arith.constant 0 : index
    %c0_73 = arith.constant 0 : index
    %124 = vector.load %arg16[%c0_72, %c0_73] : memref<1x128xf32, #tpu.memory_space<vmem>>, vector<1x128xf32>
    %125 = vector.broadcast %124 : vector<1x128xf32> to vector<128x128xf32>
    %126 = arith.addf %123, %125 : vector<128x128xf32>
    %cst_74 = arith.constant 0.000000e+00 : f32
    %127 = vector.broadcast %cst_74 : f32 to vector<128x128xf32>
    %128 = arith.maximumf %126, %127 : vector<128x128xf32>
    %129 = vector.shape_cast %128 : vector<128x128xf32> to vector<8x16x128xf32>
    %130 = arith.truncf %129 : vector<8x16x128xf32> to vector<8x16x128xbf16>
    %131 = vector.extract_strided_slice %130 {offsets = [0, 0, 0], sizes = [6, 16, 128], strides = [1, 1, 1]} : vector<8x16x128xbf16> to vector<6x16x128xbf16>
    %132 = vector.shape_cast %131 : vector<6x16x128xbf16> to vector<96x128xbf16>
    %c0_75 = arith.constant 0 : index
    %c0_76 = arith.constant 0 : index
    %c0_77 = arith.constant 0 : index
    %133 = vector.load %arg17[%c0_75, %c0_76, %c0_77] : memref<3x128x120xbf16, #tpu.memory_space<vmem>>, vector<1x128x120xbf16>
    %134 = vector.shape_cast %133 : vector<1x128x120xbf16> to vector<128x120xbf16>
    %cst_78 = arith.constant dense<0.000000e+00> : vector<96x120xf32>
    %135 = tpu.matmul %132, %134, %cst_78 {dimension_numbers = #tpu.dot_dimension_numbers<[1], [0], [0], [1], [0, 0, 1, 1], [], []>} : vector<96x128xbf16>, vector<128x120xbf16>, vector<96x120xf32> -> vector<96x120xf32>
    %136 = vector.extract_strided_slice %130 {offsets = [1, 0, 0], sizes = [6, 16, 128], strides = [1, 1, 1]} : vector<8x16x128xbf16> to vector<6x16x128xbf16>
    %137 = vector.shape_cast %136 : vector<6x16x128xbf16> to vector<96x128xbf16>
    %c1_79 = arith.constant 1 : index
    %c0_80 = arith.constant 0 : index
    %c0_81 = arith.constant 0 : index
    %138 = vector.load %arg17[%c1_79, %c0_80, %c0_81] : memref<3x128x120xbf16, #tpu.memory_space<vmem>>, vector<1x128x120xbf16>
    %139 = vector.shape_cast %138 : vector<1x128x120xbf16> to vector<128x120xbf16>
    %cst_82 = arith.constant dense<0.000000e+00> : vector<96x120xf32>
    %140 = tpu.matmul %137, %139, %cst_82 {dimension_numbers = #tpu.dot_dimension_numbers<[1], [0], [0], [1], [0, 0, 1, 1], [], []>} : vector<96x128xbf16>, vector<128x120xbf16>, vector<96x120xf32> -> vector<96x120xf32>
    %141 = arith.addf %135, %140 : vector<96x120xf32>
    %142 = vector.extract_strided_slice %130 {offsets = [2, 0, 0], sizes = [6, 16, 128], strides = [1, 1, 1]} : vector<8x16x128xbf16> to vector<6x16x128xbf16>
    %143 = vector.shape_cast %142 : vector<6x16x128xbf16> to vector<96x128xbf16>
    %c2_83 = arith.constant 2 : index
    %c0_84 = arith.constant 0 : index
    %c0_85 = arith.constant 0 : index
    %144 = vector.load %arg17[%c2_83, %c0_84, %c0_85] : memref<3x128x120xbf16, #tpu.memory_space<vmem>>, vector<1x128x120xbf16>
    %145 = vector.shape_cast %144 : vector<1x128x120xbf16> to vector<128x120xbf16>
    %cst_86 = arith.constant dense<0.000000e+00> : vector<96x120xf32>
    %146 = tpu.matmul %143, %145, %cst_86 {dimension_numbers = #tpu.dot_dimension_numbers<[1], [0], [0], [1], [0, 0, 1, 1], [], []>} : vector<96x128xbf16>, vector<128x120xbf16>, vector<96x120xf32> -> vector<96x120xf32>
    %147 = arith.addf %141, %146 : vector<96x120xf32>
    %c0_87 = arith.constant 0 : index
    %c0_88 = arith.constant 0 : index
    %148 = vector.load %arg18[%c0_87, %c0_88] : memref<1x120xf32, #tpu.memory_space<vmem>>, vector<1x120xf32>
    %149 = vector.broadcast %148 : vector<1x120xf32> to vector<96x120xf32>
    %150 = arith.mulf %147, %149 : vector<96x120xf32>
    %c0_89 = arith.constant 0 : index
    %c0_90 = arith.constant 0 : index
    %151 = vector.load %arg19[%c0_89, %c0_90] : memref<1x120xf32, #tpu.memory_space<vmem>>, vector<1x120xf32>
    %152 = vector.broadcast %151 : vector<1x120xf32> to vector<96x120xf32>
    %153 = arith.addf %150, %152 : vector<96x120xf32>
    %cst_91 = arith.constant 0.000000e+00 : f32
    %154 = vector.broadcast %cst_91 : f32 to vector<96x120xf32>
    %155 = arith.maximumf %153, %154 : vector<96x120xf32>
    %156 = vector.shape_cast %155 : vector<96x120xf32> to vector<6x16x120xf32>
    %157 = vector.shape_cast %156 : vector<6x16x120xf32> to vector<96x120xf32>
    %c0_92 = arith.constant 0 : index
    %c0_93 = arith.constant 0 : index
    %158 = vector.load %arg20[%c0_92, %c0_93] : memref<120x16xf32, #tpu.memory_space<vmem>>, vector<120x16xf32>
    %cst_94 = arith.constant dense<0.000000e+00> : vector<96x16xf32>
    %159 = tpu.matmul %157, %158, %cst_94 {dimension_numbers = #tpu.dot_dimension_numbers<[1], [0], [0], [1], [0, 0, 1, 1], [], []>} : vector<96x120xf32>, vector<120x16xf32>, vector<96x16xf32> -> vector<96x16xf32>
    %160 = vector.shape_cast %159 : vector<96x16xf32> to vector<6x16x16xf32>
    %161 = vector.extract_strided_slice %160 {offsets = [0, 0, 0], sizes = [1, 16, 16], strides = [1, 1, 1]} : vector<6x16x16xf32> to vector<1x16x16xf32>
    %162 = vector.shape_cast %161 : vector<1x16x16xf32> to vector<16x16xf32>
    %163 = vector.extract_strided_slice %160 {offsets = [1, 0, 0], sizes = [1, 16, 16], strides = [1, 1, 1]} : vector<6x16x16xf32> to vector<1x16x16xf32>
    %164 = vector.shape_cast %163 : vector<1x16x16xf32> to vector<16x16xf32>
    %165 = arith.addf %162, %164 : vector<16x16xf32>
    %166 = vector.extract_strided_slice %160 {offsets = [2, 0, 0], sizes = [1, 16, 16], strides = [1, 1, 1]} : vector<6x16x16xf32> to vector<1x16x16xf32>
    %167 = vector.shape_cast %166 : vector<1x16x16xf32> to vector<16x16xf32>
    %168 = arith.addf %165, %167 : vector<16x16xf32>
    %169 = vector.extract_strided_slice %160 {offsets = [3, 0, 0], sizes = [1, 16, 16], strides = [1, 1, 1]} : vector<6x16x16xf32> to vector<1x16x16xf32>
    %170 = vector.shape_cast %169 : vector<1x16x16xf32> to vector<16x16xf32>
    %171 = arith.addf %168, %170 : vector<16x16xf32>
    %172 = vector.extract_strided_slice %160 {offsets = [4, 0, 0], sizes = [1, 16, 16], strides = [1, 1, 1]} : vector<6x16x16xf32> to vector<1x16x16xf32>
    %173 = vector.shape_cast %172 : vector<1x16x16xf32> to vector<16x16xf32>
    %174 = arith.addf %171, %173 : vector<16x16xf32>
    %175 = vector.extract_strided_slice %160 {offsets = [5, 0, 0], sizes = [1, 16, 16], strides = [1, 1, 1]} : vector<6x16x16xf32> to vector<1x16x16xf32>
    %176 = vector.shape_cast %175 : vector<1x16x16xf32> to vector<16x16xf32>
    %177 = arith.addf %174, %176 : vector<16x16xf32>
    %c0_95 = arith.constant 0 : index
    %c0_96 = arith.constant 0 : index
    %178 = vector.load %arg21[%c0_95, %c0_96] : memref<1x16xf32, #tpu.memory_space<vmem>>, vector<1x16xf32>
    %179 = vector.broadcast %178 : vector<1x16xf32> to vector<16x16xf32>
    %180 = arith.mulf %177, %179 : vector<16x16xf32>
    %c0_97 = arith.constant 0 : index
    %c0_98 = arith.constant 0 : index
    %181 = vector.load %arg22[%c0_97, %c0_98] : memref<1x16xf32, #tpu.memory_space<vmem>>, vector<1x16xf32>
    %182 = vector.broadcast %181 : vector<1x16xf32> to vector<16x16xf32>
    %183 = arith.addf %180, %182 : vector<16x16xf32>
    %cst_99 = arith.constant 0.000000e+00 : f32
    %184 = vector.broadcast %cst_99 : f32 to vector<16x16xf32>
    %185 = arith.maximumf %183, %184 : vector<16x16xf32>
    %c0_100 = arith.constant 0 : index
    %c0_101 = arith.constant 0 : index
    %186 = vector.load %arg23[%c0_100, %c0_101] : memref<16x10xf32, #tpu.memory_space<vmem>>, vector<16x10xf32>
    %cst_102 = arith.constant dense<0.000000e+00> : vector<16x10xf32>
    %187 = tpu.matmul %185, %186, %cst_102 {dimension_numbers = #tpu.dot_dimension_numbers<[1], [0], [0], [1], [0, 0, 1, 1], [], []>} : vector<16x16xf32>, vector<16x10xf32>, vector<16x10xf32> -> vector<16x10xf32>
    %c0_103 = arith.constant 0 : index
    %c0_104 = arith.constant 0 : index
    %188 = vector.load %arg24[%c0_103, %c0_104] : memref<1x10xf32, #tpu.memory_space<vmem>>, vector<1x10xf32>
    %189 = vector.broadcast %188 : vector<1x10xf32> to vector<16x10xf32>
    %190 = arith.addf %187, %189 : vector<16x10xf32>
    %cst_105 = arith.constant dense<0xFF800000> : vector<16xf32>
    %191 = vector.multi_reduction <maximumf>, %190, %cst_105 [1] : vector<16x10xf32> to vector<16xf32>
    %192 = vector.shape_cast %191 : vector<16xf32> to vector<16x1xf32>
    %193 = vector.broadcast %192 : vector<16x1xf32> to vector<16x10xf32>
    %194 = arith.subf %190, %193 : vector<16x10xf32>
    %195 = math.exp %194 : vector<16x10xf32>
    %cst_106 = arith.constant dense<0.000000e+00> : vector<16xf32>
    %196 = vector.multi_reduction <add>, %195, %cst_106 [1] : vector<16x10xf32> to vector<16xf32>
    %197 = vector.shape_cast %196 : vector<16xf32> to vector<16x1xf32>
    %198 = math.log %197 : vector<16x1xf32>
    %199 = arith.addf %198, %192 : vector<16x1xf32>
    %200 = vector.broadcast %199 : vector<16x1xf32> to vector<16x10xf32>
    %201 = arith.subf %190, %200 : vector<16x10xf32>
    %c0_107 = arith.constant 0 : index
    %c0_108 = arith.constant 0 : index
    %202 = vector.load %arg25[%c0_107, %c0_108] : memref<16x10xf32, #tpu.memory_space<vmem>>, vector<16x10xf32>
    tpu.vector_store %arg25[%c0_107, %c0_108], %201 {strides = array<i32>} : memref<16x10xf32, #tpu.memory_space<vmem>>, vector<16x10xf32>,
    return
  }
  func.func @transform_0(%arg0: i32) -> (i32, i32, i32) {
    %c0_i32 = arith.constant 0 : i32
    %c0_i32_0 = arith.constant 0 : i32
    %c0_i32_1 = arith.constant 0 : i32
    return %c0_i32, %arg0, %c0_i32_0 : i32, i32, i32
  }
  func.func @transform_1(%arg0: i32) -> (i32, i32, i32) {
    %c0_i32 = arith.constant 0 : i32
    %c0_i32_0 = arith.constant 0 : i32
    %c0_i32_1 = arith.constant 0 : i32
    %c0_i32_2 = arith.constant 0 : i32
    return %c0_i32, %c0_i32_0, %c0_i32_1 : i32, i32, i32
  }
  func.func @transform_2(%arg0: i32) -> (i32, i32) {
    %c0_i32 = arith.constant 0 : i32
    %c0_i32_0 = arith.constant 0 : i32
    %c0_i32_1 = arith.constant 0 : i32
    return %c0_i32, %c0_i32_0 : i32, i32
  }
  func.func @transform_3(%arg0: i32) -> (i32, i32) {
    %c0_i32 = arith.constant 0 : i32
    %c0_i32_0 = arith.constant 0 : i32
    %c0_i32_1 = arith.constant 0 : i32
    return %c0_i32, %c0_i32_0 : i32, i32
  }
  func.func @transform_4(%arg0: i32) -> (i32, i32, i32) {
    %c0_i32 = arith.constant 0 : i32
    %c0_i32_0 = arith.constant 0 : i32
    %c0_i32_1 = arith.constant 0 : i32
    %c0_i32_2 = arith.constant 0 : i32
    return %c0_i32, %c0_i32_0, %c0_i32_1 : i32, i32, i32
  }
  func.func @transform_5(%arg0: i32) -> (i32, i32) {
    %c0_i32 = arith.constant 0 : i32
    %c0_i32_0 = arith.constant 0 : i32
    %c0_i32_1 = arith.constant 0 : i32
    return %c0_i32, %c0_i32_0 : i32, i32
  }
  func.func @transform_6(%arg0: i32) -> (i32, i32) {
    %c0_i32 = arith.constant 0 : i32
    %c0_i32_0 = arith.constant 0 : i32
    %c0_i32_1 = arith.constant 0 : i32
    return %c0_i32, %c0_i32_0 : i32, i32
  }
  func.func @transform_7(%arg0: i32) -> (i32, i32) {
    %c0_i32 = arith.constant 0 : i32
    %c0_i32_0 = arith.constant 0 : i32
    %c0_i32_1 = arith.constant 0 : i32
    return %c0_i32, %c0_i32_0 : i32, i32
  }
  func.func @transform_8(%arg0: i32) -> (i32, i32) {
    %c0_i32 = arith.constant 0 : i32
    %c0_i32_0 = arith.constant 0 : i32
    %c0_i32_1 = arith.constant 0 : i32
    return %c0_i32, %c0_i32_0 : i32, i32
  }
  func.func @transform_9(%arg0: i32) -> (i32, i32) {
    %c0_i32 = arith.constant 0 : i32
    %c0_i32_0 = arith.constant 0 : i32
    %c0_i32_1 = arith.constant 0 : i32
    return %c0_i32, %c0_i32_0 : i32, i32
  }
  func.func @transform_10(%arg0: i32) -> (i32, i32, i32) {
    %c0_i32 = arith.constant 0 : i32
    %c0_i32_0 = arith.constant 0 : i32
    %c0_i32_1 = arith.constant 0 : i32
    %c0_i32_2 = arith.constant 0 : i32
    return %c0_i32, %c0_i32_0, %c0_i32_1 : i32, i32, i32
  }
  func.func @transform_11(%arg0: i32) -> (i32, i32) {
    %c0_i32 = arith.constant 0 : i32
    %c0_i32_0 = arith.constant 0 : i32
    %c0_i32_1 = arith.constant 0 : i32
    return %c0_i32, %c0_i32_0 : i32, i32
  }
  func.func @transform_12(%arg0: i32) -> (i32, i32) {
    %c0_i32 = arith.constant 0 : i32
    %c0_i32_0 = arith.constant 0 : i32
    %c0_i32_1 = arith.constant 0 : i32
    return %c0_i32, %c0_i32_0 : i32, i32
  }
  func.func @transform_13(%arg0: i32) -> (i32, i32, i32) {
    %c0_i32 = arith.constant 0 : i32
    %c0_i32_0 = arith.constant 0 : i32
    %c0_i32_1 = arith.constant 0 : i32
    %c0_i32_2 = arith.constant 0 : i32
    return %c0_i32, %c0_i32_0, %c0_i32_1 : i32, i32, i32
  }
  func.func @transform_14(%arg0: i32) -> (i32, i32) {
    %c0_i32 = arith.constant 0 : i32
    %c0_i32_0 = arith.constant 0 : i32
    %c0_i32_1 = arith.constant 0 : i32
    return %c0_i32, %c0_i32_0 : i32, i32
  }
  func.func @transform_15(%arg0: i32) -> (i32, i32) {
    %c0_i32 = arith.constant 0 : i32
    %c0_i32_0 = arith.constant 0 : i32
    %c0_i32_1 = arith.constant 0 : i32
    return %c0_i32, %c0_i32_0 : i32, i32
  }
  func.func @transform_16(%arg0: i32) -> (i32, i32, i32) {
    %c0_i32 = arith.constant 0 : i32
    %c0_i32_0 = arith.constant 0 : i32
    %c0_i32_1 = arith.constant 0 : i32
    %c0_i32_2 = arith.constant 0 : i32
    return %c0_i32, %c0_i32_0, %c0_i32_1 : i32, i32, i32
  }
  func.func @transform_17(%arg0: i32) -> (i32, i32) {
    %c0_i32 = arith.constant 0 : i32
    %c0_i32_0 = arith.constant 0 : i32
    %c0_i32_1 = arith.constant 0 : i32
    return %c0_i32, %c0_i32_0 : i32, i32
  }
  func.func @transform_18(%arg0: i32) -> (i32, i32) {
    %c0_i32 = arith.constant 0 : i32
    %c0_i32_0 = arith.constant 0 : i32
    %c0_i32_1 = arith.constant 0 : i32
    return %c0_i32, %c0_i32_0 : i32, i32
  }
  func.func @transform_19(%arg0: i32) -> (i32, i32) {
    %c0_i32 = arith.constant 0 : i32
    %c0_i32_0 = arith.constant 0 : i32
    %c0_i32_1 = arith.constant 0 : i32
    return %c0_i32, %c0_i32_0 : i32, i32
  }
  func.func @transform_20(%arg0: i32) -> (i32, i32) {
    %c0_i32 = arith.constant 0 : i32
    %c0_i32_0 = arith.constant 0 : i32
    %c0_i32_1 = arith.constant 0 : i32
    return %c0_i32, %c0_i32_0 : i32, i32
  }
  func.func @transform_21(%arg0: i32) -> (i32, i32) {
    %c0_i32 = arith.constant 0 : i32
    %c0_i32_0 = arith.constant 0 : i32
    %c0_i32_1 = arith.constant 0 : i32
    return %c0_i32, %c0_i32_0 : i32, i32
  }
  func.func @transform_22(%arg0: i32) -> (i32, i32) {
    %c0_i32 = arith.constant 0 : i32
    %c0_i32_0 = arith.constant 0 : i32
    %c0_i32_1 = arith.constant 0 : i32
    return %c0_i32, %c0_i32_0 : i32, i32
  }
  func.func @transform_23(%arg0: i32) -> (i32, i32) {
    %c0_i32 = arith.constant 0 : i32
    %c0_i32_0 = arith.constant 0 : i32
    %c0_i32_1 = arith.constant 0 : i32
    return %c0_i32, %c0_i32_0 : i32, i32
  }
  func.func @transform_24(%arg0: i32) -> (i32, i32) {
    %c0_i32 = arith.constant 0 : i32
    %c0_i32_0 = arith.constant 0 : i32
    return %arg0, %c0_i32 : i32, i32
  }
}

</mosaic_0001>

<llo_original>
// kernel: net_forward.1
$region0: #{net_forward.1}
  #allocation0 [shape = 'u32[]', space=smem, size = 0x4, offset = 0x4, fixed_abs, tag = 'smem constant byte address 0x4 - core index']
  #allocation1 [shape = 'u32[144,128]{1,0:T(1,128)}', space=vmem, size = 0x12000, scoped, tag = 'internal scratch']
  %s0 = inlined_call_operand.vmem [shape: bf16[28,16,28], index: 0, kind: input, shape index: {}]
  %s1 = inlined_call_operand.vmem [shape: bf16[3,28,208], index: 1, kind: input, shape index: {}]
  %s2 = inlined_call_operand.hbm [shape: f32[1,208], index: 2, kind: input, shape index: {}]
  %s3 = inlined_call_operand.hbm [shape: f32[1,208], index: 3, kind: input, shape index: {}]
  %s4 = inlined_call_operand.vmem [shape: bf16[3,208,384], index: 4, kind: input, shape index: {}]
  %s5 = inlined_call_operand.hbm [shape: f32[1,384], index: 5, kind: input, shape index: {}]
  %s6 = inlined_call_operand.vmem [shape: f32[1,384], index: 6, kind: input, shape index: {}]
  %s7 = inlined_call_operand.vmem [shape: bf16[368,96], index: 7, kind: input, shape index: {}]
  %s8 = inlined_call_operand.hbm [shape: f32[1,96], index: 8, kind: input, shape index: {}]
  %s9 = inlined_call_operand.hbm [shape: f32[1,96], index: 9, kind: input, shape index: {}]
  %s10 = inlined_call_operand.hbm [shape: bf16[3,96,120], index: 10, kind: input, shape index: {}]
  %s11 = inlined_call_operand.hbm [shape: f32[1,120], index: 11, kind: input, shape index: {}]
  %s12 = inlined_call_operand.vmem [shape: f32[1,120], index: 12, kind: input, shape index: {}]
  %s13 = inlined_call_operand.hbm [shape: bf16[3,120,128], index: 13, kind: input, shape index: {}]
  %s14 = inlined_call_operand.hbm [shape: f32[1,128], index: 14, kind: input, shape index: {}]
  %s15 = inlined_call_operand.hbm [shape: f32[1,128], index: 15, kind: input, shape index: {}]
  %s16 = inlined_call_operand.vmem [shape: bf16[3,128,120], index: 16, kind: input, shape index: {}]
  %s17 = inlined_call_operand.hbm [shape: f32[1,120], index: 17, kind: input, shape index: {}]
  %s18 = inlined_call_operand.hbm [shape: f32[1,120], index: 18, kind: input, shape index: {}]
  %s19 = inlined_call_operand.vmem [shape: f32[120,16], index: 19, kind: input, shape index: {}]
  %s20 = inlined_call_operand.hbm [shape: f32[1,16], index: 20, kind: input, shape index: {}]
  %s21 = inlined_call_operand.hbm [shape: f32[1,16], index: 21, kind: input, shape index: {}]
  %s22 = inlined_call_operand.hbm [shape: f32[16,10], index: 22, kind: input, shape index: {}]
  %s23 = inlined_call_operand.hbm [shape: f32[1,10], index: 23, kind: input, shape index: {}]
  %s24 = inlined_call_operand.vmem [shape: f32[16,10], index: 24, kind: output, shape index: {}]
  %s25 = sld [smem:[#allocation0]]
  $region170: #{net_forward.1} parent=0
    _
  %s27 = ssub.s32 1, %s25
  %s28 = scalar_select 0, %s27, %s25
  $region1: #{net_forward.1} parent=0
    #allocation2 [shape = 'u8[1024]{0}', space=vmem, size = 0x400, scoped, tag = 'input window, operand 2, single buffered']
    #allocation3 [shape = 's32[1]{0}', space=sflag, size = 0x4, scoped, tag = 'scoped memory for net_forward.1']
    #allocation4 [shape = 'u8[1024]{0}', space=vmem, size = 0x400, scoped, tag = 'input window, operand 3, single buffered']
    #allocation5 [shape = 's32[1]{0}', space=sflag, size = 0x4, scoped, tag = 'scoped memory for net_forward.1']
    #allocation6 [shape = 'u8[1536]{0}', space=vmem, size = 0x800, scoped, tag = 'input window, operand 5, single buffered']
    #allocation7 [shape = 'u8[512]{0}', space=vmem, size = 0x400, scoped, tag = 'input window, operand 8, single buffered']
    #allocation8 [shape = 's32[1]{0}', space=sflag, size = 0x4, scoped, tag = 'scoped memory for net_forward.1']
    #allocation9 [shape = 'u8[512]{0}', space=vmem, size = 0x400, scoped, tag = 'input window, operand 9, single buffered']
    #allocation10 [shape = 'u8[73728]{0}', space=vmem, size = 0x12000, scoped, tag = 'input window, operand 10, single buffered']
    #allocation11 [shape = 's32[1]{0}', space=sflag, size = 0x4, scoped, tag = 'scoped memory for net_forward.1']
    #allocation12 [shape = 'u8[512]{0}', space=vmem, size = 0x400, scoped, tag = 'input window, operand 11, single buffered']
    #allocation13 [shape = 'u8[92160]{0}', space=vmem, size = 0x16800, scoped, tag = 'input window, operand 13, single buffered']
    #allocation14 [shape = 's32[1]{0}', space=sflag, size = 0x4, scoped, tag = 'scoped memory for net_forward.1']
    #allocation15 [shape = 'u8[512]{0}', space=vmem, size = 0x400, scoped, tag = 'input window, operand 14, single buffered']
    #allocation16 [shape = 'u8[512]{0}', space=vmem, size = 0x400, scoped, tag = 'input window, operand 15, single buffered']
    #allocation17 [shape = 's32[1]{0}', space=sflag, size = 0x4, scoped, tag = 'scoped memory for net_forward.1']
    #allocation18 [shape = 'u8[512]{0}', space=vmem, size = 0x400, scoped, tag = 'input window, operand 17, single buffered']
    #allocation19 [shape = 'u8[512]{0}', space=vmem, size = 0x400, scoped, tag = 'input window, operand 18, single buffered']
    #allocation20 [shape = 's32[1]{0}', space=sflag, size = 0x4, scoped, tag = 'scoped memory for net_forward.1']
    #allocation21 [shape = 'u8[512]{0}', space=vmem, size = 0x400, scoped, tag = 'input window, operand 20, single buffered']
    #allocation22 [shape = 'u8[512]{0}', space=vmem, size = 0x400, scoped, tag = 'input window, operand 21, single buffered']
    #allocation23 [shape = 's32[1]{0}', space=sflag, size = 0x4, scoped, tag = 'scoped memory for net_forward.1']
    #allocation24 [shape = 'u8[8192]{0}', space=vmem, size = 0x2000, scoped, tag = 'input window, operand 22, single buffered']
    #allocation25 [shape = 'u8[512]{0}', space=vmem, size = 0x400, scoped, tag = 'input window, operand 23, single buffered']
    #allocation26 [shape = 's32[1]{0}', space=sflag, size = 0x4, scoped, tag = 'scoped memory for net_forward.1']
    %29 = vsyncpa [#allocation3], 0
    %30 = vsyncpa [#allocation5], 0
    %31 = vsyncpa [#allocation8], 0
    %32 = vsyncpa [#allocation11], 0
    %33 = vsyncpa [#allocation14], 0
    %34 = vsyncpa [#allocation17], 0
    %35 = vsyncpa [#allocation20], 0
    %36 = vsyncpa [#allocation23], 0
    %37 = vsyncpa [#allocation26], 0
    // Predicated region
    $region2: #{net_forward.1} parent=1 // pred_check
      _
    $region3: #{net_forward.1} parent=1 // pred_check_branch
      %39 = sbr.rel (0) target = $region5
    $region4: #{net_forward.1} parent=1 // pred_region
      _
    $region5: #{net_forward.1} parent=1 // pred_fallthru
      _
    // Predicated region
    $region6: #{net_forward.1} parent=1 // pred_check
      _
    $region7: #{net_forward.1} parent=1 // pred_check_branch
      %41 = sbr.rel (0) target = $region9
    $region8: #{net_forward.1} parent=1 // pred_region
      _
    $region9: #{net_forward.1} parent=1 // pred_fallthru
      _
    // Predicated region
    $region10: #{net_forward.1} parent=1 // pred_check
      _
    $region11: #{net_forward.1} parent=1 // pred_check_branch
      %43 = sbr.rel (0) target = $region13
    $region12: #{net_forward.1} parent=1 // pred_region
      %s45 = ssub.s32 32, 32
      %46 = vsyncadd [#allocation3], %s45
      %s48 = sshll.u32 [#allocation2], 4
      %s49 = int_to_ptr.vmem [resolvable:$true] %s48
      %51 = dma.hbm_to_vmem [thread:$0]  %s2, 32, %s49, [#allocation3]
    $region13: #{net_forward.1} parent=1 // pred_fallthru
      _
    // Predicated region
    $region14: #{net_forward.1} parent=1 // pred_check
      _
    $region15: #{net_forward.1} parent=1 // pred_check_branch
      %53 = sbr.rel (0) target = $region17
    $region16: #{net_forward.1} parent=1 // pred_region
      %s55 = ssub.s32 32, 32
      %56 = vsyncadd [#allocation5], %s55
      %s58 = sshll.u32 [#allocation4], 4
      %s59 = int_to_ptr.vmem [resolvable:$true] %s58
      %61 = dma.hbm_to_vmem [thread:$0]  %s3, 32, %s59, [#allocation5]
    $region17: #{net_forward.1} parent=1 // pred_fallthru
      _
    // Predicated region
    $region18: #{net_forward.1} parent=1 // pred_check
      _
    $region19: #{net_forward.1} parent=1 // pred_check_branch
      %63 = sbr.rel (0) target = $region21
    $region20: #{net_forward.1} parent=1 // pred_region
      _
    $region21: #{net_forward.1} parent=1 // pred_fallthru
      _
    // Predicated region
    $region22: #{net_forward.1} parent=1 // pred_check
      _
    $region23: #{net_forward.1} parent=1 // pred_check_branch
      %65 = sbr.rel (0) target = $region25
    $region24: #{net_forward.1} parent=1 // pred_region
      %s67 = ssub.s32 48, 48
      %68 = vsyncadd [#allocation5], %s67
      %s70 = sshll.u32 [#allocation6], 4
      %s71 = int_to_ptr.vmem [resolvable:$true] %s70
      %73 = dma.hbm_to_vmem [thread:$0]  %s5, 48, %s71, [#allocation5]
    $region25: #{net_forward.1} parent=1 // pred_fallthru
      _
    // Predicated region
    $region26: #{net_forward.1} parent=1 // pred_check
      _
    $region27: #{net_forward.1} parent=1 // pred_check_branch
      %75 = sbr.rel (0) target = $region29
    $region28: #{net_forward.1} parent=1 // pred_region
      _
    $region29: #{net_forward.1} parent=1 // pred_fallthru
      _
    // Predicated region
    $region30: #{net_forward.1} parent=1 // pred_check
      _
    $region31: #{net_forward.1} parent=1 // pred_check_branch
      %77 = sbr.rel (0) target = $region33
    $region32: #{net_forward.1} parent=1 // pred_region
      _
    $region33: #{net_forward.1} parent=1 // pred_fallthru
      _
    // Predicated region
    $region34: #{net_forward.1} parent=1 // pred_check
      _
    $region35: #{net_forward.1} parent=1 // pred_check_branch
      %79 = sbr.rel (0) target = $region37
    $region36: #{net_forward.1} parent=1 // pred_region
      %s81 = ssub.s32 16, 16
      %82 = vsyncadd [#allocation8], %s81
      %s84 = sshll.u32 [#allocation7], 4
      %s85 = int_to_ptr.vmem [resolvable:$true] %s84
      %87 = dma.hbm_to_vmem [thread:$0]  %s8, 16, %s85, [#allocation8]
    $region37: #{net_forward.1} parent=1 // pred_fallthru
      _
    // Predicated region
    $region38: #{net_forward.1} parent=1 // pred_check
      _
    $region39: #{net_forward.1} parent=1 // pred_check_branch
      %89 = sbr.rel (0) target = $region41
    $region40: #{net_forward.1} parent=1 // pred_region
      %s91 = ssub.s32 16, 16
      %92 = vsyncadd [#allocation8], %s91
      %s94 = sshll.u32 [#allocation9], 4
      %s95 = int_to_ptr.vmem [resolvable:$true] %s94
      %97 = dma.hbm_to_vmem [thread:$0]  %s9, 16, %s95, [#allocation8]
    $region41: #{net_forward.1} parent=1 // pred_fallthru
      _
    // Predicated region
    $region42: #{net_forward.1} parent=1 // pred_check
      _
    $region43: #{net_forward.1} parent=1 // pred_check_branch
      %99 = sbr.rel (0) target = $region45
    $region44: #{net_forward.1} parent=1 // pred_region
      %s101 = ssub.s32 2304, 2304
      %102 = vsyncadd [#allocation11], %s101
      %s103 = sshll.u32 [#allocation10], 4
      %s104 = int_to_ptr.vmem [resolvable:$true] %s103
      %109 = dma.hbm_to_vmem [thread:$0]  %s10, 2304, %s104, [#allocation11], 64, 64, 4
    $region45: #{net_forward.1} parent=1 // pred_fallthru
      _
    // Predicated region
    $region46: #{net_forward.1} parent=1 // pred_check
      _
    $region47: #{net_forward.1} parent=1 // pred_check_branch
      %111 = sbr.rel (0) target = $region49
    $region48: #{net_forward.1} parent=1 // pred_region
      %s113 = ssub.s32 16, 16
      %114 = vsyncadd [#allocation11], %s113
      %s116 = sshll.u32 [#allocation12], 4
      %s117 = int_to_ptr.vmem [resolvable:$true] %s116
      %119 = dma.hbm_to_vmem [thread:$0]  %s11, 16, %s117, [#allocation11]
    $region49: #{net_forward.1} parent=1 // pred_fallthru
      _
    // Predicated region
    $region50: #{net_forward.1} parent=1 // pred_check
      _
    $region51: #{net_forward.1} parent=1 // pred_check_branch
      %121 = sbr.rel (0) target = $region53
    $region52: #{net_forward.1} parent=1 // pred_region
      _
    $region53: #{net_forward.1} parent=1 // pred_fallthru
      _
    // Predicated region
    $region54: #{net_forward.1} parent=1 // pred_check
      _
    $region55: #{net_forward.1} parent=1 // pred_check_branch
      %123 = sbr.rel (0) target = $region57
    $region56: #{net_forward.1} parent=1 // pred_region
      %s125 = ssub.s32 2880, 2880
      %126 = vsyncadd [#allocation14], %s125
      %s127 = sshll.u32 [#allocation13], 4
      %s128 = int_to_ptr.vmem [resolvable:$true] %s127
      %133 = dma.hbm_to_vmem [thread:$0]  %s13, 2880, %s128, [#allocation14], 64, 64, 4
    $region57: #{net_forward.1} parent=1 // pred_fallthru
      _
    // Predicated region
    $region58: #{net_forward.1} parent=1 // pred_check
      _
    $region59: #{net_forward.1} parent=1 // pred_check_branch
      %135 = sbr.rel (0) target = $region61
    $region60: #{net_forward.1} parent=1 // pred_region
      %s137 = ssub.s32 16, 16
      %138 = vsyncadd [#allocation14], %s137
      %s140 = sshll.u32 [#allocation15], 4
      %s141 = int_to_ptr.vmem [resolvable:$true] %s140
      %143 = dma.hbm_to_vmem [thread:$0]  %s14, 16, %s141, [#allocation14]
    $region61: #{net_forward.1} parent=1 // pred_fallthru
      _
    // Predicated region
    $region62: #{net_forward.1} parent=1 // pred_check
      _
    $region63: #{net_forward.1} parent=1 // pred_check_branch
      %145 = sbr.rel (0) target = $region65
    $region64: #{net_forward.1} parent=1 // pred_region
      %s147 = ssub.s32 16, 16
      %148 = vsyncadd [#allocation17], %s147
      %s150 = sshll.u32 [#allocation16], 4
      %s151 = int_to_ptr.vmem [resolvable:$true] %s150
      %153 = dma.hbm_to_vmem [thread:$0]  %s15, 16, %s151, [#allocation17]
    $region65: #{net_forward.1} parent=1 // pred_fallthru
      _
    // Predicated region
    $region66: #{net_forward.1} parent=1 // pred_check
      _
    $region67: #{net_forward.1} parent=1 // pred_check_branch
      %155 = sbr.rel (0) target = $region69
    $region68: #{net_forward.1} parent=1 // pred_region
      _
    $region69: #{net_forward.1} parent=1 // pred_fallthru
      _
    // Predicated region
    $region70: #{net_forward.1} parent=1 // pred_check
      _
    $region71: #{net_forward.1} parent=1 // pred_check_branch
      %157 = sbr.rel (0) target = $region73
    $region72: #{net_forward.1} parent=1 // pred_region
      %s159 = ssub.s32 16, 16
      %160 = vsyncadd [#allocation17], %s159
      %s162 = sshll.u32 [#allocation18], 4
      %s163 = int_to_ptr.vmem [resolvable:$true] %s162
      %165 = dma.hbm_to_vmem [thread:$0]  %s17, 16, %s163, [#allocation17]
    $region73: #{net_forward.1} parent=1 // pred_fallthru
      _
    // Predicated region
    $region74: #{net_forward.1} parent=1 // pred_check
      _
    $region75: #{net_forward.1} parent=1 // pred_check_branch
      %167 = sbr.rel (0) target = $region77
    $region76: #{net_forward.1} parent=1 // pred_region
      %s169 = ssub.s32 16, 16
      %170 = vsyncadd [#allocation20], %s169
      %s172 = sshll.u32 [#allocation19], 4
      %s173 = int_to_ptr.vmem [resolvable:$true] %s172
      %175 = dma.hbm_to_vmem [thread:$0]  %s18, 16, %s173, [#allocation20]
    $region77: #{net_forward.1} parent=1 // pred_fallthru
      _
    // Predicated region
    $region78: #{net_forward.1} parent=1 // pred_check
      _
    $region79: #{net_forward.1} parent=1 // pred_check_branch
      %177 = sbr.rel (0) target = $region81
    $region80: #{net_forward.1} parent=1 // pred_region
      _
    $region81: #{net_forward.1} parent=1 // pred_fallthru
      _
    // Predicated region
    $region82: #{net_forward.1} parent=1 // pred_check
      _
    $region83: #{net_forward.1} parent=1 // pred_check_branch
      %179 = sbr.rel (0) target = $region85
    $region84: #{net_forward.1} parent=1 // pred_region
      %s181 = ssub.s32 16, 16
      %182 = vsyncadd [#allocation20], %s181
      %s184 = sshll.u32 [#allocation21], 4
      %s185 = int_to_ptr.vmem [resolvable:$true] %s184
      %187 = dma.hbm_to_vmem [thread:$0]  %s20, 16, %s185, [#allocation20]
    $region85: #{net_forward.1} parent=1 // pred_fallthru
      _
    // Predicated region
    $region86: #{net_forward.1} parent=1 // pred_check
      _
    $region87: #{net_forward.1} parent=1 // pred_check_branch
      %189 = sbr.rel (0) target = $region89
    $region88: #{net_forward.1} parent=1 // pred_region
      %s191 = ssub.s32 16, 16
      %192 = vsyncadd [#allocation23], %s191
      %s194 = sshll.u32 [#allocation22], 4
      %s195 = int_to_ptr.vmem [resolvable:$true] %s194
      %197 = dma.hbm_to_vmem [thread:$0]  %s21, 16, %s195, [#allocation23]
    $region89: #{net_forward.1} parent=1 // pred_fallthru
      _
    // Predicated region
    $region90: #{net_forward.1} parent=1 // pred_check
      _
    $region91: #{net_forward.1} parent=1 // pred_check_branch
      %199 = sbr.rel (0) target = $region93
    $region92: #{net_forward.1} parent=1 // pred_region
      %s201 = ssub.s32 256, 256
      %202 = vsyncadd [#allocation23], %s201
      %s203 = sshll.u32 [#allocation24], 4
      %s204 = int_to_ptr.vmem [resolvable:$true] %s203
      %209 = dma.hbm_to_vmem [thread:$0]  %s22, 256, %s204, [#allocation23], 128, 128, 8
    $region93: #{net_forward.1} parent=1 // pred_fallthru
      _
    // Predicated region
    $region94: #{net_forward.1} parent=1 // pred_check
      _
    $region95: #{net_forward.1} parent=1 // pred_check_branch
      %211 = sbr.rel (0) target = $region97
    $region96: #{net_forward.1} parent=1 // pred_region
      %s213 = ssub.s32 16, 16
      %214 = vsyncadd [#allocation26], %s213
      %s216 = sshll.u32 [#allocation25], 4
      %s217 = int_to_ptr.vmem [resolvable:$true] %s216
      %219 = dma.hbm_to_vmem [thread:$0]  %s23, 16, %s217, [#allocation26]
    $region97: #{net_forward.1} parent=1 // pred_fallthru
      _
    // Predicated region
    $region98: #{net_forward.1} parent=1 // pred_check
      _
    $region99: #{net_forward.1} parent=1 // pred_check_branch
      %221 = sbr.rel (0) target = $region101
    $region100: #{net_forward.1} parent=1 // pred_region
      %222 = dma.done [#allocation3], 32
    $region101: #{net_forward.1} parent=1 // pred_fallthru
      _
    // Predicated region
    $region102: #{net_forward.1} parent=1 // pred_check
      _
    $region103: #{net_forward.1} parent=1 // pred_check_branch
      %224 = sbr.rel (0) target = $region105
    $region104: #{net_forward.1} parent=1 // pred_region
      %225 = dma.done [#allocation5], 32
    $region105: #{net_forward.1} parent=1 // pred_fallthru
      _
    // Predicated region
    $region106: #{net_forward.1} parent=1 // pred_check
      _
    $region107: #{net_forward.1} parent=1 // pred_check_branch
      %227 = sbr.rel (0) target = $region109
    $region108: #{net_forward.1} parent=1 // pred_region
      %228 = dma.done [#allocation5], 48
    $region109: #{net_forward.1} parent=1 // pred_fallthru
      _
    // Predicated region
    $region110: #{net_forward.1} parent=1 // pred_check
      _
    $region111: #{net_forward.1} parent=1 // pred_check_branch
      %230 = sbr.rel (0) target = $region113
    $region112: #{net_forward.1} parent=1 // pred_region
      %231 = dma.done [#allocation8], 16
    $region113: #{net_forward.1} parent=1 // pred_fallthru
      _
    // Predicated region
    $region114: #{net_forward.1} parent=1 // pred_check
      _
    $region115: #{net_forward.1} parent=1 // pred_check_branch
      %233 = sbr.rel (0) target = $region117
    $region116: #{net_forward.1} parent=1 // pred_region
      %234 = dma.done [#allocation8], 16
    $region117: #{net_forward.1} parent=1 // pred_fallthru
      _
    // Predicated region
    $region118: #{net_forward.1} parent=1 // pred_check
      _
    $region119: #{net_forward.1} parent=1 // pred_check_branch
      %236 = sbr.rel (0) target = $region121
    $region120: #{net_forward.1} parent=1 // pred_region
      %237 = dma.done [#allocation11], 2304
    $region121: #{net_forward.1} parent=1 // pred_fallthru
      _
    // Predicated region
    $region122: #{net_forward.1} parent=1 // pred_check
      _
    $region123: #{net_forward.1} parent=1 // pred_check_branch
      %239 = sbr.rel (0) target = $region125
    $region124: #{net_forward.1} parent=1 // pred_region
      %240 = dma.done [#allocation11], 16
    $region125: #{net_forward.1} parent=1 // pred_fallthru
      _
    // Predicated region
    $region126: #{net_forward.1} parent=1 // pred_check
      _
    $region127: #{net_forward.1} parent=1 // pred_check_branch
      %242 = sbr.rel (0) target = $region129
    $region128: #{net_forward.1} parent=1 // pred_region
      %243 = dma.done [#allocation14], 2880
    $region129: #{net_forward.1} parent=1 // pred_fallthru
      _
    // Predicated region
    $region130: #{net_forward.1} parent=1 // pred_check
      _
    $region131: #{net_forward.1} parent=1 // pred_check_branch
      %245 = sbr.rel (0) target = $region133
    $region132: #{net_forward.1} parent=1 // pred_region
      %246 = dma.done [#allocation14], 16
    $region133: #{net_forward.1} parent=1 // pred_fallthru
      _
    // Predicated region
    $region134: #{net_forward.1} parent=1 // pred_check
      _
    $region135: #{net_forward.1} parent=1 // pred_check_branch
      %248 = sbr.rel (0) target = $region137
    $region136: #{net_forward.1} parent=1 // pred_region
      %249 = dma.done [#allocation17], 16
    $region137: #{net_forward.1} parent=1 // pred_fallthru
      _
    // Predicated region
    $region138: #{net_forward.1} parent=1 // pred_check
      _
    $region139: #{net_forward.1} parent=1 // pred_check_branch
      %251 = sbr.rel (0) target = $region141
    $region140: #{net_forward.1} parent=1 // pred_region
      %252 = dma.done [#allocation17], 16
    $region141: #{net_forward.1} parent=1 // pred_fallthru
      _
    // Predicated region
    $region142: #{net_forward.1} parent=1 // pred_check
      _
    $region143: #{net_forward.1} parent=1 // pred_check_branch
      %254 = sbr.rel (0) target = $region145
    $region144: #{net_forward.1} parent=1 // pred_region
      %255 = dma.done [#allocation20], 16
    $region145: #{net_forward.1} parent=1 // pred_fallthru
      _
    // Predicated region
    $region146: #{net_forward.1} parent=1 // pred_check
      _
    $region147: #{net_forward.1} parent=1 // pred_check_branch
      %257 = sbr.rel (0) target = $region149
    $region148: #{net_forward.1} parent=1 // pred_region
      %258 = dma.done [#allocation20], 16
    $region149: #{net_forward.1} parent=1 // pred_fallthru
      _
    // Predicated region
    $region150: #{net_forward.1} parent=1 // pred_check
      _
    $region151: #{net_forward.1} parent=1 // pred_check_branch
      %260 = sbr.rel (0) target = $region153
    $region152: #{net_forward.1} parent=1 // pred_region
      %261 = dma.done [#allocation23], 16
    $region153: #{net_forward.1} parent=1 // pred_fallthru
      _
    // Predicated region
    $region154: #{net_forward.1} parent=1 // pred_check
      _
    $region155: #{net_forward.1} parent=1 // pred_check_branch
      %263 = sbr.rel (0) target = $region157
    $region156: #{net_forward.1} parent=1 // pred_region
      %264 = dma.done [#allocation23], 256
    $region157: #{net_forward.1} parent=1 // pred_fallthru
      _
    // Predicated region
    $region158: #{net_forward.1} parent=1 // pred_check
      _
    $region159: #{net_forward.1} parent=1 // pred_check_branch
      %266 = sbr.rel (0) target = $region161
    $region160: #{net_forward.1} parent=1 // pred_region
      %267 = dma.done [#allocation26], 16
    $region161: #{net_forward.1} parent=1 // pred_fallthru
      _
    %v269 = vld [vmem:[%s0] sm:$0xf]
    %v270 = vld [vmem:[%s0 + $0x4] sm:$0xf]
    %v271 = vld [vmem:[%s0 + $0x8] sm:$0xf]
    %v272 = vld [vmem:[%s0 + $0xc] sm:$0xf]
    %v273 = vld [vmem:[%s0 + $0x10] sm:$0xf]
    %v274 = vld [vmem:[%s0 + $0x14] sm:$0xf]
    %v275 = vld [vmem:[%s0 + $0x18] sm:$0xf]
    %v276 = vld [vmem:[%s0 + $0x1c] sm:$0xf]
    %v277 = vld [vmem:[%s0 + $0x20] sm:$0xf]
    %v278 = vld [vmem:[%s0 + $0x24] sm:$0xf]
    %v279 = vld [vmem:[%s0 + $0x28] sm:$0xf]
    %v280 = vld [vmem:[%s0 + $0x2c] sm:$0xf]
    %v281 = vld [vmem:[%s0 + $0x30] sm:$0xf]
    %v282 = vld [vmem:[%s0 + $0x34] sm:$0xf]
    %v283 = vld [vmem:[%s0 + $0x38] sm:$0xf]
    %v284 = vld [vmem:[%s0 + $0x3c] sm:$0xf]
    %v285 = vld [vmem:[%s0 + $0x40] sm:$0xf]
    %v286 = vld [vmem:[%s0 + $0x44] sm:$0xf]
    %v287 = vld [vmem:[%s0 + $0x48] sm:$0xf]
    %v288 = vld [vmem:[%s0 + $0x4c] sm:$0xf]
    %v289 = vld [vmem:[%s0 + $0x50] sm:$0xf]
    %v290 = vld [vmem:[%s0 + $0x54] sm:$0xf]
    %v291 = vld [vmem:[%s0 + $0x58] sm:$0xf]
    %v292 = vld [vmem:[%s0 + $0x5c] sm:$0xf]
    %v293 = vld [vmem:[%s0 + $0x60] sm:$0xf]
    %v294 = vld [vmem:[%s0 + $0x64] sm:$0xf]
    %v295 = vld [vmem:[%s0 + $0x68] sm:$0xf]
    %v296 = vld [vmem:[%s0 + $0x6c] sm:$0xf]
    %v297 = vld [vmem:[%s0 + $0x70] sm:$0xf]
    %v298 = vld [vmem:[%s0 + $0x74] sm:$0xf]
    %v299 = vld [vmem:[%s0 + $0x78] sm:$0xf]
    %v300 = vld [vmem:[%s0 + $0x7c] sm:$0xf]
    %v301 = vld [vmem:[%s0 + $0x80] sm:$0xf]
    %v302 = vld [vmem:[%s0 + $0x84] sm:$0xf]
    %v303 = vld [vmem:[%s0 + $0x88] sm:$0xf]
    %v304 = vld [vmem:[%s0 + $0x8c] sm:$0xf]
    %v305 = vld [vmem:[%s0 + $0x90] sm:$0xf]
    %v306 = vld [vmem:[%s0 + $0x94] sm:$0xf]
    %v307 = vld [vmem:[%s0 + $0x98] sm:$0xf]
    %v308 = vld [vmem:[%s0 + $0x9c] sm:$0xf]
    %v309 = vld [vmem:[%s0 + $0xa0] sm:$0xf]
    %v310 = vld [vmem:[%s0 + $0xa4] sm:$0xf]
    %v311 = vld [vmem:[%s0 + $0xa8] sm:$0xf]
    %v312 = vld [vmem:[%s0 + $0xac] sm:$0xf]
    %v313 = vld [vmem:[%s0 + $0xb0] sm:$0xf]
    %v314 = vld [vmem:[%s0 + $0xb4] sm:$0xf]
    %v315 = vld [vmem:[%s0 + $0xb8] sm:$0xf]
    %v316 = vld [vmem:[%s0 + $0xbc] sm:$0xf]
    %v317 = vld [vmem:[%s0 + $0xc0] sm:$0xf]
    %v318 = vld [vmem:[%s0 + $0xc4] sm:$0xf]
    %v319 = vld [vmem:[%s0 + $0xc8] sm:$0xf]
    %v320 = vld [vmem:[%s0 + $0xcc] sm:$0xf]
    %v321 = vld [vmem:[%s0 + $0xd0] sm:$0xf]
    %v322 = vld [vmem:[%s0 + $0xd4] sm:$0xf]
    %v323 = vld [vmem:[%s0 + $0xd8] sm:$0xf]
    %v324 = vld [vmem:[%s0 + $0xdc] sm:$0xf]
    %v325 = vld [vmem:[%s1] sm:$0xff]
    %v326 = vld [vmem:[%s1 + $0x8] sm:$0xff]
    %v327 = vld [vmem:[%s1 + $0x10] sm:$0xff]
    %v328 = vld [vmem:[%s1 + $0x18] sm:$0x33]
    %s329 = scalar_lea.vmem %s1, 32
    %v330 = vld [vmem:[%s329] sm:$0xff]
    %v331 = vld [vmem:[%s329 + $0x8] sm:$0xff]
    %v332 = vld [vmem:[%s329 + $0x10] sm:$0xff]
    %v333 = vld [vmem:[%s329 + $0x18] sm:$0x33]
    %v386 = vunpack.c.l.b16 %v271
    %v387 = vunpack.c.l.b16 %v272
    %v388 = vunpack.c.l.b16 %v273
    %v389 = vunpack.c.l.b16 %v274
    %v390 = vunpack.c.l.b16 %v275
    %v391 = vunpack.c.l.b16 %v276
    %v392 = vunpack.c.l.b16 %v277
    %v393 = vunpack.c.l.b16 %v278
    %v394 = vunpack.c.l.b16 %v279
    %v395 = vunpack.c.l.b16 %v280
    %v396 = vunpack.c.l.b16 %v281
    %v397 = vunpack.c.l.b16 %v282
    %v398 = vunpack.c.l.b16 %v283
    %v399 = vunpack.c.l.b16 %v284
    %v400 = vunpack.c.l.b16 %v285
    %v401 = vunpack.c.l.b16 %v286
    %v402 = vunpack.c.l.b16 %v287
    %v403 = vunpack.c.l.b16 %v288
    %v404 = vunpack.c.l.b16 %v289
    %v405 = vunpack.c.l.b16 %v290
    %v406 = vunpack.c.l.b16 %v291
    %v407 = vunpack.c.l.b16 %v292
    %v408 = vunpack.c.l.b16 %v293
    %v409 = vunpack.c.l.b16 %v294
    %v410 = vunpack.c.l.b16 %v295
    %v411 = vunpack.c.l.b16 %v296
    %v412 = vunpack.c.l.b16 %v297
    %v413 = vunpack.c.l.b16 %v298
    %v414 = vunpack.c.l.b16 %v299
    %v415 = vunpack.c.l.b16 %v300
    %v416 = vunpack.c.l.b16 %v301
    %v417 = vunpack.c.l.b16 %v302
    %v418 = vunpack.c.l.b16 %v303
    %v419 = vunpack.c.l.b16 %v304
    %v420 = vunpack.c.l.b16 %v305
    %v421 = vunpack.c.l.b16 %v306
    %v422 = vunpack.c.l.b16 %v307
    %v423 = vunpack.c.l.b16 %v308
    %v424 = vunpack.c.l.b16 %v309
    %v425 = vunpack.c.l.b16 %v310
    %v426 = vunpack.c.l.b16 %v311
    %v427 = vunpack.c.l.b16 %v312
    %v428 = vunpack.c.l.b16 %v313
    %v429 = vunpack.c.l.b16 %v314
    %v430 = vunpack.c.l.b16 %v315
    %v431 = vunpack.c.l.b16 %v316
    %v432 = vunpack.c.l.b16 %v317
    %v433 = vunpack.c.l.b16 %v318
    %v434 = vunpack.c.l.b16 %v319
    %v435 = vunpack.c.l.b16 %v320
    %v436 = vunpack.c.l.b16 %v321
    %v437 = vunpack.c.l.b16 %v322
    %v438 = vpack.c.b16 %v387, %v386
    %v439 = vpack.c.b16 %v389, %v388
    %v440 = vpack.c.b16 %v391, %v390
    %v441 = vpack.c.b16 %v393, %v392
    %v442 = vpack.c.b16 %v395, %v394
    %v443 = vpack.c.b16 %v397, %v396
    %v444 = vpack.c.b16 %v399, %v398
    %v445 = vpack.c.b16 %v401, %v400
    %v446 = vpack.c.b16 %v403, %v402
    %v447 = vpack.c.b16 %v405, %v404
    %v448 = vpack.c.b16 %v407, %v406
    %v449 = vpack.c.b16 %v409, %v408
    %v450 = vpack.c.b16 %v411, %v410
    %v451 = vpack.c.b16 %v413, %v412
    %v452 = vpack.c.b16 %v415, %v414
    %v453 = vpack.c.b16 %v417, %v416
    %v454 = vpack.c.b16 %v419, %v418
    %v455 = vpack.c.b16 %v421, %v420
    %v456 = vpack.c.b16 %v423, %v422
    %v457 = vpack.c.b16 %v425, %v424
    %v458 = vpack.c.b16 %v427, %v426
    %v459 = vpack.c.b16 %v429, %v428
    %v460 = vpack.c.b16 %v431, %v430
    %v461 = vpack.c.b16 %v433, %v432
    %v462 = vpack.c.b16 %v435, %v434
    %v463 = vpack.c.b16 %v437, %v436
    %v468 = vunpack.c.l.b16 %v330
    %v469 = vunpack.c.h.b16 %v330
    %v470 = vunpack.c.l.b16 %v331
    %v471 = vunpack.c.h.b16 %v331
    %v472 = vunpack.c.l.b16 %v332
    %v473 = vunpack.c.h.b16 %v332
    %v474 = vunpack.c.l.b16 %v333
    %v475 = vunpack.c.h.b16 %v333
    %v476 = vpack.c.b16 %v470, %v468
    %v477 = vpack.c.b16 %v471, %v469
    %v478 = vpack.c.b16 %v474, %v472
    %v479 = vpack.c.b16 %v475, %v473
    %vm482 = vcmask 228352
    %v484 = vsel %vm482, %v438, 0
    %v487 = vsel %vm482, %v439, 0
    %v490 = vsel %vm482, %v440, 0
    %v493 = vsel %vm482, %v441, 0
    %v496 = vsel %vm482, %v442, 0
    %v499 = vsel %vm482, %v443, 0
    %v502 = vsel %vm482, %v444, 0
    %v505 = vsel %vm482, %v445, 0
    %v508 = vsel %vm482, %v446, 0
    %v511 = vsel %vm482, %v447, 0
    %v514 = vsel %vm482, %v448, 0
    %v517 = vsel %vm482, %v449, 0
    %v520 = vsel %vm482, %v450, 0
    %v523 = vsel %vm482, %v451, 0
    %v526 = vsel %vm482, %v452, 0
    %v529 = vsel %vm482, %v453, 0
    %v532 = vsel %vm482, %v454, 0
    %v535 = vsel %vm482, %v455, 0
    %v538 = vsel %vm482, %v456, 0
    %v541 = vsel %vm482, %v457, 0
    %v544 = vsel %vm482, %v458, 0
    %v547 = vsel %vm482, %v459, 0
    %v550 = vsel %vm482, %v460, 0
    %v553 = vsel %vm482, %v461, 0
    %v556 = vsel %vm482, %v462, 0
    %v559 = vsel %vm482, %v463, 0
    %vm561 = vcmask 1045504
    %v563 = vsel %vm561, %v478, 0
    %v566 = vsel %vm561, %v479, 0
    %568 = vmatprep.subr.bf16.mxu0 %v477
    %569 = vmatpush1.bf16.msra.mxu0 %v476
    %570 = vmatprep.subr.bf16.mxu0 %v566
    %571 = vmatpush1.bf16.msra.mxu0 %v563
    %572 = vmatprep.subr.bf16.mxu0 0
    %573 = vmatpush1.bf16.msra.mxu0 0
    %574 = vmatprep.subr.bf16.mxu0 0
    %575 = vmatpush1.bf16.msra.mxu0 0
    %576 = vmatprep.subr.bf16.mxu0 0
    %577 = vmatpush1.bf16.msra.mxu0 0
    %578 = vmatprep.subr.bf16.mxu0 0
    %579 = vmatpush1.bf16.msra.mxu0 0
    %580 = vmatprep.subr.bf16.mxu0 0
    %581 = vmatpush1.bf16.msra.mxu0 0
    %582 = vmatprep.subr.bf16.mxu0 0
    %583 = vmatpush1.bf16.msra.mxu0 0
    %584 = vmatprep.subr.bf16.mxu0 0
    %585 = vmatpush1.bf16.msra.mxu0 0
    %586 = vmatprep.subr.bf16.mxu0 0
    %587 = vmatpush1.bf16.msra.mxu0 0
    %588 = vmatprep.subr.bf16.mxu0 0
    %589 = vmatpush1.bf16.msra.mxu0 0
    %590 = vmatprep.subr.bf16.mxu0 0
    %591 = vmatpush1.bf16.msra.mxu0 0
    %592 = vmatprep.subr.bf16.mxu0 0
    %593 = vmatpush1.bf16.msra.mxu0 0
    %594 = vmatprep.subr.bf16.mxu0 0
    %595 = vmatpush1.bf16.msra.mxu0 0
    %596 = vmatprep.subr.bf16.mxu0 0
    %597 = vmatpush1.bf16.msra.mxu0 0
    %598 = vmatprep.subr.bf16.mxu0 0
    %599 = vmatpush1.bf16.msra.mxu0 0
    %600 = vmatprep.mubr.bf16.mxu0 0
    %601 = vmatmul.mubr.bf16.gmra.mrb[0].mxu0 %v484
    %v602 = vpop.f32.mrb[0].mxu0
    %v603 = vadd.f32 0.0, %v602
    %v604 = vpop.f32.mrb[0].mxu0
    %v605 = vadd.f32 0.0, %v604
    %v606 = vpop.f32.mrb[0].mxu0
    %v607 = vadd.f32 0.0, %v606
    %v608 = vpop.f32.mrb[0].mxu0
    %v609 = vadd.f32 0.0, %v608
    %610 = vmatprep.mubr.bf16.mxu0 0
    %611 = vmatmul.mubr.bf16.gmra.mrb[0].mxu0 %v487
    %v612 = vpop.f32.mrb[0].mxu0
    %v613 = vadd.f32 0.0, %v612
    %v614 = vpop.f32.mrb[0].mxu0
    %v615 = vadd.f32 0.0, %v614
    %v616 = vpop.f32.mrb[0].mxu0
    %v617 = vadd.f32 0.0, %v616
    %v618 = vpop.f32.mrb[0].mxu0
    %v619 = vadd.f32 0.0, %v618
    %620 = vmatprep.mubr.bf16.mxu0 0
    %621 = vmatmul.mubr.bf16.gmra.mrb[0].mxu0 %v490
    %v622 = vpop.f32.mrb[0].mxu0
    %v623 = vadd.f32 0.0, %v622
    %v624 = vpop.f32.mrb[0].mxu0
    %v625 = vadd.f32 0.0, %v624
    %v626 = vpop.f32.mrb[0].mxu0
    %v627 = vadd.f32 0.0, %v626
    %v628 = vpop.f32.mrb[0].mxu0
    %v629 = vadd.f32 0.0, %v628
    %630 = vmatprep.mubr.bf16.mxu0 0
    %631 = vmatmul.mubr.bf16.gmra.mrb[0].mxu0 %v493
    %v632 = vpop.f32.mrb[0].mxu0
    %v633 = vadd.f32 0.0, %v632
    %v634 = vpop.f32.mrb[0].mxu0
    %v635 = vadd.f32 0.0, %v634
    %v636 = vpop.f32.mrb[0].mxu0
    %v637 = vadd.f32 0.0, %v636
    %v638 = vpop.f32.mrb[0].mxu0
    %v639 = vadd.f32 0.0, %v638
    %640 = vmatprep.mubr.bf16.mxu0 0
    %641 = vmatmul.mubr.bf16.gmra.mrb[0].mxu0 %v496
    %v642 = vpop.f32.mrb[0].mxu0
    %v643 = vadd.f32 0.0, %v642
    %v644 = vpop.f32.mrb[0].mxu0
    %v645 = vadd.f32 0.0, %v644
    %v646 = vpop.f32.mrb[0].mxu0
    %v647 = vadd.f32 0.0, %v646
    %v648 = vpop.f32.mrb[0].mxu0
    %v649 = vadd.f32 0.0, %v648
    %650 = vmatprep.mubr.bf16.mxu0 0
    %651 = vmatmul.mubr.bf16.gmra.mrb[0].mxu0 %v499
    %v652 = vpop.f32.mrb[0].mxu0
    %v653 = vadd.f32 0.0, %v652
    %v654 = vpop.f32.mrb[0].mxu0
    %v655 = vadd.f32 0.0, %v654
    %v656 = vpop.f32.mrb[0].mxu0
    %v657 = vadd.f32 0.0, %v656
    %v658 = vpop.f32.mrb[0].mxu0
    %v659 = vadd.f32 0.0, %v658
    %660 = vmatprep.mubr.bf16.mxu0 0
    %661 = vmatmul.mubr.bf16.gmra.mrb[0].mxu0 %v502
    %v662 = vpop.f32.mrb[0].mxu0
    %v663 = vadd.f32 0.0, %v662
    %v664 = vpop.f32.mrb[0].mxu0
    %v665 = vadd.f32 0.0, %v664
    %v666 = vpop.f32.mrb[0].mxu0
    %v667 = vadd.f32 0.0, %v666
    %v668 = vpop.f32.mrb[0].mxu0
    %v669 = vadd.f32 0.0, %v668
    %670 = vmatprep.mubr.bf16.mxu0 0
    %671 = vmatmul.mubr.bf16.gmra.mrb[0].mxu0 %v505
    %v672 = vpop.f32.mrb[0].mxu0
    %v673 = vadd.f32 0.0, %v672
    %v674 = vpop.f32.mrb[0].mxu0
    %v675 = vadd.f32 0.0, %v674
    %v676 = vpop.f32.mrb[0].mxu0
    %v677 = vadd.f32 0.0, %v676
    %v678 = vpop.f32.mrb[0].mxu0
    %v679 = vadd.f32 0.0, %v678
    %680 = vmatprep.mubr.bf16.mxu0 0
    %681 = vmatmul.mubr.bf16.gmra.mrb[0].mxu0 %v508
    %v682 = vpop.f32.mrb[0].mxu0
    %v683 = vadd.f32 0.0, %v682
    %v684 = vpop.f32.mrb[0].mxu0
    %v685 = vadd.f32 0.0, %v684
    %v686 = vpop.f32.mrb[0].mxu0
    %v687 = vadd.f32 0.0, %v686
    %v688 = vpop.f32.mrb[0].mxu0
    %v689 = vadd.f32 0.0, %v688
    %690 = vmatprep.mubr.bf16.mxu0 0
    %691 = vmatmul.mubr.bf16.gmra.mrb[0].mxu0 %v511
    %v692 = vpop.f32.mrb[0].mxu0
    %v693 = vadd.f32 0.0, %v692
    %v694 = vpop.f32.mrb[0].mxu0
    %v695 = vadd.f32 0.0, %v694
    %v696 = vpop.f32.mrb[0].mxu0
    %v697 = vadd.f32 0.0, %v696
    %v698 = vpop.f32.mrb[0].mxu0
    %v699 = vadd.f32 0.0, %v698
    %700 = vmatprep.mubr.bf16.mxu0 0
    %701 = vmatmul.mubr.bf16.gmra.mrb[0].mxu0 %v514
    %v702 = vpop.f32.mrb[0].mxu0
    %v703 = vadd.f32 0.0, %v702
    %v704 = vpop.f32.mrb[0].mxu0
    %v705 = vadd.f32 0.0, %v704
    %v706 = vpop.f32.mrb[0].mxu0
    %v707 = vadd.f32 0.0, %v706
    %v708 = vpop.f32.mrb[0].mxu0
    %v709 = vadd.f32 0.0, %v708
    %710 = vmatprep.mubr.bf16.mxu0 0
    %711 = vmatmul.mubr.bf16.gmra.mrb[0].mxu0 %v517
    %v712 = vpop.f32.mrb[0].mxu0
    %v713 = vadd.f32 0.0, %v712
    %v714 = vpop.f32.mrb[0].mxu0
    %v715 = vadd.f32 0.0, %v714
    %v716 = vpop.f32.mrb[0].mxu0
    %v717 = vadd.f32 0.0, %v716
    %v718 = vpop.f32.mrb[0].mxu0
    %v719 = vadd.f32 0.0, %v718
    %720 = vmatprep.mubr.bf16.mxu0 0
    %721 = vmatmul.mubr.bf16.gmra.mrb[0].mxu0 %v520
    %v722 = vpop.f32.mrb[0].mxu0
    %v723 = vadd.f32 0.0, %v722
    %v724 = vpop.f32.mrb[0].mxu0
    %v725 = vadd.f32 0.0, %v724
    %v726 = vpop.f32.mrb[0].mxu0
    %v727 = vadd.f32 0.0, %v726
    %v728 = vpop.f32.mrb[0].mxu0
    %v729 = vadd.f32 0.0, %v728
    %730 = vmatprep.mubr.bf16.mxu0 0
    %731 = vmatmul.mubr.bf16.gmra.mrb[0].mxu0 %v523
    %v732 = vpop.f32.mrb[0].mxu0
    %v733 = vadd.f32 0.0, %v732
    %v734 = vpop.f32.mrb[0].mxu0
    %v735 = vadd.f32 0.0, %v734
    %v736 = vpop.f32.mrb[0].mxu0
    %v737 = vadd.f32 0.0, %v736
    %v738 = vpop.f32.mrb[0].mxu0
    %v739 = vadd.f32 0.0, %v738
    %740 = vmatprep.mubr.bf16.mxu0 0
    %741 = vmatmul.mubr.bf16.gmra.mrb[0].mxu0 %v526
    %v742 = vpop.f32.mrb[0].mxu0
    %v743 = vadd.f32 0.0, %v742
    %v744 = vpop.f32.mrb[0].mxu0
    %v745 = vadd.f32 0.0, %v744
    %v746 = vpop.f32.mrb[0].mxu0
    %v747 = vadd.f32 0.0, %v746
    %v748 = vpop.f32.mrb[0].mxu0
    %v749 = vadd.f32 0.0, %v748
    %750 = vmatprep.mubr.bf16.mxu0 0
    %751 = vmatmul.mubr.bf16.gmra.mrb[0].mxu0 %v529
    %v752 = vpop.f32.mrb[0].mxu0
    %v753 = vadd.f32 0.0, %v752
    %v754 = vpop.f32.mrb[0].mxu0
    %v755 = vadd.f32 0.0, %v754
    %v756 = vpop.f32.mrb[0].mxu0
    %v757 = vadd.f32 0.0, %v756
    %v758 = vpop.f32.mrb[0].mxu0
    %v759 = vadd.f32 0.0, %v758
    %760 = vmatprep.mubr.bf16.mxu0 0
    %761 = vmatmul.mubr.bf16.gmra.mrb[0].mxu0 %v532
    %v762 = vpop.f32.mrb[0].mxu0
    %v763 = vadd.f32 0.0, %v762
    %v764 = vpop.f32.mrb[0].mxu0
    %v765 = vadd.f32 0.0, %v764
    %v766 = vpop.f32.mrb[0].mxu0
    %v767 = vadd.f32 0.0, %v766
    %v768 = vpop.f32.mrb[0].mxu0
    %v769 = vadd.f32 0.0, %v768
    %770 = vmatprep.mubr.bf16.mxu0 0
    %771 = vmatmul.mubr.bf16.gmra.mrb[0].mxu0 %v535
    %v772 = vpop.f32.mrb[0].mxu0
    %v773 = vadd.f32 0.0, %v772
    %v774 = vpop.f32.mrb[0].mxu0
    %v775 = vadd.f32 0.0, %v774
    %v776 = vpop.f32.mrb[0].mxu0
    %v777 = vadd.f32 0.0, %v776
    %v778 = vpop.f32.mrb[0].mxu0
    %v779 = vadd.f32 0.0, %v778
    %780 = vmatprep.mubr.bf16.mxu0 0
    %781 = vmatmul.mubr.bf16.gmra.mrb[0].mxu0 %v538
    %v782 = vpop.f32.mrb[0].mxu0
    %v783 = vadd.f32 0.0, %v782
    %v784 = vpop.f32.mrb[0].mxu0
    %v785 = vadd.f32 0.0, %v784
    %v786 = vpop.f32.mrb[0].mxu0
    %v787 = vadd.f32 0.0, %v786
    %v788 = vpop.f32.mrb[0].mxu0
    %v789 = vadd.f32 0.0, %v788
    %790 = vmatprep.mubr.bf16.mxu0 0
    %791 = vmatmul.mubr.bf16.gmra.mrb[0].mxu0 %v541
    %v792 = vpop.f32.mrb[0].mxu0
    %v793 = vadd.f32 0.0, %v792
    %v794 = vpop.f32.mrb[0].mxu0
    %v795 = vadd.f32 0.0, %v794
    %v796 = vpop.f32.mrb[0].mxu0
    %v797 = vadd.f32 0.0, %v796
    %v798 = vpop.f32.mrb[0].mxu0
    %v799 = vadd.f32 0.0, %v798
    %800 = vmatprep.mubr.bf16.mxu0 0
    %801 = vmatmul.mubr.bf16.gmra.mrb[0].mxu0 %v544
    %v802 = vpop.f32.mrb[0].mxu0
    %v803 = vadd.f32 0.0, %v802
    %v804 = vpop.f32.mrb[0].mxu0
    %v805 = vadd.f32 0.0, %v804
    %v806 = vpop.f32.mrb[0].mxu0
    %v807 = vadd.f32 0.0, %v806
    %v808 = vpop.f32.mrb[0].mxu0
    %v809 = vadd.f32 0.0, %v808
    %810 = vmatprep.mubr.bf16.mxu0 0
    %811 = vmatmul.mubr.bf16.gmra.mrb[0].mxu0 %v547
    %v812 = vpop.f32.mrb[0].mxu0
    %v813 = vadd.f32 0.0, %v812
    %v814 = vpop.f32.mrb[0].mxu0
    %v815 = vadd.f32 0.0, %v814
    %v816 = vpop.f32.mrb[0].mxu0
    %v817 = vadd.f32 0.0, %v816
    %v818 = vpop.f32.mrb[0].mxu0
    %v819 = vadd.f32 0.0, %v818
    %820 = vmatprep.mubr.bf16.mxu0 0
    %821 = vmatmul.mubr.bf16.gmra.mrb[0].mxu0 %v550
    %v822 = vpop.f32.mrb[0].mxu0
    %v823 = vadd.f32 0.0, %v822
    %v824 = vpop.f32.mrb[0].mxu0
    %v825 = vadd.f32 0.0, %v824
    %v826 = vpop.f32.mrb[0].mxu0
    %v827 = vadd.f32 0.0, %v826
    %v828 = vpop.f32.mrb[0].mxu0
    %v829 = vadd.f32 0.0, %v828
    %830 = vmatprep.mubr.bf16.mxu0 0
    %831 = vmatmul.mubr.bf16.gmra.mrb[0].mxu0 %v553
    %v832 = vpop.f32.mrb[0].mxu0
    %v833 = vadd.f32 0.0, %v832
    %v834 = vpop.f32.mrb[0].mxu0
    %v835 = vadd.f32 0.0, %v834
    %v836 = vpop.f32.mrb[0].mxu0
    %v837 = vadd.f32 0.0, %v836
    %v838 = vpop.f32.mrb[0].mxu0
    %v839 = vadd.f32 0.0, %v838
    %840 = vmatprep.mubr.bf16.mxu0 0
    %841 = vmatmul.mubr.bf16.gmra.mrb[0].mxu0 %v556
    %v842 = vpop.f32.mrb[0].mxu0
    %v843 = vadd.f32 0.0, %v842
    %v844 = vpop.f32.mrb[0].mxu0
    %v845 = vadd.f32 0.0, %v844
    %v846 = vpop.f32.mrb[0].mxu0
    %v847 = vadd.f32 0.0, %v846
    %v848 = vpop.f32.mrb[0].mxu0
    %v849 = vadd.f32 0.0, %v848
    %850 = vmatprep.mubr.bf16.mxu0 0
    %851 = vmatmul.mubr.bf16.gmra.mrb[0].mxu0 %v559
    %v852 = vpop.f32.mrb[0].mxu0
    %v853 = vadd.f32 0.0, %v852
    %v854 = vpop.f32.mrb[0].mxu0
    %v855 = vadd.f32 0.0, %v854
    %v856 = vpop.f32.mrb[0].mxu0
    %v857 = vadd.f32 0.0, %v856
    %v858 = vpop.f32.mrb[0].mxu0
    %v859 = vadd.f32 0.0, %v858
    %860 = vdwg.mxu0
    %v863 = vunpack.c.l.b16 %v269
    %v864 = vunpack.c.l.b16 %v270
    %v865 = vpack.c.b16 %v864, %v863
    %v870 = vunpack.c.l.b16 %v325
    %v871 = vunpack.c.h.b16 %v325
    %v872 = vunpack.c.l.b16 %v326
    %v873 = vunpack.c.h.b16 %v326
    %v874 = vunpack.c.l.b16 %v327
    %v875 = vunpack.c.h.b16 %v327
    %v876 = vunpack.c.l.b16 %v328
    %v877 = vunpack.c.h.b16 %v328
    %v878 = vpack.c.b16 %v872, %v870
    %v879 = vpack.c.b16 %v873, %v871
    %v880 = vpack.c.b16 %v876, %v874
    %v881 = vpack.c.b16 %v877, %v875
    %v885 = vsel %vm482, %v865, 0
    %v888 = vsel %vm561, %v880, 0
    %v891 = vsel %vm561, %v881, 0
    %893 = vmatprep.subr.bf16.mxu0 %v879
    %894 = vmatpush1.bf16.msra.mxu0 %v878
    %895 = vmatprep.subr.bf16.mxu0 %v891
    %896 = vmatpush1.bf16.msra.mxu0 %v888
    %897 = vmatprep.subr.bf16.mxu0 0
    %898 = vmatpush1.bf16.msra.mxu0 0
    %899 = vmatprep.subr.bf16.mxu0 0
    %900 = vmatpush1.bf16.msra.mxu0 0
    %901 = vmatprep.subr.bf16.mxu0 0
    %902 = vmatpush1.bf16.msra.mxu0 0
    %903 = vmatprep.subr.bf16.mxu0 0
    %904 = vmatpush1.bf16.msra.mxu0 0
    %905 = vmatprep.subr.bf16.mxu0 0
    %906 = vmatpush1.bf16.msra.mxu0 0
    %907 = vmatprep.subr.bf16.mxu0 0
    %908 = vmatpush1.bf16.msra.mxu0 0
    %909 = vmatprep.subr.bf16.mxu0 0
    %910 = vmatpush1.bf16.msra.mxu0 0
    %911 = vmatprep.subr.bf16.mxu0 0
    %912 = vmatpush1.bf16.msra.mxu0 0
    %913 = vmatprep.subr.bf16.mxu0 0
    %914 = vmatpush1.bf16.msra.mxu0 0
    %915 = vmatprep.subr.bf16.mxu0 0
    %916 = vmatpush1.bf16.msra.mxu0 0
    %917 = vmatprep.subr.bf16.mxu0 0
    %918 = vmatpush1.bf16.msra.mxu0 0
    %919 = vmatprep.subr.bf16.mxu0 0
    %920 = vmatpush1.bf16.msra.mxu0 0
    %921 = vmatprep.subr.bf16.mxu0 0
    %922 = vmatpush1.bf16.msra.mxu0 0
    %923 = vmatprep.subr.bf16.mxu0 0
    %924 = vmatpush1.bf16.msra.mxu0 0
    %925 = vmatprep.mubr.bf16.mxu0 0
    %926 = vmatmul.mubr.bf16.gmra.mrb[0].mxu0 %v885
    %v927 = vpop.f32.mrb[0].mxu0
    %v928 = vadd.f32 %v603, %v927
    %v929 = vpop.f32.mrb[0].mxu0
    %v930 = vadd.f32 %v605, %v929
    %v931 = vpop.f32.mrb[0].mxu0
    %v932 = vadd.f32 %v607, %v931
    %v933 = vpop.f32.mrb[0].mxu0
    %v934 = vadd.f32 %v609, %v933
    %935 = vmatprep.mubr.bf16.mxu0 0
    %936 = vmatmul.mubr.bf16.gmra.mrb[0].mxu0 %v484
    %v937 = vpop.f32.mrb[0].mxu0
    %v938 = vadd.f32 %v613, %v937
    %v939 = vpop.f32.mrb[0].mxu0
    %v940 = vadd.f32 %v615, %v939
    %v941 = vpop.f32.mrb[0].mxu0
    %v942 = vadd.f32 %v617, %v941
    %v943 = vpop.f32.mrb[0].mxu0
    %v944 = vadd.f32 %v619, %v943
    %945 = vmatprep.mubr.bf16.mxu0 0
    %946 = vmatmul.mubr.bf16.gmra.mrb[0].mxu0 %v487
    %v947 = vpop.f32.mrb[0].mxu0
    %v948 = vadd.f32 %v623, %v947
    %v949 = vpop.f32.mrb[0].mxu0
    %v950 = vadd.f32 %v625, %v949
    %v951 = vpop.f32.mrb[0].mxu0
    %v952 = vadd.f32 %v627, %v951
    %v953 = vpop.f32.mrb[0].mxu0
    %v954 = vadd.f32 %v629, %v953
    %955 = vmatprep.mubr.bf16.mxu0 0
    %956 = vmatmul.mubr.bf16.gmra.mrb[0].mxu0 %v490
    %v957 = vpop.f32.mrb[0].mxu0
    %v958 = vadd.f32 %v633, %v957
    %v959 = vpop.f32.mrb[0].mxu0
    %v960 = vadd.f32 %v635, %v959
    %v961 = vpop.f32.mrb[0].mxu0
    %v962 = vadd.f32 %v637, %v961
    %v963 = vpop.f32.mrb[0].mxu0
    %v964 = vadd.f32 %v639, %v963
    %965 = vmatprep.mubr.bf16.mxu0 0
    %966 = vmatmul.mubr.bf16.gmra.mrb[0].mxu0 %v493
    %v967 = vpop.f32.mrb[0].mxu0
    %v968 = vadd.f32 %v643, %v967
    %v969 = vpop.f32.mrb[0].mxu0
    %v970 = vadd.f32 %v645, %v969
    %v971 = vpop.f32.mrb[0].mxu0
    %v972 = vadd.f32 %v647, %v971
    %v973 = vpop.f32.mrb[0].mxu0
    %v974 = vadd.f32 %v649, %v973
    %975 = vmatprep.mubr.bf16.mxu0 0
    %976 = vmatmul.mubr.bf16.gmra.mrb[0].mxu0 %v496
    %v977 = vpop.f32.mrb[0].mxu0
    %v978 = vadd.f32 %v653, %v977
    %v979 = vpop.f32.mrb[0].mxu0
    %v980 = vadd.f32 %v655, %v979
    %v981 = vpop.f32.mrb[0].mxu0
    %v982 = vadd.f32 %v657, %v981
    %v983 = vpop.f32.mrb[0].mxu0
    %v984 = vadd.f32 %v659, %v983
    %985 = vmatprep.mubr.bf16.mxu0 0
    %986 = vmatmul.mubr.bf16.gmra.mrb[0].mxu0 %v499
    %v987 = vpop.f32.mrb[0].mxu0
    %v988 = vadd.f32 %v663, %v987
    %v989 = vpop.f32.mrb[0].mxu0
    %v990 = vadd.f32 %v665, %v989
    %v991 = vpop.f32.mrb[0].mxu0
    %v992 = vadd.f32 %v667, %v991
    %v993 = vpop.f32.mrb[0].mxu0
    %v994 = vadd.f32 %v669, %v993
    %995 = vmatprep.mubr.bf16.mxu0 0
    %996 = vmatmul.mubr.bf16.gmra.mrb[0].mxu0 %v502
    %v997 = vpop.f32.mrb[0].mxu0
    %v998 = vadd.f32 %v673, %v997
    %v999 = vpop.f32.mrb[0].mxu0
    %v1000 = vadd.f32 %v675, %v999
    %v1001 = vpop.f32.mrb[0].mxu0
    %v1002 = vadd.f32 %v677, %v1001
    %v1003 = vpop.f32.mrb[0].mxu0
    %v1004 = vadd.f32 %v679, %v1003
    %1005 = vmatprep.mubr.bf16.mxu0 0
    %1006 = vmatmul.mubr.bf16.gmra.mrb[0].mxu0 %v505
    %v1007 = vpop.f32.mrb[0].mxu0
    %v1008 = vadd.f32 %v683, %v1007
    %v1009 = vpop.f32.mrb[0].mxu0
    %v1010 = vadd.f32 %v685, %v1009
    %v1011 = vpop.f32.mrb[0].mxu0
    %v1012 = vadd.f32 %v687, %v1011
    %v1013 = vpop.f32.mrb[0].mxu0
    %v1014 = vadd.f32 %v689, %v1013
    %1015 = vmatprep.mubr.bf16.mxu0 0
    %1016 = vmatmul.mubr.bf16.gmra.mrb[0].mxu0 %v508
    %v1017 = vpop.f32.mrb[0].mxu0
    %v1018 = vadd.f32 %v693, %v1017
    %v1019 = vpop.f32.mrb[0].mxu0
    %v1020 = vadd.f32 %v695, %v1019
    %v1021 = vpop.f32.mrb[0].mxu0
    %v1022 = vadd.f32 %v697, %v1021
    %v1023 = vpop.f32.mrb[0].mxu0
    %v1024 = vadd.f32 %v699, %v1023
    %1025 = vmatprep.mubr.bf16.mxu0 0
    %1026 = vmatmul.mubr.bf16.gmra.mrb[0].mxu0 %v511
    %v1027 = vpop.f32.mrb[0].mxu0
    %v1028 = vadd.f32 %v703, %v1027
    %v1029 = vpop.f32.mrb[0].mxu0
    %v1030 = vadd.f32 %v705, %v1029
    %v1031 = vpop.f32.mrb[0].mxu0
    %v1032 = vadd.f32 %v707, %v1031
    %v1033 = vpop.f32.mrb[0].mxu0
    %v1034 = vadd.f32 %v709, %v1033
    %1035 = vmatprep.mubr.bf16.mxu0 0
    %1036 = vmatmul.mubr.bf16.gmra.mrb[0].mxu0 %v514
    %v1037 = vpop.f32.mrb[0].mxu0
    %v1038 = vadd.f32 %v713, %v1037
    %v1039 = vpop.f32.mrb[0].mxu0
    %v1040 = vadd.f32 %v715, %v1039
    %v1041 = vpop.f32.mrb[0].mxu0
    %v1042 = vadd.f32 %v717, %v1041
    %v1043 = vpop.f32.mrb[0].mxu0
    %v1044 = vadd.f32 %v719, %v1043
    %1045 = vmatprep.mubr.bf16.mxu0 0
    %1046 = vmatmul.mubr.bf16.gmra.mrb[0].mxu0 %v517
    %v1047 = vpop.f32.mrb[0].mxu0
    %v1048 = vadd.f32 %v723, %v1047
    %v1049 = vpop.f32.mrb[0].mxu0
    %v1050 = vadd.f32 %v725, %v1049
    %v1051 = vpop.f32.mrb[0].mxu0
    %v1052 = vadd.f32 %v727, %v1051
    %v1053 = vpop.f32.mrb[0].mxu0
    %v1054 = vadd.f32 %v729, %v1053
    %1055 = vmatprep.mubr.bf16.mxu0 0
    %1056 = vmatmul.mubr.bf16.gmra.mrb[0].mxu0 %v520
    %v1057 = vpop.f32.mrb[0].mxu0
    %v1058 = vadd.f32 %v733, %v1057
    %v1059 = vpop.f32.mrb[0].mxu0
    %v1060 = vadd.f32 %v735, %v1059
    %v1061 = vpop.f32.mrb[0].mxu0
    %v1062 = vadd.f32 %v737, %v1061
    %v1063 = vpop.f32.mrb[0].mxu0
    %v1064 = vadd.f32 %v739, %v1063
    %1065 = vmatprep.mubr.bf16.mxu0 0
    %1066 = vmatmul.mubr.bf16.gmra.mrb[0].mxu0 %v523
    %v1067 = vpop.f32.mrb[0].mxu0
    %v1068 = vadd.f32 %v743, %v1067
    %v1069 = vpop.f32.mrb[0].mxu0
    %v1070 = vadd.f32 %v745, %v1069
    %v1071 = vpop.f32.mrb[0].mxu0
    %v1072 = vadd.f32 %v747, %v1071
    %v1073 = vpop.f32.mrb[0].mxu0
    %v1074 = vadd.f32 %v749, %v1073
    %1075 = vmatprep.mubr.bf16.mxu0 0
    %1076 = vmatmul.mubr.bf16.gmra.mrb[0].mxu0 %v526
    %v1077 = vpop.f32.mrb[0].mxu0
    %v1078 = vadd.f32 %v753, %v1077
    %v1079 = vpop.f32.mrb[0].mxu0
    %v1080 = vadd.f32 %v755, %v1079
    %v1081 = vpop.f32.mrb[0].mxu0
    %v1082 = vadd.f32 %v757, %v1081
    %v1083 = vpop.f32.mrb[0].mxu0
    %v1084 = vadd.f32 %v759, %v1083
    %1085 = vmatprep.mubr.bf16.mxu0 0
    %1086 = vmatmul.mubr.bf16.gmra.mrb[0].mxu0 %v529
    %v1087 = vpop.f32.mrb[0].mxu0
    %v1088 = vadd.f32 %v763, %v1087
    %v1089 = vpop.f32.mrb[0].mxu0
    %v1090 = vadd.f32 %v765, %v1089
    %v1091 = vpop.f32.mrb[0].mxu0
    %v1092 = vadd.f32 %v767, %v1091
    %v1093 = vpop.f32.mrb[0].mxu0
    %v1094 = vadd.f32 %v769, %v1093
    %1095 = vmatprep.mubr.bf16.mxu0 0
    %1096 = vmatmul.mubr.bf16.gmra.mrb[0].mxu0 %v532
    %v1097 = vpop.f32.mrb[0].mxu0
    %v1098 = vadd.f32 %v773, %v1097
    %v1099 = vpop.f32.mrb[0].mxu0
    %v1100 = vadd.f32 %v775, %v1099
    %v1101 = vpop.f32.mrb[0].mxu0
    %v1102 = vadd.f32 %v777, %v1101
    %v1103 = vpop.f32.mrb[0].mxu0
    %v1104 = vadd.f32 %v779, %v1103
    %1105 = vmatprep.mubr.bf16.mxu0 0
    %1106 = vmatmul.mubr.bf16.gmra.mrb[0].mxu0 %v535
    %v1107 = vpop.f32.mrb[0].mxu0
    %v1108 = vadd.f32 %v783, %v1107
    %v1109 = vpop.f32.mrb[0].mxu0
    %v1110 = vadd.f32 %v785, %v1109
    %v1111 = vpop.f32.mrb[0].mxu0
    %v1112 = vadd.f32 %v787, %v1111
    %v1113 = vpop.f32.mrb[0].mxu0
    %v1114 = vadd.f32 %v789, %v1113
    %1115 = vmatprep.mubr.bf16.mxu0 0
    %1116 = vmatmul.mubr.bf16.gmra.mrb[0].mxu0 %v538
    %v1117 = vpop.f32.mrb[0].mxu0
    %v1118 = vadd.f32 %v793, %v1117
    %v1119 = vpop.f32.mrb[0].mxu0
    %v1120 = vadd.f32 %v795, %v1119
    %v1121 = vpop.f32.mrb[0].mxu0
    %v1122 = vadd.f32 %v797, %v1121
    %v1123 = vpop.f32.mrb[0].mxu0
    %v1124 = vadd.f32 %v799, %v1123
    %1125 = vmatprep.mubr.bf16.mxu0 0
    %1126 = vmatmul.mubr.bf16.gmra.mrb[0].mxu0 %v541
    %v1127 = vpop.f32.mrb[0].mxu0
    %v1128 = vadd.f32 %v803, %v1127
    %v1129 = vpop.f32.mrb[0].mxu0
    %v1130 = vadd.f32 %v805, %v1129
    %v1131 = vpop.f32.mrb[0].mxu0
    %v1132 = vadd.f32 %v807, %v1131
    %v1133 = vpop.f32.mrb[0].mxu0
    %v1134 = vadd.f32 %v809, %v1133
    %1135 = vmatprep.mubr.bf16.mxu0 0
    %1136 = vmatmul.mubr.bf16.gmra.mrb[0].mxu0 %v544
    %v1137 = vpop.f32.mrb[0].mxu0
    %v1138 = vadd.f32 %v813, %v1137
    %v1139 = vpop.f32.mrb[0].mxu0
    %v1140 = vadd.f32 %v815, %v1139
    %v1141 = vpop.f32.mrb[0].mxu0
    %v1142 = vadd.f32 %v817, %v1141
    %v1143 = vpop.f32.mrb[0].mxu0
    %v1144 = vadd.f32 %v819, %v1143
    %1145 = vmatprep.mubr.bf16.mxu0 0
    %1146 = vmatmul.mubr.bf16.gmra.mrb[0].mxu0 %v547
    %v1147 = vpop.f32.mrb[0].mxu0
    %v1148 = vadd.f32 %v823, %v1147
    %v1149 = vpop.f32.mrb[0].mxu0
    %v1150 = vadd.f32 %v825, %v1149
    %v1151 = vpop.f32.mrb[0].mxu0
    %v1152 = vadd.f32 %v827, %v1151
    %v1153 = vpop.f32.mrb[0].mxu0
    %v1154 = vadd.f32 %v829, %v1153
    %1155 = vmatprep.mubr.bf16.mxu0 0
    %1156 = vmatmul.mubr.bf16.gmra.mrb[0].mxu0 %v550
    %v1157 = vpop.f32.mrb[0].mxu0
    %v1158 = vadd.f32 %v833, %v1157
    %v1159 = vpop.f32.mrb[0].mxu0
    %v1160 = vadd.f32 %v835, %v1159
    %v1161 = vpop.f32.mrb[0].mxu0
    %v1162 = vadd.f32 %v837, %v1161
    %v1163 = vpop.f32.mrb[0].mxu0
    %v1164 = vadd.f32 %v839, %v1163
    %1165 = vmatprep.mubr.bf16.mxu0 0
    %1166 = vmatmul.mubr.bf16.gmra.mrb[0].mxu0 %v553
    %v1167 = vpop.f32.mrb[0].mxu0
    %v1168 = vadd.f32 %v843, %v1167
    %v1169 = vpop.f32.mrb[0].mxu0
    %v1170 = vadd.f32 %v845, %v1169
    %v1171 = vpop.f32.mrb[0].mxu0
    %v1172 = vadd.f32 %v847, %v1171
    %v1173 = vpop.f32.mrb[0].mxu0
    %v1174 = vadd.f32 %v849, %v1173
    %1175 = vmatprep.mubr.bf16.mxu0 0
    %1176 = vmatmul.mubr.bf16.gmra.mrb[0].mxu0 %v556
    %v1177 = vpop.f32.mrb[0].mxu0
    %v1178 = vadd.f32 %v853, %v1177
    %v1179 = vpop.f32.mrb[0].mxu0
    %v1180 = vadd.f32 %v855, %v1179
    %v1181 = vpop.f32.mrb[0].mxu0
    %v1182 = vadd.f32 %v857, %v1181
    %v1183 = vpop.f32.mrb[0].mxu0
    %v1184 = vadd.f32 %v859, %v1183
    %1185 = vdwg.mxu0
    %s1186 = scalar_lea.vmem %s1, 64
    %v1187 = vld [vmem:[%s1186] sm:$0xff]
    %v1188 = vld [vmem:[%s1186 + $0x8] sm:$0xff]
    %v1189 = vld [vmem:[%s1186 + $0x10] sm:$0xff]
    %v1190 = vld [vmem:[%s1186 + $0x18] sm:$0x33]
    %v1193 = vunpack.c.l.b16 %v323
    %v1194 = vunpack.c.l.b16 %v324
    %v1195 = vpack.c.b16 %v1194, %v1193
    %v1200 = vunpack.c.l.b16 %v1187
    %v1201 = vunpack.c.h.b16 %v1187
    %v1202 = vunpack.c.l.b16 %v1188
    %v1203 = vunpack.c.h.b16 %v1188
    %v1204 = vunpack.c.l.b16 %v1189
    %v1205 = vunpack.c.h.b16 %v1189
    %v1206 = vunpack.c.l.b16 %v1190
    %v1207 = vunpack.c.h.b16 %v1190
    %v1208 = vpack.c.b16 %v1202, %v1200
    %v1209 = vpack.c.b16 %v1203, %v1201
    %v1210 = vpack.c.b16 %v1206, %v1204
    %v1211 = vpack.c.b16 %v1207, %v1205
    %v1215 = vsel %vm482, %v1195, 0
    %v1218 = vsel %vm561, %v1210, 0
    %v1221 = vsel %vm561, %v1211, 0
    %1223 = vmatprep.subr.bf16.mxu0 %v1209
    %1224 = vmatpush1.bf16.msra.mxu0 %v1208
    %1225 = vmatprep.subr.bf16.mxu0 %v1221
    %1226 = vmatpush1.bf16.msra.mxu0 %v1218
    %1227 = vmatprep.subr.bf16.mxu0 0
    %1228 = vmatpush1.bf16.msra.mxu0 0
    %1229 = vmatprep.subr.bf16.mxu0 0
    %1230 = vmatpush1.bf16.msra.mxu0 0
    %1231 = vmatprep.subr.bf16.mxu0 0
    %1232 = vmatpush1.bf16.msra.mxu0 0
    %1233 = vmatprep.subr.bf16.mxu0 0
    %1234 = vmatpush1.bf16.msra.mxu0 0
    %1235 = vmatprep.subr.bf16.mxu0 0
    %1236 = vmatpush1.bf16.msra.mxu0 0
    %1237 = vmatprep.subr.bf16.mxu0 0
    %1238 = vmatpush1.bf16.msra.mxu0 0
    %1239 = vmatprep.subr.bf16.mxu0 0
    %1240 = vmatpush1.bf16.msra.mxu0 0
    %1241 = vmatprep.subr.bf16.mxu0 0
    %1242 = vmatpush1.bf16.msra.mxu0 0
    %1243 = vmatprep.subr.bf16.mxu0 0
    %1244 = vmatpush1.bf16.msra.mxu0 0
    %1245 = vmatprep.subr.bf16.mxu0 0
    %1246 = vmatpush1.bf16.msra.mxu0 0
    %1247 = vmatprep.subr.bf16.mxu0 0
    %1248 = vmatpush1.bf16.msra.mxu0 0
    %1249 = vmatprep.subr.bf16.mxu0 0
    %1250 = vmatpush1.bf16.msra.mxu0 0
    %1251 = vmatprep.subr.bf16.mxu0 0
    %1252 = vmatpush1.bf16.msra.mxu0 0
    %1253 = vmatprep.subr.bf16.mxu0 0
    %1254 = vmatpush1.bf16.msra.mxu0 0
    %1255 = vmatprep.mubr.bf16.mxu0 0
    %1256 = vmatmul.mubr.bf16.gmra.mrb[0].mxu0 %v487
    %v1257 = vpop.f32.mrb[0].mxu0
    %v1258 = vadd.f32 0.0, %v1257
    %v1259 = vpop.f32.mrb[0].mxu0
    %v1260 = vadd.f32 0.0, %v1259
    %v1261 = vpop.f32.mrb[0].mxu0
    %v1262 = vadd.f32 0.0, %v1261
    %v1263 = vpop.f32.mrb[0].mxu0
    %v1264 = vadd.f32 0.0, %v1263
    %1265 = vmatprep.mubr.bf16.mxu0 0
    %1266 = vmatmul.mubr.bf16.gmra.mrb[0].mxu0 %v490
    %v1267 = vpop.f32.mrb[0].mxu0
    %v1268 = vadd.f32 0.0, %v1267
    %v1269 = vpop.f32.mrb[0].mxu0
    %v1270 = vadd.f32 0.0, %v1269
    %v1271 = vpop.f32.mrb[0].mxu0
    %v1272 = vadd.f32 0.0, %v1271
    %v1273 = vpop.f32.mrb[0].mxu0
    %v1274 = vadd.f32 0.0, %v1273
    %1275 = vmatprep.mubr.bf16.mxu0 0
    %1276 = vmatmul.mubr.bf16.gmra.mrb[0].mxu0 %v493
    %v1277 = vpop.f32.mrb[0].mxu0
    %v1278 = vadd.f32 0.0, %v1277
    %v1279 = vpop.f32.mrb[0].mxu0
    %v1280 = vadd.f32 0.0, %v1279
    %v1281 = vpop.f32.mrb[0].mxu0
    %v1282 = vadd.f32 0.0, %v1281
    %v1283 = vpop.f32.mrb[0].mxu0
    %v1284 = vadd.f32 0.0, %v1283
    %1285 = vmatprep.mubr.bf16.mxu0 0
    %1286 = vmatmul.mubr.bf16.gmra.mrb[0].mxu0 %v496
    %v1287 = vpop.f32.mrb[0].mxu0
    %v1288 = vadd.f32 0.0, %v1287
    %v1289 = vpop.f32.mrb[0].mxu0
    %v1290 = vadd.f32 0.0, %v1289
    %v1291 = vpop.f32.mrb[0].mxu0
    %v1292 = vadd.f32 0.0, %v1291
    %v1293 = vpop.f32.mrb[0].mxu0
    %v1294 = vadd.f32 0.0, %v1293
    %1295 = vmatprep.mubr.bf16.mxu0 0
    %1296 = vmatmul.mubr.bf16.gmra.mrb[0].mxu0 %v499
    %v1297 = vpop.f32.mrb[0].mxu0
    %v1298 = vadd.f32 0.0, %v1297
    %v1299 = vpop.f32.mrb[0].mxu0
    %v1300 = vadd.f32 0.0, %v1299
    %v1301 = vpop.f32.mrb[0].mxu0
    %v1302 = vadd.f32 0.0, %v1301
    %v1303 = vpop.f32.mrb[0].mxu0
    %v1304 = vadd.f32 0.0, %v1303
    %1305 = vmatprep.mubr.bf16.mxu0 0
    %1306 = vmatmul.mubr.bf16.gmra.mrb[0].mxu0 %v502
    %v1307 = vpop.f32.mrb[0].mxu0
    %v1308 = vadd.f32 0.0, %v1307
    %v1309 = vpop.f32.mrb[0].mxu0
    %v1310 = vadd.f32 0.0, %v1309
    %v1311 = vpop.f32.mrb[0].mxu0
    %v1312 = vadd.f32 0.0, %v1311
    %v1313 = vpop.f32.mrb[0].mxu0
    %v1314 = vadd.f32 0.0, %v1313
    %1315 = vmatprep.mubr.bf16.mxu0 0
    %1316 = vmatmul.mubr.bf16.gmra.mrb[0].mxu0 %v505
    %v1317 = vpop.f32.mrb[0].mxu0
    %v1318 = vadd.f32 0.0, %v1317
    %v1319 = vpop.f32.mrb[0].mxu0
    %v1320 = vadd.f32 0.0, %v1319
    %v1321 = vpop.f32.mrb[0].mxu0
    %v1322 = vadd.f32 0.0, %v1321
    %v1323 = vpop.f32.mrb[0].mxu0
    %v1324 = vadd.f32 0.0, %v1323
    %1325 = vmatprep.mubr.bf16.mxu0 0
    %1326 = vmatmul.mubr.bf16.gmra.mrb[0].mxu0 %v508
    %v1327 = vpop.f32.mrb[0].mxu0
    %v1328 = vadd.f32 0.0, %v1327
    %v1329 = vpop.f32.mrb[0].mxu0
    %v1330 = vadd.f32 0.0, %v1329
    %v1331 = vpop.f32.mrb[0].mxu0
    %v1332 = vadd.f32 0.0, %v1331
    %v1333 = vpop.f32.mrb[0].mxu0
    %v1334 = vadd.f32 0.0, %v1333
    %1335 = vmatprep.mubr.bf16.mxu0 0
    %1336 = vmatmul.mubr.bf16.gmra.mrb[0].mxu0 %v511
    %v1337 = vpop.f32.mrb[0].mxu0
    %v1338 = vadd.f32 0.0, %v1337
    %v1339 = vpop.f32.mrb[0].mxu0
    %v1340 = vadd.f32 0.0, %v1339
    %v1341 = vpop.f32.mrb[0].mxu0
    %v1342 = vadd.f32 0.0, %v1341
    %v1343 = vpop.f32.mrb[0].mxu0
    %v1344 = vadd.f32 0.0, %v1343
    %1345 = vmatprep.mubr.bf16.mxu0 0
    %1346 = vmatmul.mubr.bf16.gmra.mrb[0].mxu0 %v514
    %v1347 = vpop.f32.mrb[0].mxu0
    %v1348 = vadd.f32 0.0, %v1347
    %v1349 = vpop.f32.mrb[0].mxu0
    %v1350 = vadd.f32 0.0, %v1349
    %v1351 = vpop.f32.mrb[0].mxu0
    %v1352 = vadd.f32 0.0, %v1351
    %v1353 = vpop.f32.mrb[0].mxu0
    %v1354 = vadd.f32 0.0, %v1353
    %1355 = vmatprep.mubr.bf16.mxu0 0
    %1356 = vmatmul.mubr.bf16.gmra.mrb[0].mxu0 %v517
    %v1357 = vpop.f32.mrb[0].mxu0
    %v1358 = vadd.f32 0.0, %v1357
    %v1359 = vpop.f32.mrb[0].mxu0
    %v1360 = vadd.f32 0.0, %v1359
    %v1361 = vpop.f32.mrb[0].mxu0
    %v1362 = vadd.f32 0.0, %v1361
    %v1363 = vpop.f32.mrb[0].mxu0
    %v1364 = vadd.f32 0.0, %v1363
    %1365 = vmatprep.mubr.bf16.mxu0 0
    %1366 = vmatmul.mubr.bf16.gmra.mrb[0].mxu0 %v520
    %v1367 = vpop.f32.mrb[0].mxu0
    %v1368 = vadd.f32 0.0, %v1367
    %v1369 = vpop.f32.mrb[0].mxu0
    %v1370 = vadd.f32 0.0, %v1369
    %v1371 = vpop.f32.mrb[0].mxu0
    %v1372 = vadd.f32 0.0, %v1371
    %v1373 = vpop.f32.mrb[0].mxu0
    %v1374 = vadd.f32 0.0, %v1373
    %1375 = vmatprep.mubr.bf16.mxu0 0
    %1376 = vmatmul.mubr.bf16.gmra.mrb[0].mxu0 %v523
    %v1377 = vpop.f32.mrb[0].mxu0
    %v1378 = vadd.f32 0.0, %v1377
    %v1379 = vpop.f32.mrb[0].mxu0
    %v1380 = vadd.f32 0.0, %v1379
    %v1381 = vpop.f32.mrb[0].mxu0
    %v1382 = vadd.f32 0.0, %v1381
    %v1383 = vpop.f32.mrb[0].mxu0
    %v1384 = vadd.f32 0.0, %v1383
    %1385 = vmatprep.mubr.bf16.mxu0 0
    %1386 = vmatmul.mubr.bf16.gmra.mrb[0].mxu0 %v526
    %v1387 = vpop.f32.mrb[0].mxu0
    %v1388 = vadd.f32 0.0, %v1387
    %v1389 = vpop.f32.mrb[0].mxu0
    %v1390 = vadd.f32 0.0, %v1389
    %v1391 = vpop.f32.mrb[0].mxu0
    %v1392 = vadd.f32 0.0, %v1391
    %v1393 = vpop.f32.mrb[0].mxu0
    %v1394 = vadd.f32 0.0, %v1393
    %1395 = vmatprep.mubr.bf16.mxu0 0
    %1396 = vmatmul.mubr.bf16.gmra.mrb[0].mxu0 %v529
    %v1397 = vpop.f32.mrb[0].mxu0
    %v1398 = vadd.f32 0.0, %v1397
    %v1399 = vpop.f32.mrb[0].mxu0
    %v1400 = vadd.f32 0.0, %v1399
    %v1401 = vpop.f32.mrb[0].mxu0
    %v1402 = vadd.f32 0.0, %v1401
    %v1403 = vpop.f32.mrb[0].mxu0
    %v1404 = vadd.f32 0.0, %v1403
    %1405 = vmatprep.mubr.bf16.mxu0 0
    %1406 = vmatmul.mubr.bf16.gmra.mrb[0].mxu0 %v532
    %v1407 = vpop.f32.mrb[0].mxu0
    %v1408 = vadd.f32 0.0, %v1407
    %v1409 = vpop.f32.mrb[0].mxu0
    %v1410 = vadd.f32 0.0, %v1409
    %v1411 = vpop.f32.mrb[0].mxu0
    %v1412 = vadd.f32 0.0, %v1411
    %v1413 = vpop.f32.mrb[0].mxu0
    %v1414 = vadd.f32 0.0, %v1413
    %1415 = vmatprep.mubr.bf16.mxu0 0
    %1416 = vmatmul.mubr.bf16.gmra.mrb[0].mxu0 %v535
    %v1417 = vpop.f32.mrb[0].mxu0
    %v1418 = vadd.f32 0.0, %v1417
    %v1419 = vpop.f32.mrb[0].mxu0
    %v1420 = vadd.f32 0.0, %v1419
    %v1421 = vpop.f32.mrb[0].mxu0
    %v1422 = vadd.f32 0.0, %v1421
    %v1423 = vpop.f32.mrb[0].mxu0
    %v1424 = vadd.f32 0.0, %v1423
    %1425 = vmatprep.mubr.bf16.mxu0 0
    %1426 = vmatmul.mubr.bf16.gmra.mrb[0].mxu0 %v538
    %v1427 = vpop.f32.mrb[0].mxu0
    %v1428 = vadd.f32 0.0, %v1427
    %v1429 = vpop.f32.mrb[0].mxu0
    %v1430 = vadd.f32 0.0, %v1429
    %v1431 = vpop.f32.mrb[0].mxu0
    %v1432 = vadd.f32 0.0, %v1431
    %v1433 = vpop.f32.mrb[0].mxu0
    %v1434 = vadd.f32 0.0, %v1433
    %1435 = vmatprep.mubr.bf16.mxu0 0
    %1436 = vmatmul.mubr.bf16.gmra.mrb[0].mxu0 %v541
    %v1437 = vpop.f32.mrb[0].mxu0
    %v1438 = vadd.f32 0.0, %v1437
    %v1439 = vpop.f32.mrb[0].mxu0
    %v1440 = vadd.f32 0.0, %v1439
    %v1441 = vpop.f32.mrb[0].mxu0
    %v1442 = vadd.f32 0.0, %v1441
    %v1443 = vpop.f32.mrb[0].mxu0
    %v1444 = vadd.f32 0.0, %v1443
    %1445 = vmatprep.mubr.bf16.mxu0 0
    %1446 = vmatmul.mubr.bf16.gmra.mrb[0].mxu0 %v544
    %v1447 = vpop.f32.mrb[0].mxu0
    %v1448 = vadd.f32 0.0, %v1447
    %v1449 = vpop.f32.mrb[0].mxu0
    %v1450 = vadd.f32 0.0, %v1449
    %v1451 = vpop.f32.mrb[0].mxu0
    %v1452 = vadd.f32 0.0, %v1451
    %v1453 = vpop.f32.mrb[0].mxu0
    %v1454 = vadd.f32 0.0, %v1453
    %1455 = vmatprep.mubr.bf16.mxu0 0
    %1456 = vmatmul.mubr.bf16.gmra.mrb[0].mxu0 %v547
    %v1457 = vpop.f32.mrb[0].mxu0
    %v1458 = vadd.f32 0.0, %v1457
    %v1459 = vpop.f32.mrb[0].mxu0
    %v1460 = vadd.f32 0.0, %v1459
    %v1461 = vpop.f32.mrb[0].mxu0
    %v1462 = vadd.f32 0.0, %v1461
    %v1463 = vpop.f32.mrb[0].mxu0
    %v1464 = vadd.f32 0.0, %v1463
    %1465 = vmatprep.mubr.bf16.mxu0 0
    %1466 = vmatmul.mubr.bf16.gmra.mrb[0].mxu0 %v550
    %v1467 = vpop.f32.mrb[0].mxu0
    %v1468 = vadd.f32 0.0, %v1467
    %v1469 = vpop.f32.mrb[0].mxu0
    %v1470 = vadd.f32 0.0, %v1469
    %v1471 = vpop.f32.mrb[0].mxu0
    %v1472 = vadd.f32 0.0, %v1471
    %v1473 = vpop.f32.mrb[0].mxu0
    %v1474 = vadd.f32 0.0, %v1473
    %1475 = vmatprep.mubr.bf16.mxu0 0
    %1476 = vmatmul.mubr.bf16.gmra.mrb[0].mxu0 %v553
    %v1477 = vpop.f32.mrb[0].mxu0
    %v1478 = vadd.f32 0.0, %v1477
    %v1479 = vpop.f32.mrb[0].mxu0
    %v1480 = vadd.f32 0.0, %v1479
    %v1481 = vpop.f32.mrb[0].mxu0
    %v1482 = vadd.f32 0.0, %v1481
    %v1483 = vpop.f32.mrb[0].mxu0
    %v1484 = vadd.f32 0.0, %v1483
    %1485 = vmatprep.mubr.bf16.mxu0 0
    %1486 = vmatmul.mubr.bf16.gmra.mrb[0].mxu0 %v556
    %v1487 = vpop.f32.mrb[0].mxu0
    %v1488 = vadd.f32 0.0, %v1487
    %v1489 = vpop.f32.mrb[0].mxu0
    %v1490 = vadd.f32 0.0, %v1489
    %v1491 = vpop.f32.mrb[0].mxu0
    %v1492 = vadd.f32 0.0, %v1491
    %v1493 = vpop.f32.mrb[0].mxu0
    %v1494 = vadd.f32 0.0, %v1493
    %1495 = vmatprep.mubr.bf16.mxu0 0
    %1496 = vmatmul.mubr.bf16.gmra.mrb[0].mxu0 %v559
    %v1497 = vpop.f32.mrb[0].mxu0
    %v1498 = vadd.f32 0.0, %v1497
    %v1499 = vpop.f32.mrb[0].mxu0
    %v1500 = vadd.f32 0.0, %v1499
    %v1501 = vpop.f32.mrb[0].mxu0
    %v1502 = vadd.f32 0.0, %v1501
    %v1503 = vpop.f32.mrb[0].mxu0
    %v1504 = vadd.f32 0.0, %v1503
    %1505 = vmatprep.mubr.bf16.mxu0 0
    %1506 = vmatmul.mubr.bf16.gmra.mrb[0].mxu0 %v1215
    %v1507 = vpop.f32.mrb[0].mxu0
    %v1508 = vadd.f32 0.0, %v1507
    %v1509 = vpop.f32.mrb[0].mxu0
    %v1510 = vadd.f32 0.0, %v1509
    %v1511 = vpop.f32.mrb[0].mxu0
    %v1512 = vadd.f32 0.0, %v1511
    %v1513 = vpop.f32.mrb[0].mxu0
    %v1514 = vadd.f32 0.0, %v1513
    %1515 = vdwg.mxu0
    %v1516 = vadd.f32 %v928, %v1258
    %v1517 = vadd.f32 %v930, %v1260
    %v1518 = vadd.f32 %v932, %v1262
    %v1519 = vadd.f32 %v934, %v1264
    %v1520 = vadd.f32 %v938, %v1268
    %v1521 = vadd.f32 %v940, %v1270
    %v1522 = vadd.f32 %v942, %v1272
    %v1523 = vadd.f32 %v944, %v1274
    %v1524 = vadd.f32 %v948, %v1278
    %v1525 = vadd.f32 %v950, %v1280
    %v1526 = vadd.f32 %v952, %v1282
    %v1527 = vadd.f32 %v954, %v1284
    %v1528 = vadd.f32 %v958, %v1288
    %v1529 = vadd.f32 %v960, %v1290
    %v1530 = vadd.f32 %v962, %v1292
    %v1531 = vadd.f32 %v964, %v1294
    %v1532 = vadd.f32 %v968, %v1298
    %v1533 = vadd.f32 %v970, %v1300
    %v1534 = vadd.f32 %v972, %v1302
    %v1535 = vadd.f32 %v974, %v1304
    %v1536 = vadd.f32 %v978, %v1308
    %v1537 = vadd.f32 %v980, %v1310
    %v1538 = vadd.f32 %v982, %v1312
    %v1539 = vadd.f32 %v984, %v1314
    %v1540 = vadd.f32 %v988, %v1318
    %v1541 = vadd.f32 %v990, %v1320
    %v1542 = vadd.f32 %v992, %v1322
    %v1543 = vadd.f32 %v994, %v1324
    %v1544 = vadd.f32 %v998, %v1328
    %v1545 = vadd.f32 %v1000, %v1330
    %v1546 = vadd.f32 %v1002, %v1332
    %v1547 = vadd.f32 %v1004, %v1334
    %v1548 = vadd.f32 %v1008, %v1338
    %v1549 = vadd.f32 %v1010, %v1340
    %v1550 = vadd.f32 %v1012, %v1342
    %v1551 = vadd.f32 %v1014, %v1344
    %v1552 = vadd.f32 %v1018, %v1348
    %v1553 = vadd.f32 %v1020, %v1350
    %v1554 = vadd.f32 %v1022, %v1352
    %v1555 = vadd.f32 %v1024, %v1354
    %v1556 = vadd.f32 %v1028, %v1358
    %v1557 = vadd.f32 %v1030, %v1360
    %v1558 = vadd.f32 %v1032, %v1362
    %v1559 = vadd.f32 %v1034, %v1364
    %v1560 = vadd.f32 %v1038, %v1368
    %v1561 = vadd.f32 %v1040, %v1370
    %v1562 = vadd.f32 %v1042, %v1372
    %v1563 = vadd.f32 %v1044, %v1374
    %v1564 = vadd.f32 %v1048, %v1378
    %v1565 = vadd.f32 %v1050, %v1380
    %v1566 = vadd.f32 %v1052, %v1382
    %v1567 = vadd.f32 %v1054, %v1384
    %v1568 = vadd.f32 %v1058, %v1388
    %v1569 = vadd.f32 %v1060, %v1390
    %v1570 = vadd.f32 %v1062, %v1392
    %v1571 = vadd.f32 %v1064, %v1394
    %v1572 = vadd.f32 %v1068, %v1398
    %v1573 = vadd.f32 %v1070, %v1400
    %v1574 = vadd.f32 %v1072, %v1402
    %v1575 = vadd.f32 %v1074, %v1404
    %v1576 = vadd.f32 %v1078, %v1408
    %v1577 = vadd.f32 %v1080, %v1410
    %v1578 = vadd.f32 %v1082, %v1412
    %v1579 = vadd.f32 %v1084, %v1414
    %v1580 = vadd.f32 %v1088, %v1418
    %v1581 = vadd.f32 %v1090, %v1420
    %v1582 = vadd.f32 %v1092, %v1422
    %v1583 = vadd.f32 %v1094, %v1424
    %v1584 = vadd.f32 %v1098, %v1428
    %v1585 = vadd.f32 %v1100, %v1430
    %v1586 = vadd.f32 %v1102, %v1432
    %v1587 = vadd.f32 %v1104, %v1434
    %v1588 = vadd.f32 %v1108, %v1438
    %v1589 = vadd.f32 %v1110, %v1440
    %v1590 = vadd.f32 %v1112, %v1442
    %v1591 = vadd.f32 %v1114, %v1444
    %v1592 = vadd.f32 %v1118, %v1448
    %v1593 = vadd.f32 %v1120, %v1450
    %v1594 = vadd.f32 %v1122, %v1452
    %v1595 = vadd.f32 %v1124, %v1454
    %v1596 = vadd.f32 %v1128, %v1458
    %v1597 = vadd.f32 %v1130, %v1460
    %v1598 = vadd.f32 %v1132, %v1462
    %v1599 = vadd.f32 %v1134, %v1464
    %v1600 = vadd.f32 %v1138, %v1468
    %v1601 = vadd.f32 %v1140, %v1470
    %v1602 = vadd.f32 %v1142, %v1472
    %v1603 = vadd.f32 %v1144, %v1474
    %v1604 = vadd.f32 %v1148, %v1478
    %v1605 = vadd.f32 %v1150, %v1480
    %v1606 = vadd.f32 %v1152, %v1482
    %v1607 = vadd.f32 %v1154, %v1484
    %v1608 = vadd.f32 %v1158, %v1488
    %v1609 = vadd.f32 %v1160, %v1490
    %v1610 = vadd.f32 %v1162, %v1492
    %v1611 = vadd.f32 %v1164, %v1494
    %v1612 = vadd.f32 %v1168, %v1498
    %v1613 = vadd.f32 %v1170, %v1500
    %v1614 = vadd.f32 %v1172, %v1502
    %v1615 = vadd.f32 %v1174, %v1504
    %v1616 = vadd.f32 %v1178, %v1508
    %v1617 = vadd.f32 %v1180, %v1510
    %v1618 = vadd.f32 %v1182, %v1512
    %v1619 = vadd.f32 %v1184, %v1514
    %v1620 = vld [vmem:[#allocation2] sm:$0x3]
    %v1622 = vlaneseq
    %v1623 = vshrl.u32 %v1622, 7
    %v1624 = vsub.s32 0, %v1623
    %v1625 = vrot.slane %v1620, %v1624
    %v1626 = vlaneseq
    %v1627 = vshrl.u32 %v1626, 7
    %v1628 = vsub.s32 1, %v1627
    %v1629 = vrot.slane %v1620, %v1628
    %v1632 = vmul.f32 %v1516, %v1625
    %v1633 = vmul.f32 %v1517, %v1629
    %v1634 = vmul.f32 %v1518, %v1625
    %v1635 = vmul.f32 %v1519, %v1629
    %v1636 = vmul.f32 %v1520, %v1625
    %v1637 = vmul.f32 %v1521, %v1629
    %v1638 = vmul.f32 %v1522, %v1625
    %v1639 = vmul.f32 %v1523, %v1629
    %v1640 = vmul.f32 %v1524, %v1625
    %v1641 = vmul.f32 %v1525, %v1629
    %v1642 = vmul.f32 %v1526, %v1625
    %v1643 = vmul.f32 %v1527, %v1629
    %v1644 = vmul.f32 %v1528, %v1625
    %v1645 = vmul.f32 %v1529, %v1629
    %v1646 = vmul.f32 %v1530, %v1625
    %v1647 = vmul.f32 %v1531, %v1629
    %v1648 = vmul.f32 %v1532, %v1625
    %v1649 = vmul.f32 %v1533, %v1629
    %v1650 = vmul.f32 %v1534, %v1625
    %v1651 = vmul.f32 %v1535, %v1629
    %v1652 = vmul.f32 %v1536, %v1625
    %v1653 = vmul.f32 %v1537, %v1629
    %v1654 = vmul.f32 %v1538, %v1625
    %v1655 = vmul.f32 %v1539, %v1629
    %v1656 = vmul.f32 %v1540, %v1625
    %v1657 = vmul.f32 %v1541, %v1629
    %v1658 = vmul.f32 %v1542, %v1625
    %v1659 = vmul.f32 %v1543, %v1629
    %v1660 = vmul.f32 %v1544, %v1625
    %v1661 = vmul.f32 %v1545, %v1629
    %v1662 = vmul.f32 %v1546, %v1625
    %v1663 = vmul.f32 %v1547, %v1629
    %v1664 = vmul.f32 %v1548, %v1625
    %v1665 = vmul.f32 %v1549, %v1629
    %v1666 = vmul.f32 %v1550, %v1625
    %v1667 = vmul.f32 %v1551, %v1629
    %v1668 = vmul.f32 %v1552, %v1625
    %v1669 = vmul.f32 %v1553, %v1629
    %v1670 = vmul.f32 %v1554, %v1625
    %v1671 = vmul.f32 %v1555, %v1629
    %v1672 = vmul.f32 %v1556, %v1625
    %v1673 = vmul.f32 %v1557, %v1629
    %v1674 = vmul.f32 %v1558, %v1625
    %v1675 = vmul.f32 %v1559, %v1629
    %v1676 = vmul.f32 %v1560, %v1625
    %v1677 = vmul.f32 %v1561, %v1629
    %v1678 = vmul.f32 %v1562, %v1625
    %v1679 = vmul.f32 %v1563, %v1629
    %v1680 = vmul.f32 %v1564, %v1625
    %v1681 = vmul.f32 %v1565, %v1629
    %v1682 = vmul.f32 %v1566, %v1625
    %v1683 = vmul.f32 %v1567, %v1629
    %v1684 = vmul.f32 %v1568, %v1625
    %v1685 = vmul.f32 %v1569, %v1629
    %v1686 = vmul.f32 %v1570, %v1625
    %v1687 = vmul.f32 %v1571, %v1629
    %v1688 = vmul.f32 %v1572, %v1625
    %v1689 = vmul.f32 %v1573, %v1629
    %v1690 = vmul.f32 %v1574, %v1625
    %v1691 = vmul.f32 %v1575, %v1629
    %v1692 = vmul.f32 %v1576, %v1625
    %v1693 = vmul.f32 %v1577, %v1629
    %v1694 = vmul.f32 %v1578, %v1625
    %v1695 = vmul.f32 %v1579, %v1629
    %v1696 = vmul.f32 %v1580, %v1625
    %v1697 = vmul.f32 %v1581, %v1629
    %v1698 = vmul.f32 %v1582, %v1625
    %v1699 = vmul.f32 %v1583, %v1629
    %v1700 = vmul.f32 %v1584, %v1625
    %v1701 = vmul.f32 %v1585, %v1629
    %v1702 = vmul.f32 %v1586, %v1625
    %v1703 = vmul.f32 %v1587, %v1629
    %v1704 = vmul.f32 %v1588, %v1625
    %v1705 = vmul.f32 %v1589, %v1629
    %v1706 = vmul.f32 %v1590, %v1625
    %v1707 = vmul.f32 %v1591, %v1629
    %v1708 = vmul.f32 %v1592, %v1625
    %v1709 = vmul.f32 %v1593, %v1629
    %v1710 = vmul.f32 %v1594, %v1625
    %v1711 = vmul.f32 %v1595, %v1629
    %v1712 = vmul.f32 %v1596, %v1625
    %v1713 = vmul.f32 %v1597, %v1629
    %v1714 = vmul.f32 %v1598, %v1625
    %v1715 = vmul.f32 %v1599, %v1629
    %v1716 = vmul.f32 %v1600, %v1625
    %v1717 = vmul.f32 %v1601, %v1629
    %v1718 = vmul.f32 %v1602, %v1625
    %v1719 = vmul.f32 %v1603, %v1629
    %v1720 = vmul.f32 %v1604, %v1625
    %v1721 = vmul.f32 %v1605, %v1629
    %v1722 = vmul.f32 %v1606, %v1625
    %v1723 = vmul.f32 %v1607, %v1629
    %v1724 = vmul.f32 %v1608, %v1625
    %v1725 = vmul.f32 %v1609, %v1629
    %v1726 = vmul.f32 %v1610, %v1625
    %v1727 = vmul.f32 %v1611, %v1629
    %v1728 = vmul.f32 %v1612, %v1625
    %v1729 = vmul.f32 %v1613, %v1629
    %v1730 = vmul.f32 %v1614, %v1625
    %v1731 = vmul.f32 %v1615, %v1629
    %v1732 = vmul.f32 %v1616, %v1625
    %v1733 = vmul.f32 %v1617, %v1629
    %v1734 = vmul.f32 %v1618, %v1625
    %v1735 = vmul.f32 %v1619, %v1629
    %v1736 = vld [vmem:[#allocation4] sm:$0x3]
    %v1738 = vlaneseq
    %v1739 = vshrl.u32 %v1738, 7
    %v1740 = vsub.s32 0, %v1739
    %v1741 = vrot.slane %v1736, %v1740
    %v1742 = vlaneseq
    %v1743 = vshrl.u32 %v1742, 7
    %v1744 = vsub.s32 1, %v1743
    %v1745 = vrot.slane %v1736, %v1744
    %v1748 = vadd.f32 %v1632, %v1741
    %v1749 = vadd.f32 %v1633, %v1745
    %v1750 = vadd.f32 %v1634, %v1741
    %v1751 = vadd.f32 %v1635, %v1745
    %v1752 = vadd.f32 %v1636, %v1741
    %v1753 = vadd.f32 %v1637, %v1745
    %v1754 = vadd.f32 %v1638, %v1741
    %v1755 = vadd.f32 %v1639, %v1745
    %v1756 = vadd.f32 %v1640, %v1741
    %v1757 = vadd.f32 %v1641, %v1745
    %v1758 = vadd.f32 %v1642, %v1741
    %v1759 = vadd.f32 %v1643, %v1745
    %v1760 = vadd.f32 %v1644, %v1741
    %v1761 = vadd.f32 %v1645, %v1745
    %v1762 = vadd.f32 %v1646, %v1741
    %v1763 = vadd.f32 %v1647, %v1745
    %v1764 = vadd.f32 %v1648, %v1741
    %v1765 = vadd.f32 %v1649, %v1745
    %v1766 = vadd.f32 %v1650, %v1741
    %v1767 = vadd.f32 %v1651, %v1745
    %v1768 = vadd.f32 %v1652, %v1741
    %v1769 = vadd.f32 %v1653, %v1745
    %v1770 = vadd.f32 %v1654, %v1741
    %v1771 = vadd.f32 %v1655, %v1745
    %v1772 = vadd.f32 %v1656, %v1741
    %v1773 = vadd.f32 %v1657, %v1745
    %v1774 = vadd.f32 %v1658, %v1741
    %v1775 = vadd.f32 %v1659, %v1745
    %v1776 = vadd.f32 %v1660, %v1741
    %v1777 = vadd.f32 %v1661, %v1745
    %v1778 = vadd.f32 %v1662, %v1741
    %v1779 = vadd.f32 %v1663, %v1745
    %v1780 = vadd.f32 %v1664, %v1741
    %v1781 = vadd.f32 %v1665, %v1745
    %v1782 = vadd.f32 %v1666, %v1741
    %v1783 = vadd.f32 %v1667, %v1745
    %v1784 = vadd.f32 %v1668, %v1741
    %v1785 = vadd.f32 %v1669, %v1745
    %v1786 = vadd.f32 %v1670, %v1741
    %v1787 = vadd.f32 %v1671, %v1745
    %v1788 = vadd.f32 %v1672, %v1741
    %v1789 = vadd.f32 %v1673, %v1745
    %v1790 = vadd.f32 %v1674, %v1741
    %v1791 = vadd.f32 %v1675, %v1745
    %v1792 = vadd.f32 %v1676, %v1741
    %v1793 = vadd.f32 %v1677, %v1745
    %v1794 = vadd.f32 %v1678, %v1741
    %v1795 = vadd.f32 %v1679, %v1745
    %v1796 = vadd.f32 %v1680, %v1741
    %v1797 = vadd.f32 %v1681, %v1745
    %v1798 = vadd.f32 %v1682, %v1741
    %v1799 = vadd.f32 %v1683, %v1745
    %v1800 = vadd.f32 %v1684, %v1741
    %v1801 = vadd.f32 %v1685, %v1745
    %v1802 = vadd.f32 %v1686, %v1741
    %v1803 = vadd.f32 %v1687, %v1745
    %v1804 = vadd.f32 %v1688, %v1741
    %v1805 = vadd.f32 %v1689, %v1745
    %v1806 = vadd.f32 %v1690, %v1741
    %v1807 = vadd.f32 %v1691, %v1745
    %v1808 = vadd.f32 %v1692, %v1741
    %v1809 = vadd.f32 %v1693, %v1745
    %v1810 = vadd.f32 %v1694, %v1741
    %v1811 = vadd.f32 %v1695, %v1745
    %v1812 = vadd.f32 %v1696, %v1741
    %v1813 = vadd.f32 %v1697, %v1745
    %v1814 = vadd.f32 %v1698, %v1741
    %v1815 = vadd.f32 %v1699, %v1745
    %v1816 = vadd.f32 %v1700, %v1741
    %v1817 = vadd.f32 %v1701, %v1745
    %v1818 = vadd.f32 %v1702, %v1741
    %v1819 = vadd.f32 %v1703, %v1745
    %v1820 = vadd.f32 %v1704, %v1741
    %v1821 = vadd.f32 %v1705, %v1745
    %v1822 = vadd.f32 %v1706, %v1741
    %v1823 = vadd.f32 %v1707, %v1745
    %v1824 = vadd.f32 %v1708, %v1741
    %v1825 = vadd.f32 %v1709, %v1745
    %v1826 = vadd.f32 %v1710, %v1741
    %v1827 = vadd.f32 %v1711, %v1745
    %v1828 = vadd.f32 %v1712, %v1741
    %v1829 = vadd.f32 %v1713, %v1745
    %v1830 = vadd.f32 %v1714, %v1741
    %v1831 = vadd.f32 %v1715, %v1745
    %v1832 = vadd.f32 %v1716, %v1741
    %v1833 = vadd.f32 %v1717, %v1745
    %v1834 = vadd.f32 %v1718, %v1741
    %v1835 = vadd.f32 %v1719, %v1745
    %v1836 = vadd.f32 %v1720, %v1741
    %v1837 = vadd.f32 %v1721, %v1745
    %v1838 = vadd.f32 %v1722, %v1741
    %v1839 = vadd.f32 %v1723, %v1745
    %v1840 = vadd.f32 %v1724, %v1741
    %v1841 = vadd.f32 %v1725, %v1745
    %v1842 = vadd.f32 %v1726, %v1741
    %v1843 = vadd.f32 %v1727, %v1745
    %v1844 = vadd.f32 %v1728, %v1741
    %v1845 = vadd.f32 %v1729, %v1745
    %v1846 = vadd.f32 %v1730, %v1741
    %v1847 = vadd.f32 %v1731, %v1745
    %v1848 = vadd.f32 %v1732, %v1741
    %v1849 = vadd.f32 %v1733, %v1745
    %v1850 = vadd.f32 %v1734, %v1741
    %v1851 = vadd.f32 %v1735, %v1745
    %v1852 = vmax.f32 %v1748, 0.0
    %v1853 = vmax.f32 %v1749, 0.0
    %v1854 = vmax.f32 %v1750, 0.0
    %v1855 = vmax.f32 %v1751, 0.0
    %v1856 = vmax.f32 %v1752, 0.0
    %v1857 = vmax.f32 %v1753, 0.0
    %v1858 = vmax.f32 %v1754, 0.0
    %v1859 = vmax.f32 %v1755, 0.0
    %v1860 = vmax.f32 %v1756, 0.0
    %v1861 = vmax.f32 %v1757, 0.0
    %v1862 = vmax.f32 %v1758, 0.0
    %v1863 = vmax.f32 %v1759, 0.0
    %v1864 = vmax.f32 %v1760, 0.0
    %v1865 = vmax.f32 %v1761, 0.0
    %v1866 = vmax.f32 %v1762, 0.0
    %v1867 = vmax.f32 %v1763, 0.0
    %v1868 = vmax.f32 %v1764, 0.0
    %v1869 = vmax.f32 %v1765, 0.0
    %v1870 = vmax.f32 %v1766, 0.0
    %v1871 = vmax.f32 %v1767, 0.0
    %v1872 = vmax.f32 %v1768, 0.0
    %v1873 = vmax.f32 %v1769, 0.0
    %v1874 = vmax.f32 %v1770, 0.0
    %v1875 = vmax.f32 %v1771, 0.0
    %v1876 = vmax.f32 %v1772, 0.0
    %v1877 = vmax.f32 %v1773, 0.0
    %v1878 = vmax.f32 %v1774, 0.0
    %v1879 = vmax.f32 %v1775, 0.0
    %v1880 = vmax.f32 %v1776, 0.0
    %v1881 = vmax.f32 %v1777, 0.0
    %v1882 = vmax.f32 %v1778, 0.0
    %v1883 = vmax.f32 %v1779, 0.0
    %v1884 = vmax.f32 %v1780, 0.0
    %v1885 = vmax.f32 %v1781, 0.0
    %v1886 = vmax.f32 %v1782, 0.0
    %v1887 = vmax.f32 %v1783, 0.0
    %v1888 = vmax.f32 %v1784, 0.0
    %v1889 = vmax.f32 %v1785, 0.0
    %v1890 = vmax.f32 %v1786, 0.0
    %v1891 = vmax.f32 %v1787, 0.0
    %v1892 = vmax.f32 %v1788, 0.0
    %v1893 = vmax.f32 %v1789, 0.0
    %v1894 = vmax.f32 %v1790, 0.0
    %v1895 = vmax.f32 %v1791, 0.0
    %v1896 = vmax.f32 %v1792, 0.0
    %v1897 = vmax.f32 %v1793, 0.0
    %v1898 = vmax.f32 %v1794, 0.0
    %v1899 = vmax.f32 %v1795, 0.0
    %v1900 = vmax.f32 %v1796, 0.0
    %v1901 = vmax.f32 %v1797, 0.0
    %v1902 = vmax.f32 %v1798, 0.0
    %v1903 = vmax.f32 %v1799, 0.0
    %v1904 = vmax.f32 %v1800, 0.0
    %v1905 = vmax.f32 %v1801, 0.0
    %v1906 = vmax.f32 %v1802, 0.0
    %v1907 = vmax.f32 %v1803, 0.0
    %v1908 = vmax.f32 %v1804, 0.0
    %v1909 = vmax.f32 %v1805, 0.0
    %v1910 = vmax.f32 %v1806, 0.0
    %v1911 = vmax.f32 %v1807, 0.0
    %v1912 = vmax.f32 %v1808, 0.0
    %v1913 = vmax.f32 %v1809, 0.0
    %v1914 = vmax.f32 %v1810, 0.0
    %v1915 = vmax.f32 %v1811, 0.0
    %v1916 = vmax.f32 %v1812, 0.0
    %v1917 = vmax.f32 %v1813, 0.0
    %v1918 = vmax.f32 %v1814, 0.0
    %v1919 = vmax.f32 %v1815, 0.0
    %v1920 = vmax.f32 %v1816, 0.0
    %v1921 = vmax.f32 %v1817, 0.0
    %v1922 = vmax.f32 %v1818, 0.0
    %v1923 = vmax.f32 %v1819, 0.0
    %v1924 = vmax.f32 %v1820, 0.0
    %v1925 = vmax.f32 %v1821, 0.0
    %v1926 = vmax.f32 %v1822, 0.0
    %v1927 = vmax.f32 %v1823, 0.0
    %v1928 = vmax.f32 %v1824, 0.0
    %v1929 = vmax.f32 %v1825, 0.0
    %v1930 = vmax.f32 %v1826, 0.0
    %v1931 = vmax.f32 %v1827, 0.0
    %v1932 = vmax.f32 %v1828, 0.0
    %v1933 = vmax.f32 %v1829, 0.0
    %v1934 = vmax.f32 %v1830, 0.0
    %v1935 = vmax.f32 %v1831, 0.0
    %v1936 = vmax.f32 %v1832, 0.0
    %v1937 = vmax.f32 %v1833, 0.0
    %v1938 = vmax.f32 %v1834, 0.0
    %v1939 = vmax.f32 %v1835, 0.0
    %v1940 = vmax.f32 %v1836, 0.0
    %v1941 = vmax.f32 %v1837, 0.0
    %v1942 = vmax.f32 %v1838, 0.0
    %v1943 = vmax.f32 %v1839, 0.0
    %v1944 = vmax.f32 %v1840, 0.0
    %v1945 = vmax.f32 %v1841, 0.0
    %v1946 = vmax.f32 %v1842, 0.0
    %v1947 = vmax.f32 %v1843, 0.0
    %v1948 = vmax.f32 %v1844, 0.0
    %v1949 = vmax.f32 %v1845, 0.0
    %v1950 = vmax.f32 %v1846, 0.0
    %v1951 = vmax.f32 %v1847, 0.0
    %v1952 = vmax.f32 %v1848, 0.0
    %v1953 = vmax.f32 %v1849, 0.0
    %v1954 = vmax.f32 %v1850, 0.0
    %v1955 = vmax.f32 %v1851, 0.0
    %v1956 = vpack.c.bf16 %v1854, %v1852
    %v1957 = vpack.c.bf16 %v1855, %v1853
    %v1958 = vpack.c.bf16 %v1858, %v1856
    %v1959 = vpack.c.bf16 %v1859, %v1857
    %v1960 = vpack.c.bf16 %v1862, %v1860
    %v1961 = vpack.c.bf16 %v1863, %v1861
    %v1962 = vpack.c.bf16 %v1866, %v1864
    %v1963 = vpack.c.bf16 %v1867, %v1865
    %v1964 = vpack.c.bf16 %v1870, %v1868
    %v1965 = vpack.c.bf16 %v1871, %v1869
    %v1966 = vpack.c.bf16 %v1874, %v1872
    %v1967 = vpack.c.bf16 %v1875, %v1873
    %v1968 = vpack.c.bf16 %v1878, %v1876
    %v1969 = vpack.c.bf16 %v1879, %v1877
    %v1970 = vpack.c.bf16 %v1882, %v1880
    %v1971 = vpack.c.bf16 %v1883, %v1881
    %v1972 = vpack.c.bf16 %v1886, %v1884
    %v1973 = vpack.c.bf16 %v1887, %v1885
    %v1974 = vpack.c.bf16 %v1890, %v1888
    %v1975 = vpack.c.bf16 %v1891, %v1889
    %v1976 = vpack.c.bf16 %v1894, %v1892
    %v1977 = vpack.c.bf16 %v1895, %v1893
    %v1978 = vpack.c.bf16 %v1898, %v1896
    %v1979 = vpack.c.bf16 %v1899, %v1897
    %v1980 = vpack.c.bf16 %v1902, %v1900
    %v1981 = vpack.c.bf16 %v1903, %v1901
    %v1982 = vpack.c.bf16 %v1906, %v1904
    %v1983 = vpack.c.bf16 %v1907, %v1905
    %v1984 = vpack.c.bf16 %v1910, %v1908
    %v1985 = vpack.c.bf16 %v1911, %v1909
    %v1986 = vpack.c.bf16 %v1914, %v1912
    %v1987 = vpack.c.bf16 %v1915, %v1913
    %v1988 = vpack.c.bf16 %v1918, %v1916
    %v1989 = vpack.c.bf16 %v1919, %v1917
    %v1990 = vpack.c.bf16 %v1922, %v1920
    %v1991 = vpack.c.bf16 %v1923, %v1921
    %v1992 = vpack.c.bf16 %v1926, %v1924
    %v1993 = vpack.c.bf16 %v1927, %v1925
    %v1994 = vpack.c.bf16 %v1930, %v1928
    %v1995 = vpack.c.bf16 %v1931, %v1929
    %v1996 = vpack.c.bf16 %v1934, %v1932
    %v1997 = vpack.c.bf16 %v1935, %v1933
    %v1998 = vpack.c.bf16 %v1938, %v1936
    %v1999 = vpack.c.bf16 %v1939, %v1937
    %v2000 = vpack.c.bf16 %v1942, %v1940
    %v2001 = vpack.c.bf16 %v1943, %v1941
    %v2002 = vpack.c.bf16 %v1946, %v1944
    %v2003 = vpack.c.bf16 %v1947, %v1945
    %v2004 = vpack.c.bf16 %v1950, %v1948
    %v2005 = vpack.c.bf16 %v1951, %v1949
    %v2006 = vpack.c.bf16 %v1954, %v1952
    %v2007 = vpack.c.bf16 %v1955, %v1953
    %v2008 = vld [vmem:[%s4] sm:$0xff]
    %v2009 = vld [vmem:[%s4 + $0x8] sm:$0xf]
    %v2010 = vld [vmem:[%s4 + $0xc] sm:$0xff]
    %v2011 = vld [vmem:[%s4 + $0x14] sm:$0xf]
    %v2012 = vld [vmem:[%s4 + $0x18] sm:$0xff]
    %v2013 = vld [vmem:[%s4 + $0x20] sm:$0xf]
    %v2014 = vld [vmem:[%s4 + $0x24] sm:$0xff]
    %v2015 = vld [vmem:[%s4 + $0x2c] sm:$0xf]
    %v2016 = vld [vmem:[%s4 + $0x30] sm:$0xff]
    %v2017 = vld [vmem:[%s4 + $0x38] sm:$0xf]
    %v2018 = vld [vmem:[%s4 + $0x3c] sm:$0xff]
    %v2019 = vld [vmem:[%s4 + $0x44] sm:$0xf]
    %v2020 = vld [vmem:[%s4 + $0x48] sm:$0xff]
    %v2021 = vld [vmem:[%s4 + $0x50] sm:$0xf]
    %v2022 = vld [vmem:[%s4 + $0x54] sm:$0xff]
    %v2023 = vld [vmem:[%s4 + $0x5c] sm:$0xf]
    %v2024 = vld [vmem:[%s4 + $0x60] sm:$0xff]
    %v2025 = vld [vmem:[%s4 + $0x68] sm:$0xf]
    %v2026 = vld [vmem:[%s4 + $0x6c] sm:$0xff]
    %v2027 = vld [vmem:[%s4 + $0x74] sm:$0xf]
    %v2028 = vld [vmem:[%s4 + $0x78] sm:$0xff]
    %v2029 = vld [vmem:[%s4 + $0x80] sm:$0xf]
    %v2030 = vld [vmem:[%s4 + $0x84] sm:$0xff]
    %v2031 = vld [vmem:[%s4 + $0x8c] sm:$0xf]
    %v2032 = vld [vmem:[%s4 + $0x90] sm:$0xff]
    %v2033 = vld [vmem:[%s4 + $0x98] sm:$0xf]
    %v2034 = vld [vmem:[%s4 + $0x9c] sm:$0xff]
    %v2035 = vld [vmem:[%s4 + $0xa4] sm:$0xf]
    %v2036 = vld [vmem:[%s4 + $0xa8] sm:$0xff]
    %v2037 = vld [vmem:[%s4 + $0xb0] sm:$0xf]
    %v2038 = vld [vmem:[%s4 + $0xb4] sm:$0xff]
    %v2039 = vld [vmem:[%s4 + $0xbc] sm:$0xf]
    %v2040 = vld [vmem:[%s4 + $0xc0] sm:$0xff]
    %v2041 = vld [vmem:[%s4 + $0xc8] sm:$0xf]
    %v2042 = vld [vmem:[%s4 + $0xcc] sm:$0xff]
    %v2043 = vld [vmem:[%s4 + $0xd4] sm:$0xf]
    %v2044 = vld [vmem:[%s4 + $0xd8] sm:$0xff]
    %v2045 = vld [vmem:[%s4 + $0xe0] sm:$0xf]
    %v2046 = vld [vmem:[%s4 + $0xe4] sm:$0xff]
    %v2047 = vld [vmem:[%s4 + $0xec] sm:$0xf]
    %v2048 = vld [vmem:[%s4 + $0xf0] sm:$0xff]
    %v2049 = vld [vmem:[%s4 + $0xf8] sm:$0xf]
    %v2050 = vld [vmem:[%s4 + $0xfc] sm:$0xff]
    %v2051 = vld [vmem:[%s4 + $0x104] sm:$0xf]
    %v2052 = vld [vmem:[%s4 + $0x108] sm:$0xff]
    %v2053 = vld [vmem:[%s4 + $0x110] sm:$0xf]
    %v2054 = vld [vmem:[%s4 + $0x114] sm:$0xff]
    %v2055 = vld [vmem:[%s4 + $0x11c] sm:$0xf]
    %v2056 = vld [vmem:[%s4 + $0x120] sm:$0xff]
    %v2057 = vld [vmem:[%s4 + $0x128] sm:$0xf]
    %v2058 = vld [vmem:[%s4 + $0x12c] sm:$0xff]
    %v2059 = vld [vmem:[%s4 + $0x134] sm:$0xf]
    %s2060 = scalar_lea.vmem %s4, 312
    %v2061 = vld [vmem:[%s2060] sm:$0xff]
    %v2062 = vld [vmem:[%s2060 + $0x8] sm:$0xf]
    %v2063 = vld [vmem:[%s2060 + $0xc] sm:$0xff]
    %v2064 = vld [vmem:[%s2060 + $0x14] sm:$0xf]
    %v2065 = vld [vmem:[%s2060 + $0x18] sm:$0xff]
    %v2066 = vld [vmem:[%s2060 + $0x20] sm:$0xf]
    %v2067 = vld [vmem:[%s2060 + $0x24] sm:$0xff]
    %v2068 = vld [vmem:[%s2060 + $0x2c] sm:$0xf]
    %v2069 = vld [vmem:[%s2060 + $0x30] sm:$0xff]
    %v2070 = vld [vmem:[%s2060 + $0x38] sm:$0xf]
    %v2071 = vld [vmem:[%s2060 + $0x3c] sm:$0xff]
    %v2072 = vld [vmem:[%s2060 + $0x44] sm:$0xf]
    %v2073 = vld [vmem:[%s2060 + $0x48] sm:$0xff]
    %v2074 = vld [vmem:[%s2060 + $0x50] sm:$0xf]
    %v2075 = vld [vmem:[%s2060 + $0x54] sm:$0xff]
    %v2076 = vld [vmem:[%s2060 + $0x5c] sm:$0xf]
    %v2077 = vld [vmem:[%s2060 + $0x60] sm:$0xff]
    %v2078 = vld [vmem:[%s2060 + $0x68] sm:$0xf]
    %v2079 = vld [vmem:[%s2060 + $0x6c] sm:$0xff]
    %v2080 = vld [vmem:[%s2060 + $0x74] sm:$0xf]
    %v2081 = vld [vmem:[%s2060 + $0x78] sm:$0xff]
    %v2082 = vld [vmem:[%s2060 + $0x80] sm:$0xf]
    %v2083 = vld [vmem:[%s2060 + $0x84] sm:$0xff]
    %v2084 = vld [vmem:[%s2060 + $0x8c] sm:$0xf]
    %v2085 = vld [vmem:[%s2060 + $0x90] sm:$0xff]
    %v2086 = vld [vmem:[%s2060 + $0x98] sm:$0xf]
    %v2087 = vld [vmem:[%s2060 + $0x9c] sm:$0xff]
    %v2088 = vld [vmem:[%s2060 + $0xa4] sm:$0xf]
    %v2089 = vld [vmem:[%s2060 + $0xa8] sm:$0xff]
    %v2090 = vld [vmem:[%s2060 + $0xb0] sm:$0xf]
    %v2091 = vld [vmem:[%s2060 + $0xb4] sm:$0xff]
    %v2092 = vld [vmem:[%s2060 + $0xbc] sm:$0xf]
    %v2093 = vld [vmem:[%s2060 + $0xc0] sm:$0xff]
    %v2094 = vld [vmem:[%s2060 + $0xc8] sm:$0xf]
    %v2095 = vld [vmem:[%s2060 + $0xcc] sm:$0xff]
    %v2096 = vld [vmem:[%s2060 + $0xd4] sm:$0xf]
    %v2097 = vld [vmem:[%s2060 + $0xd8] sm:$0xff]
    %v2098 = vld [vmem:[%s2060 + $0xe0] sm:$0xf]
    %v2099 = vld [vmem:[%s2060 + $0xe4] sm:$0xff]
    %v2100 = vld [vmem:[%s2060 + $0xec] sm:$0xf]
    %v2101 = vld [vmem:[%s2060 + $0xf0] sm:$0xff]
    %v2102 = vld [vmem:[%s2060 + $0xf8] sm:$0xf]
    %v2103 = vld [vmem:[%s2060 + $0xfc] sm:$0xff]
    %v2104 = vld [vmem:[%s2060 + $0x104] sm:$0xf]
    %v2105 = vld [vmem:[%s2060 + $0x108] sm:$0xff]
    %v2106 = vld [vmem:[%s2060 + $0x110] sm:$0xf]
    %v2107 = vld [vmem:[%s2060 + $0x114] sm:$0xff]
    %v2108 = vld [vmem:[%s2060 + $0x11c] sm:$0xf]
    %v2109 = vld [vmem:[%s2060 + $0x120] sm:$0xff]
    %v2110 = vld [vmem:[%s2060 + $0x128] sm:$0xf]
    %v2111 = vld [vmem:[%s2060 + $0x12c] sm:$0xff]
    %v2112 = vld [vmem:[%s2060 + $0x134] sm:$0xf]
    %v2165 = vunpack.c.l.b16 %v2061
    %v2166 = vunpack.c.h.b16 %v2061
    %v2167 = vunpack.c.l.b16 %v2062
    %v2168 = vunpack.c.l.b16 %v2063
    %v2169 = vunpack.c.h.b16 %v2063
    %v2170 = vunpack.c.l.b16 %v2064
    %v2171 = vunpack.c.l.b16 %v2065
    %v2172 = vunpack.c.h.b16 %v2065
    %v2173 = vunpack.c.l.b16 %v2066
    %v2174 = vunpack.c.l.b16 %v2067
    %v2175 = vunpack.c.h.b16 %v2067
    %v2176 = vunpack.c.l.b16 %v2068
    %v2177 = vunpack.c.l.b16 %v2069
    %v2178 = vunpack.c.h.b16 %v2069
    %v2179 = vunpack.c.l.b16 %v2070
    %v2180 = vunpack.c.l.b16 %v2071
    %v2181 = vunpack.c.h.b16 %v2071
    %v2182 = vunpack.c.l.b16 %v2072
    %v2183 = vunpack.c.l.b16 %v2073
    %v2184 = vunpack.c.h.b16 %v2073
    %v2185 = vunpack.c.l.b16 %v2074
    %v2186 = vunpack.c.l.b16 %v2075
    %v2187 = vunpack.c.h.b16 %v2075
    %v2188 = vunpack.c.l.b16 %v2076
    %v2189 = vunpack.c.l.b16 %v2077
    %v2190 = vunpack.c.h.b16 %v2077
    %v2191 = vunpack.c.l.b16 %v2078
    %v2192 = vunpack.c.l.b16 %v2079
    %v2193 = vunpack.c.h.b16 %v2079
    %v2194 = vunpack.c.l.b16 %v2080
    %v2195 = vunpack.c.l.b16 %v2081
    %v2196 = vunpack.c.h.b16 %v2081
    %v2197 = vunpack.c.l.b16 %v2082
    %v2198 = vunpack.c.l.b16 %v2083
    %v2199 = vunpack.c.h.b16 %v2083
    %v2200 = vunpack.c.l.b16 %v2084
    %v2201 = vunpack.c.l.b16 %v2085
    %v2202 = vunpack.c.h.b16 %v2085
    %v2203 = vunpack.c.l.b16 %v2086
    %v2204 = vunpack.c.l.b16 %v2087
    %v2205 = vunpack.c.h.b16 %v2087
    %v2206 = vunpack.c.l.b16 %v2088
    %v2207 = vunpack.c.l.b16 %v2089
    %v2208 = vunpack.c.h.b16 %v2089
    %v2209 = vunpack.c.l.b16 %v2090
    %v2210 = vunpack.c.l.b16 %v2091
    %v2211 = vunpack.c.h.b16 %v2091
    %v2212 = vunpack.c.l.b16 %v2092
    %v2213 = vunpack.c.l.b16 %v2093
    %v2214 = vunpack.c.h.b16 %v2093
    %v2215 = vunpack.c.l.b16 %v2094
    %v2216 = vunpack.c.l.b16 %v2095
    %v2217 = vunpack.c.h.b16 %v2095
    %v2218 = vunpack.c.l.b16 %v2096
    %v2219 = vunpack.c.l.b16 %v2097
    %v2220 = vunpack.c.h.b16 %v2097
    %v2221 = vunpack.c.l.b16 %v2098
    %v2222 = vunpack.c.l.b16 %v2099
    %v2223 = vunpack.c.h.b16 %v2099
    %v2224 = vunpack.c.l.b16 %v2100
    %v2225 = vunpack.c.l.b16 %v2101
    %v2226 = vunpack.c.h.b16 %v2101
    %v2227 = vunpack.c.l.b16 %v2102
    %v2228 = vunpack.c.l.b16 %v2103
    %v2229 = vunpack.c.h.b16 %v2103
    %v2230 = vunpack.c.l.b16 %v2104
    %v2231 = vunpack.c.l.b16 %v2105
    %v2232 = vunpack.c.h.b16 %v2105
    %v2233 = vunpack.c.l.b16 %v2106
    %v2234 = vunpack.c.l.b16 %v2107
    %v2235 = vunpack.c.h.b16 %v2107
    %v2236 = vunpack.c.l.b16 %v2108
    %v2237 = vunpack.c.l.b16 %v2109
    %v2238 = vunpack.c.h.b16 %v2109
    %v2239 = vunpack.c.l.b16 %v2110
    %v2240 = vunpack.c.l.b16 %v2111
    %v2241 = vunpack.c.h.b16 %v2111
    %v2242 = vunpack.c.l.b16 %v2112
    %v2243 = vpack.c.b16 %v2168, %v2165
    %v2244 = vpack.c.b16 %v2169, %v2166
    %v2245 = vpack.c.b16 %v2170, %v2167
    %v2246 = vpack.c.b16 %v2174, %v2171
    %v2247 = vpack.c.b16 %v2175, %v2172
    %v2248 = vpack.c.b16 %v2176, %v2173
    %v2249 = vpack.c.b16 %v2180, %v2177
    %v2250 = vpack.c.b16 %v2181, %v2178
    %v2251 = vpack.c.b16 %v2182, %v2179
    %v2252 = vpack.c.b16 %v2186, %v2183
    %v2253 = vpack.c.b16 %v2187, %v2184
    %v2254 = vpack.c.b16 %v2188, %v2185
    %v2255 = vpack.c.b16 %v2192, %v2189
    %v2256 = vpack.c.b16 %v2193, %v2190
    %v2257 = vpack.c.b16 %v2194, %v2191
    %v2258 = vpack.c.b16 %v2198, %v2195
    %v2259 = vpack.c.b16 %v2199, %v2196
    %v2260 = vpack.c.b16 %v2200, %v2197
    %v2261 = vpack.c.b16 %v2204, %v2201
    %v2262 = vpack.c.b16 %v2205, %v2202
    %v2263 = vpack.c.b16 %v2206, %v2203
    %v2264 = vpack.c.b16 %v2210, %v2207
    %v2265 = vpack.c.b16 %v2211, %v2208
    %v2266 = vpack.c.b16 %v2212, %v2209
    %v2267 = vpack.c.b16 %v2216, %v2213
    %v2268 = vpack.c.b16 %v2217, %v2214
    %v2269 = vpack.c.b16 %v2218, %v2215
    %v2270 = vpack.c.b16 %v2222, %v2219
    %v2271 = vpack.c.b16 %v2223, %v2220
    %v2272 = vpack.c.b16 %v2224, %v2221
    %v2273 = vpack.c.b16 %v2228, %v2225
    %v2274 = vpack.c.b16 %v2229, %v2226
    %v2275 = vpack.c.b16 %v2230, %v2227
    %v2276 = vpack.c.b16 %v2234, %v2231
    %v2277 = vpack.c.b16 %v2235, %v2232
    %v2278 = vpack.c.b16 %v2236, %v2233
    %v2279 = vpack.c.b16 %v2240, %v2237
    %v2280 = vpack.c.b16 %v2241, %v2238
    %v2281 = vpack.c.b16 %v2242, %v2239
    %vm2321 = vcmask 654336
    %v2323 = vsel %vm2321, %v1959, 0
    %v2326 = vsel %vm2321, %v1961, 0
    %v2329 = vsel %vm2321, %v1963, 0
    %v2332 = vsel %vm2321, %v1965, 0
    %v2335 = vsel %vm2321, %v1967, 0
    %v2338 = vsel %vm2321, %v1969, 0
    %v2341 = vsel %vm2321, %v1971, 0
    %v2344 = vsel %vm2321, %v1973, 0
    %v2347 = vsel %vm2321, %v1975, 0
    %v2350 = vsel %vm2321, %v1977, 0
    %v2353 = vsel %vm2321, %v1979, 0
    %v2356 = vsel %vm2321, %v1981, 0
    %v2359 = vsel %vm2321, %v1983, 0
    %v2362 = vsel %vm2321, %v1985, 0
    %v2365 = vsel %vm2321, %v1987, 0
    %v2368 = vsel %vm2321, %v1989, 0
    %v2371 = vsel %vm2321, %v1991, 0
    %v2374 = vsel %vm2321, %v1993, 0
    %v2377 = vsel %vm2321, %v1995, 0
    %v2380 = vsel %vm2321, %v1997, 0
    %v2383 = vsel %vm2321, %v1999, 0
    %v2386 = vsel %vm2321, %v2001, 0
    %v2389 = vsel %vm2321, %v2003, 0
    %v2392 = vsel %vm2321, %v2005, 0
    %2394 = vmatprep.subr.bf16.mxu0 %v2244
    %2395 = vmatpush1.bf16.msra.mxu0 %v2243
    %2396 = vmatprep.subr.bf16.mxu0 %v2247
    %2397 = vmatpush1.bf16.msra.mxu0 %v2246
    %2398 = vmatprep.subr.bf16.mxu0 %v2250
    %2399 = vmatpush1.bf16.msra.mxu0 %v2249
    %2400 = vmatprep.subr.bf16.mxu0 %v2253
    %2401 = vmatpush1.bf16.msra.mxu0 %v2252
    %2402 = vmatprep.subr.bf16.mxu0 %v2256
    %2403 = vmatpush1.bf16.msra.mxu0 %v2255
    %2404 = vmatprep.subr.bf16.mxu0 %v2259
    %2405 = vmatpush1.bf16.msra.mxu0 %v2258
    %2406 = vmatprep.subr.bf16.mxu0 %v2262
    %2407 = vmatpush1.bf16.msra.mxu0 %v2261
    %2408 = vmatprep.subr.bf16.mxu0 %v2265
    %2409 = vmatpush1.bf16.msra.mxu0 %v2264
    %2410 = vmatprep.subr.bf16.mxu0 %v2268
    %2411 = vmatpush1.bf16.msra.mxu0 %v2267
    %2412 = vmatprep.subr.bf16.mxu0 %v2271
    %2413 = vmatpush1.bf16.msra.mxu0 %v2270
    %2414 = vmatprep.subr.bf16.mxu0 %v2274
    %2415 = vmatpush1.bf16.msra.mxu0 %v2273
    %2416 = vmatprep.subr.bf16.mxu0 %v2277
    %2417 = vmatpush1.bf16.msra.mxu0 %v2276
    %2418 = vmatprep.subr.bf16.mxu0 %v2280
    %2419 = vmatpush1.bf16.msra.mxu0 %v2279
    %2420 = vmatprep.subr.bf16.mxu0 0
    %2421 = vmatpush1.bf16.msra.mxu0 0
    %2422 = vmatprep.subr.bf16.mxu0 0
    %2423 = vmatpush1.bf16.msra.mxu0 0
    %2424 = vmatprep.subr.bf16.mxu0 0
    %2425 = vmatpush1.bf16.msra.mxu0 0
    %2426 = vmatprep.mubr.bf16.mxu0 %v2323
    %2427 = vmatmul.mubr.bf16.gmra.mrb[0].mxu0 %v1958
    %v2428 = vpop.f32.mrb[0].mxu0
    %v2429 = vadd.f32 0.0, %v2428
    %v2430 = vpop.f32.mrb[0].mxu0
    %v2431 = vadd.f32 0.0, %v2430
    %v2432 = vpop.f32.mrb[0].mxu0
    %v2433 = vadd.f32 0.0, %v2432
    %v2434 = vpop.f32.mrb[0].mxu0
    %v2435 = vadd.f32 0.0, %v2434
    %2436 = vmatprep.mubr.bf16.mxu0 %v2326
    %2437 = vmatmul.mubr.bf16.gmra.mrb[0].mxu0 %v1960
    %v2438 = vpop.f32.mrb[0].mxu0
    %v2439 = vadd.f32 0.0, %v2438
    %v2440 = vpop.f32.mrb[0].mxu0
    %v2441 = vadd.f32 0.0, %v2440
    %v2442 = vpop.f32.mrb[0].mxu0
    %v2443 = vadd.f32 0.0, %v2442
    %v2444 = vpop.f32.mrb[0].mxu0
    %v2445 = vadd.f32 0.0, %v2444
    %2446 = vmatprep.mubr.bf16.mxu0 %v2329
    %2447 = vmatmul.mubr.bf16.gmra.mrb[0].mxu0 %v1962
    %v2448 = vpop.f32.mrb[0].mxu0
    %v2449 = vadd.f32 0.0, %v2448
    %v2450 = vpop.f32.mrb[0].mxu0
    %v2451 = vadd.f32 0.0, %v2450
    %v2452 = vpop.f32.mrb[0].mxu0
    %v2453 = vadd.f32 0.0, %v2452
    %v2454 = vpop.f32.mrb[0].mxu0
    %v2455 = vadd.f32 0.0, %v2454
    %2456 = vmatprep.mubr.bf16.mxu0 %v2332
    %2457 = vmatmul.mubr.bf16.gmra.mrb[0].mxu0 %v1964
    %v2458 = vpop.f32.mrb[0].mxu0
    %v2459 = vadd.f32 0.0, %v2458
    %v2460 = vpop.f32.mrb[0].mxu0
    %v2461 = vadd.f32 0.0, %v2460
    %v2462 = vpop.f32.mrb[0].mxu0
    %v2463 = vadd.f32 0.0, %v2462
    %v2464 = vpop.f32.mrb[0].mxu0
    %v2465 = vadd.f32 0.0, %v2464
    %2466 = vmatprep.mubr.bf16.mxu0 %v2335
    %2467 = vmatmul.mubr.bf16.gmra.mrb[0].mxu0 %v1966
    %v2468 = vpop.f32.mrb[0].mxu0
    %v2469 = vadd.f32 0.0, %v2468
    %v2470 = vpop.f32.mrb[0].mxu0
    %v2471 = vadd.f32 0.0, %v2470
    %v2472 = vpop.f32.mrb[0].mxu0
    %v2473 = vadd.f32 0.0, %v2472
    %v2474 = vpop.f32.mrb[0].mxu0
    %v2475 = vadd.f32 0.0, %v2474
    %2476 = vmatprep.mubr.bf16.mxu0 %v2338
    %2477 = vmatmul.mubr.bf16.gmra.mrb[0].mxu0 %v1968
    %v2478 = vpop.f32.mrb[0].mxu0
    %v2479 = vadd.f32 0.0, %v2478
    %v2480 = vpop.f32.mrb[0].mxu0
    %v2481 = vadd.f32 0.0, %v2480
    %v2482 = vpop.f32.mrb[0].mxu0
    %v2483 = vadd.f32 0.0, %v2482
    %v2484 = vpop.f32.mrb[0].mxu0
    %v2485 = vadd.f32 0.0, %v2484
    %2486 = vmatprep.mubr.bf16.mxu0 %v2341
    %2487 = vmatmul.mubr.bf16.gmra.mrb[0].mxu0 %v1970
    %v2488 = vpop.f32.mrb[0].mxu0
    %v2489 = vadd.f32 0.0, %v2488
    %v2490 = vpop.f32.mrb[0].mxu0
    %v2491 = vadd.f32 0.0, %v2490
    %v2492 = vpop.f32.mrb[0].mxu0
    %v2493 = vadd.f32 0.0, %v2492
    %v2494 = vpop.f32.mrb[0].mxu0
    %v2495 = vadd.f32 0.0, %v2494
    %2496 = vmatprep.mubr.bf16.mxu0 %v2344
    %2497 = vmatmul.mubr.bf16.gmra.mrb[0].mxu0 %v1972
    %v2498 = vpop.f32.mrb[0].mxu0
    %v2499 = vadd.f32 0.0, %v2498
    %v2500 = vpop.f32.mrb[0].mxu0
    %v2501 = vadd.f32 0.0, %v2500
    %v2502 = vpop.f32.mrb[0].mxu0
    %v2503 = vadd.f32 0.0, %v2502
    %v2504 = vpop.f32.mrb[0].mxu0
    %v2505 = vadd.f32 0.0, %v2504
    %2506 = vmatprep.mubr.bf16.mxu0 %v2347
    %2507 = vmatmul.mubr.bf16.gmra.mrb[0].mxu0 %v1974
    %v2508 = vpop.f32.mrb[0].mxu0
    %v2509 = vadd.f32 0.0, %v2508
    %v2510 = vpop.f32.mrb[0].mxu0
    %v2511 = vadd.f32 0.0, %v2510
    %v2512 = vpop.f32.mrb[0].mxu0
    %v2513 = vadd.f32 0.0, %v2512
    %v2514 = vpop.f32.mrb[0].mxu0
    %v2515 = vadd.f32 0.0, %v2514
    %2516 = vmatprep.mubr.bf16.mxu0 %v2350
    %2517 = vmatmul.mubr.bf16.gmra.mrb[0].mxu0 %v1976
    %v2518 = vpop.f32.mrb[0].mxu0
    %v2519 = vadd.f32 0.0, %v2518
    %v2520 = vpop.f32.mrb[0].mxu0
    %v2521 = vadd.f32 0.0, %v2520
    %v2522 = vpop.f32.mrb[0].mxu0
    %v2523 = vadd.f32 0.0, %v2522
    %v2524 = vpop.f32.mrb[0].mxu0
    %v2525 = vadd.f32 0.0, %v2524
    %2526 = vmatprep.mubr.bf16.mxu0 %v2353
    %2527 = vmatmul.mubr.bf16.gmra.mrb[0].mxu0 %v1978
    %v2528 = vpop.f32.mrb[0].mxu0
    %v2529 = vadd.f32 0.0, %v2528
    %v2530 = vpop.f32.mrb[0].mxu0
    %v2531 = vadd.f32 0.0, %v2530
    %v2532 = vpop.f32.mrb[0].mxu0
    %v2533 = vadd.f32 0.0, %v2532
    %v2534 = vpop.f32.mrb[0].mxu0
    %v2535 = vadd.f32 0.0, %v2534
    %2536 = vmatprep.mubr.bf16.mxu0 %v2356
    %2537 = vmatmul.mubr.bf16.gmra.mrb[0].mxu0 %v1980
    %v2538 = vpop.f32.mrb[0].mxu0
    %v2539 = vadd.f32 0.0, %v2538
    %v2540 = vpop.f32.mrb[0].mxu0
    %v2541 = vadd.f32 0.0, %v2540
    %v2542 = vpop.f32.mrb[0].mxu0
    %v2543 = vadd.f32 0.0, %v2542
    %v2544 = vpop.f32.mrb[0].mxu0
    %v2545 = vadd.f32 0.0, %v2544
    %2546 = vmatprep.mubr.bf16.mxu0 %v2359
    %2547 = vmatmul.mubr.bf16.gmra.mrb[0].mxu0 %v1982
    %v2548 = vpop.f32.mrb[0].mxu0
    %v2549 = vadd.f32 0.0, %v2548
    %v2550 = vpop.f32.mrb[0].mxu0
    %v2551 = vadd.f32 0.0, %v2550
    %v2552 = vpop.f32.mrb[0].mxu0
    %v2553 = vadd.f32 0.0, %v2552
    %v2554 = vpop.f32.mrb[0].mxu0
    %v2555 = vadd.f32 0.0, %v2554
    %2556 = vmatprep.mubr.bf16.mxu0 %v2362
    %2557 = vmatmul.mubr.bf16.gmra.mrb[0].mxu0 %v1984
    %v2558 = vpop.f32.mrb[0].mxu0
    %v2559 = vadd.f32 0.0, %v2558
    %v2560 = vpop.f32.mrb[0].mxu0
    %v2561 = vadd.f32 0.0, %v2560
    %v2562 = vpop.f32.mrb[0].mxu0
    %v2563 = vadd.f32 0.0, %v2562
    %v2564 = vpop.f32.mrb[0].mxu0
    %v2565 = vadd.f32 0.0, %v2564
    %2566 = vmatprep.mubr.bf16.mxu0 %v2365
    %2567 = vmatmul.mubr.bf16.gmra.mrb[0].mxu0 %v1986
    %v2568 = vpop.f32.mrb[0].mxu0
    %v2569 = vadd.f32 0.0, %v2568
    %v2570 = vpop.f32.mrb[0].mxu0
    %v2571 = vadd.f32 0.0, %v2570
    %v2572 = vpop.f32.mrb[0].mxu0
    %v2573 = vadd.f32 0.0, %v2572
    %v2574 = vpop.f32.mrb[0].mxu0
    %v2575 = vadd.f32 0.0, %v2574
    %2576 = vmatprep.mubr.bf16.mxu0 %v2368
    %2577 = vmatmul.mubr.bf16.gmra.mrb[0].mxu0 %v1988
    %v2578 = vpop.f32.mrb[0].mxu0
    %v2579 = vadd.f32 0.0, %v2578
    %v2580 = vpop.f32.mrb[0].mxu0
    %v2581 = vadd.f32 0.0, %v2580
    %v2582 = vpop.f32.mrb[0].mxu0
    %v2583 = vadd.f32 0.0, %v2582
    %v2584 = vpop.f32.mrb[0].mxu0
    %v2585 = vadd.f32 0.0, %v2584
    %2586 = vmatprep.mubr.bf16.mxu0 %v2371
    %2587 = vmatmul.mubr.bf16.gmra.mrb[0].mxu0 %v1990
    %v2588 = vpop.f32.mrb[0].mxu0
    %v2589 = vadd.f32 0.0, %v2588
    %v2590 = vpop.f32.mrb[0].mxu0
    %v2591 = vadd.f32 0.0, %v2590
    %v2592 = vpop.f32.mrb[0].mxu0
    %v2593 = vadd.f32 0.0, %v2592
    %v2594 = vpop.f32.mrb[0].mxu0
    %v2595 = vadd.f32 0.0, %v2594
    %2596 = vmatprep.mubr.bf16.mxu0 %v2374
    %2597 = vmatmul.mubr.bf16.gmra.mrb[0].mxu0 %v1992
    %v2598 = vpop.f32.mrb[0].mxu0
    %v2599 = vadd.f32 0.0, %v2598
    %v2600 = vpop.f32.mrb[0].mxu0
    %v2601 = vadd.f32 0.0, %v2600
    %v2602 = vpop.f32.mrb[0].mxu0
    %v2603 = vadd.f32 0.0, %v2602
    %v2604 = vpop.f32.mrb[0].mxu0
    %v2605 = vadd.f32 0.0, %v2604
    %2606 = vmatprep.mubr.bf16.mxu0 %v2377
    %2607 = vmatmul.mubr.bf16.gmra.mrb[0].mxu0 %v1994
    %v2608 = vpop.f32.mrb[0].mxu0
    %v2609 = vadd.f32 0.0, %v2608
    %v2610 = vpop.f32.mrb[0].mxu0
    %v2611 = vadd.f32 0.0, %v2610
    %v2612 = vpop.f32.mrb[0].mxu0
    %v2613 = vadd.f32 0.0, %v2612
    %v2614 = vpop.f32.mrb[0].mxu0
    %v2615 = vadd.f32 0.0, %v2614
    %2616 = vmatprep.mubr.bf16.mxu0 %v2380
    %2617 = vmatmul.mubr.bf16.gmra.mrb[0].mxu0 %v1996
    %v2618 = vpop.f32.mrb[0].mxu0
    %v2619 = vadd.f32 0.0, %v2618
    %v2620 = vpop.f32.mrb[0].mxu0
    %v2621 = vadd.f32 0.0, %v2620
    %v2622 = vpop.f32.mrb[0].mxu0
    %v2623 = vadd.f32 0.0, %v2622
    %v2624 = vpop.f32.mrb[0].mxu0
    %v2625 = vadd.f32 0.0, %v2624
    %2626 = vmatprep.mubr.bf16.mxu0 %v2383
    %2627 = vmatmul.mubr.bf16.gmra.mrb[0].mxu0 %v1998
    %v2628 = vpop.f32.mrb[0].mxu0
    %v2629 = vadd.f32 0.0, %v2628
    %v2630 = vpop.f32.mrb[0].mxu0
    %v2631 = vadd.f32 0.0, %v2630
    %v2632 = vpop.f32.mrb[0].mxu0
    %v2633 = vadd.f32 0.0, %v2632
    %v2634 = vpop.f32.mrb[0].mxu0
    %v2635 = vadd.f32 0.0, %v2634
    %2636 = vmatprep.mubr.bf16.mxu0 %v2386
    %2637 = vmatmul.mubr.bf16.gmra.mrb[0].mxu0 %v2000
    %v2638 = vpop.f32.mrb[0].mxu0
    %v2639 = vadd.f32 0.0, %v2638
    %v2640 = vpop.f32.mrb[0].mxu0
    %v2641 = vadd.f32 0.0, %v2640
    %v2642 = vpop.f32.mrb[0].mxu0
    %v2643 = vadd.f32 0.0, %v2642
    %v2644 = vpop.f32.mrb[0].mxu0
    %v2645 = vadd.f32 0.0, %v2644
    %2646 = vmatprep.mubr.bf16.mxu0 %v2389
    %2647 = vmatmul.mubr.bf16.gmra.mrb[0].mxu0 %v2002
    %v2648 = vpop.f32.mrb[0].mxu0
    %v2649 = vadd.f32 0.0, %v2648
    %v2650 = vpop.f32.mrb[0].mxu0
    %v2651 = vadd.f32 0.0, %v2650
    %v2652 = vpop.f32.mrb[0].mxu0
    %v2653 = vadd.f32 0.0, %v2652
    %v2654 = vpop.f32.mrb[0].mxu0
    %v2655 = vadd.f32 0.0, %v2654
    %2656 = vmatprep.mubr.bf16.mxu0 %v2392
    %2657 = vmatmul.mubr.bf16.gmra.mrb[0].mxu0 %v2004
    %v2658 = vpop.f32.mrb[0].mxu0
    %v2659 = vadd.f32 0.0, %v2658
    %v2660 = vpop.f32.mrb[0].mxu0
    %v2661 = vadd.f32 0.0, %v2660
    %v2662 = vpop.f32.mrb[0].mxu0
    %v2663 = vadd.f32 0.0, %v2662
    %v2664 = vpop.f32.mrb[0].mxu0
    %v2665 = vadd.f32 0.0, %v2664
    %2666 = vdwg.mxu0
    %2667 = vmatprep.subr.bf16.mxu0 0
    %2668 = vmatpush1.bf16.msra.mxu0 %v2245
    %2669 = vmatprep.subr.bf16.mxu0 0
    %2670 = vmatpush1.bf16.msra.mxu0 %v2248
    %2671 = vmatprep.subr.bf16.mxu0 0
    %2672 = vmatpush1.bf16.msra.mxu0 %v2251
    %2673 = vmatprep.subr.bf16.mxu0 0
    %2674 = vmatpush1.bf16.msra.mxu0 %v2254
    %2675 = vmatprep.subr.bf16.mxu0 0
    %2676 = vmatpush1.bf16.msra.mxu0 %v2257
    %2677 = vmatprep.subr.bf16.mxu0 0
    %2678 = vmatpush1.bf16.msra.mxu0 %v2260
    %2679 = vmatprep.subr.bf16.mxu0 0
    %2680 = vmatpush1.bf16.msra.mxu0 %v2263
    %2681 = vmatprep.subr.bf16.mxu0 0
    %2682 = vmatpush1.bf16.msra.mxu0 %v2266
    %2683 = vmatprep.subr.bf16.mxu0 0
    %2684 = vmatpush1.bf16.msra.mxu0 %v2269
    %2685 = vmatprep.subr.bf16.mxu0 0
    %2686 = vmatpush1.bf16.msra.mxu0 %v2272
    %2687 = vmatprep.subr.bf16.mxu0 0
    %2688 = vmatpush1.bf16.msra.mxu0 %v2275
    %2689 = vmatprep.subr.bf16.mxu0 0
    %2690 = vmatpush1.bf16.msra.mxu0 %v2278
    %2691 = vmatprep.subr.bf16.mxu0 0
    %2692 = vmatpush1.bf16.msra.mxu0 %v2281
    %2693 = vmatprep.subr.bf16.mxu0 0
    %2694 = vmatpush1.bf16.msra.mxu0 0
    %2695 = vmatprep.subr.bf16.mxu0 0
    %2696 = vmatpush1.bf16.msra.mxu0 0
    %2697 = vmatprep.subr.bf16.mxu0 0
    %2698 = vmatpush1.bf16.msra.mxu0 0
    %2699 = vmatprep.mubr.bf16.mxu0 %v2323
    %2700 = vmatmul.mubr.bf16.gmra.mrb[0].mxu0 %v1958
    %v2701 = vpop.f32.mrb[0].mxu0
    %v2702 = vadd.f32 0.0, %v2701
    %v2703 = vpop.f32.mrb[0].mxu0
    %v2704 = vpop.f32.mrb[0].mxu0
    %v2705 = vadd.f32 0.0, %v2704
    %v2706 = vpop.f32.mrb[0].mxu0
    %2707 = vmatprep.mubr.bf16.mxu0 %v2326
    %2708 = vmatmul.mubr.bf16.gmra.mrb[0].mxu0 %v1960
    %v2709 = vpop.f32.mrb[0].mxu0
    %v2710 = vadd.f32 0.0, %v2709
    %v2711 = vpop.f32.mrb[0].mxu0
    %v2712 = vpop.f32.mrb[0].mxu0
    %v2713 = vadd.f32 0.0, %v2712
    %v2714 = vpop.f32.mrb[0].mxu0
    %2715 = vmatprep.mubr.bf16.mxu0 %v2329
    %2716 = vmatmul.mubr.bf16.gmra.mrb[0].mxu0 %v1962
    %v2717 = vpop.f32.mrb[0].mxu0
    %v2718 = vadd.f32 0.0, %v2717
    %v2719 = vpop.f32.mrb[0].mxu0
    %v2720 = vpop.f32.mrb[0].mxu0
    %v2721 = vadd.f32 0.0, %v2720
    %v2722 = vpop.f32.mrb[0].mxu0
    %2723 = vmatprep.mubr.bf16.mxu0 %v2332
    %2724 = vmatmul.mubr.bf16.gmra.mrb[0].mxu0 %v1964
    %v2725 = vpop.f32.mrb[0].mxu0
    %v2726 = vadd.f32 0.0, %v2725
    %v2727 = vpop.f32.mrb[0].mxu0
    %v2728 = vpop.f32.mrb[0].mxu0
    %v2729 = vadd.f32 0.0, %v2728
    %v2730 = vpop.f32.mrb[0].mxu0
    %2731 = vmatprep.mubr.bf16.mxu0 %v2335
    %2732 = vmatmul.mubr.bf16.gmra.mrb[0].mxu0 %v1966
    %v2733 = vpop.f32.mrb[0].mxu0
    %v2734 = vadd.f32 0.0, %v2733
    %v2735 = vpop.f32.mrb[0].mxu0
    %v2736 = vpop.f32.mrb[0].mxu0
    %v2737 = vadd.f32 0.0, %v2736
    %v2738 = vpop.f32.mrb[0].mxu0
    %2739 = vmatprep.mubr.bf16.mxu0 %v2338
    %2740 = vmatmul.mubr.bf16.gmra.mrb[0].mxu0 %v1968
    %v2741 = vpop.f32.mrb[0].mxu0
    %v2742 = vadd.f32 0.0, %v2741
    %v2743 = vpop.f32.mrb[0].mxu0
    %v2744 = vpop.f32.mrb[0].mxu0
    %v2745 = vadd.f32 0.0, %v2744
    %v2746 = vpop.f32.mrb[0].mxu0
    %2747 = vmatprep.mubr.bf16.mxu0 %v2341
    %2748 = vmatmul.mubr.bf16.gmra.mrb[0].mxu0 %v1970
    %v2749 = vpop.f32.mrb[0].mxu0
    %v2750 = vadd.f32 0.0, %v2749
    %v2751 = vpop.f32.mrb[0].mxu0
    %v2752 = vpop.f32.mrb[0].mxu0
    %v2753 = vadd.f32 0.0, %v2752
    %v2754 = vpop.f32.mrb[0].mxu0
    %2755 = vmatprep.mubr.bf16.mxu0 %v2344
    %2756 = vmatmul.mubr.bf16.gmra.mrb[0].mxu0 %v1972
    %v2757 = vpop.f32.mrb[0].mxu0
    %v2758 = vadd.f32 0.0, %v2757
    %v2759 = vpop.f32.mrb[0].mxu0
    %v2760 = vpop.f32.mrb[0].mxu0
    %v2761 = vadd.f32 0.0, %v2760
    %v2762 = vpop.f32.mrb[0].mxu0
    %2763 = vmatprep.mubr.bf16.mxu0 %v2347
    %2764 = vmatmul.mubr.bf16.gmra.mrb[0].mxu0 %v1974
    %v2765 = vpop.f32.mrb[0].mxu0
    %v2766 = vadd.f32 0.0, %v2765
    %v2767 = vpop.f32.mrb[0].mxu0
    %v2768 = vpop.f32.mrb[0].mxu0
    %v2769 = vadd.f32 0.0, %v2768
    %v2770 = vpop.f32.mrb[0].mxu0
    %2771 = vmatprep.mubr.bf16.mxu0 %v2350
    %2772 = vmatmul.mubr.bf16.gmra.mrb[0].mxu0 %v1976
    %v2773 = vpop.f32.mrb[0].mxu0
    %v2774 = vadd.f32 0.0, %v2773
    %v2775 = vpop.f32.mrb[0].mxu0
    %v2776 = vpop.f32.mrb[0].mxu0
    %v2777 = vadd.f32 0.0, %v2776
    %v2778 = vpop.f32.mrb[0].mxu0
    %2779 = vmatprep.mubr.bf16.mxu0 %v2353
    %2780 = vmatmul.mubr.bf16.gmra.mrb[0].mxu0 %v1978
    %v2781 = vpop.f32.mrb[0].mxu0
    %v2782 = vadd.f32 0.0, %v2781
    %v2783 = vpop.f32.mrb[0].mxu0
    %v2784 = vpop.f32.mrb[0].mxu0
    %v2785 = vadd.f32 0.0, %v2784
    %v2786 = vpop.f32.mrb[0].mxu0
    %2787 = vmatprep.mubr.bf16.mxu0 %v2356
    %2788 = vmatmul.mubr.bf16.gmra.mrb[0].mxu0 %v1980
    %v2789 = vpop.f32.mrb[0].mxu0
    %v2790 = vadd.f32 0.0, %v2789
    %v2791 = vpop.f32.mrb[0].mxu0
    %v2792 = vpop.f32.mrb[0].mxu0
    %v2793 = vadd.f32 0.0, %v2792
    %v2794 = vpop.f32.mrb[0].mxu0
    %2795 = vmatprep.mubr.bf16.mxu0 %v2359
    %2796 = vmatmul.mubr.bf16.gmra.mrb[0].mxu0 %v1982
    %v2797 = vpop.f32.mrb[0].mxu0
    %v2798 = vadd.f32 0.0, %v2797
    %v2799 = vpop.f32.mrb[0].mxu0
    %v2800 = vpop.f32.mrb[0].mxu0
    %v2801 = vadd.f32 0.0, %v2800
    %v2802 = vpop.f32.mrb[0].mxu0
    %2803 = vmatprep.mubr.bf16.mxu0 %v2362
    %2804 = vmatmul.mubr.bf16.gmra.mrb[0].mxu0 %v1984
    %v2805 = vpop.f32.mrb[0].mxu0
    %v2806 = vadd.f32 0.0, %v2805
    %v2807 = vpop.f32.mrb[0].mxu0
    %v2808 = vpop.f32.mrb[0].mxu0
    %v2809 = vadd.f32 0.0, %v2808
    %v2810 = vpop.f32.mrb[0].mxu0
    %2811 = vmatprep.mubr.bf16.mxu0 %v2365
    %2812 = vmatmul.mubr.bf16.gmra.mrb[0].mxu0 %v1986
    %v2813 = vpop.f32.mrb[0].mxu0
    %v2814 = vadd.f32 0.0, %v2813
    %v2815 = vpop.f32.mrb[0].mxu0
    %v2816 = vpop.f32.mrb[0].mxu0
    %v2817 = vadd.f32 0.0, %v2816
    %v2818 = vpop.f32.mrb[0].mxu0
    %2819 = vmatprep.mubr.bf16.mxu0 %v2368
    %2820 = vmatmul.mubr.bf16.gmra.mrb[0].mxu0 %v1988
    %v2821 = vpop.f32.mrb[0].mxu0
    %v2822 = vadd.f32 0.0, %v2821
    %v2823 = vpop.f32.mrb[0].mxu0
    %v2824 = vpop.f32.mrb[0].mxu0
    %v2825 = vadd.f32 0.0, %v2824
    %v2826 = vpop.f32.mrb[0].mxu0
    %2827 = vmatprep.mubr.bf16.mxu0 %v2371
    %2828 = vmatmul.mubr.bf16.gmra.mrb[0].mxu0 %v1990
    %v2829 = vpop.f32.mrb[0].mxu0
    %v2830 = vadd.f32 0.0, %v2829
    %v2831 = vpop.f32.mrb[0].mxu0
    %v2832 = vpop.f32.mrb[0].mxu0
    %v2833 = vadd.f32 0.0, %v2832
    %v2834 = vpop.f32.mrb[0].mxu0
    %2835 = vmatprep.mubr.bf16.mxu0 %v2374
    %2836 = vmatmul.mubr.bf16.gmra.mrb[0].mxu0 %v1992
    %v2837 = vpop.f32.mrb[0].mxu0
    %v2838 = vadd.f32 0.0, %v2837
    %v2839 = vpop.f32.mrb[0].mxu0
    %v2840 = vpop.f32.mrb[0].mxu0
    %v2841 = vadd.f32 0.0, %v2840
    %v2842 = vpop.f32.mrb[0].mxu0
    %2843 = vmatprep.mubr.bf16.mxu0 %v2377
    %2844 = vmatmul.mubr.bf16.gmra.mrb[0].mxu0 %v1994
    %v2845 = vpop.f32.mrb[0].mxu0
    %v2846 = vadd.f32 0.0, %v2845
    %v2847 = vpop.f32.mrb[0].mxu0
    %v2848 = vpop.f32.mrb[0].mxu0
    %v2849 = vadd.f32 0.0, %v2848
    %v2850 = vpop.f32.mrb[0].mxu0
    %2851 = vmatprep.mubr.bf16.mxu0 %v2380
    %2852 = vmatmul.mubr.bf16.gmra.mrb[0].mxu0 %v1996
    %v2853 = vpop.f32.mrb[0].mxu0
    %v2854 = vadd.f32 0.0, %v2853
    %v2855 = vpop.f32.mrb[0].mxu0
    %v2856 = vpop.f32.mrb[0].mxu0
    %v2857 = vadd.f32 0.0, %v2856
    %v2858 = vpop.f32.mrb[0].mxu0
    %2859 = vmatprep.mubr.bf16.mxu0 %v2383
    %2860 = vmatmul.mubr.bf16.gmra.mrb[0].mxu0 %v1998
    %v2861 = vpop.f32.mrb[0].mxu0
    %v2862 = vadd.f32 0.0, %v2861
    %v2863 = vpop.f32.mrb[0].mxu0
    %v2864 = vpop.f32.mrb[0].mxu0
    %v2865 = vadd.f32 0.0, %v2864
    %v2866 = vpop.f32.mrb[0].mxu0
    %2867 = vmatprep.mubr.bf16.mxu0 %v2386
    %2868 = vmatmul.mubr.bf16.gmra.mrb[0].mxu0 %v2000
    %v2869 = vpop.f32.mrb[0].mxu0
    %v2870 = vadd.f32 0.0, %v2869
    %v2871 = vpop.f32.mrb[0].mxu0
    %v2872 = vpop.f32.mrb[0].mxu0
    %v2873 = vadd.f32 0.0, %v2872
    %v2874 = vpop.f32.mrb[0].mxu0
    %2875 = vmatprep.mubr.bf16.mxu0 %v2389
    %2876 = vmatmul.mubr.bf16.gmra.mrb[0].mxu0 %v2002
    %v2877 = vpop.f32.mrb[0].mxu0
    %v2878 = vadd.f32 0.0, %v2877
    %v2879 = vpop.f32.mrb[0].mxu0
    %v2880 = vpop.f32.mrb[0].mxu0
    %v2881 = vadd.f32 0.0, %v2880
    %v2882 = vpop.f32.mrb[0].mxu0
    %2883 = vmatprep.mubr.bf16.mxu0 %v2392
    %2884 = vmatmul.mubr.bf16.gmra.mrb[0].mxu0 %v2004
    %v2885 = vpop.f32.mrb[0].mxu0
    %v2886 = vadd.f32 0.0, %v2885
    %v2887 = vpop.f32.mrb[0].mxu0
    %v2888 = vpop.f32.mrb[0].mxu0
    %v2889 = vadd.f32 0.0, %v2888
    %v2890 = vpop.f32.mrb[0].mxu0
    %2891 = vdwg.mxu0
    %v2944 = vunpack.c.l.b16 %v2008
    %v2945 = vunpack.c.h.b16 %v2008
    %v2946 = vunpack.c.l.b16 %v2009
    %v2947 = vunpack.c.l.b16 %v2010
    %v2948 = vunpack.c.h.b16 %v2010
    %v2949 = vunpack.c.l.b16 %v2011
    %v2950 = vunpack.c.l.b16 %v2012
    %v2951 = vunpack.c.h.b16 %v2012
    %v2952 = vunpack.c.l.b16 %v2013
    %v2953 = vunpack.c.l.b16 %v2014
    %v2954 = vunpack.c.h.b16 %v2014
    %v2955 = vunpack.c.l.b16 %v2015
    %v2956 = vunpack.c.l.b16 %v2016
    %v2957 = vunpack.c.h.b16 %v2016
    %v2958 = vunpack.c.l.b16 %v2017
    %v2959 = vunpack.c.l.b16 %v2018
    %v2960 = vunpack.c.h.b16 %v2018
    %v2961 = vunpack.c.l.b16 %v2019
    %v2962 = vunpack.c.l.b16 %v2020
    %v2963 = vunpack.c.h.b16 %v2020
    %v2964 = vunpack.c.l.b16 %v2021
    %v2965 = vunpack.c.l.b16 %v2022
    %v2966 = vunpack.c.h.b16 %v2022
    %v2967 = vunpack.c.l.b16 %v2023
    %v2968 = vunpack.c.l.b16 %v2024
    %v2969 = vunpack.c.h.b16 %v2024
    %v2970 = vunpack.c.l.b16 %v2025
    %v2971 = vunpack.c.l.b16 %v2026
    %v2972 = vunpack.c.h.b16 %v2026
    %v2973 = vunpack.c.l.b16 %v2027
    %v2974 = vunpack.c.l.b16 %v2028
    %v2975 = vunpack.c.h.b16 %v2028
    %v2976 = vunpack.c.l.b16 %v2029
    %v2977 = vunpack.c.l.b16 %v2030
    %v2978 = vunpack.c.h.b16 %v2030
    %v2979 = vunpack.c.l.b16 %v2031
    %v2980 = vunpack.c.l.b16 %v2032
    %v2981 = vunpack.c.h.b16 %v2032
    %v2982 = vunpack.c.l.b16 %v2033
    %v2983 = vunpack.c.l.b16 %v2034
    %v2984 = vunpack.c.h.b16 %v2034
    %v2985 = vunpack.c.l.b16 %v2035
    %v2986 = vunpack.c.l.b16 %v2036
    %v2987 = vunpack.c.h.b16 %v2036
    %v2988 = vunpack.c.l.b16 %v2037
    %v2989 = vunpack.c.l.b16 %v2038
    %v2990 = vunpack.c.h.b16 %v2038
    %v2991 = vunpack.c.l.b16 %v2039
    %v2992 = vunpack.c.l.b16 %v2040
    %v2993 = vunpack.c.h.b16 %v2040
    %v2994 = vunpack.c.l.b16 %v2041
    %v2995 = vunpack.c.l.b16 %v2042
    %v2996 = vunpack.c.h.b16 %v2042
    %v2997 = vunpack.c.l.b16 %v2043
    %v2998 = vunpack.c.l.b16 %v2044
    %v2999 = vunpack.c.h.b16 %v2044
    %v3000 = vunpack.c.l.b16 %v2045
    %v3001 = vunpack.c.l.b16 %v2046
    %v3002 = vunpack.c.h.b16 %v2046
    %v3003 = vunpack.c.l.b16 %v2047
    %v3004 = vunpack.c.l.b16 %v2048
    %v3005 = vunpack.c.h.b16 %v2048
    %v3006 = vunpack.c.l.b16 %v2049
    %v3007 = vunpack.c.l.b16 %v2050
    %v3008 = vunpack.c.h.b16 %v2050
    %v3009 = vunpack.c.l.b16 %v2051
    %v3010 = vunpack.c.l.b16 %v2052
    %v3011 = vunpack.c.h.b16 %v2052
    %v3012 = vunpack.c.l.b16 %v2053
    %v3013 = vunpack.c.l.b16 %v2054
    %v3014 = vunpack.c.h.b16 %v2054
    %v3015 = vunpack.c.l.b16 %v2055
    %v3016 = vunpack.c.l.b16 %v2056
    %v3017 = vunpack.c.h.b16 %v2056
    %v3018 = vunpack.c.l.b16 %v2057
    %v3019 = vunpack.c.l.b16 %v2058
    %v3020 = vunpack.c.h.b16 %v2058
    %v3021 = vunpack.c.l.b16 %v2059
    %v3022 = vpack.c.b16 %v2947, %v2944
    %v3023 = vpack.c.b16 %v2948, %v2945
    %v3024 = vpack.c.b16 %v2949, %v2946
    %v3025 = vpack.c.b16 %v2953, %v2950
    %v3026 = vpack.c.b16 %v2954, %v2951
    %v3027 = vpack.c.b16 %v2955, %v2952
    %v3028 = vpack.c.b16 %v2959, %v2956
    %v3029 = vpack.c.b16 %v2960, %v2957
    %v3030 = vpack.c.b16 %v2961, %v2958
    %v3031 = vpack.c.b16 %v2965, %v2962
    %v3032 = vpack.c.b16 %v2966, %v2963
    %v3033 = vpack.c.b16 %v2967, %v2964
    %v3034 = vpack.c.b16 %v2971, %v2968
    %v3035 = vpack.c.b16 %v2972, %v2969
    %v3036 = vpack.c.b16 %v2973, %v2970
    %v3037 = vpack.c.b16 %v2977, %v2974
    %v3038 = vpack.c.b16 %v2978, %v2975
    %v3039 = vpack.c.b16 %v2979, %v2976
    %v3040 = vpack.c.b16 %v2983, %v2980
    %v3041 = vpack.c.b16 %v2984, %v2981
    %v3042 = vpack.c.b16 %v2985, %v2982
    %v3043 = vpack.c.b16 %v2989, %v2986
    %v3044 = vpack.c.b16 %v2990, %v2987
    %v3045 = vpack.c.b16 %v2991, %v2988
    %v3046 = vpack.c.b16 %v2995, %v2992
    %v3047 = vpack.c.b16 %v2996, %v2993
    %v3048 = vpack.c.b16 %v2997, %v2994
    %v3049 = vpack.c.b16 %v3001, %v2998
    %v3050 = vpack.c.b16 %v3002, %v2999
    %v3051 = vpack.c.b16 %v3003, %v3000
    %v3052 = vpack.c.b16 %v3007, %v3004
    %v3053 = vpack.c.b16 %v3008, %v3005
    %v3054 = vpack.c.b16 %v3009, %v3006
    %v3055 = vpack.c.b16 %v3013, %v3010
    %v3056 = vpack.c.b16 %v3014, %v3011
    %v3057 = vpack.c.b16 %v3015, %v3012
    %v3058 = vpack.c.b16 %v3019, %v3016
    %v3059 = vpack.c.b16 %v3020, %v3017
    %v3060 = vpack.c.b16 %v3021, %v3018
    %v3101 = vsel %vm2321, %v1957, 0
    %3103 = vmatprep.subr.bf16.mxu0 %v3023
    %3104 = vmatpush1.bf16.msra.mxu0 %v3022
    %3105 = vmatprep.subr.bf16.mxu0 %v3026
    %3106 = vmatpush1.bf16.msra.mxu0 %v3025
    %3107 = vmatprep.subr.bf16.mxu0 %v3029
    %3108 = vmatpush1.bf16.msra.mxu0 %v3028
    %3109 = vmatprep.subr.bf16.mxu0 %v3032
    %3110 = vmatpush1.bf16.msra.mxu0 %v3031
    %3111 = vmatprep.subr.bf16.mxu0 %v3035
    %3112 = vmatpush1.bf16.msra.mxu0 %v3034
    %3113 = vmatprep.subr.bf16.mxu0 %v3038
    %3114 = vmatpush1.bf16.msra.mxu0 %v3037
    %3115 = vmatprep.subr.bf16.mxu0 %v3041
    %3116 = vmatpush1.bf16.msra.mxu0 %v3040
    %3117 = vmatprep.subr.bf16.mxu0 %v3044
    %3118 = vmatpush1.bf16.msra.mxu0 %v3043
    %3119 = vmatprep.subr.bf16.mxu0 %v3047
    %3120 = vmatpush1.bf16.msra.mxu0 %v3046
    %3121 = vmatprep.subr.bf16.mxu0 %v3050
    %3122 = vmatpush1.bf16.msra.mxu0 %v3049
    %3123 = vmatprep.subr.bf16.mxu0 %v3053
    %3124 = vmatpush1.bf16.msra.mxu0 %v3052
    %3125 = vmatprep.subr.bf16.mxu0 %v3056
    %3126 = vmatpush1.bf16.msra.mxu0 %v3055
    %3127 = vmatprep.subr.bf16.mxu0 %v3059
    %3128 = vmatpush1.bf16.msra.mxu0 %v3058
    %3129 = vmatprep.subr.bf16.mxu0 0
    %3130 = vmatpush1.bf16.msra.mxu0 0
    %3131 = vmatprep.subr.bf16.mxu0 0
    %3132 = vmatpush1.bf16.msra.mxu0 0
    %3133 = vmatprep.subr.bf16.mxu0 0
    %3134 = vmatpush1.bf16.msra.mxu0 0
    %3135 = vmatprep.mubr.bf16.mxu0 %v3101
    %3136 = vmatmul.mubr.bf16.gmra.mrb[0].mxu0 %v1956
    %v3137 = vpop.f32.mrb[0].mxu0
    %v3138 = vadd.f32 %v2429, %v3137
    %v3139 = vpop.f32.mrb[0].mxu0
    %v3140 = vadd.f32 %v2431, %v3139
    %v3141 = vpop.f32.mrb[0].mxu0
    %v3142 = vadd.f32 %v2433, %v3141
    %v3143 = vpop.f32.mrb[0].mxu0
    %v3144 = vadd.f32 %v2435, %v3143
    %3145 = vmatprep.mubr.bf16.mxu0 %v2323
    %3146 = vmatmul.mubr.bf16.gmra.mrb[0].mxu0 %v1958
    %v3147 = vpop.f32.mrb[0].mxu0
    %v3148 = vadd.f32 %v2439, %v3147
    %v3149 = vpop.f32.mrb[0].mxu0
    %v3150 = vadd.f32 %v2441, %v3149
    %v3151 = vpop.f32.mrb[0].mxu0
    %v3152 = vadd.f32 %v2443, %v3151
    %v3153 = vpop.f32.mrb[0].mxu0
    %v3154 = vadd.f32 %v2445, %v3153
    %3155 = vmatprep.mubr.bf16.mxu0 %v2326
    %3156 = vmatmul.mubr.bf16.gmra.mrb[0].mxu0 %v1960
    %v3157 = vpop.f32.mrb[0].mxu0
    %v3158 = vadd.f32 %v2449, %v3157
    %v3159 = vpop.f32.mrb[0].mxu0
    %v3160 = vadd.f32 %v2451, %v3159
    %v3161 = vpop.f32.mrb[0].mxu0
    %v3162 = vadd.f32 %v2453, %v3161
    %v3163 = vpop.f32.mrb[0].mxu0
    %v3164 = vadd.f32 %v2455, %v3163
    %3165 = vmatprep.mubr.bf16.mxu0 %v2329
    %3166 = vmatmul.mubr.bf16.gmra.mrb[0].mxu0 %v1962
    %v3167 = vpop.f32.mrb[0].mxu0
    %v3168 = vadd.f32 %v2459, %v3167
    %v3169 = vpop.f32.mrb[0].mxu0
    %v3170 = vadd.f32 %v2461, %v3169
    %v3171 = vpop.f32.mrb[0].mxu0
    %v3172 = vadd.f32 %v2463, %v3171
    %v3173 = vpop.f32.mrb[0].mxu0
    %v3174 = vadd.f32 %v2465, %v3173
    %3175 = vmatprep.mubr.bf16.mxu0 %v2332
    %3176 = vmatmul.mubr.bf16.gmra.mrb[0].mxu0 %v1964
    %v3177 = vpop.f32.mrb[0].mxu0
    %v3178 = vadd.f32 %v2469, %v3177
    %v3179 = vpop.f32.mrb[0].mxu0
    %v3180 = vadd.f32 %v2471, %v3179
    %v3181 = vpop.f32.mrb[0].mxu0
    %v3182 = vadd.f32 %v2473, %v3181
    %v3183 = vpop.f32.mrb[0].mxu0
    %v3184 = vadd.f32 %v2475, %v3183
    %3185 = vmatprep.mubr.bf16.mxu0 %v2335
    %3186 = vmatmul.mubr.bf16.gmra.mrb[0].mxu0 %v1966
    %v3187 = vpop.f32.mrb[0].mxu0
    %v3188 = vadd.f32 %v2479, %v3187
    %v3189 = vpop.f32.mrb[0].mxu0
    %v3190 = vadd.f32 %v2481, %v3189
    %v3191 = vpop.f32.mrb[0].mxu0
    %v3192 = vadd.f32 %v2483, %v3191
    %v3193 = vpop.f32.mrb[0].mxu0
    %v3194 = vadd.f32 %v2485, %v3193
    %3195 = vmatprep.mubr.bf16.mxu0 %v2338
    %3196 = vmatmul.mubr.bf16.gmra.mrb[0].mxu0 %v1968
    %v3197 = vpop.f32.mrb[0].mxu0
    %v3198 = vadd.f32 %v2489, %v3197
    %v3199 = vpop.f32.mrb[0].mxu0
    %v3200 = vadd.f32 %v2491, %v3199
    %v3201 = vpop.f32.mrb[0].mxu0
    %v3202 = vadd.f32 %v2493, %v3201
    %v3203 = vpop.f32.mrb[0].mxu0
    %v3204 = vadd.f32 %v2495, %v3203
    %3205 = vmatprep.mubr.bf16.mxu0 %v2341
    %3206 = vmatmul.mubr.bf16.gmra.mrb[0].mxu0 %v1970
    %v3207 = vpop.f32.mrb[0].mxu0
    %v3208 = vadd.f32 %v2499, %v3207
    %v3209 = vpop.f32.mrb[0].mxu0
    %v3210 = vadd.f32 %v2501, %v3209
    %v3211 = vpop.f32.mrb[0].mxu0
    %v3212 = vadd.f32 %v2503, %v3211
    %v3213 = vpop.f32.mrb[0].mxu0
    %v3214 = vadd.f32 %v2505, %v3213
    %3215 = vmatprep.mubr.bf16.mxu0 %v2344
    %3216 = vmatmul.mubr.bf16.gmra.mrb[0].mxu0 %v1972
    %v3217 = vpop.f32.mrb[0].mxu0
    %v3218 = vadd.f32 %v2509, %v3217
    %v3219 = vpop.f32.mrb[0].mxu0
    %v3220 = vadd.f32 %v2511, %v3219
    %v3221 = vpop.f32.mrb[0].mxu0
    %v3222 = vadd.f32 %v2513, %v3221
    %v3223 = vpop.f32.mrb[0].mxu0
    %v3224 = vadd.f32 %v2515, %v3223
    %3225 = vmatprep.mubr.bf16.mxu0 %v2347
    %3226 = vmatmul.mubr.bf16.gmra.mrb[0].mxu0 %v1974
    %v3227 = vpop.f32.mrb[0].mxu0
    %v3228 = vadd.f32 %v2519, %v3227
    %v3229 = vpop.f32.mrb[0].mxu0
    %v3230 = vadd.f32 %v2521, %v3229
    %v3231 = vpop.f32.mrb[0].mxu0
    %v3232 = vadd.f32 %v2523, %v3231
    %v3233 = vpop.f32.mrb[0].mxu0
    %v3234 = vadd.f32 %v2525, %v3233
    %3235 = vmatprep.mubr.bf16.mxu0 %v2350
    %3236 = vmatmul.mubr.bf16.gmra.mrb[0].mxu0 %v1976
    %v3237 = vpop.f32.mrb[0].mxu0
    %v3238 = vadd.f32 %v2529, %v3237
    %v3239 = vpop.f32.mrb[0].mxu0
    %v3240 = vadd.f32 %v2531, %v3239
    %v3241 = vpop.f32.mrb[0].mxu0
    %v3242 = vadd.f32 %v2533, %v3241
    %v3243 = vpop.f32.mrb[0].mxu0
    %v3244 = vadd.f32 %v2535, %v3243
    %3245 = vmatprep.mubr.bf16.mxu0 %v2353
    %3246 = vmatmul.mubr.bf16.gmra.mrb[0].mxu0 %v1978
    %v3247 = vpop.f32.mrb[0].mxu0
    %v3248 = vadd.f32 %v2539, %v3247
    %v3249 = vpop.f32.mrb[0].mxu0
    %v3250 = vadd.f32 %v2541, %v3249
    %v3251 = vpop.f32.mrb[0].mxu0
    %v3252 = vadd.f32 %v2543, %v3251
    %v3253 = vpop.f32.mrb[0].mxu0
    %v3254 = vadd.f32 %v2545, %v3253
    %3255 = vmatprep.mubr.bf16.mxu0 %v2356
    %3256 = vmatmul.mubr.bf16.gmra.mrb[0].mxu0 %v1980
    %v3257 = vpop.f32.mrb[0].mxu0
    %v3258 = vadd.f32 %v2549, %v3257
    %v3259 = vpop.f32.mrb[0].mxu0
    %v3260 = vadd.f32 %v2551, %v3259
    %v3261 = vpop.f32.mrb[0].mxu0
    %v3262 = vadd.f32 %v2553, %v3261
    %v3263 = vpop.f32.mrb[0].mxu0
    %v3264 = vadd.f32 %v2555, %v3263
    %3265 = vmatprep.mubr.bf16.mxu0 %v2359
    %3266 = vmatmul.mubr.bf16.gmra.mrb[0].mxu0 %v1982
    %v3267 = vpop.f32.mrb[0].mxu0
    %v3268 = vadd.f32 %v2559, %v3267
    %v3269 = vpop.f32.mrb[0].mxu0
    %v3270 = vadd.f32 %v2561, %v3269
    %v3271 = vpop.f32.mrb[0].mxu0
    %v3272 = vadd.f32 %v2563, %v3271
    %v3273 = vpop.f32.mrb[0].mxu0
    %v3274 = vadd.f32 %v2565, %v3273
    %3275 = vmatprep.mubr.bf16.mxu0 %v2362
    %3276 = vmatmul.mubr.bf16.gmra.mrb[0].mxu0 %v1984
    %v3277 = vpop.f32.mrb[0].mxu0
    %v3278 = vadd.f32 %v2569, %v3277
    %v3279 = vpop.f32.mrb[0].mxu0
    %v3280 = vadd.f32 %v2571, %v3279
    %v3281 = vpop.f32.mrb[0].mxu0
    %v3282 = vadd.f32 %v2573, %v3281
    %v3283 = vpop.f32.mrb[0].mxu0
    %v3284 = vadd.f32 %v2575, %v3283
    %3285 = vmatprep.mubr.bf16.mxu0 %v2365
    %3286 = vmatmul.mubr.bf16.gmra.mrb[0].mxu0 %v1986
    %v3287 = vpop.f32.mrb[0].mxu0
    %v3288 = vadd.f32 %v2579, %v3287
    %v3289 = vpop.f32.mrb[0].mxu0
    %v3290 = vadd.f32 %v2581, %v3289
    %v3291 = vpop.f32.mrb[0].mxu0
    %v3292 = vadd.f32 %v2583, %v3291
    %v3293 = vpop.f32.mrb[0].mxu0
    %v3294 = vadd.f32 %v2585, %v3293
    %3295 = vmatprep.mubr.bf16.mxu0 %v2368
    %3296 = vmatmul.mubr.bf16.gmra.mrb[0].mxu0 %v1988
    %v3297 = vpop.f32.mrb[0].mxu0
    %v3298 = vadd.f32 %v2589, %v3297
    %v3299 = vpop.f32.mrb[0].mxu0
    %v3300 = vadd.f32 %v2591, %v3299
    %v3301 = vpop.f32.mrb[0].mxu0
    %v3302 = vadd.f32 %v2593, %v3301
    %v3303 = vpop.f32.mrb[0].mxu0
    %v3304 = vadd.f32 %v2595, %v3303
    %3305 = vmatprep.mubr.bf16.mxu0 %v2371
    %3306 = vmatmul.mubr.bf16.gmra.mrb[0].mxu0 %v1990
    %v3307 = vpop.f32.mrb[0].mxu0
    %v3308 = vadd.f32 %v2599, %v3307
    %v3309 = vpop.f32.mrb[0].mxu0
    %v3310 = vadd.f32 %v2601, %v3309
    %v3311 = vpop.f32.mrb[0].mxu0
    %v3312 = vadd.f32 %v2603, %v3311
    %v3313 = vpop.f32.mrb[0].mxu0
    %v3314 = vadd.f32 %v2605, %v3313
    %3315 = vmatprep.mubr.bf16.mxu0 %v2374
    %3316 = vmatmul.mubr.bf16.gmra.mrb[0].mxu0 %v1992
    %v3317 = vpop.f32.mrb[0].mxu0
    %v3318 = vadd.f32 %v2609, %v3317
    %v3319 = vpop.f32.mrb[0].mxu0
    %v3320 = vadd.f32 %v2611, %v3319
    %v3321 = vpop.f32.mrb[0].mxu0
    %v3322 = vadd.f32 %v2613, %v3321
    %v3323 = vpop.f32.mrb[0].mxu0
    %v3324 = vadd.f32 %v2615, %v3323
    %3325 = vmatprep.mubr.bf16.mxu0 %v2377
    %3326 = vmatmul.mubr.bf16.gmra.mrb[0].mxu0 %v1994
    %v3327 = vpop.f32.mrb[0].mxu0
    %v3328 = vadd.f32 %v2619, %v3327
    %v3329 = vpop.f32.mrb[0].mxu0
    %v3330 = vadd.f32 %v2621, %v3329
    %v3331 = vpop.f32.mrb[0].mxu0
    %v3332 = vadd.f32 %v2623, %v3331
    %v3333 = vpop.f32.mrb[0].mxu0
    %v3334 = vadd.f32 %v2625, %v3333
    %3335 = vmatprep.mubr.bf16.mxu0 %v2380
    %3336 = vmatmul.mubr.bf16.gmra.mrb[0].mxu0 %v1996
    %v3337 = vpop.f32.mrb[0].mxu0
    %v3338 = vadd.f32 %v2629, %v3337
    %v3339 = vpop.f32.mrb[0].mxu0
    %v3340 = vadd.f32 %v2631, %v3339
    %v3341 = vpop.f32.mrb[0].mxu0
    %v3342 = vadd.f32 %v2633, %v3341
    %v3343 = vpop.f32.mrb[0].mxu0
    %v3344 = vadd.f32 %v2635, %v3343
    %3345 = vmatprep.mubr.bf16.mxu0 %v2383
    %3346 = vmatmul.mubr.bf16.gmra.mrb[0].mxu0 %v1998
    %v3347 = vpop.f32.mrb[0].mxu0
    %v3348 = vadd.f32 %v2639, %v3347
    %v3349 = vpop.f32.mrb[0].mxu0
    %v3350 = vadd.f32 %v2641, %v3349
    %v3351 = vpop.f32.mrb[0].mxu0
    %v3352 = vadd.f32 %v2643, %v3351
    %v3353 = vpop.f32.mrb[0].mxu0
    %v3354 = vadd.f32 %v2645, %v3353
    %3355 = vmatprep.mubr.bf16.mxu0 %v2386
    %3356 = vmatmul.mubr.bf16.gmra.mrb[0].mxu0 %v2000
    %v3357 = vpop.f32.mrb[0].mxu0
    %v3358 = vadd.f32 %v2649, %v3357
    %v3359 = vpop.f32.mrb[0].mxu0
    %v3360 = vadd.f32 %v2651, %v3359
    %v3361 = vpop.f32.mrb[0].mxu0
    %v3362 = vadd.f32 %v2653, %v3361
    %v3363 = vpop.f32.mrb[0].mxu0
    %v3364 = vadd.f32 %v2655, %v3363
    %3365 = vmatprep.mubr.bf16.mxu0 %v2389
    %3366 = vmatmul.mubr.bf16.gmra.mrb[0].mxu0 %v2002
    %v3367 = vpop.f32.mrb[0].mxu0
    %v3368 = vadd.f32 %v2659, %v3367
    %v3369 = vpop.f32.mrb[0].mxu0
    %v3370 = vadd.f32 %v2661, %v3369
    %v3371 = vpop.f32.mrb[0].mxu0
    %v3372 = vadd.f32 %v2663, %v3371
    %v3373 = vpop.f32.mrb[0].mxu0
    %v3374 = vadd.f32 %v2665, %v3373
    %3375 = vdwg.mxu0
    %3376 = vmatprep.subr.bf16.mxu0 0
    %3377 = vmatpush1.bf16.msra.mxu0 %v3024
    %3378 = vmatprep.subr.bf16.mxu0 0
    %3379 = vmatpush1.bf16.msra.mxu0 %v3027
    %3380 = vmatprep.subr.bf16.mxu0 0
    %3381 = vmatpush1.bf16.msra.mxu0 %v3030
    %3382 = vmatprep.subr.bf16.mxu0 0
    %3383 = vmatpush1.bf16.msra.mxu0 %v3033
    %3384 = vmatprep.subr.bf16.mxu0 0
    %3385 = vmatpush1.bf16.msra.mxu0 %v3036
    %3386 = vmatprep.subr.bf16.mxu0 0
    %3387 = vmatpush1.bf16.msra.mxu0 %v3039
    %3388 = vmatprep.subr.bf16.mxu0 0
    %3389 = vmatpush1.bf16.msra.mxu0 %v3042
    %3390 = vmatprep.subr.bf16.mxu0 0
    %3391 = vmatpush1.bf16.msra.mxu0 %v3045
    %3392 = vmatprep.subr.bf16.mxu0 0
    %3393 = vmatpush1.bf16.msra.mxu0 %v3048
    %3394 = vmatprep.subr.bf16.mxu0 0
    %3395 = vmatpush1.bf16.msra.mxu0 %v3051
    %3396 = vmatprep.subr.bf16.mxu0 0
    %3397 = vmatpush1.bf16.msra.mxu0 %v3054
    %3398 = vmatprep.subr.bf16.mxu0 0
    %3399 = vmatpush1.bf16.msra.mxu0 %v3057
    %3400 = vmatprep.subr.bf16.mxu0 0
    %3401 = vmatpush1.bf16.msra.mxu0 %v3060
    %3402 = vmatprep.subr.bf16.mxu0 0
    %3403 = vmatpush1.bf16.msra.mxu0 0
    %3404 = vmatprep.subr.bf16.mxu0 0
    %3405 = vmatpush1.bf16.msra.mxu0 0
    %3406 = vmatprep.subr.bf16.mxu0 0
    %3407 = vmatpush1.bf16.msra.mxu0 0
    %3408 = vmatprep.mubr.bf16.mxu0 %v3101
    %3409 = vmatmul.mubr.bf16.gmra.mrb[0].mxu0 %v1956
    %v3410 = vpop.f32.mrb[0].mxu0
    %v3411 = vadd.f32 %v2702, %v3410
    %v3412 = vpop.f32.mrb[0].mxu0
    %v3413 = vpop.f32.mrb[0].mxu0
    %v3414 = vadd.f32 %v2705, %v3413
    %v3415 = vpop.f32.mrb[0].mxu0
    %3416 = vmatprep.mubr.bf16.mxu0 %v2323
    %3417 = vmatmul.mubr.bf16.gmra.mrb[0].mxu0 %v1958
    %v3418 = vpop.f32.mrb[0].mxu0
    %v3419 = vadd.f32 %v2710, %v3418
    %v3420 = vpop.f32.mrb[0].mxu0
    %v3421 = vpop.f32.mrb[0].mxu0
    %v3422 = vadd.f32 %v2713, %v3421
    %v3423 = vpop.f32.mrb[0].mxu0
    %3424 = vmatprep.mubr.bf16.mxu0 %v2326
    %3425 = vmatmul.mubr.bf16.gmra.mrb[0].mxu0 %v1960
    %v3426 = vpop.f32.mrb[0].mxu0
    %v3427 = vadd.f32 %v2718, %v3426
    %v3428 = vpop.f32.mrb[0].mxu0
    %v3429 = vpop.f32.mrb[0].mxu0
    %v3430 = vadd.f32 %v2721, %v3429
    %v3431 = vpop.f32.mrb[0].mxu0
    %3432 = vmatprep.mubr.bf16.mxu0 %v2329
    %3433 = vmatmul.mubr.bf16.gmra.mrb[0].mxu0 %v1962
    %v3434 = vpop.f32.mrb[0].mxu0
    %v3435 = vadd.f32 %v2726, %v3434
    %v3436 = vpop.f32.mrb[0].mxu0
    %v3437 = vpop.f32.mrb[0].mxu0
    %v3438 = vadd.f32 %v2729, %v3437
    %v3439 = vpop.f32.mrb[0].mxu0
    %3440 = vmatprep.mubr.bf16.mxu0 %v2332
    %3441 = vmatmul.mubr.bf16.gmra.mrb[0].mxu0 %v1964
    %v3442 = vpop.f32.mrb[0].mxu0
    %v3443 = vadd.f32 %v2734, %v3442
    %v3444 = vpop.f32.mrb[0].mxu0
    %v3445 = vpop.f32.mrb[0].mxu0
    %v3446 = vadd.f32 %v2737, %v3445
    %v3447 = vpop.f32.mrb[0].mxu0
    %3448 = vmatprep.mubr.bf16.mxu0 %v2335
    %3449 = vmatmul.mubr.bf16.gmra.mrb[0].mxu0 %v1966
    %v3450 = vpop.f32.mrb[0].mxu0
    %v3451 = vadd.f32 %v2742, %v3450
    %v3452 = vpop.f32.mrb[0].mxu0
    %v3453 = vpop.f32.mrb[0].mxu0
    %v3454 = vadd.f32 %v2745, %v3453
    %v3455 = vpop.f32.mrb[0].mxu0
    %3456 = vmatprep.mubr.bf16.mxu0 %v2338
    %3457 = vmatmul.mubr.bf16.gmra.mrb[0].mxu0 %v1968
    %v3458 = vpop.f32.mrb[0].mxu0
    %v3459 = vadd.f32 %v2750, %v3458
    %v3460 = vpop.f32.mrb[0].mxu0
    %v3461 = vpop.f32.mrb[0].mxu0
    %v3462 = vadd.f32 %v2753, %v3461
    %v3463 = vpop.f32.mrb[0].mxu0
    %3464 = vmatprep.mubr.bf16.mxu0 %v2341
    %3465 = vmatmul.mubr.bf16.gmra.mrb[0].mxu0 %v1970
    %v3466 = vpop.f32.mrb[0].mxu0
    %v3467 = vadd.f32 %v2758, %v3466
    %v3468 = vpop.f32.mrb[0].mxu0
    %v3469 = vpop.f32.mrb[0].mxu0
    %v3470 = vadd.f32 %v2761, %v3469
    %v3471 = vpop.f32.mrb[0].mxu0
    %3472 = vmatprep.mubr.bf16.mxu0 %v2344
    %3473 = vmatmul.mubr.bf16.gmra.mrb[0].mxu0 %v1972
    %v3474 = vpop.f32.mrb[0].mxu0
    %v3475 = vadd.f32 %v2766, %v3474
    %v3476 = vpop.f32.mrb[0].mxu0
    %v3477 = vpop.f32.mrb[0].mxu0
    %v3478 = vadd.f32 %v2769, %v3477
    %v3479 = vpop.f32.mrb[0].mxu0
    %3480 = vmatprep.mubr.bf16.mxu0 %v2347
    %3481 = vmatmul.mubr.bf16.gmra.mrb[0].mxu0 %v1974
    %v3482 = vpop.f32.mrb[0].mxu0
    %v3483 = vadd.f32 %v2774, %v3482
    %v3484 = vpop.f32.mrb[0].mxu0
    %v3485 = vpop.f32.mrb[0].mxu0
    %v3486 = vadd.f32 %v2777, %v3485
    %v3487 = vpop.f32.mrb[0].mxu0
    %3488 = vmatprep.mubr.bf16.mxu0 %v2350
    %3489 = vmatmul.mubr.bf16.gmra.mrb[0].mxu0 %v1976
    %v3490 = vpop.f32.mrb[0].mxu0
    %v3491 = vadd.f32 %v2782, %v3490
    %v3492 = vpop.f32.mrb[0].mxu0
    %v3493 = vpop.f32.mrb[0].mxu0
    %v3494 = vadd.f32 %v2785, %v3493
    %v3495 = vpop.f32.mrb[0].mxu0
    %3496 = vmatprep.mubr.bf16.mxu0 %v2353
    %3497 = vmatmul.mubr.bf16.gmra.mrb[0].mxu0 %v1978
    %v3498 = vpop.f32.mrb[0].mxu0
    %v3499 = vadd.f32 %v2790, %v3498
    %v3500 = vpop.f32.mrb[0].mxu0
    %v3501 = vpop.f32.mrb[0].mxu0
    %v3502 = vadd.f32 %v2793, %v3501
    %v3503 = vpop.f32.mrb[0].mxu0
    %3504 = vmatprep.mubr.bf16.mxu0 %v2356
    %3505 = vmatmul.mubr.bf16.gmra.mrb[0].mxu0 %v1980
    %v3506 = vpop.f32.mrb[0].mxu0
    %v3507 = vadd.f32 %v2798, %v3506
    %v3508 = vpop.f32.mrb[0].mxu0
    %v3509 = vpop.f32.mrb[0].mxu0
    %v3510 = vadd.f32 %v2801, %v3509
    %v3511 = vpop.f32.mrb[0].mxu0
    %3512 = vmatprep.mubr.bf16.mxu0 %v2359
    %3513 = vmatmul.mubr.bf16.gmra.mrb[0].mxu0 %v1982
    %v3514 = vpop.f32.mrb[0].mxu0
    %v3515 = vadd.f32 %v2806, %v3514
    %v3516 = vpop.f32.mrb[0].mxu0
    %v3517 = vpop.f32.mrb[0].mxu0
    %v3518 = vadd.f32 %v2809, %v3517
    %v3519 = vpop.f32.mrb[0].mxu0
    %3520 = vmatprep.mubr.bf16.mxu0 %v2362
    %3521 = vmatmul.mubr.bf16.gmra.mrb[0].mxu0 %v1984
    %v3522 = vpop.f32.mrb[0].mxu0
    %v3523 = vadd.f32 %v2814, %v3522
    %v3524 = vpop.f32.mrb[0].mxu0
    %v3525 = vpop.f32.mrb[0].mxu0
    %v3526 = vadd.f32 %v2817, %v3525
    %v3527 = vpop.f32.mrb[0].mxu0
    %3528 = vmatprep.mubr.bf16.mxu0 %v2365
    %3529 = vmatmul.mubr.bf16.gmra.mrb[0].mxu0 %v1986
    %v3530 = vpop.f32.mrb[0].mxu0
    %v3531 = vadd.f32 %v2822, %v3530
    %v3532 = vpop.f32.mrb[0].mxu0
    %v3533 = vpop.f32.mrb[0].mxu0
    %v3534 = vadd.f32 %v2825, %v3533
    %v3535 = vpop.f32.mrb[0].mxu0
    %3536 = vmatprep.mubr.bf16.mxu0 %v2368
    %3537 = vmatmul.mubr.bf16.gmra.mrb[0].mxu0 %v1988
    %v3538 = vpop.f32.mrb[0].mxu0
    %v3539 = vadd.f32 %v2830, %v3538
    %v3540 = vpop.f32.mrb[0].mxu0
    %v3541 = vpop.f32.mrb[0].mxu0
    %v3542 = vadd.f32 %v2833, %v3541
    %v3543 = vpop.f32.mrb[0].mxu0
    %3544 = vmatprep.mubr.bf16.mxu0 %v2371
    %3545 = vmatmul.mubr.bf16.gmra.mrb[0].mxu0 %v1990
    %v3546 = vpop.f32.mrb[0].mxu0
    %v3547 = vadd.f32 %v2838, %v3546
    %v3548 = vpop.f32.mrb[0].mxu0
    %v3549 = vpop.f32.mrb[0].mxu0
    %v3550 = vadd.f32 %v2841, %v3549
    %v3551 = vpop.f32.mrb[0].mxu0
    %3552 = vmatprep.mubr.bf16.mxu0 %v2374
    %3553 = vmatmul.mubr.bf16.gmra.mrb[0].mxu0 %v1992
    %v3554 = vpop.f32.mrb[0].mxu0
    %v3555 = vadd.f32 %v2846, %v3554
    %v3556 = vpop.f32.mrb[0].mxu0
    %v3557 = vpop.f32.mrb[0].mxu0
    %v3558 = vadd.f32 %v2849, %v3557
    %v3559 = vpop.f32.mrb[0].mxu0
    %3560 = vmatprep.mubr.bf16.mxu0 %v2377
    %3561 = vmatmul.mubr.bf16.gmra.mrb[0].mxu0 %v1994
    %v3562 = vpop.f32.mrb[0].mxu0
    %v3563 = vadd.f32 %v2854, %v3562
    %v3564 = vpop.f32.mrb[0].mxu0
    %v3565 = vpop.f32.mrb[0].mxu0
    %v3566 = vadd.f32 %v2857, %v3565
    %v3567 = vpop.f32.mrb[0].mxu0
    %3568 = vmatprep.mubr.bf16.mxu0 %v2380
    %3569 = vmatmul.mubr.bf16.gmra.mrb[0].mxu0 %v1996
    %v3570 = vpop.f32.mrb[0].mxu0
    %v3571 = vadd.f32 %v2862, %v3570
    %v3572 = vpop.f32.mrb[0].mxu0
    %v3573 = vpop.f32.mrb[0].mxu0
    %v3574 = vadd.f32 %v2865, %v3573
    %v3575 = vpop.f32.mrb[0].mxu0
    %3576 = vmatprep.mubr.bf16.mxu0 %v2383
    %3577 = vmatmul.mubr.bf16.gmra.mrb[0].mxu0 %v1998
    %v3578 = vpop.f32.mrb[0].mxu0
    %v3579 = vadd.f32 %v2870, %v3578
    %v3580 = vpop.f32.mrb[0].mxu0
    %v3581 = vpop.f32.mrb[0].mxu0
    %v3582 = vadd.f32 %v2873, %v3581
    %v3583 = vpop.f32.mrb[0].mxu0
    %3584 = vmatprep.mubr.bf16.mxu0 %v2386
    %3585 = vmatmul.mubr.bf16.gmra.mrb[0].mxu0 %v2000
    %v3586 = vpop.f32.mrb[0].mxu0
    %v3587 = vadd.f32 %v2878, %v3586
    %v3588 = vpop.f32.mrb[0].mxu0
    %v3589 = vpop.f32.mrb[0].mxu0
    %v3590 = vadd.f32 %v2881, %v3589
    %v3591 = vpop.f32.mrb[0].mxu0
    %3592 = vmatprep.mubr.bf16.mxu0 %v2389
    %3593 = vmatmul.mubr.bf16.gmra.mrb[0].mxu0 %v2002
    %v3594 = vpop.f32.mrb[0].mxu0
    %v3595 = vadd.f32 %v2886, %v3594
    %v3596 = vpop.f32.mrb[0].mxu0
    %v3597 = vpop.f32.mrb[0].mxu0
    %v3598 = vadd.f32 %v2889, %v3597
    %v3599 = vpop.f32.mrb[0].mxu0
    %3600 = vdwg.mxu0
    %s3601 = scalar_lea.vmem %s4, 624
    %v3602 = vld [vmem:[%s3601] sm:$0xff]
    %v3603 = vld [vmem:[%s3601 + $0x8] sm:$0xf]
    %v3604 = vld [vmem:[%s3601 + $0xc] sm:$0xff]
    %v3605 = vld [vmem:[%s3601 + $0x14] sm:$0xf]
    %v3606 = vld [vmem:[%s3601 + $0x18] sm:$0xff]
    %v3607 = vld [vmem:[%s3601 + $0x20] sm:$0xf]
    %v3608 = vld [vmem:[%s3601 + $0x24] sm:$0xff]
    %v3609 = vld [vmem:[%s3601 + $0x2c] sm:$0xf]
    %v3610 = vld [vmem:[%s3601 + $0x30] sm:$0xff]
    %v3611 = vld [vmem:[%s3601 + $0x38] sm:$0xf]
    %v3612 = vld [vmem:[%s3601 + $0x3c] sm:$0xff]
    %v3613 = vld [vmem:[%s3601 + $0x44] sm:$0xf]
    %v3614 = vld [vmem:[%s3601 + $0x48] sm:$0xff]
    %v3615 = vld [vmem:[%s3601 + $0x50] sm:$0xf]
    %v3616 = vld [vmem:[%s3601 + $0x54] sm:$0xff]
    %v3617 = vld [vmem:[%s3601 + $0x5c] sm:$0xf]
    %v3618 = vld [vmem:[%s3601 + $0x60] sm:$0xff]
    %v3619 = vld [vmem:[%s3601 + $0x68] sm:$0xf]
    %v3620 = vld [vmem:[%s3601 + $0x6c] sm:$0xff]
    %v3621 = vld [vmem:[%s3601 + $0x74] sm:$0xf]
    %v3622 = vld [vmem:[%s3601 + $0x78] sm:$0xff]
    %v3623 = vld [vmem:[%s3601 + $0x80] sm:$0xf]
    %v3624 = vld [vmem:[%s3601 + $0x84] sm:$0xff]
    %v3625 = vld [vmem:[%s3601 + $0x8c] sm:$0xf]
    %v3626 = vld [vmem:[%s3601 + $0x90] sm:$0xff]
    %v3627 = vld [vmem:[%s3601 + $0x98] sm:$0xf]
    %v3628 = vld [vmem:[%s3601 + $0x9c] sm:$0xff]
    %v3629 = vld [vmem:[%s3601 + $0xa4] sm:$0xf]
    %v3630 = vld [vmem:[%s3601 + $0xa8] sm:$0xff]
    %v3631 = vld [vmem:[%s3601 + $0xb0] sm:$0xf]
    %v3632 = vld [vmem:[%s3601 + $0xb4] sm:$0xff]
    %v3633 = vld [vmem:[%s3601 + $0xbc] sm:$0xf]
    %v3634 = vld [vmem:[%s3601 + $0xc0] sm:$0xff]
    %v3635 = vld [vmem:[%s3601 + $0xc8] sm:$0xf]
    %v3636 = vld [vmem:[%s3601 + $0xcc] sm:$0xff]
    %v3637 = vld [vmem:[%s3601 + $0xd4] sm:$0xf]
    %v3638 = vld [vmem:[%s3601 + $0xd8] sm:$0xff]
    %v3639 = vld [vmem:[%s3601 + $0xe0] sm:$0xf]
    %v3640 = vld [vmem:[%s3601 + $0xe4] sm:$0xff]
    %v3641 = vld [vmem:[%s3601 + $0xec] sm:$0xf]
    %v3642 = vld [vmem:[%s3601 + $0xf0] sm:$0xff]
    %v3643 = vld [vmem:[%s3601 + $0xf8] sm:$0xf]
    %v3644 = vld [vmem:[%s3601 + $0xfc] sm:$0xff]
    %v3645 = vld [vmem:[%s3601 + $0x104] sm:$0xf]
    %v3646 = vld [vmem:[%s3601 + $0x108] sm:$0xff]
    %v3647 = vld [vmem:[%s3601 + $0x110] sm:$0xf]
    %v3648 = vld [vmem:[%s3601 + $0x114] sm:$0xff]
    %v3649 = vld [vmem:[%s3601 + $0x11c] sm:$0xf]
    %v3650 = vld [vmem:[%s3601 + $0x120] sm:$0xff]
    %v3651 = vld [vmem:[%s3601 + $0x128] sm:$0xf]
    %v3652 = vld [vmem:[%s3601 + $0x12c] sm:$0xff]
    %v3653 = vld [vmem:[%s3601 + $0x134] sm:$0xf]
    %v3706 = vunpack.c.l.b16 %v3602
    %v3707 = vunpack.c.h.b16 %v3602
    %v3708 = vunpack.c.l.b16 %v3603
    %v3709 = vunpack.c.l.b16 %v3604
    %v3710 = vunpack.c.h.b16 %v3604
    %v3711 = vunpack.c.l.b16 %v3605
    %v3712 = vunpack.c.l.b16 %v3606
    %v3713 = vunpack.c.h.b16 %v3606
    %v3714 = vunpack.c.l.b16 %v3607
    %v3715 = vunpack.c.l.b16 %v3608
    %v3716 = vunpack.c.h.b16 %v3608
    %v3717 = vunpack.c.l.b16 %v3609
    %v3718 = vunpack.c.l.b16 %v3610
    %v3719 = vunpack.c.h.b16 %v3610
    %v3720 = vunpack.c.l.b16 %v3611
    %v3721 = vunpack.c.l.b16 %v3612
    %v3722 = vunpack.c.h.b16 %v3612
    %v3723 = vunpack.c.l.b16 %v3613
    %v3724 = vunpack.c.l.b16 %v3614
    %v3725 = vunpack.c.h.b16 %v3614
    %v3726 = vunpack.c.l.b16 %v3615
    %v3727 = vunpack.c.l.b16 %v3616
    %v3728 = vunpack.c.h.b16 %v3616
    %v3729 = vunpack.c.l.b16 %v3617
    %v3730 = vunpack.c.l.b16 %v3618
    %v3731 = vunpack.c.h.b16 %v3618
    %v3732 = vunpack.c.l.b16 %v3619
    %v3733 = vunpack.c.l.b16 %v3620
    %v3734 = vunpack.c.h.b16 %v3620
    %v3735 = vunpack.c.l.b16 %v3621
    %v3736 = vunpack.c.l.b16 %v3622
    %v3737 = vunpack.c.h.b16 %v3622
    %v3738 = vunpack.c.l.b16 %v3623
    %v3739 = vunpack.c.l.b16 %v3624
    %v3740 = vunpack.c.h.b16 %v3624
    %v3741 = vunpack.c.l.b16 %v3625
    %v3742 = vunpack.c.l.b16 %v3626
    %v3743 = vunpack.c.h.b16 %v3626
    %v3744 = vunpack.c.l.b16 %v3627
    %v3745 = vunpack.c.l.b16 %v3628
    %v3746 = vunpack.c.h.b16 %v3628
    %v3747 = vunpack.c.l.b16 %v3629
    %v3748 = vunpack.c.l.b16 %v3630
    %v3749 = vunpack.c.h.b16 %v3630
    %v3750 = vunpack.c.l.b16 %v3631
    %v3751 = vunpack.c.l.b16 %v3632
    %v3752 = vunpack.c.h.b16 %v3632
    %v3753 = vunpack.c.l.b16 %v3633
    %v3754 = vunpack.c.l.b16 %v3634
    %v3755 = vunpack.c.h.b16 %v3634
    %v3756 = vunpack.c.l.b16 %v3635
    %v3757 = vunpack.c.l.b16 %v3636
    %v3758 = vunpack.c.h.b16 %v3636
    %v3759 = vunpack.c.l.b16 %v3637
    %v3760 = vunpack.c.l.b16 %v3638
    %v3761 = vunpack.c.h.b16 %v3638
    %v3762 = vunpack.c.l.b16 %v3639
    %v3763 = vunpack.c.l.b16 %v3640
    %v3764 = vunpack.c.h.b16 %v3640
    %v3765 = vunpack.c.l.b16 %v3641
    %v3766 = vunpack.c.l.b16 %v3642
    %v3767 = vunpack.c.h.b16 %v3642
    %v3768 = vunpack.c.l.b16 %v3643
    %v3769 = vunpack.c.l.b16 %v3644
    %v3770 = vunpack.c.h.b16 %v3644
    %v3771 = vunpack.c.l.b16 %v3645
    %v3772 = vunpack.c.l.b16 %v3646
    %v3773 = vunpack.c.h.b16 %v3646
    %v3774 = vunpack.c.l.b16 %v3647
    %v3775 = vunpack.c.l.b16 %v3648
    %v3776 = vunpack.c.h.b16 %v3648
    %v3777 = vunpack.c.l.b16 %v3649
    %v3778 = vunpack.c.l.b16 %v3650
    %v3779 = vunpack.c.h.b16 %v3650
    %v3780 = vunpack.c.l.b16 %v3651
    %v3781 = vunpack.c.l.b16 %v3652
    %v3782 = vunpack.c.h.b16 %v3652
    %v3783 = vunpack.c.l.b16 %v3653
    %v3784 = vpack.c.b16 %v3709, %v3706
    %v3785 = vpack.c.b16 %v3710, %v3707
    %v3786 = vpack.c.b16 %v3711, %v3708
    %v3787 = vpack.c.b16 %v3715, %v3712
    %v3788 = vpack.c.b16 %v3716, %v3713
    %v3789 = vpack.c.b16 %v3717, %v3714
    %v3790 = vpack.c.b16 %v3721, %v3718
    %v3791 = vpack.c.b16 %v3722, %v3719
    %v3792 = vpack.c.b16 %v3723, %v3720
    %v3793 = vpack.c.b16 %v3727, %v3724
    %v3794 = vpack.c.b16 %v3728, %v3725
    %v3795 = vpack.c.b16 %v3729, %v3726
    %v3796 = vpack.c.b16 %v3733, %v3730
    %v3797 = vpack.c.b16 %v3734, %v3731
    %v3798 = vpack.c.b16 %v3735, %v3732
    %v3799 = vpack.c.b16 %v3739, %v3736
    %v3800 = vpack.c.b16 %v3740, %v3737
    %v3801 = vpack.c.b16 %v3741, %v3738
    %v3802 = vpack.c.b16 %v3745, %v3742
    %v3803 = vpack.c.b16 %v3746, %v3743
    %v3804 = vpack.c.b16 %v3747, %v3744
    %v3805 = vpack.c.b16 %v3751, %v3748
    %v3806 = vpack.c.b16 %v3752, %v3749
    %v3807 = vpack.c.b16 %v3753, %v3750
    %v3808 = vpack.c.b16 %v3757, %v3754
    %v3809 = vpack.c.b16 %v3758, %v3755
    %v3810 = vpack.c.b16 %v3759, %v3756
    %v3811 = vpack.c.b16 %v3763, %v3760
    %v3812 = vpack.c.b16 %v3764, %v3761
    %v3813 = vpack.c.b16 %v3765, %v3762
    %v3814 = vpack.c.b16 %v3769, %v3766
    %v3815 = vpack.c.b16 %v3770, %v3767
    %v3816 = vpack.c.b16 %v3771, %v3768
    %v3817 = vpack.c.b16 %v3775, %v3772
    %v3818 = vpack.c.b16 %v3776, %v3773
    %v3819 = vpack.c.b16 %v3777, %v3774
    %v3820 = vpack.c.b16 %v3781, %v3778
    %v3821 = vpack.c.b16 %v3782, %v3779
    %v3822 = vpack.c.b16 %v3783, %v3780
    %v3863 = vsel %vm2321, %v2007, 0
    %3865 = vmatprep.subr.bf16.mxu0 %v3785
    %3866 = vmatpush1.bf16.msra.mxu0 %v3784
    %3867 = vmatprep.subr.bf16.mxu0 %v3788
    %3868 = vmatpush1.bf16.msra.mxu0 %v3787
    %3869 = vmatprep.subr.bf16.mxu0 %v3791
    %3870 = vmatpush1.bf16.msra.mxu0 %v3790
    %3871 = vmatprep.subr.bf16.mxu0 %v3794
    %3872 = vmatpush1.bf16.msra.mxu0 %v3793
    %3873 = vmatprep.subr.bf16.mxu0 %v3797
    %3874 = vmatpush1.bf16.msra.mxu0 %v3796
    %3875 = vmatprep.subr.bf16.mxu0 %v3800
    %3876 = vmatpush1.bf16.msra.mxu0 %v3799
    %3877 = vmatprep.subr.bf16.mxu0 %v3803
    %3878 = vmatpush1.bf16.msra.mxu0 %v3802
    %3879 = vmatprep.subr.bf16.mxu0 %v3806
    %3880 = vmatpush1.bf16.msra.mxu0 %v3805
    %3881 = vmatprep.subr.bf16.mxu0 %v3809
    %3882 = vmatpush1.bf16.msra.mxu0 %v3808
    %3883 = vmatprep.subr.bf16.mxu0 %v3812
    %3884 = vmatpush1.bf16.msra.mxu0 %v3811
    %3885 = vmatprep.subr.bf16.mxu0 %v3815
    %3886 = vmatpush1.bf16.msra.mxu0 %v3814
    %3887 = vmatprep.subr.bf16.mxu0 %v3818
    %3888 = vmatpush1.bf16.msra.mxu0 %v3817
    %3889 = vmatprep.subr.bf16.mxu0 %v3821
    %3890 = vmatpush1.bf16.msra.mxu0 %v3820
    %3891 = vmatprep.subr.bf16.mxu0 0
    %3892 = vmatpush1.bf16.msra.mxu0 0
    %3893 = vmatprep.subr.bf16.mxu0 0
    %3894 = vmatpush1.bf16.msra.mxu0 0
    %3895 = vmatprep.subr.bf16.mxu0 0
    %3896 = vmatpush1.bf16.msra.mxu0 0
    %3897 = vmatprep.mubr.bf16.mxu0 %v2326
    %3898 = vmatmul.mubr.bf16.gmra.mrb[0].mxu0 %v1960
    %v3899 = vpop.f32.mrb[0].mxu0
    %v3900 = vadd.f32 0.0, %v3899
    %v3901 = vpop.f32.mrb[0].mxu0
    %v3902 = vadd.f32 0.0, %v3901
    %v3903 = vpop.f32.mrb[0].mxu0
    %v3904 = vadd.f32 0.0, %v3903
    %v3905 = vpop.f32.mrb[0].mxu0
    %v3906 = vadd.f32 0.0, %v3905
    %3907 = vmatprep.mubr.bf16.mxu0 %v2329
    %3908 = vmatmul.mubr.bf16.gmra.mrb[0].mxu0 %v1962
    %v3909 = vpop.f32.mrb[0].mxu0
    %v3910 = vadd.f32 0.0, %v3909
    %v3911 = vpop.f32.mrb[0].mxu0
    %v3912 = vadd.f32 0.0, %v3911
    %v3913 = vpop.f32.mrb[0].mxu0
    %v3914 = vadd.f32 0.0, %v3913
    %v3915 = vpop.f32.mrb[0].mxu0
    %v3916 = vadd.f32 0.0, %v3915
    %3917 = vmatprep.mubr.bf16.mxu0 %v2332
    %3918 = vmatmul.mubr.bf16.gmra.mrb[0].mxu0 %v1964
    %v3919 = vpop.f32.mrb[0].mxu0
    %v3920 = vadd.f32 0.0, %v3919
    %v3921 = vpop.f32.mrb[0].mxu0
    %v3922 = vadd.f32 0.0, %v3921
    %v3923 = vpop.f32.mrb[0].mxu0
    %v3924 = vadd.f32 0.0, %v3923
    %v3925 = vpop.f32.mrb[0].mxu0
    %v3926 = vadd.f32 0.0, %v3925
    %3927 = vmatprep.mubr.bf16.mxu0 %v2335
    %3928 = vmatmul.mubr.bf16.gmra.mrb[0].mxu0 %v1966
    %v3929 = vpop.f32.mrb[0].mxu0
    %v3930 = vadd.f32 0.0, %v3929
    %v3931 = vpop.f32.mrb[0].mxu0
    %v3932 = vadd.f32 0.0, %v3931
    %v3933 = vpop.f32.mrb[0].mxu0
    %v3934 = vadd.f32 0.0, %v3933
    %v3935 = vpop.f32.mrb[0].mxu0
    %v3936 = vadd.f32 0.0, %v3935
    %3937 = vmatprep.mubr.bf16.mxu0 %v2338
    %3938 = vmatmul.mubr.bf16.gmra.mrb[0].mxu0 %v1968
    %v3939 = vpop.f32.mrb[0].mxu0
    %v3940 = vadd.f32 0.0, %v3939
    %v3941 = vpop.f32.mrb[0].mxu0
    %v3942 = vadd.f32 0.0, %v3941
    %v3943 = vpop.f32.mrb[0].mxu0
    %v3944 = vadd.f32 0.0, %v3943
    %v3945 = vpop.f32.mrb[0].mxu0
    %v3946 = vadd.f32 0.0, %v3945
    %3947 = vmatprep.mubr.bf16.mxu0 %v2341
    %3948 = vmatmul.mubr.bf16.gmra.mrb[0].mxu0 %v1970
    %v3949 = vpop.f32.mrb[0].mxu0
    %v3950 = vadd.f32 0.0, %v3949
    %v3951 = vpop.f32.mrb[0].mxu0
    %v3952 = vadd.f32 0.0, %v3951
    %v3953 = vpop.f32.mrb[0].mxu0
    %v3954 = vadd.f32 0.0, %v3953
    %v3955 = vpop.f32.mrb[0].mxu0
    %v3956 = vadd.f32 0.0, %v3955
    %3957 = vmatprep.mubr.bf16.mxu0 %v2344
    %3958 = vmatmul.mubr.bf16.gmra.mrb[0].mxu0 %v1972
    %v3959 = vpop.f32.mrb[0].mxu0
    %v3960 = vadd.f32 0.0, %v3959
    %v3961 = vpop.f32.mrb[0].mxu0
    %v3962 = vadd.f32 0.0, %v3961
    %v3963 = vpop.f32.mrb[0].mxu0
    %v3964 = vadd.f32 0.0, %v3963
    %v3965 = vpop.f32.mrb[0].mxu0
    %v3966 = vadd.f32 0.0, %v3965
    %3967 = vmatprep.mubr.bf16.mxu0 %v2347
    %3968 = vmatmul.mubr.bf16.gmra.mrb[0].mxu0 %v1974
    %v3969 = vpop.f32.mrb[0].mxu0
    %v3970 = vadd.f32 0.0, %v3969
    %v3971 = vpop.f32.mrb[0].mxu0
    %v3972 = vadd.f32 0.0, %v3971
    %v3973 = vpop.f32.mrb[0].mxu0
    %v3974 = vadd.f32 0.0, %v3973
    %v3975 = vpop.f32.mrb[0].mxu0
    %v3976 = vadd.f32 0.0, %v3975
    %3977 = vmatprep.mubr.bf16.mxu0 %v2350
    %3978 = vmatmul.mubr.bf16.gmra.mrb[0].mxu0 %v1976
    %v3979 = vpop.f32.mrb[0].mxu0
    %v3980 = vadd.f32 0.0, %v3979
    %v3981 = vpop.f32.mrb[0].mxu0
    %v3982 = vadd.f32 0.0, %v3981
    %v3983 = vpop.f32.mrb[0].mxu0
    %v3984 = vadd.f32 0.0, %v3983
    %v3985 = vpop.f32.mrb[0].mxu0
    %v3986 = vadd.f32 0.0, %v3985
    %3987 = vmatprep.mubr.bf16.mxu0 %v2353
    %3988 = vmatmul.mubr.bf16.gmra.mrb[0].mxu0 %v1978
    %v3989 = vpop.f32.mrb[0].mxu0
    %v3990 = vadd.f32 0.0, %v3989
    %v3991 = vpop.f32.mrb[0].mxu0
    %v3992 = vadd.f32 0.0, %v3991
    %v3993 = vpop.f32.mrb[0].mxu0
    %v3994 = vadd.f32 0.0, %v3993
    %v3995 = vpop.f32.mrb[0].mxu0
    %v3996 = vadd.f32 0.0, %v3995
    %3997 = vmatprep.mubr.bf16.mxu0 %v2356
    %3998 = vmatmul.mubr.bf16.gmra.mrb[0].mxu0 %v1980
    %v3999 = vpop.f32.mrb[0].mxu0
    %v4000 = vadd.f32 0.0, %v3999
    %v4001 = vpop.f32.mrb[0].mxu0
    %v4002 = vadd.f32 0.0, %v4001
    %v4003 = vpop.f32.mrb[0].mxu0
    %v4004 = vadd.f32 0.0, %v4003
    %v4005 = vpop.f32.mrb[0].mxu0
    %v4006 = vadd.f32 0.0, %v4005
    %4007 = vmatprep.mubr.bf16.mxu0 %v2359
    %4008 = vmatmul.mubr.bf16.gmra.mrb[0].mxu0 %v1982
    %v4009 = vpop.f32.mrb[0].mxu0
    %v4010 = vadd.f32 0.0, %v4009
    %v4011 = vpop.f32.mrb[0].mxu0
    %v4012 = vadd.f32 0.0, %v4011
    %v4013 = vpop.f32.mrb[0].mxu0
    %v4014 = vadd.f32 0.0, %v4013
    %v4015 = vpop.f32.mrb[0].mxu0
    %v4016 = vadd.f32 0.0, %v4015
    %4017 = vmatprep.mubr.bf16.mxu0 %v2362
    %4018 = vmatmul.mubr.bf16.gmra.mrb[0].mxu0 %v1984
    %v4019 = vpop.f32.mrb[0].mxu0
    %v4020 = vadd.f32 0.0, %v4019
    %v4021 = vpop.f32.mrb[0].mxu0
    %v4022 = vadd.f32 0.0, %v4021
    %v4023 = vpop.f32.mrb[0].mxu0
    %v4024 = vadd.f32 0.0, %v4023
    %v4025 = vpop.f32.mrb[0].mxu0
    %v4026 = vadd.f32 0.0, %v4025
    %4027 = vmatprep.mubr.bf16.mxu0 %v2365
    %4028 = vmatmul.mubr.bf16.gmra.mrb[0].mxu0 %v1986
    %v4029 = vpop.f32.mrb[0].mxu0
    %v4030 = vadd.f32 0.0, %v4029
    %v4031 = vpop.f32.mrb[0].mxu0
    %v4032 = vadd.f32 0.0, %v4031
    %v4033 = vpop.f32.mrb[0].mxu0
    %v4034 = vadd.f32 0.0, %v4033
    %v4035 = vpop.f32.mrb[0].mxu0
    %v4036 = vadd.f32 0.0, %v4035
    %4037 = vmatprep.mubr.bf16.mxu0 %v2368
    %4038 = vmatmul.mubr.bf16.gmra.mrb[0].mxu0 %v1988
    %v4039 = vpop.f32.mrb[0].mxu0
    %v4040 = vadd.f32 0.0, %v4039
    %v4041 = vpop.f32.mrb[0].mxu0
    %v4042 = vadd.f32 0.0, %v4041
    %v4043 = vpop.f32.mrb[0].mxu0
    %v4044 = vadd.f32 0.0, %v4043
    %v4045 = vpop.f32.mrb[0].mxu0
    %v4046 = vadd.f32 0.0, %v4045
    %4047 = vmatprep.mubr.bf16.mxu0 %v2371
    %4048 = vmatmul.mubr.bf16.gmra.mrb[0].mxu0 %v1990
    %v4049 = vpop.f32.mrb[0].mxu0
    %v4050 = vadd.f32 0.0, %v4049
    %v4051 = vpop.f32.mrb[0].mxu0
    %v4052 = vadd.f32 0.0, %v4051
    %v4053 = vpop.f32.mrb[0].mxu0
    %v4054 = vadd.f32 0.0, %v4053
    %v4055 = vpop.f32.mrb[0].mxu0
    %v4056 = vadd.f32 0.0, %v4055
    %4057 = vmatprep.mubr.bf16.mxu0 %v2374
    %4058 = vmatmul.mubr.bf16.gmra.mrb[0].mxu0 %v1992
    %v4059 = vpop.f32.mrb[0].mxu0
    %v4060 = vadd.f32 0.0, %v4059
    %v4061 = vpop.f32.mrb[0].mxu0
    %v4062 = vadd.f32 0.0, %v4061
    %v4063 = vpop.f32.mrb[0].mxu0
    %v4064 = vadd.f32 0.0, %v4063
    %v4065 = vpop.f32.mrb[0].mxu0
    %v4066 = vadd.f32 0.0, %v4065
    %4067 = vmatprep.mubr.bf16.mxu0 %v2377
    %4068 = vmatmul.mubr.bf16.gmra.mrb[0].mxu0 %v1994
    %v4069 = vpop.f32.mrb[0].mxu0
    %v4070 = vadd.f32 0.0, %v4069
    %v4071 = vpop.f32.mrb[0].mxu0
    %v4072 = vadd.f32 0.0, %v4071
    %v4073 = vpop.f32.mrb[0].mxu0
    %v4074 = vadd.f32 0.0, %v4073
    %v4075 = vpop.f32.mrb[0].mxu0
    %v4076 = vadd.f32 0.0, %v4075
    %4077 = vmatprep.mubr.bf16.mxu0 %v2380
    %4078 = vmatmul.mubr.bf16.gmra.mrb[0].mxu0 %v1996
    %v4079 = vpop.f32.mrb[0].mxu0
    %v4080 = vadd.f32 0.0, %v4079
    %v4081 = vpop.f32.mrb[0].mxu0
    %v4082 = vadd.f32 0.0, %v4081
    %v4083 = vpop.f32.mrb[0].mxu0
    %v4084 = vadd.f32 0.0, %v4083
    %v4085 = vpop.f32.mrb[0].mxu0
    %v4086 = vadd.f32 0.0, %v4085
    %4087 = vmatprep.mubr.bf16.mxu0 %v2383
    %4088 = vmatmul.mubr.bf16.gmra.mrb[0].mxu0 %v1998
    %v4089 = vpop.f32.mrb[0].mxu0
    %v4090 = vadd.f32 0.0, %v4089
    %v4091 = vpop.f32.mrb[0].mxu0
    %v4092 = vadd.f32 0.0, %v4091
    %v4093 = vpop.f32.mrb[0].mxu0
    %v4094 = vadd.f32 0.0, %v4093
    %v4095 = vpop.f32.mrb[0].mxu0
    %v4096 = vadd.f32 0.0, %v4095
    %4097 = vmatprep.mubr.bf16.mxu0 %v2386
    %4098 = vmatmul.mubr.bf16.gmra.mrb[0].mxu0 %v2000
    %v4099 = vpop.f32.mrb[0].mxu0
    %v4100 = vadd.f32 0.0, %v4099
    %v4101 = vpop.f32.mrb[0].mxu0
    %v4102 = vadd.f32 0.0, %v4101
    %v4103 = vpop.f32.mrb[0].mxu0
    %v4104 = vadd.f32 0.0, %v4103
    %v4105 = vpop.f32.mrb[0].mxu0
    %v4106 = vadd.f32 0.0, %v4105
    %4107 = vmatprep.mubr.bf16.mxu0 %v2389
    %4108 = vmatmul.mubr.bf16.gmra.mrb[0].mxu0 %v2002
    %v4109 = vpop.f32.mrb[0].mxu0
    %v4110 = vadd.f32 0.0, %v4109
    %v4111 = vpop.f32.mrb[0].mxu0
    %v4112 = vadd.f32 0.0, %v4111
    %v4113 = vpop.f32.mrb[0].mxu0
    %v4114 = vadd.f32 0.0, %v4113
    %v4115 = vpop.f32.mrb[0].mxu0
    %v4116 = vadd.f32 0.0, %v4115
    %4117 = vmatprep.mubr.bf16.mxu0 %v2392
    %4118 = vmatmul.mubr.bf16.gmra.mrb[0].mxu0 %v2004
    %v4119 = vpop.f32.mrb[0].mxu0
    %v4120 = vadd.f32 0.0, %v4119
    %v4121 = vpop.f32.mrb[0].mxu0
    %v4122 = vadd.f32 0.0, %v4121
    %v4123 = vpop.f32.mrb[0].mxu0
    %v4124 = vadd.f32 0.0, %v4123
    %v4125 = vpop.f32.mrb[0].mxu0
    %v4126 = vadd.f32 0.0, %v4125
    %4127 = vmatprep.mubr.bf16.mxu0 %v3863
    %4128 = vmatmul.mubr.bf16.gmra.mrb[0].mxu0 %v2006
    %v4129 = vpop.f32.mrb[0].mxu0
    %v4130 = vadd.f32 0.0, %v4129
    %v4131 = vpop.f32.mrb[0].mxu0
    %v4132 = vadd.f32 0.0, %v4131
    %v4133 = vpop.f32.mrb[0].mxu0
    %v4134 = vadd.f32 0.0, %v4133
    %v4135 = vpop.f32.mrb[0].mxu0
    %v4136 = vadd.f32 0.0, %v4135
    %4137 = vdwg.mxu0
    %4138 = vmatprep.subr.bf16.mxu0 0
    %4139 = vmatpush1.bf16.msra.mxu0 %v3786
    %4140 = vmatprep.subr.bf16.mxu0 0
    %4141 = vmatpush1.bf16.msra.mxu0 %v3789
    %4142 = vmatprep.subr.bf16.mxu0 0
    %4143 = vmatpush1.bf16.msra.mxu0 %v3792
    %4144 = vmatprep.subr.bf16.mxu0 0
    %4145 = vmatpush1.bf16.msra.mxu0 %v3795
    %4146 = vmatprep.subr.bf16.mxu0 0
    %4147 = vmatpush1.bf16.msra.mxu0 %v3798
    %4148 = vmatprep.subr.bf16.mxu0 0
    %4149 = vmatpush1.bf16.msra.mxu0 %v3801
    %4150 = vmatprep.subr.bf16.mxu0 0
    %4151 = vmatpush1.bf16.msra.mxu0 %v3804
    %4152 = vmatprep.subr.bf16.mxu0 0
    %4153 = vmatpush1.bf16.msra.mxu0 %v3807
    %4154 = vmatprep.subr.bf16.mxu0 0
    %4155 = vmatpush1.bf16.msra.mxu0 %v3810
    %4156 = vmatprep.subr.bf16.mxu0 0
    %4157 = vmatpush1.bf16.msra.mxu0 %v3813
    %4158 = vmatprep.subr.bf16.mxu0 0
    %4159 = vmatpush1.bf16.msra.mxu0 %v3816
    %4160 = vmatprep.subr.bf16.mxu0 0
    %4161 = vmatpush1.bf16.msra.mxu0 %v3819
    %4162 = vmatprep.subr.bf16.mxu0 0
    %4163 = vmatpush1.bf16.msra.mxu0 %v3822
    %4164 = vmatprep.subr.bf16.mxu0 0
    %4165 = vmatpush1.bf16.msra.mxu0 0
    %4166 = vmatprep.subr.bf16.mxu0 0
    %4167 = vmatpush1.bf16.msra.mxu0 0
    %4168 = vmatprep.subr.bf16.mxu0 0
    %4169 = vmatpush1.bf16.msra.mxu0 0
    %4170 = vmatprep.mubr.bf16.mxu0 %v2326
    %4171 = vmatmul.mubr.bf16.gmra.mrb[0].mxu0 %v1960
    %v4172 = vpop.f32.mrb[0].mxu0
    %v4173 = vadd.f32 0.0, %v4172
    %v4174 = vpop.f32.mrb[0].mxu0
    %v4175 = vpop.f32.mrb[0].mxu0
    %v4176 = vadd.f32 0.0, %v4175
    %v4177 = vpop.f32.mrb[0].mxu0
    %4178 = vmatprep.mubr.bf16.mxu0 %v2329
    %4179 = vmatmul.mubr.bf16.gmra.mrb[0].mxu0 %v1962
    %v4180 = vpop.f32.mrb[0].mxu0
    %v4181 = vadd.f32 0.0, %v4180
    %v4182 = vpop.f32.mrb[0].mxu0
    %v4183 = vpop.f32.mrb[0].mxu0
    %v4184 = vadd.f32 0.0, %v4183
    %v4185 = vpop.f32.mrb[0].mxu0
    %4186 = vmatprep.mubr.bf16.mxu0 %v2332
    %4187 = vmatmul.mubr.bf16.gmra.mrb[0].mxu0 %v1964
    %v4188 = vpop.f32.mrb[0].mxu0
    %v4189 = vadd.f32 0.0, %v4188
    %v4190 = vpop.f32.mrb[0].mxu0
    %v4191 = vpop.f32.mrb[0].mxu0
    %v4192 = vadd.f32 0.0, %v4191
    %v4193 = vpop.f32.mrb[0].mxu0
    %4194 = vmatprep.mubr.bf16.mxu0 %v2335
    %4195 = vmatmul.mubr.bf16.gmra.mrb[0].mxu0 %v1966
    %v4196 = vpop.f32.mrb[0].mxu0
    %v4197 = vadd.f32 0.0, %v4196
    %v4198 = vpop.f32.mrb[0].mxu0
    %v4199 = vpop.f32.mrb[0].mxu0
    %v4200 = vadd.f32 0.0, %v4199
    %v4201 = vpop.f32.mrb[0].mxu0
    %4202 = vmatprep.mubr.bf16.mxu0 %v2338
    %4203 = vmatmul.mubr.bf16.gmra.mrb[0].mxu0 %v1968
    %v4204 = vpop.f32.mrb[0].mxu0
    %v4205 = vadd.f32 0.0, %v4204
    %v4206 = vpop.f32.mrb[0].mxu0
    %v4207 = vpop.f32.mrb[0].mxu0
    %v4208 = vadd.f32 0.0, %v4207
    %v4209 = vpop.f32.mrb[0].mxu0
    %4210 = vmatprep.mubr.bf16.mxu0 %v2341
    %4211 = vmatmul.mubr.bf16.gmra.mrb[0].mxu0 %v1970
    %v4212 = vpop.f32.mrb[0].mxu0
    %v4213 = vadd.f32 0.0, %v4212
    %v4214 = vpop.f32.mrb[0].mxu0
    %v4215 = vpop.f32.mrb[0].mxu0
    %v4216 = vadd.f32 0.0, %v4215
    %v4217 = vpop.f32.mrb[0].mxu0
    %4218 = vmatprep.mubr.bf16.mxu0 %v2344
    %4219 = vmatmul.mubr.bf16.gmra.mrb[0].mxu0 %v1972
    %v4220 = vpop.f32.mrb[0].mxu0
    %v4221 = vadd.f32 0.0, %v4220
    %v4222 = vpop.f32.mrb[0].mxu0
    %v4223 = vpop.f32.mrb[0].mxu0
    %v4224 = vadd.f32 0.0, %v4223
    %v4225 = vpop.f32.mrb[0].mxu0
    %4226 = vmatprep.mubr.bf16.mxu0 %v2347
    %4227 = vmatmul.mubr.bf16.gmra.mrb[0].mxu0 %v1974
    %v4228 = vpop.f32.mrb[0].mxu0
    %v4229 = vadd.f32 0.0, %v4228
    %v4230 = vpop.f32.mrb[0].mxu0
    %v4231 = vpop.f32.mrb[0].mxu0
    %v4232 = vadd.f32 0.0, %v4231
    %v4233 = vpop.f32.mrb[0].mxu0
    %4234 = vmatprep.mubr.bf16.mxu0 %v2350
    %4235 = vmatmul.mubr.bf16.gmra.mrb[0].mxu0 %v1976
    %v4236 = vpop.f32.mrb[0].mxu0
    %v4237 = vadd.f32 0.0, %v4236
    %v4238 = vpop.f32.mrb[0].mxu0
    %v4239 = vpop.f32.mrb[0].mxu0
    %v4240 = vadd.f32 0.0, %v4239
    %v4241 = vpop.f32.mrb[0].mxu0
    %4242 = vmatprep.mubr.bf16.mxu0 %v2353
    %4243 = vmatmul.mubr.bf16.gmra.mrb[0].mxu0 %v1978
    %v4244 = vpop.f32.mrb[0].mxu0
    %v4245 = vadd.f32 0.0, %v4244
    %v4246 = vpop.f32.mrb[0].mxu0
    %v4247 = vpop.f32.mrb[0].mxu0
    %v4248 = vadd.f32 0.0, %v4247
    %v4249 = vpop.f32.mrb[0].mxu0
    %4250 = vmatprep.mubr.bf16.mxu0 %v2356
    %4251 = vmatmul.mubr.bf16.gmra.mrb[0].mxu0 %v1980
    %v4252 = vpop.f32.mrb[0].mxu0
    %v4253 = vadd.f32 0.0, %v4252
    %v4254 = vpop.f32.mrb[0].mxu0
    %v4255 = vpop.f32.mrb[0].mxu0
    %v4256 = vadd.f32 0.0, %v4255
    %v4257 = vpop.f32.mrb[0].mxu0
    %4258 = vmatprep.mubr.bf16.mxu0 %v2359
    %4259 = vmatmul.mubr.bf16.gmra.mrb[0].mxu0 %v1982
    %v4260 = vpop.f32.mrb[0].mxu0
    %v4261 = vadd.f32 0.0, %v4260
    %v4262 = vpop.f32.mrb[0].mxu0
    %v4263 = vpop.f32.mrb[0].mxu0
    %v4264 = vadd.f32 0.0, %v4263
    %v4265 = vpop.f32.mrb[0].mxu0
    %4266 = vmatprep.mubr.bf16.mxu0 %v2362
    %4267 = vmatmul.mubr.bf16.gmra.mrb[0].mxu0 %v1984
    %v4268 = vpop.f32.mrb[0].mxu0
    %v4269 = vadd.f32 0.0, %v4268
    %v4270 = vpop.f32.mrb[0].mxu0
    %v4271 = vpop.f32.mrb[0].mxu0
    %v4272 = vadd.f32 0.0, %v4271
    %v4273 = vpop.f32.mrb[0].mxu0
    %4274 = vmatprep.mubr.bf16.mxu0 %v2365
    %4275 = vmatmul.mubr.bf16.gmra.mrb[0].mxu0 %v1986
    %v4276 = vpop.f32.mrb[0].mxu0
    %v4277 = vadd.f32 0.0, %v4276
    %v4278 = vpop.f32.mrb[0].mxu0
    %v4279 = vpop.f32.mrb[0].mxu0
    %v4280 = vadd.f32 0.0, %v4279
    %v4281 = vpop.f32.mrb[0].mxu0
    %4282 = vmatprep.mubr.bf16.mxu0 %v2368
    %4283 = vmatmul.mubr.bf16.gmra.mrb[0].mxu0 %v1988
    %v4284 = vpop.f32.mrb[0].mxu0
    %v4285 = vadd.f32 0.0, %v4284
    %v4286 = vpop.f32.mrb[0].mxu0
    %v4287 = vpop.f32.mrb[0].mxu0
    %v4288 = vadd.f32 0.0, %v4287
    %v4289 = vpop.f32.mrb[0].mxu0
    %4290 = vmatprep.mubr.bf16.mxu0 %v2371
    %4291 = vmatmul.mubr.bf16.gmra.mrb[0].mxu0 %v1990
    %v4292 = vpop.f32.mrb[0].mxu0
    %v4293 = vadd.f32 0.0, %v4292
    %v4294 = vpop.f32.mrb[0].mxu0
    %v4295 = vpop.f32.mrb[0].mxu0
    %v4296 = vadd.f32 0.0, %v4295
    %v4297 = vpop.f32.mrb[0].mxu0
    %4298 = vmatprep.mubr.bf16.mxu0 %v2374
    %4299 = vmatmul.mubr.bf16.gmra.mrb[0].mxu0 %v1992
    %v4300 = vpop.f32.mrb[0].mxu0
    %v4301 = vadd.f32 0.0, %v4300
    %v4302 = vpop.f32.mrb[0].mxu0
    %v4303 = vpop.f32.mrb[0].mxu0
    %v4304 = vadd.f32 0.0, %v4303
    %v4305 = vpop.f32.mrb[0].mxu0
    %4306 = vmatprep.mubr.bf16.mxu0 %v2377
    %4307 = vmatmul.mubr.bf16.gmra.mrb[0].mxu0 %v1994
    %v4308 = vpop.f32.mrb[0].mxu0
    %v4309 = vadd.f32 0.0, %v4308
    %v4310 = vpop.f32.mrb[0].mxu0
    %v4311 = vpop.f32.mrb[0].mxu0
    %v4312 = vadd.f32 0.0, %v4311
    %v4313 = vpop.f32.mrb[0].mxu0
    %4314 = vmatprep.mubr.bf16.mxu0 %v2380
    %4315 = vmatmul.mubr.bf16.gmra.mrb[0].mxu0 %v1996
    %v4316 = vpop.f32.mrb[0].mxu0
    %v4317 = vadd.f32 0.0, %v4316
    %v4318 = vpop.f32.mrb[0].mxu0
    %v4319 = vpop.f32.mrb[0].mxu0
    %v4320 = vadd.f32 0.0, %v4319
    %v4321 = vpop.f32.mrb[0].mxu0
    %4322 = vmatprep.mubr.bf16.mxu0 %v2383
    %4323 = vmatmul.mubr.bf16.gmra.mrb[0].mxu0 %v1998
    %v4324 = vpop.f32.mrb[0].mxu0
    %v4325 = vadd.f32 0.0, %v4324
    %v4326 = vpop.f32.mrb[0].mxu0
    %v4327 = vpop.f32.mrb[0].mxu0
    %v4328 = vadd.f32 0.0, %v4327
    %v4329 = vpop.f32.mrb[0].mxu0
    %4330 = vmatprep.mubr.bf16.mxu0 %v2386
    %4331 = vmatmul.mubr.bf16.gmra.mrb[0].mxu0 %v2000
    %v4332 = vpop.f32.mrb[0].mxu0
    %v4333 = vadd.f32 0.0, %v4332
    %v4334 = vpop.f32.mrb[0].mxu0
    %v4335 = vpop.f32.mrb[0].mxu0
    %v4336 = vadd.f32 0.0, %v4335
    %v4337 = vpop.f32.mrb[0].mxu0
    %4338 = vmatprep.mubr.bf16.mxu0 %v2389
    %4339 = vmatmul.mubr.bf16.gmra.mrb[0].mxu0 %v2002
    %v4340 = vpop.f32.mrb[0].mxu0
    %v4341 = vadd.f32 0.0, %v4340
    %v4342 = vpop.f32.mrb[0].mxu0
    %v4343 = vpop.f32.mrb[0].mxu0
    %v4344 = vadd.f32 0.0, %v4343
    %v4345 = vpop.f32.mrb[0].mxu0
    %4346 = vmatprep.mubr.bf16.mxu0 %v2392
    %4347 = vmatmul.mubr.bf16.gmra.mrb[0].mxu0 %v2004
    %v4348 = vpop.f32.mrb[0].mxu0
    %v4349 = vadd.f32 0.0, %v4348
    %v4350 = vpop.f32.mrb[0].mxu0
    %v4351 = vpop.f32.mrb[0].mxu0
    %v4352 = vadd.f32 0.0, %v4351
    %v4353 = vpop.f32.mrb[0].mxu0
    %4354 = vmatprep.mubr.bf16.mxu0 %v3863
    %4355 = vmatmul.mubr.bf16.gmra.mrb[0].mxu0 %v2006
    %v4356 = vpop.f32.mrb[0].mxu0
    %v4357 = vadd.f32 0.0, %v4356
    %v4358 = vpop.f32.mrb[0].mxu0
    %v4359 = vpop.f32.mrb[0].mxu0
    %v4360 = vadd.f32 0.0, %v4359
    %v4361 = vpop.f32.mrb[0].mxu0
    %4362 = vdwg.mxu0
    %v4363 = vadd.f32 %v3138, %v3900
    %v4364 = vadd.f32 %v3140, %v3902
    %v4365 = vadd.f32 %v3411, %v4173
    %v4366 = vadd.f32 %v3142, %v3904
    %v4367 = vadd.f32 %v3144, %v3906
    %v4368 = vadd.f32 %v3414, %v4176
    %v4369 = vadd.f32 %v3148, %v3910
    %v4370 = vadd.f32 %v3150, %v3912
    %v4371 = vadd.f32 %v3419, %v4181
    %v4372 = vadd.f32 %v3152, %v3914
    %v4373 = vadd.f32 %v3154, %v3916
    %v4374 = vadd.f32 %v3422, %v4184
    %v4375 = vadd.f32 %v3158, %v3920
    %v4376 = vadd.f32 %v3160, %v3922
    %v4377 = vadd.f32 %v3427, %v4189
    %v4378 = vadd.f32 %v3162, %v3924
    %v4379 = vadd.f32 %v3164, %v3926
    %v4380 = vadd.f32 %v3430, %v4192
    %v4381 = vadd.f32 %v3168, %v3930
    %v4382 = vadd.f32 %v3170, %v3932
    %v4383 = vadd.f32 %v3435, %v4197
    %v4384 = vadd.f32 %v3172, %v3934
    %v4385 = vadd.f32 %v3174, %v3936
    %v4386 = vadd.f32 %v3438, %v4200
    %v4387 = vadd.f32 %v3178, %v3940
    %v4388 = vadd.f32 %v3180, %v3942
    %v4389 = vadd.f32 %v3443, %v4205
    %v4390 = vadd.f32 %v3182, %v3944
    %v4391 = vadd.f32 %v3184, %v3946
    %v4392 = vadd.f32 %v3446, %v4208
    %v4393 = vadd.f32 %v3188, %v3950
    %v4394 = vadd.f32 %v3190, %v3952
    %v4395 = vadd.f32 %v3451, %v4213
    %v4396 = vadd.f32 %v3192, %v3954
    %v4397 = vadd.f32 %v3194, %v3956
    %v4398 = vadd.f32 %v3454, %v4216
    %v4399 = vadd.f32 %v3198, %v3960
    %v4400 = vadd.f32 %v3200, %v3962
    %v4401 = vadd.f32 %v3459, %v4221
    %v4402 = vadd.f32 %v3202, %v3964
    %v4403 = vadd.f32 %v3204, %v3966
    %v4404 = vadd.f32 %v3462, %v4224
    %v4405 = vadd.f32 %v3208, %v3970
    %v4406 = vadd.f32 %v3210, %v3972
    %v4407 = vadd.f32 %v3467, %v4229
    %v4408 = vadd.f32 %v3212, %v3974
    %v4409 = vadd.f32 %v3214, %v3976
    %v4410 = vadd.f32 %v3470, %v4232
    %v4411 = vadd.f32 %v3218, %v3980
    %v4412 = vadd.f32 %v3220, %v3982
    %v4413 = vadd.f32 %v3475, %v4237
    %v4414 = vadd.f32 %v3222, %v3984
    %v4415 = vadd.f32 %v3224, %v3986
    %v4416 = vadd.f32 %v3478, %v4240
    %v4417 = vadd.f32 %v3228, %v3990
    %v4418 = vadd.f32 %v3230, %v3992
    %v4419 = vadd.f32 %v3483, %v4245
    %v4420 = vadd.f32 %v3232, %v3994
    %v4421 = vadd.f32 %v3234, %v3996
    %v4422 = vadd.f32 %v3486, %v4248
    %v4423 = vadd.f32 %v3238, %v4000
    %v4424 = vadd.f32 %v3240, %v4002
    %v4425 = vadd.f32 %v3491, %v4253
    %v4426 = vadd.f32 %v3242, %v4004
    %v4427 = vadd.f32 %v3244, %v4006
    %v4428 = vadd.f32 %v3494, %v4256
    %v4429 = vadd.f32 %v3248, %v4010
    %v4430 = vadd.f32 %v3250, %v4012
    %v4431 = vadd.f32 %v3499, %v4261
    %v4432 = vadd.f32 %v3252, %v4014
    %v4433 = vadd.f32 %v3254, %v4016
    %v4434 = vadd.f32 %v3502, %v4264
    %v4435 = vadd.f32 %v3258, %v4020
    %v4436 = vadd.f32 %v3260, %v4022
    %v4437 = vadd.f32 %v3507, %v4269
    %v4438 = vadd.f32 %v3262, %v4024
    %v4439 = vadd.f32 %v3264, %v4026
    %v4440 = vadd.f32 %v3510, %v4272
    %v4441 = vadd.f32 %v3268, %v4030
    %v4442 = vadd.f32 %v3270, %v4032
    %v4443 = vadd.f32 %v3515, %v4277
    %v4444 = vadd.f32 %v3272, %v4034
    %v4445 = vadd.f32 %v3274, %v4036
    %v4446 = vadd.f32 %v3518, %v4280
    %v4447 = vadd.f32 %v3278, %v4040
    %v4448 = vadd.f32 %v3280, %v4042
    %v4449 = vadd.f32 %v3523, %v4285
    %v4450 = vadd.f32 %v3282, %v4044
    %v4451 = vadd.f32 %v3284, %v4046
    %v4452 = vadd.f32 %v3526, %v4288
    %v4453 = vadd.f32 %v3288, %v4050
    %v4454 = vadd.f32 %v3290, %v4052
    %v4455 = vadd.f32 %v3531, %v4293
    %v4456 = vadd.f32 %v3292, %v4054
    %v4457 = vadd.f32 %v3294, %v4056
    %v4458 = vadd.f32 %v3534, %v4296
    %v4459 = vadd.f32 %v3298, %v4060
    %v4460 = vadd.f32 %v3300, %v4062
    %v4461 = vadd.f32 %v3539, %v4301
    %v4462 = vadd.f32 %v3302, %v4064
    %v4463 = vadd.f32 %v3304, %v4066
    %v4464 = vadd.f32 %v3542, %v4304
    %v4465 = vadd.f32 %v3308, %v4070
    %v4466 = vadd.f32 %v3310, %v4072
    %v4467 = vadd.f32 %v3547, %v4309
    %v4468 = vadd.f32 %v3312, %v4074
    %v4469 = vadd.f32 %v3314, %v4076
    %v4470 = vadd.f32 %v3550, %v4312
    %v4471 = vadd.f32 %v3318, %v4080
    %v4472 = vadd.f32 %v3320, %v4082
    %v4473 = vadd.f32 %v3555, %v4317
    %v4474 = vadd.f32 %v3322, %v4084
    %v4475 = vadd.f32 %v3324, %v4086
    %v4476 = vadd.f32 %v3558, %v4320
    %v4477 = vadd.f32 %v3328, %v4090
    %v4478 = vadd.f32 %v3330, %v4092
    %v4479 = vadd.f32 %v3563, %v4325
    %v4480 = vadd.f32 %v3332, %v4094
    %v4481 = vadd.f32 %v3334, %v4096
    %v4482 = vadd.f32 %v3566, %v4328
    %v4483 = vadd.f32 %v3338, %v4100
    %v4484 = vadd.f32 %v3340, %v4102
    %v4485 = vadd.f32 %v3571, %v4333
    %v4486 = vadd.f32 %v3342, %v4104
    %v4487 = vadd.f32 %v3344, %v4106
    %v4488 = vadd.f32 %v3574, %v4336
    %v4489 = vadd.f32 %v3348, %v4110
    %v4490 = vadd.f32 %v3350, %v4112
    %v4491 = vadd.f32 %v3579, %v4341
    %v4492 = vadd.f32 %v3352, %v4114
    %v4493 = vadd.f32 %v3354, %v4116
    %v4494 = vadd.f32 %v3582, %v4344
    %v4495 = vadd.f32 %v3358, %v4120
    %v4496 = vadd.f32 %v3360, %v4122
    %v4497 = vadd.f32 %v3587, %v4349
    %v4498 = vadd.f32 %v3362, %v4124
    %v4499 = vadd.f32 %v3364, %v4126
    %v4500 = vadd.f32 %v3590, %v4352
    %v4501 = vadd.f32 %v3368, %v4130
    %v4502 = vadd.f32 %v3370, %v4132
    %v4503 = vadd.f32 %v3595, %v4357
    %v4504 = vadd.f32 %v3372, %v4134
    %v4505 = vadd.f32 %v3374, %v4136
    %v4506 = vadd.f32 %v3598, %v4360
    %v4507 = vld [vmem:[#allocation6] sm:$0x7]
    %v4509 = vlaneseq
    %v4510 = vshrl.u32 %v4509, 7
    %v4511 = vsub.s32 0, %v4510
    %v4512 = vrot.slane %v4507, %v4511
    %v4513 = vlaneseq
    %v4514 = vshrl.u32 %v4513, 7
    %v4515 = vsub.s32 1, %v4514
    %v4516 = vrot.slane %v4507, %v4515
    %v4517 = vlaneseq
    %v4518 = vshrl.u32 %v4517, 7
    %v4519 = vsub.s32 2, %v4518
    %v4520 = vrot.slane %v4507, %v4519
    %v4524 = vmul.f32 %v4363, %v4512
    %v4525 = vmul.f32 %v4364, %v4516
    %v4526 = vmul.f32 %v4365, %v4520
    %v4527 = vmul.f32 %v4366, %v4512
    %v4528 = vmul.f32 %v4367, %v4516
    %v4529 = vmul.f32 %v4368, %v4520
    %v4530 = vmul.f32 %v4369, %v4512
    %v4531 = vmul.f32 %v4370, %v4516
    %v4532 = vmul.f32 %v4371, %v4520
    %v4533 = vmul.f32 %v4372, %v4512
    %v4534 = vmul.f32 %v4373, %v4516
    %v4535 = vmul.f32 %v4374, %v4520
    %v4536 = vmul.f32 %v4375, %v4512
    %v4537 = vmul.f32 %v4376, %v4516
    %v4538 = vmul.f32 %v4377, %v4520
    %v4539 = vmul.f32 %v4378, %v4512
    %v4540 = vmul.f32 %v4379, %v4516
    %v4541 = vmul.f32 %v4380, %v4520
    %v4542 = vmul.f32 %v4381, %v4512
    %v4543 = vmul.f32 %v4382, %v4516
    %v4544 = vmul.f32 %v4383, %v4520
    %v4545 = vmul.f32 %v4384, %v4512
    %v4546 = vmul.f32 %v4385, %v4516
    %v4547 = vmul.f32 %v4386, %v4520
    %v4548 = vmul.f32 %v4387, %v4512
    %v4549 = vmul.f32 %v4388, %v4516
    %v4550 = vmul.f32 %v4389, %v4520
    %v4551 = vmul.f32 %v4390, %v4512
    %v4552 = vmul.f32 %v4391, %v4516
    %v4553 = vmul.f32 %v4392, %v4520
    %v4554 = vmul.f32 %v4393, %v4512
    %v4555 = vmul.f32 %v4394, %v4516
    %v4556 = vmul.f32 %v4395, %v4520
    %v4557 = vmul.f32 %v4396, %v4512
    %v4558 = vmul.f32 %v4397, %v4516
    %v4559 = vmul.f32 %v4398, %v4520
    %v4560 = vmul.f32 %v4399, %v4512
    %v4561 = vmul.f32 %v4400, %v4516
    %v4562 = vmul.f32 %v4401, %v4520
    %v4563 = vmul.f32 %v4402, %v4512
    %v4564 = vmul.f32 %v4403, %v4516
    %v4565 = vmul.f32 %v4404, %v4520
    %v4566 = vmul.f32 %v4405, %v4512
    %v4567 = vmul.f32 %v4406, %v4516
    %v4568 = vmul.f32 %v4407, %v4520
    %v4569 = vmul.f32 %v4408, %v4512
    %v4570 = vmul.f32 %v4409, %v4516
    %v4571 = vmul.f32 %v4410, %v4520
    %v4572 = vmul.f32 %v4411, %v4512
    %v4573 = vmul.f32 %v4412, %v4516
    %v4574 = vmul.f32 %v4413, %v4520
    %v4575 = vmul.f32 %v4414, %v4512
    %v4576 = vmul.f32 %v4415, %v4516
    %v4577 = vmul.f32 %v4416, %v4520
    %v4578 = vmul.f32 %v4417, %v4512
    %v4579 = vmul.f32 %v4418, %v4516
    %v4580 = vmul.f32 %v4419, %v4520
    %v4581 = vmul.f32 %v4420, %v4512
    %v4582 = vmul.f32 %v4421, %v4516
    %v4583 = vmul.f32 %v4422, %v4520
    %v4584 = vmul.f32 %v4423, %v4512
    %v4585 = vmul.f32 %v4424, %v4516
    %v4586 = vmul.f32 %v4425, %v4520
    %v4587 = vmul.f32 %v4426, %v4512
    %v4588 = vmul.f32 %v4427, %v4516
    %v4589 = vmul.f32 %v4428, %v4520
    %v4590 = vmul.f32 %v4429, %v4512
    %v4591 = vmul.f32 %v4430, %v4516
    %v4592 = vmul.f32 %v4431, %v4520
    %v4593 = vmul.f32 %v4432, %v4512
    %v4594 = vmul.f32 %v4433, %v4516
    %v4595 = vmul.f32 %v4434, %v4520
    %v4596 = vmul.f32 %v4435, %v4512
    %v4597 = vmul.f32 %v4436, %v4516
    %v4598 = vmul.f32 %v4437, %v4520
    %v4599 = vmul.f32 %v4438, %v4512
    %v4600 = vmul.f32 %v4439, %v4516
    %v4601 = vmul.f32 %v4440, %v4520
    %v4602 = vmul.f32 %v4441, %v4512
    %v4603 = vmul.f32 %v4442, %v4516
    %v4604 = vmul.f32 %v4443, %v4520
    %v4605 = vmul.f32 %v4444, %v4512
    %v4606 = vmul.f32 %v4445, %v4516
    %v4607 = vmul.f32 %v4446, %v4520
    %v4608 = vmul.f32 %v4447, %v4512
    %v4609 = vmul.f32 %v4448, %v4516
    %v4610 = vmul.f32 %v4449, %v4520
    %v4611 = vmul.f32 %v4450, %v4512
    %v4612 = vmul.f32 %v4451, %v4516
    %v4613 = vmul.f32 %v4452, %v4520
    %v4614 = vmul.f32 %v4453, %v4512
    %v4615 = vmul.f32 %v4454, %v4516
    %v4616 = vmul.f32 %v4455, %v4520
    %v4617 = vmul.f32 %v4456, %v4512
    %v4618 = vmul.f32 %v4457, %v4516
    %v4619 = vmul.f32 %v4458, %v4520
    %v4620 = vmul.f32 %v4459, %v4512
    %v4621 = vmul.f32 %v4460, %v4516
    %v4622 = vmul.f32 %v4461, %v4520
    %v4623 = vmul.f32 %v4462, %v4512
    %v4624 = vmul.f32 %v4463, %v4516
    %v4625 = vmul.f32 %v4464, %v4520
    %v4626 = vmul.f32 %v4465, %v4512
    %v4627 = vmul.f32 %v4466, %v4516
    %v4628 = vmul.f32 %v4467, %v4520
    %v4629 = vmul.f32 %v4468, %v4512
    %v4630 = vmul.f32 %v4469, %v4516
    %v4631 = vmul.f32 %v4470, %v4520
    %v4632 = vmul.f32 %v4471, %v4512
    %v4633 = vmul.f32 %v4472, %v4516
    %v4634 = vmul.f32 %v4473, %v4520
    %v4635 = vmul.f32 %v4474, %v4512
    %v4636 = vmul.f32 %v4475, %v4516
    %v4637 = vmul.f32 %v4476, %v4520
    %v4638 = vmul.f32 %v4477, %v4512
    %v4639 = vmul.f32 %v4478, %v4516
    %v4640 = vmul.f32 %v4479, %v4520
    %v4641 = vmul.f32 %v4480, %v4512
    %v4642 = vmul.f32 %v4481, %v4516
    %v4643 = vmul.f32 %v4482, %v4520
    %v4644 = vmul.f32 %v4483, %v4512
    %v4645 = vmul.f32 %v4484, %v4516
    %v4646 = vmul.f32 %v4485, %v4520
    %v4647 = vmul.f32 %v4486, %v4512
    %v4648 = vmul.f32 %v4487, %v4516
    %v4649 = vmul.f32 %v4488, %v4520
    %v4650 = vmul.f32 %v4489, %v4512
    %v4651 = vmul.f32 %v4490, %v4516
    %v4652 = vmul.f32 %v4491, %v4520
    %v4653 = vmul.f32 %v4492, %v4512
    %v4654 = vmul.f32 %v4493, %v4516
    %v4655 = vmul.f32 %v4494, %v4520
    %v4656 = vmul.f32 %v4495, %v4512
    %v4657 = vmul.f32 %v4496, %v4516
    %v4658 = vmul.f32 %v4497, %v4520
    %v4659 = vmul.f32 %v4498, %v4512
    %v4660 = vmul.f32 %v4499, %v4516
    %v4661 = vmul.f32 %v4500, %v4520
    %v4662 = vmul.f32 %v4501, %v4512
    %v4663 = vmul.f32 %v4502, %v4516
    %v4664 = vmul.f32 %v4503, %v4520
    %v4665 = vmul.f32 %v4504, %v4512
    %v4666 = vmul.f32 %v4505, %v4516
    %v4667 = vmul.f32 %v4506, %v4520
    %v4668 = vld [vmem:[%s6] sm:$0x7]
    %v4670 = vlaneseq
    %v4671 = vshrl.u32 %v4670, 7
    %v4672 = vsub.s32 0, %v4671
    %v4673 = vrot.slane %v4668, %v4672
    %v4674 = vlaneseq
    %v4675 = vshrl.u32 %v4674, 7
    %v4676 = vsub.s32 1, %v4675
    %v4677 = vrot.slane %v4668, %v4676
    %v4678 = vlaneseq
    %v4679 = vshrl.u32 %v4678, 7
    %v4680 = vsub.s32 2, %v4679
    %v4681 = vrot.slane %v4668, %v4680
    %v4685 = vadd.f32 %v4524, %v4673
    %v4686 = vadd.f32 %v4525, %v4677
    %v4687 = vadd.f32 %v4526, %v4681
    %v4688 = vadd.f32 %v4527, %v4673
    %v4689 = vadd.f32 %v4528, %v4677
    %v4690 = vadd.f32 %v4529, %v4681
    %v4691 = vadd.f32 %v4530, %v4673
    %v4692 = vadd.f32 %v4531, %v4677
    %v4693 = vadd.f32 %v4532, %v4681
    %v4694 = vadd.f32 %v4533, %v4673
    %v4695 = vadd.f32 %v4534, %v4677
    %v4696 = vadd.f32 %v4535, %v4681
    %v4697 = vadd.f32 %v4536, %v4673
    %v4698 = vadd.f32 %v4537, %v4677
    %v4699 = vadd.f32 %v4538, %v4681
    %v4700 = vadd.f32 %v4539, %v4673
    %v4701 = vadd.f32 %v4540, %v4677
    %v4702 = vadd.f32 %v4541, %v4681
    %v4703 = vadd.f32 %v4542, %v4673
    %v4704 = vadd.f32 %v4543, %v4677
    %v4705 = vadd.f32 %v4544, %v4681
    %v4706 = vadd.f32 %v4545, %v4673
    %v4707 = vadd.f32 %v4546, %v4677
    %v4708 = vadd.f32 %v4547, %v4681
    %v4709 = vadd.f32 %v4548, %v4673
    %v4710 = vadd.f32 %v4549, %v4677
    %v4711 = vadd.f32 %v4550, %v4681
    %v4712 = vadd.f32 %v4551, %v4673
    %v4713 = vadd.f32 %v4552, %v4677
    %v4714 = vadd.f32 %v4553, %v4681
    %v4715 = vadd.f32 %v4554, %v4673
    %v4716 = vadd.f32 %v4555, %v4677
    %v4717 = vadd.f32 %v4556, %v4681
    %v4718 = vadd.f32 %v4557, %v4673
    %v4719 = vadd.f32 %v4558, %v4677
    %v4720 = vadd.f32 %v4559, %v4681
    %v4721 = vadd.f32 %v4560, %v4673
    %v4722 = vadd.f32 %v4561, %v4677
    %v4723 = vadd.f32 %v4562, %v4681
    %v4724 = vadd.f32 %v4563, %v4673
    %v4725 = vadd.f32 %v4564, %v4677
    %v4726 = vadd.f32 %v4565, %v4681
    %v4727 = vadd.f32 %v4566, %v4673
    %v4728 = vadd.f32 %v4567, %v4677
    %v4729 = vadd.f32 %v4568, %v4681
    %v4730 = vadd.f32 %v4569, %v4673
    %v4731 = vadd.f32 %v4570, %v4677
    %v4732 = vadd.f32 %v4571, %v4681
    %v4733 = vadd.f32 %v4572, %v4673
    %v4734 = vadd.f32 %v4573, %v4677
    %v4735 = vadd.f32 %v4574, %v4681
    %v4736 = vadd.f32 %v4575, %v4673
    %v4737 = vadd.f32 %v4576, %v4677
    %v4738 = vadd.f32 %v4577, %v4681
    %v4739 = vadd.f32 %v4578, %v4673
    %v4740 = vadd.f32 %v4579, %v4677
    %v4741 = vadd.f32 %v4580, %v4681
    %v4742 = vadd.f32 %v4581, %v4673
    %v4743 = vadd.f32 %v4582, %v4677
    %v4744 = vadd.f32 %v4583, %v4681
    %v4745 = vadd.f32 %v4584, %v4673
    %v4746 = vadd.f32 %v4585, %v4677
    %v4747 = vadd.f32 %v4586, %v4681
    %v4748 = vadd.f32 %v4587, %v4673
    %v4749 = vadd.f32 %v4588, %v4677
    %v4750 = vadd.f32 %v4589, %v4681
    %v4751 = vadd.f32 %v4590, %v4673
    %v4752 = vadd.f32 %v4591, %v4677
    %v4753 = vadd.f32 %v4592, %v4681
    %v4754 = vadd.f32 %v4593, %v4673
    %v4755 = vadd.f32 %v4594, %v4677
    %v4756 = vadd.f32 %v4595, %v4681
    %v4757 = vadd.f32 %v4596, %v4673
    %v4758 = vadd.f32 %v4597, %v4677
    %v4759 = vadd.f32 %v4598, %v4681
    %v4760 = vadd.f32 %v4599, %v4673
    %v4761 = vadd.f32 %v4600, %v4677
    %v4762 = vadd.f32 %v4601, %v4681
    %v4763 = vadd.f32 %v4602, %v4673
    %v4764 = vadd.f32 %v4603, %v4677
    %v4765 = vadd.f32 %v4604, %v4681
    %v4766 = vadd.f32 %v4605, %v4673
    %v4767 = vadd.f32 %v4606, %v4677
    %v4768 = vadd.f32 %v4607, %v4681
    %v4769 = vadd.f32 %v4608, %v4673
    %v4770 = vadd.f32 %v4609, %v4677
    %v4771 = vadd.f32 %v4610, %v4681
    %v4772 = vadd.f32 %v4611, %v4673
    %v4773 = vadd.f32 %v4612, %v4677
    %v4774 = vadd.f32 %v4613, %v4681
    %v4775 = vadd.f32 %v4614, %v4673
    %v4776 = vadd.f32 %v4615, %v4677
    %v4777 = vadd.f32 %v4616, %v4681
    %v4778 = vadd.f32 %v4617, %v4673
    %v4779 = vadd.f32 %v4618, %v4677
    %v4780 = vadd.f32 %v4619, %v4681
    %v4781 = vadd.f32 %v4620, %v4673
    %v4782 = vadd.f32 %v4621, %v4677
    %v4783 = vadd.f32 %v4622, %v4681
    %v4784 = vadd.f32 %v4623, %v4673
    %v4785 = vadd.f32 %v4624, %v4677
    %v4786 = vadd.f32 %v4625, %v4681
    %v4787 = vadd.f32 %v4626, %v4673
    %v4788 = vadd.f32 %v4627, %v4677
    %v4789 = vadd.f32 %v4628, %v4681
    %v4790 = vadd.f32 %v4629, %v4673
    %v4791 = vadd.f32 %v4630, %v4677
    %v4792 = vadd.f32 %v4631, %v4681
    %v4793 = vadd.f32 %v4632, %v4673
    %v4794 = vadd.f32 %v4633, %v4677
    %v4795 = vadd.f32 %v4634, %v4681
    %v4796 = vadd.f32 %v4635, %v4673
    %v4797 = vadd.f32 %v4636, %v4677
    %v4798 = vadd.f32 %v4637, %v4681
    %v4799 = vadd.f32 %v4638, %v4673
    %v4800 = vadd.f32 %v4639, %v4677
    %v4801 = vadd.f32 %v4640, %v4681
    %v4802 = vadd.f32 %v4641, %v4673
    %v4803 = vadd.f32 %v4642, %v4677
    %v4804 = vadd.f32 %v4643, %v4681
    %v4805 = vadd.f32 %v4644, %v4673
    %v4806 = vadd.f32 %v4645, %v4677
    %v4807 = vadd.f32 %v4646, %v4681
    %v4808 = vadd.f32 %v4647, %v4673
    %v4809 = vadd.f32 %v4648, %v4677
    %v4810 = vadd.f32 %v4649, %v4681
    %v4811 = vadd.f32 %v4650, %v4673
    %v4812 = vadd.f32 %v4651, %v4677
    %v4813 = vadd.f32 %v4652, %v4681
    %v4814 = vadd.f32 %v4653, %v4673
    %v4815 = vadd.f32 %v4654, %v4677
    %v4816 = vadd.f32 %v4655, %v4681
    %v4817 = vadd.f32 %v4656, %v4673
    %v4818 = vadd.f32 %v4657, %v4677
    %v4819 = vadd.f32 %v4658, %v4681
    %v4820 = vadd.f32 %v4659, %v4673
    %v4821 = vadd.f32 %v4660, %v4677
    %v4822 = vadd.f32 %v4661, %v4681
    %v4823 = vadd.f32 %v4662, %v4673
    %v4824 = vadd.f32 %v4663, %v4677
    %v4825 = vadd.f32 %v4664, %v4681
    %v4826 = vadd.f32 %v4665, %v4673
    %v4827 = vadd.f32 %v4666, %v4677
    %v4828 = vadd.f32 %v4667, %v4681
    %v4829 = vmax.f32 %v4685, 0.0
    %v4830 = vmax.f32 %v4686, 0.0
    %v4831 = vmax.f32 %v4687, 0.0
    %v4832 = vmax.f32 %v4688, 0.0
    %v4833 = vmax.f32 %v4689, 0.0
    %v4834 = vmax.f32 %v4690, 0.0
    %v4835 = vmax.f32 %v4691, 0.0
    %v4836 = vmax.f32 %v4692, 0.0
    %v4837 = vmax.f32 %v4693, 0.0
    %v4838 = vmax.f32 %v4694, 0.0
    %v4839 = vmax.f32 %v4695, 0.0
    %v4840 = vmax.f32 %v4696, 0.0
    %v4841 = vmax.f32 %v4697, 0.0
    %v4842 = vmax.f32 %v4698, 0.0
    %v4843 = vmax.f32 %v4699, 0.0
    %v4844 = vmax.f32 %v4700, 0.0
    %v4845 = vmax.f32 %v4701, 0.0
    %v4846 = vmax.f32 %v4702, 0.0
    %v4847 = vmax.f32 %v4703, 0.0
    %v4848 = vmax.f32 %v4704, 0.0
    %v4849 = vmax.f32 %v4705, 0.0
    %v4850 = vmax.f32 %v4706, 0.0
    %v4851 = vmax.f32 %v4707, 0.0
    %v4852 = vmax.f32 %v4708, 0.0
    %v4853 = vmax.f32 %v4709, 0.0
    %v4854 = vmax.f32 %v4710, 0.0
    %v4855 = vmax.f32 %v4711, 0.0
    %v4856 = vmax.f32 %v4712, 0.0
    %v4857 = vmax.f32 %v4713, 0.0
    %v4858 = vmax.f32 %v4714, 0.0
    %v4859 = vmax.f32 %v4715, 0.0
    %v4860 = vmax.f32 %v4716, 0.0
    %v4861 = vmax.f32 %v4717, 0.0
    %v4862 = vmax.f32 %v4718, 0.0
    %v4863 = vmax.f32 %v4719, 0.0
    %v4864 = vmax.f32 %v4720, 0.0
    %v4865 = vmax.f32 %v4721, 0.0
    %v4866 = vmax.f32 %v4722, 0.0
    %v4867 = vmax.f32 %v4723, 0.0
    %v4868 = vmax.f32 %v4724, 0.0
    %v4869 = vmax.f32 %v4725, 0.0
    %v4870 = vmax.f32 %v4726, 0.0
    %v4871 = vmax.f32 %v4727, 0.0
    %v4872 = vmax.f32 %v4728, 0.0
    %v4873 = vmax.f32 %v4729, 0.0
    %v4874 = vmax.f32 %v4730, 0.0
    %v4875 = vmax.f32 %v4731, 0.0
    %v4876 = vmax.f32 %v4732, 0.0
    %v4877 = vmax.f32 %v4733, 0.0
    %v4878 = vmax.f32 %v4734, 0.0
    %v4879 = vmax.f32 %v4735, 0.0
    %v4880 = vmax.f32 %v4736, 0.0
    %v4881 = vmax.f32 %v4737, 0.0
    %v4882 = vmax.f32 %v4738, 0.0
    %v4883 = vmax.f32 %v4739, 0.0
    %v4884 = vmax.f32 %v4740, 0.0
    %v4885 = vmax.f32 %v4741, 0.0
    %v4886 = vmax.f32 %v4742, 0.0
    %v4887 = vmax.f32 %v4743, 0.0
    %v4888 = vmax.f32 %v4744, 0.0
    %v4889 = vmax.f32 %v4745, 0.0
    %v4890 = vmax.f32 %v4746, 0.0
    %v4891 = vmax.f32 %v4747, 0.0
    %v4892 = vmax.f32 %v4748, 0.0
    %v4893 = vmax.f32 %v4749, 0.0
    %v4894 = vmax.f32 %v4750, 0.0
    %v4895 = vmax.f32 %v4751, 0.0
    %v4896 = vmax.f32 %v4752, 0.0
    %v4897 = vmax.f32 %v4753, 0.0
    %v4898 = vmax.f32 %v4754, 0.0
    %v4899 = vmax.f32 %v4755, 0.0
    %v4900 = vmax.f32 %v4756, 0.0
    %v4901 = vmax.f32 %v4757, 0.0
    %v4902 = vmax.f32 %v4758, 0.0
    %v4903 = vmax.f32 %v4759, 0.0
    %v4904 = vmax.f32 %v4760, 0.0
    %v4905 = vmax.f32 %v4761, 0.0
    %v4906 = vmax.f32 %v4762, 0.0
    %v4907 = vmax.f32 %v4763, 0.0
    %v4908 = vmax.f32 %v4764, 0.0
    %v4909 = vmax.f32 %v4765, 0.0
    %v4910 = vmax.f32 %v4766, 0.0
    %v4911 = vmax.f32 %v4767, 0.0
    %v4912 = vmax.f32 %v4768, 0.0
    %v4913 = vmax.f32 %v4769, 0.0
    %v4914 = vmax.f32 %v4770, 0.0
    %v4915 = vmax.f32 %v4771, 0.0
    %v4916 = vmax.f32 %v4772, 0.0
    %v4917 = vmax.f32 %v4773, 0.0
    %v4918 = vmax.f32 %v4774, 0.0
    %v4919 = vmax.f32 %v4775, 0.0
    %v4920 = vmax.f32 %v4776, 0.0
    %v4921 = vmax.f32 %v4777, 0.0
    %v4922 = vmax.f32 %v4778, 0.0
    %v4923 = vmax.f32 %v4779, 0.0
    %v4924 = vmax.f32 %v4780, 0.0
    %v4925 = vmax.f32 %v4781, 0.0
    %v4926 = vmax.f32 %v4782, 0.0
    %v4927 = vmax.f32 %v4783, 0.0
    %v4928 = vmax.f32 %v4784, 0.0
    %v4929 = vmax.f32 %v4785, 0.0
    %v4930 = vmax.f32 %v4786, 0.0
    %v4931 = vmax.f32 %v4787, 0.0
    %v4932 = vmax.f32 %v4788, 0.0
    %v4933 = vmax.f32 %v4789, 0.0
    %v4934 = vmax.f32 %v4790, 0.0
    %v4935 = vmax.f32 %v4791, 0.0
    %v4936 = vmax.f32 %v4792, 0.0
    %v4937 = vmax.f32 %v4793, 0.0
    %v4938 = vmax.f32 %v4794, 0.0
    %v4939 = vmax.f32 %v4795, 0.0
    %v4940 = vmax.f32 %v4796, 0.0
    %v4941 = vmax.f32 %v4797, 0.0
    %v4942 = vmax.f32 %v4798, 0.0
    %v4943 = vmax.f32 %v4799, 0.0
    %v4944 = vmax.f32 %v4800, 0.0
    %v4945 = vmax.f32 %v4801, 0.0
    %v4946 = vmax.f32 %v4802, 0.0
    %v4947 = vmax.f32 %v4803, 0.0
    %v4948 = vmax.f32 %v4804, 0.0
    %v4949 = vmax.f32 %v4805, 0.0
    %v4950 = vmax.f32 %v4806, 0.0
    %v4951 = vmax.f32 %v4807, 0.0
    %v4952 = vmax.f32 %v4808, 0.0
    %v4953 = vmax.f32 %v4809, 0.0
    %v4954 = vmax.f32 %v4810, 0.0
    %v4955 = vmax.f32 %v4811, 0.0
    %v4956 = vmax.f32 %v4812, 0.0
    %v4957 = vmax.f32 %v4813, 0.0
    %v4958 = vmax.f32 %v4814, 0.0
    %v4959 = vmax.f32 %v4815, 0.0
    %v4960 = vmax.f32 %v4816, 0.0
    %v4961 = vmax.f32 %v4817, 0.0
    %v4962 = vmax.f32 %v4818, 0.0
    %v4963 = vmax.f32 %v4819, 0.0
    %v4964 = vmax.f32 %v4820, 0.0
    %v4965 = vmax.f32 %v4821, 0.0
    %v4966 = vmax.f32 %v4822, 0.0
    %v4967 = vmax.f32 %v4823, 0.0
    %v4968 = vmax.f32 %v4824, 0.0
    %v4969 = vmax.f32 %v4825, 0.0
    %v4970 = vmax.f32 %v4826, 0.0
    %v4971 = vmax.f32 %v4827, 0.0
    %v4972 = vmax.f32 %v4828, 0.0
    %v4973 = vmax.f32 %v4829, %v4835
    %v4974 = vmax.f32 %v4830, %v4836
    %v4975 = vmax.f32 %v4831, %v4837
    %v4976 = vmax.f32 %v4832, %v4838
    %v4977 = vmax.f32 %v4833, %v4839
    %v4978 = vmax.f32 %v4834, %v4840
    %v4979 = vmax.f32 %v4841, %v4847
    %v4980 = vmax.f32 %v4842, %v4848
    %v4981 = vmax.f32 %v4843, %v4849
    %v4982 = vmax.f32 %v4844, %v4850
    %v4983 = vmax.f32 %v4845, %v4851
    %v4984 = vmax.f32 %v4846, %v4852
    %v4985 = vmax.f32 %v4853, %v4859
    %v4986 = vmax.f32 %v4854, %v4860
    %v4987 = vmax.f32 %v4855, %v4861
    %v4988 = vmax.f32 %v4856, %v4862
    %v4989 = vmax.f32 %v4857, %v4863
    %v4990 = vmax.f32 %v4858, %v4864
    %v4991 = vmax.f32 %v4865, %v4871
    %v4992 = vmax.f32 %v4866, %v4872
    %v4993 = vmax.f32 %v4867, %v4873
    %v4994 = vmax.f32 %v4868, %v4874
    %v4995 = vmax.f32 %v4869, %v4875
    %v4996 = vmax.f32 %v4870, %v4876
    %v4997 = vmax.f32 %v4877, %v4883
    %v4998 = vmax.f32 %v4878, %v4884
    %v4999 = vmax.f32 %v4879, %v4885
    %v5000 = vmax.f32 %v4880, %v4886
    %v5001 = vmax.f32 %v4881, %v4887
    %v5002 = vmax.f32 %v4882, %v4888
    %v5003 = vmax.f32 %v4889, %v4895
    %v5004 = vmax.f32 %v4890, %v4896
    %v5005 = vmax.f32 %v4891, %v4897
    %v5006 = vmax.f32 %v4892, %v4898
    %v5007 = vmax.f32 %v4893, %v4899
    %v5008 = vmax.f32 %v4894, %v4900
    %v5009 = vmax.f32 %v4901, %v4907
    %v5010 = vmax.f32 %v4902, %v4908
    %v5011 = vmax.f32 %v4903, %v4909
    %v5012 = vmax.f32 %v4904, %v4910
    %v5013 = vmax.f32 %v4905, %v4911
    %v5014 = vmax.f32 %v4906, %v4912
    %v5015 = vmax.f32 %v4913, %v4919
    %v5016 = vmax.f32 %v4914, %v4920
    %v5017 = vmax.f32 %v4915, %v4921
    %v5018 = vmax.f32 %v4916, %v4922
    %v5019 = vmax.f32 %v4917, %v4923
    %v5020 = vmax.f32 %v4918, %v4924
    %v5021 = vmax.f32 %v4925, %v4931
    %v5022 = vmax.f32 %v4926, %v4932
    %v5023 = vmax.f32 %v4927, %v4933
    %v5024 = vmax.f32 %v4928, %v4934
    %v5025 = vmax.f32 %v4929, %v4935
    %v5026 = vmax.f32 %v4930, %v4936
    %v5027 = vmax.f32 %v4937, %v4943
    %v5028 = vmax.f32 %v4938, %v4944
    %v5029 = vmax.f32 %v4939, %v4945
    %v5030 = vmax.f32 %v4940, %v4946
    %v5031 = vmax.f32 %v4941, %v4947
    %v5032 = vmax.f32 %v4942, %v4948
    %v5033 = vmax.f32 %v4949, %v4955
    %v5034 = vmax.f32 %v4950, %v4956
    %v5035 = vmax.f32 %v4951, %v4957
    %v5036 = vmax.f32 %v4952, %v4958
    %v5037 = vmax.f32 %v4953, %v4959
    %v5038 = vmax.f32 %v4954, %v4960
    %v5039 = vmax.f32 %v4961, %v4967
    %v5040 = vmax.f32 %v4962, %v4968
    %v5041 = vmax.f32 %v4963, %v4969
    %v5042 = vmax.f32 %v4964, %v4970
    %v5043 = vmax.f32 %v4965, %v4971
    %v5044 = vmax.f32 %v4966, %v4972
    %5117 = vrot.lane.b32.xlu0 %v4973, 112
    %v5118 = vpop.permute.xlu0 %5117
    %5119 = vrot.lane.b32.xlu0 %v4974, 112
    %v5120 = vpop.permute.xlu0 %5119
    %5121 = vrot.lane.b32.xlu0 %v4975, 112
    %v5122 = vpop.permute.xlu0 %5121
    %5123 = vrot.lane.b32.xlu0 %v4976, 112
    %v5124 = vpop.permute.xlu0 %5123
    %5125 = vrot.lane.b32.xlu0 %v4977, 112
    %v5126 = vpop.permute.xlu0 %5125
    %5127 = vrot.lane.b32.xlu0 %v4978, 112
    %v5128 = vpop.permute.xlu0 %5127
    %5129 = vrot.lane.b32.xlu0 %v4979, 112
    %v5130 = vpop.permute.xlu0 %5129
    %5131 = vrot.lane.b32.xlu0 %v4980, 112
    %v5132 = vpop.permute.xlu0 %5131
    %5133 = vrot.lane.b32.xlu0 %v4981, 112
    %v5134 = vpop.permute.xlu0 %5133
    %5135 = vrot.lane.b32.xlu0 %v4982, 112
    %v5136 = vpop.permute.xlu0 %5135
    %5137 = vrot.lane.b32.xlu0 %v4983, 112
    %v5138 = vpop.permute.xlu0 %5137
    %5139 = vrot.lane.b32.xlu0 %v4984, 112
    %v5140 = vpop.permute.xlu0 %5139
    %5141 = vrot.lane.b32.xlu0 %v4985, 112
    %v5142 = vpop.permute.xlu0 %5141
    %5143 = vrot.lane.b32.xlu0 %v4986, 112
    %v5144 = vpop.permute.xlu0 %5143
    %5145 = vrot.lane.b32.xlu0 %v4987, 112
    %v5146 = vpop.permute.xlu0 %5145
    %5147 = vrot.lane.b32.xlu0 %v4988, 112
    %v5148 = vpop.permute.xlu0 %5147
    %5149 = vrot.lane.b32.xlu0 %v4989, 112
    %v5150 = vpop.permute.xlu0 %5149
    %5151 = vrot.lane.b32.xlu0 %v4990, 112
    %v5152 = vpop.permute.xlu0 %5151
    %5153 = vrot.lane.b32.xlu0 %v4991, 112
    %v5154 = vpop.permute.xlu0 %5153
    %5155 = vrot.lane.b32.xlu0 %v4992, 112
    %v5156 = vpop.permute.xlu0 %5155
    %5157 = vrot.lane.b32.xlu0 %v4993, 112
    %v5158 = vpop.permute.xlu0 %5157
    %5159 = vrot.lane.b32.xlu0 %v4994, 112
    %v5160 = vpop.permute.xlu0 %5159
    %5161 = vrot.lane.b32.xlu0 %v4995, 112
    %v5162 = vpop.permute.xlu0 %5161
    %5163 = vrot.lane.b32.xlu0 %v4996, 112
    %v5164 = vpop.permute.xlu0 %5163
    %5165 = vrot.lane.b32.xlu0 %v4997, 112
    %v5166 = vpop.permute.xlu0 %5165
    %5167 = vrot.lane.b32.xlu0 %v4998, 112
    %v5168 = vpop.permute.xlu0 %5167
    %5169 = vrot.lane.b32.xlu0 %v4999, 112
    %v5170 = vpop.permute.xlu0 %5169
    %5171 = vrot.lane.b32.xlu0 %v5000, 112
    %v5172 = vpop.permute.xlu0 %5171
    %5173 = vrot.lane.b32.xlu0 %v5001, 112
    %v5174 = vpop.permute.xlu0 %5173
    %5175 = vrot.lane.b32.xlu0 %v5002, 112
    %v5176 = vpop.permute.xlu0 %5175
    %5177 = vrot.lane.b32.xlu0 %v5003, 112
    %v5178 = vpop.permute.xlu0 %5177
    %5179 = vrot.lane.b32.xlu0 %v5004, 112
    %v5180 = vpop.permute.xlu0 %5179
    %5181 = vrot.lane.b32.xlu0 %v5005, 112
    %v5182 = vpop.permute.xlu0 %5181
    %5183 = vrot.lane.b32.xlu0 %v5006, 112
    %v5184 = vpop.permute.xlu0 %5183
    %5185 = vrot.lane.b32.xlu0 %v5007, 112
    %v5186 = vpop.permute.xlu0 %5185
    %5187 = vrot.lane.b32.xlu0 %v5008, 112
    %v5188 = vpop.permute.xlu0 %5187
    %5189 = vrot.lane.b32.xlu0 %v5009, 112
    %v5190 = vpop.permute.xlu0 %5189
    %5191 = vrot.lane.b32.xlu0 %v5010, 112
    %v5192 = vpop.permute.xlu0 %5191
    %5193 = vrot.lane.b32.xlu0 %v5011, 112
    %v5194 = vpop.permute.xlu0 %5193
    %5195 = vrot.lane.b32.xlu0 %v5012, 112
    %v5196 = vpop.permute.xlu0 %5195
    %5197 = vrot.lane.b32.xlu0 %v5013, 112
    %v5198 = vpop.permute.xlu0 %5197
    %5199 = vrot.lane.b32.xlu0 %v5014, 112
    %v5200 = vpop.permute.xlu0 %5199
    %5201 = vrot.lane.b32.xlu0 %v5015, 112
    %v5202 = vpop.permute.xlu0 %5201
    %5203 = vrot.lane.b32.xlu0 %v5016, 112
    %v5204 = vpop.permute.xlu0 %5203
    %5205 = vrot.lane.b32.xlu0 %v5017, 112
    %v5206 = vpop.permute.xlu0 %5205
    %5207 = vrot.lane.b32.xlu0 %v5018, 112
    %v5208 = vpop.permute.xlu0 %5207
    %5209 = vrot.lane.b32.xlu0 %v5019, 112
    %v5210 = vpop.permute.xlu0 %5209
    %5211 = vrot.lane.b32.xlu0 %v5020, 112
    %v5212 = vpop.permute.xlu0 %5211
    %5213 = vrot.lane.b32.xlu0 %v5021, 112
    %v5214 = vpop.permute.xlu0 %5213
    %5215 = vrot.lane.b32.xlu0 %v5022, 112
    %v5216 = vpop.permute.xlu0 %5215
    %5217 = vrot.lane.b32.xlu0 %v5023, 112
    %v5218 = vpop.permute.xlu0 %5217
    %5219 = vrot.lane.b32.xlu0 %v5024, 112
    %v5220 = vpop.permute.xlu0 %5219
    %5221 = vrot.lane.b32.xlu0 %v5025, 112
    %v5222 = vpop.permute.xlu0 %5221
    %5223 = vrot.lane.b32.xlu0 %v5026, 112
    %v5224 = vpop.permute.xlu0 %5223
    %5225 = vrot.lane.b32.xlu0 %v5027, 112
    %v5226 = vpop.permute.xlu0 %5225
    %5227 = vrot.lane.b32.xlu0 %v5028, 112
    %v5228 = vpop.permute.xlu0 %5227
    %5229 = vrot.lane.b32.xlu0 %v5029, 112
    %v5230 = vpop.permute.xlu0 %5229
    %5231 = vrot.lane.b32.xlu0 %v5030, 112
    %v5232 = vpop.permute.xlu0 %5231
    %5233 = vrot.lane.b32.xlu0 %v5031, 112
    %v5234 = vpop.permute.xlu0 %5233
    %5235 = vrot.lane.b32.xlu0 %v5032, 112
    %v5236 = vpop.permute.xlu0 %5235
    %5237 = vrot.lane.b32.xlu0 %v5033, 112
    %v5238 = vpop.permute.xlu0 %5237
    %5239 = vrot.lane.b32.xlu0 %v5034, 112
    %v5240 = vpop.permute.xlu0 %5239
    %5241 = vrot.lane.b32.xlu0 %v5035, 112
    %v5242 = vpop.permute.xlu0 %5241
    %5243 = vrot.lane.b32.xlu0 %v5036, 112
    %v5244 = vpop.permute.xlu0 %5243
    %5245 = vrot.lane.b32.xlu0 %v5037, 112
    %v5246 = vpop.permute.xlu0 %5245
    %5247 = vrot.lane.b32.xlu0 %v5038, 112
    %v5248 = vpop.permute.xlu0 %5247
    %5249 = vrot.lane.b32.xlu0 %v5039, 112
    %v5250 = vpop.permute.xlu0 %5249
    %5251 = vrot.lane.b32.xlu0 %v5040, 112
    %v5252 = vpop.permute.xlu0 %5251
    %5253 = vrot.lane.b32.xlu0 %v5041, 112
    %v5254 = vpop.permute.xlu0 %5253
    %5255 = vrot.lane.b32.xlu0 %v5042, 112
    %v5256 = vpop.permute.xlu0 %5255
    %5257 = vrot.lane.b32.xlu0 %v5043, 112
    %v5258 = vpop.permute.xlu0 %5257
    %5259 = vrot.lane.b32.xlu0 %v5044, 112
    %v5260 = vpop.permute.xlu0 %5259
    %vm5261 = vcmask 916480
    %v5262 = vsel %vm5261, %v5118, %v5120
    %v5263 = vsel %vm5261, %v5120, %v5122
    %v5264 = vsel %vm5261, %v5124, %v5126
    %v5265 = vsel %vm5261, %v5126, %v5128
    %v5266 = vsel %vm5261, %v5130, %v5132
    %v5267 = vsel %vm5261, %v5132, %v5134
    %v5268 = vsel %vm5261, %v5136, %v5138
    %v5269 = vsel %vm5261, %v5138, %v5140
    %v5270 = vsel %vm5261, %v5142, %v5144
    %v5271 = vsel %vm5261, %v5144, %v5146
    %v5272 = vsel %vm5261, %v5148, %v5150
    %v5273 = vsel %vm5261, %v5150, %v5152
    %v5274 = vsel %vm5261, %v5154, %v5156
    %v5275 = vsel %vm5261, %v5156, %v5158
    %v5276 = vsel %vm5261, %v5160, %v5162
    %v5277 = vsel %vm5261, %v5162, %v5164
    %v5278 = vsel %vm5261, %v5166, %v5168
    %v5279 = vsel %vm5261, %v5168, %v5170
    %v5280 = vsel %vm5261, %v5172, %v5174
    %v5281 = vsel %vm5261, %v5174, %v5176
    %v5282 = vsel %vm5261, %v5178, %v5180
    %v5283 = vsel %vm5261, %v5180, %v5182
    %v5284 = vsel %vm5261, %v5184, %v5186
    %v5285 = vsel %vm5261, %v5186, %v5188
    %v5286 = vsel %vm5261, %v5190, %v5192
    %v5287 = vsel %vm5261, %v5192, %v5194
    %v5288 = vsel %vm5261, %v5196, %v5198
    %v5289 = vsel %vm5261, %v5198, %v5200
    %v5290 = vsel %vm5261, %v5202, %v5204
    %v5291 = vsel %vm5261, %v5204, %v5206
    %v5292 = vsel %vm5261, %v5208, %v5210
    %v5293 = vsel %vm5261, %v5210, %v5212
    %v5294 = vsel %vm5261, %v5214, %v5216
    %v5295 = vsel %vm5261, %v5216, %v5218
    %v5296 = vsel %vm5261, %v5220, %v5222
    %v5297 = vsel %vm5261, %v5222, %v5224
    %v5298 = vsel %vm5261, %v5226, %v5228
    %v5299 = vsel %vm5261, %v5228, %v5230
    %v5300 = vsel %vm5261, %v5232, %v5234
    %v5301 = vsel %vm5261, %v5234, %v5236
    %v5302 = vsel %vm5261, %v5238, %v5240
    %v5303 = vsel %vm5261, %v5240, %v5242
    %v5304 = vsel %vm5261, %v5244, %v5246
    %v5305 = vsel %vm5261, %v5246, %v5248
    %v5306 = vsel %vm5261, %v5250, %v5252
    %v5307 = vsel %vm5261, %v5252, %v5254
    %v5308 = vsel %vm5261, %v5256, %v5258
    %v5309 = vsel %vm5261, %v5258, %v5260
    %v5382 = vmax.f32 %v4973, %v5262
    %v5383 = vmax.f32 %v4974, %v5263
    %v5384 = vmax.f32 %v4975, %v5122
    %v5385 = vmax.f32 %v4976, %v5264
    %v5386 = vmax.f32 %v4977, %v5265
    %v5387 = vmax.f32 %v4978, %v5128
    %v5388 = vmax.f32 %v4979, %v5266
    %v5389 = vmax.f32 %v4980, %v5267
    %v5390 = vmax.f32 %v4981, %v5134
    %v5391 = vmax.f32 %v4982, %v5268
    %v5392 = vmax.f32 %v4983, %v5269
    %v5393 = vmax.f32 %v4984, %v5140
    %v5394 = vmax.f32 %v4985, %v5270
    %v5395 = vmax.f32 %v4986, %v5271
    %v5396 = vmax.f32 %v4987, %v5146
    %v5397 = vmax.f32 %v4988, %v5272
    %v5398 = vmax.f32 %v4989, %v5273
    %v5399 = vmax.f32 %v4990, %v5152
    %v5400 = vmax.f32 %v4991, %v5274
    %v5401 = vmax.f32 %v4992, %v5275
    %v5402 = vmax.f32 %v4993, %v5158
    %v5403 = vmax.f32 %v4994, %v5276
    %v5404 = vmax.f32 %v4995, %v5277
    %v5405 = vmax.f32 %v4996, %v5164
    %v5406 = vmax.f32 %v4997, %v5278
    %v5407 = vmax.f32 %v4998, %v5279
    %v5408 = vmax.f32 %v4999, %v5170
    %v5409 = vmax.f32 %v5000, %v5280
    %v5410 = vmax.f32 %v5001, %v5281
    %v5411 = vmax.f32 %v5002, %v5176
    %v5412 = vmax.f32 %v5003, %v5282
    %v5413 = vmax.f32 %v5004, %v5283
    %v5414 = vmax.f32 %v5005, %v5182
    %v5415 = vmax.f32 %v5006, %v5284
    %v5416 = vmax.f32 %v5007, %v5285
    %v5417 = vmax.f32 %v5008, %v5188
    %v5418 = vmax.f32 %v5009, %v5286
    %v5419 = vmax.f32 %v5010, %v5287
    %v5420 = vmax.f32 %v5011, %v5194
    %v5421 = vmax.f32 %v5012, %v5288
    %v5422 = vmax.f32 %v5013, %v5289
    %v5423 = vmax.f32 %v5014, %v5200
    %v5424 = vmax.f32 %v5015, %v5290
    %v5425 = vmax.f32 %v5016, %v5291
    %v5426 = vmax.f32 %v5017, %v5206
    %v5427 = vmax.f32 %v5018, %v5292
    %v5428 = vmax.f32 %v5019, %v5293
    %v5429 = vmax.f32 %v5020, %v5212
    %v5430 = vmax.f32 %v5021, %v5294
    %v5431 = vmax.f32 %v5022, %v5295
    %v5432 = vmax.f32 %v5023, %v5218
    %v5433 = vmax.f32 %v5024, %v5296
    %v5434 = vmax.f32 %v5025, %v5297
    %v5435 = vmax.f32 %v5026, %v5224
    %v5436 = vmax.f32 %v5027, %v5298
    %v5437 = vmax.f32 %v5028, %v5299
    %v5438 = vmax.f32 %v5029, %v5230
    %v5439 = vmax.f32 %v5030, %v5300
    %v5440 = vmax.f32 %v5031, %v5301
    %v5441 = vmax.f32 %v5032, %v5236
    %v5442 = vmax.f32 %v5033, %v5302
    %v5443 = vmax.f32 %v5034, %v5303
    %v5444 = vmax.f32 %v5035, %v5242
    %v5445 = vmax.f32 %v5036, %v5304
    %v5446 = vmax.f32 %v5037, %v5305
    %v5447 = vmax.f32 %v5038, %v5248
    %v5448 = vmax.f32 %v5039, %v5306
    %v5449 = vmax.f32 %v5040, %v5307
    %v5450 = vmax.f32 %v5041, %v5254
    %v5451 = vmax.f32 %v5042, %v5308
    %v5452 = vmax.f32 %v5043, %v5309
    %v5453 = vmax.f32 %v5044, %v5260
    %v5454 = vpack.c.bf16 %v5385, %v5382
    %v5455 = vpack.c.bf16 %v5386, %v5383
    %v5456 = vpack.c.bf16 %v5387, %v5384
    %v5457 = vpack.c.bf16 %v5391, %v5388
    %v5458 = vpack.c.bf16 %v5392, %v5389
    %v5459 = vpack.c.bf16 %v5393, %v5390
    %v5460 = vpack.c.bf16 %v5397, %v5394
    %v5461 = vpack.c.bf16 %v5398, %v5395
    %v5462 = vpack.c.bf16 %v5399, %v5396
    %v5463 = vpack.c.bf16 %v5403, %v5400
    %v5464 = vpack.c.bf16 %v5404, %v5401
    %v5465 = vpack.c.bf16 %v5405, %v5402
    %v5466 = vpack.c.bf16 %v5409, %v5406
    %v5467 = vpack.c.bf16 %v5410, %v5407
    %v5468 = vpack.c.bf16 %v5411, %v5408
    %v5469 = vpack.c.bf16 %v5415, %v5412
    %v5470 = vpack.c.bf16 %v5416, %v5413
    %v5471 = vpack.c.bf16 %v5417, %v5414
    %v5472 = vpack.c.bf16 %v5421, %v5418
    %v5473 = vpack.c.bf16 %v5422, %v5419
    %v5474 = vpack.c.bf16 %v5423, %v5420
    %v5475 = vpack.c.bf16 %v5427, %v5424
    %v5476 = vpack.c.bf16 %v5428, %v5425
    %v5477 = vpack.c.bf16 %v5429, %v5426
    %v5478 = vpack.c.bf16 %v5433, %v5430
    %v5479 = vpack.c.bf16 %v5434, %v5431
    %v5480 = vpack.c.bf16 %v5435, %v5432
    %v5481 = vpack.c.bf16 %v5439, %v5436
    %v5482 = vpack.c.bf16 %v5440, %v5437
    %v5483 = vpack.c.bf16 %v5441, %v5438
    %v5484 = vpack.c.bf16 %v5445, %v5442
    %v5485 = vpack.c.bf16 %v5446, %v5443
    %v5486 = vpack.c.bf16 %v5447, %v5444
    %v5487 = vpack.c.bf16 %v5451, %v5448
    %v5488 = vpack.c.bf16 %v5452, %v5449
    %v5489 = vpack.c.bf16 %v5453, %v5450
    %v5490 = vld [vmem:[%s7] sm:$0xf]
    %v5491 = vld [vmem:[%s7 + $0x4] sm:$0xf]
    %v5492 = vld [vmem:[%s7 + $0x8] sm:$0xf]
    %v5493 = vld [vmem:[%s7 + $0xc] sm:$0xf]
    %v5494 = vld [vmem:[%s7 + $0x10] sm:$0xf]
    %v5495 = vld [vmem:[%s7 + $0x14] sm:$0xf]
    %v5496 = vld [vmem:[%s7 + $0x18] sm:$0xf]
    %v5497 = vld [vmem:[%s7 + $0x1c] sm:$0xf]
    %v5498 = vld [vmem:[%s7 + $0x20] sm:$0xf]
    %v5499 = vld [vmem:[%s7 + $0x24] sm:$0xf]
    %v5500 = vld [vmem:[%s7 + $0x28] sm:$0xf]
    %v5501 = vld [vmem:[%s7 + $0x2c] sm:$0xf]
    %v5502 = vld [vmem:[%s7 + $0x30] sm:$0xf]
    %v5503 = vld [vmem:[%s7 + $0x34] sm:$0xf]
    %v5504 = vld [vmem:[%s7 + $0x38] sm:$0xf]
    %v5505 = vld [vmem:[%s7 + $0x3c] sm:$0xf]
    %v5506 = vld [vmem:[%s7 + $0x40] sm:$0xf]
    %v5507 = vld [vmem:[%s7 + $0x44] sm:$0xf]
    %v5508 = vld [vmem:[%s7 + $0x48] sm:$0xf]
    %v5509 = vld [vmem:[%s7 + $0x4c] sm:$0xf]
    %v5510 = vld [vmem:[%s7 + $0x50] sm:$0xf]
    %v5511 = vld [vmem:[%s7 + $0x54] sm:$0xf]
    %v5512 = vld [vmem:[%s7 + $0x58] sm:$0xf]
    %v5513 = vld [vmem:[%s7 + $0x5c] sm:$0xf]
    %v5514 = vld [vmem:[%s7 + $0x60] sm:$0xf]
    %v5515 = vld [vmem:[%s7 + $0x64] sm:$0xf]
    %v5516 = vld [vmem:[%s7 + $0x68] sm:$0xf]
    %v5517 = vld [vmem:[%s7 + $0x6c] sm:$0xf]
    %v5518 = vld [vmem:[%s7 + $0x70] sm:$0xf]
    %v5519 = vld [vmem:[%s7 + $0x74] sm:$0xf]
    %v5520 = vld [vmem:[%s7 + $0x78] sm:$0xf]
    %v5521 = vld [vmem:[%s7 + $0x7c] sm:$0xf]
    %v5522 = vld [vmem:[%s7 + $0x80] sm:$0xf]
    %v5523 = vld [vmem:[%s7 + $0x84] sm:$0xf]
    %v5524 = vld [vmem:[%s7 + $0x88] sm:$0xf]
    %v5525 = vld [vmem:[%s7 + $0x8c] sm:$0xf]
    %v5526 = vld [vmem:[%s7 + $0x90] sm:$0xf]
    %v5527 = vld [vmem:[%s7 + $0x94] sm:$0xf]
    %v5528 = vld [vmem:[%s7 + $0x98] sm:$0xf]
    %v5529 = vld [vmem:[%s7 + $0x9c] sm:$0xf]
    %v5530 = vld [vmem:[%s7 + $0xa0] sm:$0xf]
    %v5531 = vld [vmem:[%s7 + $0xa4] sm:$0xf]
    %v5532 = vld [vmem:[%s7 + $0xa8] sm:$0xf]
    %v5533 = vld [vmem:[%s7 + $0xac] sm:$0xf]
    %v5534 = vld [vmem:[%s7 + $0xb0] sm:$0xf]
    %v5535 = vld [vmem:[%s7 + $0xb4] sm:$0xf]
    %v5582 = vunpack.c.l.b16 %v5490
    %v5583 = vunpack.c.l.b16 %v5491
    %v5584 = vunpack.c.l.b16 %v5492
    %v5585 = vunpack.c.l.b16 %v5493
    %v5586 = vunpack.c.l.b16 %v5494
    %v5587 = vunpack.c.l.b16 %v5495
    %v5588 = vunpack.c.l.b16 %v5496
    %v5589 = vunpack.c.l.b16 %v5497
    %v5590 = vunpack.c.l.b16 %v5498
    %v5591 = vunpack.c.l.b16 %v5499
    %v5592 = vunpack.c.l.b16 %v5500
    %v5593 = vunpack.c.l.b16 %v5501
    %v5594 = vunpack.c.l.b16 %v5502
    %v5595 = vunpack.c.l.b16 %v5503
    %v5596 = vunpack.c.l.b16 %v5504
    %v5597 = vunpack.c.l.b16 %v5505
    %v5598 = vunpack.c.l.b16 %v5506
    %v5599 = vunpack.c.l.b16 %v5507
    %v5600 = vunpack.c.l.b16 %v5508
    %v5601 = vunpack.c.l.b16 %v5509
    %v5602 = vunpack.c.l.b16 %v5510
    %v5603 = vunpack.c.l.b16 %v5511
    %v5604 = vunpack.c.l.b16 %v5512
    %v5605 = vunpack.c.l.b16 %v5513
    %v5606 = vunpack.c.l.b16 %v5514
    %v5607 = vunpack.c.l.b16 %v5515
    %v5608 = vunpack.c.l.b16 %v5516
    %v5609 = vunpack.c.l.b16 %v5517
    %v5610 = vunpack.c.l.b16 %v5518
    %v5611 = vunpack.c.l.b16 %v5519
    %v5612 = vunpack.c.l.b16 %v5520
    %v5613 = vunpack.c.l.b16 %v5521
    %v5614 = vunpack.c.l.b16 %v5522
    %v5615 = vunpack.c.l.b16 %v5523
    %v5616 = vunpack.c.l.b16 %v5524
    %v5617 = vunpack.c.l.b16 %v5525
    %v5618 = vunpack.c.l.b16 %v5526
    %v5619 = vunpack.c.l.b16 %v5527
    %v5620 = vunpack.c.l.b16 %v5528
    %v5621 = vunpack.c.l.b16 %v5529
    %v5622 = vunpack.c.l.b16 %v5530
    %v5623 = vunpack.c.l.b16 %v5531
    %v5624 = vunpack.c.l.b16 %v5532
    %v5625 = vunpack.c.l.b16 %v5533
    %v5626 = vunpack.c.l.b16 %v5534
    %v5627 = vunpack.c.l.b16 %v5535
    %v5628 = vpack.c.b16 %v5583, %v5582
    %v5629 = vpack.c.b16 %v5585, %v5584
    %v5630 = vpack.c.b16 %v5587, %v5586
    %v5631 = vpack.c.b16 %v5589, %v5588
    %v5632 = vpack.c.b16 %v5591, %v5590
    %v5633 = vpack.c.b16 %v5593, %v5592
    %v5634 = vpack.c.b16 %v5595, %v5594
    %v5635 = vpack.c.b16 %v5597, %v5596
    %v5636 = vpack.c.b16 %v5599, %v5598
    %v5637 = vpack.c.b16 %v5601, %v5600
    %v5638 = vpack.c.b16 %v5603, %v5602
    %v5639 = vpack.c.b16 %v5605, %v5604
    %v5640 = vpack.c.b16 %v5607, %v5606
    %v5641 = vpack.c.b16 %v5609, %v5608
    %v5642 = vpack.c.b16 %v5611, %v5610
    %v5643 = vpack.c.b16 %v5613, %v5612
    %v5644 = vpack.c.b16 %v5615, %v5614
    %v5645 = vpack.c.b16 %v5617, %v5616
    %v5646 = vpack.c.b16 %v5619, %v5618
    %v5647 = vpack.c.b16 %v5621, %v5620
    %v5648 = vpack.c.b16 %v5623, %v5622
    %v5649 = vpack.c.b16 %v5625, %v5624
    %v5650 = vpack.c.b16 %v5627, %v5626
    %v5675 = vsel %vm5261, %v5456, 0
    %v5678 = vsel %vm5261, %v5459, 0
    %v5681 = vsel %vm5261, %v5462, 0
    %v5684 = vsel %vm5261, %v5465, 0
    %v5687 = vsel %vm5261, %v5468, 0
    %v5690 = vsel %vm5261, %v5471, 0
    %v5693 = vsel %vm5261, %v5474, 0
    %v5696 = vsel %vm5261, %v5477, 0
    %v5699 = vsel %vm5261, %v5480, 0
    %v5702 = vsel %vm5261, %v5483, 0
    %v5705 = vsel %vm5261, %v5486, 0
    %v5708 = vsel %vm5261, %v5489, 0
    %5710 = vmatprep.subr.bf16.mxu0 0
    %5711 = vmatpush1.bf16.msra.mxu0 %v5628
    %5712 = vmatprep.subr.bf16.mxu0 0
    %5713 = vmatpush1.bf16.msra.mxu0 %v5629
    %5714 = vmatprep.subr.bf16.mxu0 0
    %5715 = vmatpush1.bf16.msra.mxu0 %v5630
    %5716 = vmatprep.subr.bf16.mxu0 0
    %5717 = vmatpush1.bf16.msra.mxu0 %v5631
    %5718 = vmatprep.subr.bf16.mxu0 0
    %5719 = vmatpush1.bf16.msra.mxu0 %v5632
    %5720 = vmatprep.subr.bf16.mxu0 0
    %5721 = vmatpush1.bf16.msra.mxu0 %v5633
    %5722 = vmatprep.subr.bf16.mxu0 0
    %5723 = vmatpush1.bf16.msra.mxu0 %v5634
    %5724 = vmatprep.subr.bf16.mxu0 0
    %5725 = vmatpush1.bf16.msra.mxu0 %v5635
    %5726 = vmatprep.subr.bf16.mxu0 0
    %5727 = vmatpush1.bf16.msra.mxu0 %v5636
    %5728 = vmatprep.subr.bf16.mxu0 0
    %5729 = vmatpush1.bf16.msra.mxu0 %v5637
    %5730 = vmatprep.subr.bf16.mxu0 0
    %5731 = vmatpush1.bf16.msra.mxu0 %v5638
    %5732 = vmatprep.subr.bf16.mxu0 0
    %5733 = vmatpush1.bf16.msra.mxu0 %v5639
    %5734 = vmatprep.subr.bf16.mxu0 0
    %5735 = vmatpush1.bf16.msra.mxu0 %v5640
    %5736 = vmatprep.subr.bf16.mxu0 0
    %5737 = vmatpush1.bf16.msra.mxu0 %v5641
    %5738 = vmatprep.subr.bf16.mxu0 0
    %5739 = vmatpush1.bf16.msra.mxu0 %v5642
    %5740 = vmatprep.subr.bf16.mxu0 0
    %5741 = vmatpush1.bf16.msra.mxu0 %v5643
    %5742 = vmatprep.mubr.bf16.mxu0 %v5455
    %5743 = vmatmul.mubr.bf16.gmra.mrb[0].mxu0 %v5454
    %v5744 = vpop.f32.mrb[0].mxu0
    %v5745 = vadd.f32 0.0, %v5744
    %v5746 = vpop.f32.mrb[0].mxu0
    %v5747 = vpop.f32.mrb[0].mxu0
    %v5748 = vadd.f32 0.0, %v5747
    %v5749 = vpop.f32.mrb[0].mxu0
    %5750 = vmatprep.mubr.bf16.mxu0 %v5458
    %5751 = vmatmul.mubr.bf16.gmra.mrb[0].mxu0 %v5457
    %v5752 = vpop.f32.mrb[0].mxu0
    %v5753 = vadd.f32 0.0, %v5752
    %v5754 = vpop.f32.mrb[0].mxu0
    %v5755 = vpop.f32.mrb[0].mxu0
    %v5756 = vadd.f32 0.0, %v5755
    %v5757 = vpop.f32.mrb[0].mxu0
    %5758 = vmatprep.mubr.bf16.mxu0 %v5461
    %5759 = vmatmul.mubr.bf16.gmra.mrb[0].mxu0 %v5460
    %v5760 = vpop.f32.mrb[0].mxu0
    %v5761 = vadd.f32 0.0, %v5760
    %v5762 = vpop.f32.mrb[0].mxu0
    %v5763 = vpop.f32.mrb[0].mxu0
    %v5764 = vadd.f32 0.0, %v5763
    %v5765 = vpop.f32.mrb[0].mxu0
    %5766 = vmatprep.mubr.bf16.mxu0 %v5464
    %5767 = vmatmul.mubr.bf16.gmra.mrb[0].mxu0 %v5463
    %v5768 = vpop.f32.mrb[0].mxu0
    %v5769 = vadd.f32 0.0, %v5768
    %v5770 = vpop.f32.mrb[0].mxu0
    %v5771 = vpop.f32.mrb[0].mxu0
    %v5772 = vadd.f32 0.0, %v5771
    %v5773 = vpop.f32.mrb[0].mxu0
    %5774 = vmatprep.mubr.bf16.mxu0 %v5467
    %5775 = vmatmul.mubr.bf16.gmra.mrb[0].mxu0 %v5466
    %v5776 = vpop.f32.mrb[0].mxu0
    %v5777 = vadd.f32 0.0, %v5776
    %v5778 = vpop.f32.mrb[0].mxu0
    %v5779 = vpop.f32.mrb[0].mxu0
    %v5780 = vadd.f32 0.0, %v5779
    %v5781 = vpop.f32.mrb[0].mxu0
    %5782 = vmatprep.mubr.bf16.mxu0 %v5470
    %5783 = vmatmul.mubr.bf16.gmra.mrb[0].mxu0 %v5469
    %v5784 = vpop.f32.mrb[0].mxu0
    %v5785 = vadd.f32 0.0, %v5784
    %v5786 = vpop.f32.mrb[0].mxu0
    %v5787 = vpop.f32.mrb[0].mxu0
    %v5788 = vadd.f32 0.0, %v5787
    %v5789 = vpop.f32.mrb[0].mxu0
    %5790 = vmatprep.mubr.bf16.mxu0 %v5473
    %5791 = vmatmul.mubr.bf16.gmra.mrb[0].mxu0 %v5472
    %v5792 = vpop.f32.mrb[0].mxu0
    %v5793 = vadd.f32 0.0, %v5792
    %v5794 = vpop.f32.mrb[0].mxu0
    %v5795 = vpop.f32.mrb[0].mxu0
    %v5796 = vadd.f32 0.0, %v5795
    %v5797 = vpop.f32.mrb[0].mxu0
    %5798 = vmatprep.mubr.bf16.mxu0 %v5476
    %5799 = vmatmul.mubr.bf16.gmra.mrb[0].mxu0 %v5475
    %v5800 = vpop.f32.mrb[0].mxu0
    %v5801 = vadd.f32 0.0, %v5800
    %v5802 = vpop.f32.mrb[0].mxu0
    %v5803 = vpop.f32.mrb[0].mxu0
    %v5804 = vadd.f32 0.0, %v5803
    %v5805 = vpop.f32.mrb[0].mxu0
    %5806 = vmatprep.mubr.bf16.mxu0 %v5479
    %5807 = vmatmul.mubr.bf16.gmra.mrb[0].mxu0 %v5478
    %v5808 = vpop.f32.mrb[0].mxu0
    %v5809 = vadd.f32 0.0, %v5808
    %v5810 = vpop.f32.mrb[0].mxu0
    %v5811 = vpop.f32.mrb[0].mxu0
    %v5812 = vadd.f32 0.0, %v5811
    %v5813 = vpop.f32.mrb[0].mxu0
    %5814 = vmatprep.mubr.bf16.mxu0 %v5482
    %5815 = vmatmul.mubr.bf16.gmra.mrb[0].mxu0 %v5481
    %v5816 = vpop.f32.mrb[0].mxu0
    %v5817 = vadd.f32 0.0, %v5816
    %v5818 = vpop.f32.mrb[0].mxu0
    %v5819 = vpop.f32.mrb[0].mxu0
    %v5820 = vadd.f32 0.0, %v5819
    %v5821 = vpop.f32.mrb[0].mxu0
    %5822 = vmatprep.mubr.bf16.mxu0 %v5485
    %5823 = vmatmul.mubr.bf16.gmra.mrb[0].mxu0 %v5484
    %v5824 = vpop.f32.mrb[0].mxu0
    %v5825 = vadd.f32 0.0, %v5824
    %v5826 = vpop.f32.mrb[0].mxu0
    %v5827 = vpop.f32.mrb[0].mxu0
    %v5828 = vadd.f32 0.0, %v5827
    %v5829 = vpop.f32.mrb[0].mxu0
    %5830 = vmatprep.mubr.bf16.mxu0 %v5488
    %5831 = vmatmul.mubr.bf16.gmra.mrb[0].mxu0 %v5487
    %v5832 = vpop.f32.mrb[0].mxu0
    %v5833 = vadd.f32 0.0, %v5832
    %v5834 = vpop.f32.mrb[0].mxu0
    %v5835 = vpop.f32.mrb[0].mxu0
    %v5836 = vadd.f32 0.0, %v5835
    %v5837 = vpop.f32.mrb[0].mxu0
    %5838 = vdwg.mxu0
    %5839 = vmatprep.subr.bf16.mxu0 0
    %5840 = vmatpush1.bf16.msra.mxu0 %v5644
    %5841 = vmatprep.subr.bf16.mxu0 0
    %5842 = vmatpush1.bf16.msra.mxu0 %v5645
    %5843 = vmatprep.subr.bf16.mxu0 0
    %5844 = vmatpush1.bf16.msra.mxu0 %v5646
    %5845 = vmatprep.subr.bf16.mxu0 0
    %5846 = vmatpush1.bf16.msra.mxu0 %v5647
    %5847 = vmatprep.subr.bf16.mxu0 0
    %5848 = vmatpush1.bf16.msra.mxu0 %v5648
    %5849 = vmatprep.subr.bf16.mxu0 0
    %5850 = vmatpush1.bf16.msra.mxu0 %v5649
    %5851 = vmatprep.subr.bf16.mxu0 0
    %5852 = vmatpush1.bf16.msra.mxu0 %v5650
    %5853 = vmatprep.subr.bf16.mxu0 0
    %5854 = vmatpush1.bf16.msra.mxu0 0
    %5855 = vmatprep.subr.bf16.mxu0 0
    %5856 = vmatpush1.bf16.msra.mxu0 0
    %5857 = vmatprep.subr.bf16.mxu0 0
    %5858 = vmatpush1.bf16.msra.mxu0 0
    %5859 = vmatprep.subr.bf16.mxu0 0
    %5860 = vmatpush1.bf16.msra.mxu0 0
    %5861 = vmatprep.subr.bf16.mxu0 0
    %5862 = vmatpush1.bf16.msra.mxu0 0
    %5863 = vmatprep.subr.bf16.mxu0 0
    %5864 = vmatpush1.bf16.msra.mxu0 0
    %5865 = vmatprep.subr.bf16.mxu0 0
    %5866 = vmatpush1.bf16.msra.mxu0 0
    %5867 = vmatprep.subr.bf16.mxu0 0
    %5868 = vmatpush1.bf16.msra.mxu0 0
    %5869 = vmatprep.subr.bf16.mxu0 0
    %5870 = vmatpush1.bf16.msra.mxu0 0
    %5871 = vmatprep.mubr.bf16.mxu0 0
    %5872 = vmatmul.mubr.bf16.gmra.mrb[0].mxu0 %v5675
    %v5873 = vpop.f32.mrb[0].mxu0
    %v5874 = vadd.f32 %v5745, %v5873
    %v5875 = vpop.f32.mrb[0].mxu0
    %v5876 = vpop.f32.mrb[0].mxu0
    %v5877 = vadd.f32 %v5748, %v5876
    %v5878 = vpop.f32.mrb[0].mxu0
    %5879 = vmatprep.mubr.bf16.mxu0 0
    %5880 = vmatmul.mubr.bf16.gmra.mrb[0].mxu0 %v5678
    %v5881 = vpop.f32.mrb[0].mxu0
    %v5882 = vadd.f32 %v5753, %v5881
    %v5883 = vpop.f32.mrb[0].mxu0
    %v5884 = vpop.f32.mrb[0].mxu0
    %v5885 = vadd.f32 %v5756, %v5884
    %v5886 = vpop.f32.mrb[0].mxu0
    %5887 = vmatprep.mubr.bf16.mxu0 0
    %5888 = vmatmul.mubr.bf16.gmra.mrb[0].mxu0 %v5681
    %v5889 = vpop.f32.mrb[0].mxu0
    %v5890 = vadd.f32 %v5761, %v5889
    %v5891 = vpop.f32.mrb[0].mxu0
    %v5892 = vpop.f32.mrb[0].mxu0
    %v5893 = vadd.f32 %v5764, %v5892
    %v5894 = vpop.f32.mrb[0].mxu0
    %5895 = vmatprep.mubr.bf16.mxu0 0
    %5896 = vmatmul.mubr.bf16.gmra.mrb[0].mxu0 %v5684
    %v5897 = vpop.f32.mrb[0].mxu0
    %v5898 = vadd.f32 %v5769, %v5897
    %v5899 = vpop.f32.mrb[0].mxu0
    %v5900 = vpop.f32.mrb[0].mxu0
    %v5901 = vadd.f32 %v5772, %v5900
    %v5902 = vpop.f32.mrb[0].mxu0
    %5903 = vmatprep.mubr.bf16.mxu0 0
    %5904 = vmatmul.mubr.bf16.gmra.mrb[0].mxu0 %v5687
    %v5905 = vpop.f32.mrb[0].mxu0
    %v5906 = vadd.f32 %v5777, %v5905
    %v5907 = vpop.f32.mrb[0].mxu0
    %v5908 = vpop.f32.mrb[0].mxu0
    %v5909 = vadd.f32 %v5780, %v5908
    %v5910 = vpop.f32.mrb[0].mxu0
    %5911 = vmatprep.mubr.bf16.mxu0 0
    %5912 = vmatmul.mubr.bf16.gmra.mrb[0].mxu0 %v5690
    %v5913 = vpop.f32.mrb[0].mxu0
    %v5914 = vadd.f32 %v5785, %v5913
    %v5915 = vpop.f32.mrb[0].mxu0
    %v5916 = vpop.f32.mrb[0].mxu0
    %v5917 = vadd.f32 %v5788, %v5916
    %v5918 = vpop.f32.mrb[0].mxu0
    %5919 = vmatprep.mubr.bf16.mxu0 0
    %5920 = vmatmul.mubr.bf16.gmra.mrb[0].mxu0 %v5693
    %v5921 = vpop.f32.mrb[0].mxu0
    %v5922 = vadd.f32 %v5793, %v5921
    %v5923 = vpop.f32.mrb[0].mxu0
    %v5924 = vpop.f32.mrb[0].mxu0
    %v5925 = vadd.f32 %v5796, %v5924
    %v5926 = vpop.f32.mrb[0].mxu0
    %5927 = vmatprep.mubr.bf16.mxu0 0
    %5928 = vmatmul.mubr.bf16.gmra.mrb[0].mxu0 %v5696
    %v5929 = vpop.f32.mrb[0].mxu0
    %v5930 = vadd.f32 %v5801, %v5929
    %v5931 = vpop.f32.mrb[0].mxu0
    %v5932 = vpop.f32.mrb[0].mxu0
    %v5933 = vadd.f32 %v5804, %v5932
    %v5934 = vpop.f32.mrb[0].mxu0
    %5935 = vmatprep.mubr.bf16.mxu0 0
    %5936 = vmatmul.mubr.bf16.gmra.mrb[0].mxu0 %v5699
    %v5937 = vpop.f32.mrb[0].mxu0
    %v5938 = vadd.f32 %v5809, %v5937
    %v5939 = vpop.f32.mrb[0].mxu0
    %v5940 = vpop.f32.mrb[0].mxu0
    %v5941 = vadd.f32 %v5812, %v5940
    %v5942 = vpop.f32.mrb[0].mxu0
    %5943 = vmatprep.mubr.bf16.mxu0 0
    %5944 = vmatmul.mubr.bf16.gmra.mrb[0].mxu0 %v5702
    %v5945 = vpop.f32.mrb[0].mxu0
    %v5946 = vadd.f32 %v5817, %v5945
    %v5947 = vpop.f32.mrb[0].mxu0
    %v5948 = vpop.f32.mrb[0].mxu0
    %v5949 = vadd.f32 %v5820, %v5948
    %v5950 = vpop.f32.mrb[0].mxu0
    %5951 = vmatprep.mubr.bf16.mxu0 0
    %5952 = vmatmul.mubr.bf16.gmra.mrb[0].mxu0 %v5705
    %v5953 = vpop.f32.mrb[0].mxu0
    %v5954 = vadd.f32 %v5825, %v5953
    %v5955 = vpop.f32.mrb[0].mxu0
    %v5956 = vpop.f32.mrb[0].mxu0
    %v5957 = vadd.f32 %v5828, %v5956
    %v5958 = vpop.f32.mrb[0].mxu0
    %5959 = vmatprep.mubr.bf16.mxu0 0
    %5960 = vmatmul.mubr.bf16.gmra.mrb[0].mxu0 %v5708
    %v5961 = vpop.f32.mrb[0].mxu0
    %v5962 = vadd.f32 %v5833, %v5961
    %v5963 = vpop.f32.mrb[0].mxu0
    %v5964 = vpop.f32.mrb[0].mxu0
    %v5965 = vadd.f32 %v5836, %v5964
    %v5966 = vpop.f32.mrb[0].mxu0
    %5967 = vdwg.mxu0
    %v5968 = vld [vmem:[#allocation7] sm:$0x1]
    %v5970 = vlaneseq
    %v5971 = vshrl.u32 %v5970, 7
    %v5972 = vsub.s32 0, %v5971
    %v5973 = vrot.slane %v5968, %v5972
    %v5975 = vmul.f32 %v5874, %v5973
    %v5976 = vmul.f32 %v5877, %v5973
    %v5977 = vmul.f32 %v5882, %v5973
    %v5978 = vmul.f32 %v5885, %v5973
    %v5979 = vmul.f32 %v5890, %v5973
    %v5980 = vmul.f32 %v5893, %v5973
    %v5981 = vmul.f32 %v5898, %v5973
    %v5982 = vmul.f32 %v5901, %v5973
    %v5983 = vmul.f32 %v5906, %v5973
    %v5984 = vmul.f32 %v5909, %v5973
    %v5985 = vmul.f32 %v5914, %v5973
    %v5986 = vmul.f32 %v5917, %v5973
    %v5987 = vmul.f32 %v5922, %v5973
    %v5988 = vmul.f32 %v5925, %v5973
    %v5989 = vmul.f32 %v5930, %v5973
    %v5990 = vmul.f32 %v5933, %v5973
    %v5991 = vmul.f32 %v5938, %v5973
    %v5992 = vmul.f32 %v5941, %v5973
    %v5993 = vmul.f32 %v5946, %v5973
    %v5994 = vmul.f32 %v5949, %v5973
    %v5995 = vmul.f32 %v5954, %v5973
    %v5996 = vmul.f32 %v5957, %v5973
    %v5997 = vmul.f32 %v5962, %v5973
    %v5998 = vmul.f32 %v5965, %v5973
    %v5999 = vld [vmem:[#allocation9] sm:$0x1]
    %v6001 = vlaneseq
    %v6002 = vshrl.u32 %v6001, 7
    %v6003 = vsub.s32 0, %v6002
    %v6004 = vrot.slane %v5999, %v6003
    %v6006 = vadd.f32 %v5975, %v6004
    %v6007 = vadd.f32 %v5976, %v6004
    %v6008 = vadd.f32 %v5977, %v6004
    %v6009 = vadd.f32 %v5978, %v6004
    %v6010 = vadd.f32 %v5979, %v6004
    %v6011 = vadd.f32 %v5980, %v6004
    %v6012 = vadd.f32 %v5981, %v6004
    %v6013 = vadd.f32 %v5982, %v6004
    %v6014 = vadd.f32 %v5983, %v6004
    %v6015 = vadd.f32 %v5984, %v6004
    %v6016 = vadd.f32 %v5985, %v6004
    %v6017 = vadd.f32 %v5986, %v6004
    %v6018 = vadd.f32 %v5987, %v6004
    %v6019 = vadd.f32 %v5988, %v6004
    %v6020 = vadd.f32 %v5989, %v6004
    %v6021 = vadd.f32 %v5990, %v6004
    %v6022 = vadd.f32 %v5991, %v6004
    %v6023 = vadd.f32 %v5992, %v6004
    %v6024 = vadd.f32 %v5993, %v6004
    %v6025 = vadd.f32 %v5994, %v6004
    %v6026 = vadd.f32 %v5995, %v6004
    %v6027 = vadd.f32 %v5996, %v6004
    %v6028 = vadd.f32 %v5997, %v6004
    %v6029 = vadd.f32 %v5998, %v6004
    %v6030 = vmax.f32 %v6006, 0.0
    %v6031 = vmax.f32 %v6007, 0.0
    %v6032 = vmax.f32 %v6008, 0.0
    %v6033 = vmax.f32 %v6009, 0.0
    %v6034 = vmax.f32 %v6010, 0.0
    %v6035 = vmax.f32 %v6011, 0.0
    %v6036 = vmax.f32 %v6012, 0.0
    %v6037 = vmax.f32 %v6013, 0.0
    %v6038 = vmax.f32 %v6014, 0.0
    %v6039 = vmax.f32 %v6015, 0.0
    %v6040 = vmax.f32 %v6016, 0.0
    %v6041 = vmax.f32 %v6017, 0.0
    %v6042 = vmax.f32 %v6018, 0.0
    %v6043 = vmax.f32 %v6019, 0.0
    %v6044 = vmax.f32 %v6020, 0.0
    %v6045 = vmax.f32 %v6021, 0.0
    %v6046 = vmax.f32 %v6022, 0.0
    %v6047 = vmax.f32 %v6023, 0.0
    %v6048 = vmax.f32 %v6024, 0.0
    %v6049 = vmax.f32 %v6025, 0.0
    %v6050 = vmax.f32 %v6026, 0.0
    %v6051 = vmax.f32 %v6027, 0.0
    %v6052 = vmax.f32 %v6028, 0.0
    %v6053 = vmax.f32 %v6029, 0.0
    %v6054 = vpack.c.bf16 %v6031, %v6030
    %v6055 = vpack.c.bf16 %v6033, %v6032
    %v6056 = vpack.c.bf16 %v6035, %v6034
    %v6057 = vpack.c.bf16 %v6037, %v6036
    %v6058 = vpack.c.bf16 %v6039, %v6038
    %v6059 = vpack.c.bf16 %v6041, %v6040
    %v6060 = vpack.c.bf16 %v6043, %v6042
    %v6061 = vpack.c.bf16 %v6045, %v6044
    %v6062 = vpack.c.bf16 %v6047, %v6046
    %v6063 = vpack.c.bf16 %v6049, %v6048
    %v6064 = vpack.c.bf16 %v6051, %v6050
    %v6065 = vpack.c.bf16 %v6053, %v6052
    %v6066 = vld [vmem:[#allocation10] sm:$0xf]
    %v6067 = vld [vmem:[#allocation10 + $0x4] sm:$0xf]
    %v6068 = vld [vmem:[#allocation10 + $0x8] sm:$0xf]
    %v6069 = vld [vmem:[#allocation10 + $0xc] sm:$0xf]
    %v6070 = vld [vmem:[#allocation10 + $0x10] sm:$0xf]
    %v6071 = vld [vmem:[#allocation10 + $0x14] sm:$0xf]
    %v6072 = vld [vmem:[#allocation10 + $0x18] sm:$0xf]
    %v6073 = vld [vmem:[#allocation10 + $0x1c] sm:$0xf]
    %v6074 = vld [vmem:[#allocation10 + $0x20] sm:$0xf]
    %v6075 = vld [vmem:[#allocation10 + $0x24] sm:$0xf]
    %v6076 = vld [vmem:[#allocation10 + $0x28] sm:$0xf]
    %v6077 = vld [vmem:[#allocation10 + $0x2c] sm:$0xf]
    %s6078 = scalar_lea.vmem [#allocation10], 48
    %v6079 = vld [vmem:[%s6078] sm:$0xf]
    %v6080 = vld [vmem:[%s6078 + $0x4] sm:$0xf]
    %v6081 = vld [vmem:[%s6078 + $0x8] sm:$0xf]
    %v6082 = vld [vmem:[%s6078 + $0xc] sm:$0xf]
    %v6083 = vld [vmem:[%s6078 + $0x10] sm:$0xf]
    %v6084 = vld [vmem:[%s6078 + $0x14] sm:$0xf]
    %v6085 = vld [vmem:[%s6078 + $0x18] sm:$0xf]
    %v6086 = vld [vmem:[%s6078 + $0x1c] sm:$0xf]
    %v6087 = vld [vmem:[%s6078 + $0x20] sm:$0xf]
    %v6088 = vld [vmem:[%s6078 + $0x24] sm:$0xf]
    %v6089 = vld [vmem:[%s6078 + $0x28] sm:$0xf]
    %v6090 = vld [vmem:[%s6078 + $0x2c] sm:$0xf]
    %v6103 = vunpack.c.l.b16 %v6079
    %v6104 = vunpack.c.l.b16 %v6080
    %v6105 = vunpack.c.l.b16 %v6081
    %v6106 = vunpack.c.l.b16 %v6082
    %v6107 = vunpack.c.l.b16 %v6083
    %v6108 = vunpack.c.l.b16 %v6084
    %v6109 = vunpack.c.l.b16 %v6085
    %v6110 = vunpack.c.l.b16 %v6086
    %v6111 = vunpack.c.l.b16 %v6087
    %v6112 = vunpack.c.l.b16 %v6088
    %v6113 = vunpack.c.l.b16 %v6089
    %v6114 = vunpack.c.l.b16 %v6090
    %v6115 = vpack.c.b16 %v6104, %v6103
    %v6116 = vpack.c.b16 %v6106, %v6105
    %v6117 = vpack.c.b16 %v6108, %v6107
    %v6118 = vpack.c.b16 %v6110, %v6109
    %v6119 = vpack.c.b16 %v6112, %v6111
    %v6120 = vpack.c.b16 %v6114, %v6113
    %vm6127 = vcmask 785408
    %v6129 = vsel %vm6127, %v6055, 0
    %v6132 = vsel %vm6127, %v6056, 0
    %v6135 = vsel %vm6127, %v6057, 0
    %v6138 = vsel %vm6127, %v6058, 0
    %v6141 = vsel %vm6127, %v6059, 0
    %v6144 = vsel %vm6127, %v6060, 0
    %v6147 = vsel %vm6127, %v6061, 0
    %v6150 = vsel %vm6127, %v6062, 0
    %v6153 = vsel %vm6127, %v6063, 0
    %v6156 = vsel %vm6127, %v6064, 0
    %6158 = vmatprep.subr.bf16.mxu0 0
    %6159 = vmatpush1.bf16.msra.mxu0 %v6115
    %6160 = vmatprep.subr.bf16.mxu0 0
    %6161 = vmatpush1.bf16.msra.mxu0 %v6116
    %6162 = vmatprep.subr.bf16.mxu0 0
    %6163 = vmatpush1.bf16.msra.mxu0 %v6117
    %6164 = vmatprep.subr.bf16.mxu0 0
    %6165 = vmatpush1.bf16.msra.mxu0 %v6118
    %6166 = vmatprep.subr.bf16.mxu0 0
    %6167 = vmatpush1.bf16.msra.mxu0 %v6119
    %6168 = vmatprep.subr.bf16.mxu0 0
    %6169 = vmatpush1.bf16.msra.mxu0 %v6120
    %6170 = vmatprep.subr.bf16.mxu0 0
    %6171 = vmatpush1.bf16.msra.mxu0 0
    %6172 = vmatprep.subr.bf16.mxu0 0
    %6173 = vmatpush1.bf16.msra.mxu0 0
    %6174 = vmatprep.subr.bf16.mxu0 0
    %6175 = vmatpush1.bf16.msra.mxu0 0
    %6176 = vmatprep.subr.bf16.mxu0 0
    %6177 = vmatpush1.bf16.msra.mxu0 0
    %6178 = vmatprep.subr.bf16.mxu0 0
    %6179 = vmatpush1.bf16.msra.mxu0 0
    %6180 = vmatprep.subr.bf16.mxu0 0
    %6181 = vmatpush1.bf16.msra.mxu0 0
    %6182 = vmatprep.subr.bf16.mxu0 0
    %6183 = vmatpush1.bf16.msra.mxu0 0
    %6184 = vmatprep.subr.bf16.mxu0 0
    %6185 = vmatpush1.bf16.msra.mxu0 0
    %6186 = vmatprep.subr.bf16.mxu0 0
    %6187 = vmatpush1.bf16.msra.mxu0 0
    %6188 = vmatprep.subr.bf16.mxu0 0
    %6189 = vmatpush1.bf16.msra.mxu0 0
    %6190 = vmatprep.mubr.bf16.mxu0 0
    %6191 = vmatmul.mubr.bf16.gmra.mrb[0].mxu0 %v6129
    %v6192 = vpop.f32.mrb[0].mxu0
    %v6193 = vadd.f32 0.0, %v6192
    %v6194 = vpop.f32.mrb[0].mxu0
    %v6195 = vpop.f32.mrb[0].mxu0
    %v6196 = vadd.f32 0.0, %v6195
    %v6197 = vpop.f32.mrb[0].mxu0
    %6198 = vmatprep.mubr.bf16.mxu0 0
    %6199 = vmatmul.mubr.bf16.gmra.mrb[0].mxu0 %v6132
    %v6200 = vpop.f32.mrb[0].mxu0
    %v6201 = vadd.f32 0.0, %v6200
    %v6202 = vpop.f32.mrb[0].mxu0
    %v6203 = vpop.f32.mrb[0].mxu0
    %v6204 = vadd.f32 0.0, %v6203
    %v6205 = vpop.f32.mrb[0].mxu0
    %6206 = vmatprep.mubr.bf16.mxu0 0
    %6207 = vmatmul.mubr.bf16.gmra.mrb[0].mxu0 %v6135
    %v6208 = vpop.f32.mrb[0].mxu0
    %v6209 = vadd.f32 0.0, %v6208
    %v6210 = vpop.f32.mrb[0].mxu0
    %v6211 = vpop.f32.mrb[0].mxu0
    %v6212 = vadd.f32 0.0, %v6211
    %v6213 = vpop.f32.mrb[0].mxu0
    %6214 = vmatprep.mubr.bf16.mxu0 0
    %6215 = vmatmul.mubr.bf16.gmra.mrb[0].mxu0 %v6138
    %v6216 = vpop.f32.mrb[0].mxu0
    %v6217 = vadd.f32 0.0, %v6216
    %v6218 = vpop.f32.mrb[0].mxu0
    %v6219 = vpop.f32.mrb[0].mxu0
    %v6220 = vadd.f32 0.0, %v6219
    %v6221 = vpop.f32.mrb[0].mxu0
    %6222 = vmatprep.mubr.bf16.mxu0 0
    %6223 = vmatmul.mubr.bf16.gmra.mrb[0].mxu0 %v6141
    %v6224 = vpop.f32.mrb[0].mxu0
    %v6225 = vadd.f32 0.0, %v6224
    %v6226 = vpop.f32.mrb[0].mxu0
    %v6227 = vpop.f32.mrb[0].mxu0
    %v6228 = vadd.f32 0.0, %v6227
    %v6229 = vpop.f32.mrb[0].mxu0
    %6230 = vmatprep.mubr.bf16.mxu0 0
    %6231 = vmatmul.mubr.bf16.gmra.mrb[0].mxu0 %v6144
    %v6232 = vpop.f32.mrb[0].mxu0
    %v6233 = vadd.f32 0.0, %v6232
    %v6234 = vpop.f32.mrb[0].mxu0
    %v6235 = vpop.f32.mrb[0].mxu0
    %v6236 = vadd.f32 0.0, %v6235
    %v6237 = vpop.f32.mrb[0].mxu0
    %6238 = vmatprep.mubr.bf16.mxu0 0
    %6239 = vmatmul.mubr.bf16.gmra.mrb[0].mxu0 %v6147
    %v6240 = vpop.f32.mrb[0].mxu0
    %v6241 = vadd.f32 0.0, %v6240
    %v6242 = vpop.f32.mrb[0].mxu0
    %v6243 = vpop.f32.mrb[0].mxu0
    %v6244 = vadd.f32 0.0, %v6243
    %v6245 = vpop.f32.mrb[0].mxu0
    %6246 = vmatprep.mubr.bf16.mxu0 0
    %6247 = vmatmul.mubr.bf16.gmra.mrb[0].mxu0 %v6150
    %v6248 = vpop.f32.mrb[0].mxu0
    %v6249 = vadd.f32 0.0, %v6248
    %v6250 = vpop.f32.mrb[0].mxu0
    %v6251 = vpop.f32.mrb[0].mxu0
    %v6252 = vadd.f32 0.0, %v6251
    %v6253 = vpop.f32.mrb[0].mxu0
    %6254 = vmatprep.mubr.bf16.mxu0 0
    %6255 = vmatmul.mubr.bf16.gmra.mrb[0].mxu0 %v6153
    %v6256 = vpop.f32.mrb[0].mxu0
    %v6257 = vadd.f32 0.0, %v6256
    %v6258 = vpop.f32.mrb[0].mxu0
    %v6259 = vpop.f32.mrb[0].mxu0
    %v6260 = vadd.f32 0.0, %v6259
    %v6261 = vpop.f32.mrb[0].mxu0
    %6262 = vmatprep.mubr.bf16.mxu0 0
    %6263 = vmatmul.mubr.bf16.gmra.mrb[0].mxu0 %v6156
    %v6264 = vpop.f32.mrb[0].mxu0
    %v6265 = vadd.f32 0.0, %v6264
    %v6266 = vpop.f32.mrb[0].mxu0
    %v6267 = vpop.f32.mrb[0].mxu0
    %v6268 = vadd.f32 0.0, %v6267
    %v6269 = vpop.f32.mrb[0].mxu0
    %6270 = vdwg.mxu0
    %v6283 = vunpack.c.l.b16 %v6066
    %v6284 = vunpack.c.l.b16 %v6067
    %v6285 = vunpack.c.l.b16 %v6068
    %v6286 = vunpack.c.l.b16 %v6069
    %v6287 = vunpack.c.l.b16 %v6070
    %v6288 = vunpack.c.l.b16 %v6071
    %v6289 = vunpack.c.l.b16 %v6072
    %v6290 = vunpack.c.l.b16 %v6073
    %v6291 = vunpack.c.l.b16 %v6074
    %v6292 = vunpack.c.l.b16 %v6075
    %v6293 = vunpack.c.l.b16 %v6076
    %v6294 = vunpack.c.l.b16 %v6077
    %v6295 = vpack.c.b16 %v6284, %v6283
    %v6296 = vpack.c.b16 %v6286, %v6285
    %v6297 = vpack.c.b16 %v6288, %v6287
    %v6298 = vpack.c.b16 %v6290, %v6289
    %v6299 = vpack.c.b16 %v6292, %v6291
    %v6300 = vpack.c.b16 %v6294, %v6293
    %v6308 = vsel %vm6127, %v6054, 0
    %6310 = vmatprep.subr.bf16.mxu0 0
    %6311 = vmatpush1.bf16.msra.mxu0 %v6295
    %6312 = vmatprep.subr.bf16.mxu0 0
    %6313 = vmatpush1.bf16.msra.mxu0 %v6296
    %6314 = vmatprep.subr.bf16.mxu0 0
    %6315 = vmatpush1.bf16.msra.mxu0 %v6297
    %6316 = vmatprep.subr.bf16.mxu0 0
    %6317 = vmatpush1.bf16.msra.mxu0 %v6298
    %6318 = vmatprep.subr.bf16.mxu0 0
    %6319 = vmatpush1.bf16.msra.mxu0 %v6299
    %6320 = vmatprep.subr.bf16.mxu0 0
    %6321 = vmatpush1.bf16.msra.mxu0 %v6300
    %6322 = vmatprep.subr.bf16.mxu0 0
    %6323 = vmatpush1.bf16.msra.mxu0 0
    %6324 = vmatprep.subr.bf16.mxu0 0
    %6325 = vmatpush1.bf16.msra.mxu0 0
    %6326 = vmatprep.subr.bf16.mxu0 0
    %6327 = vmatpush1.bf16.msra.mxu0 0
    %6328 = vmatprep.subr.bf16.mxu0 0
    %6329 = vmatpush1.bf16.msra.mxu0 0
    %6330 = vmatprep.subr.bf16.mxu0 0
    %6331 = vmatpush1.bf16.msra.mxu0 0
    %6332 = vmatprep.subr.bf16.mxu0 0
    %6333 = vmatpush1.bf16.msra.mxu0 0
    %6334 = vmatprep.subr.bf16.mxu0 0
    %6335 = vmatpush1.bf16.msra.mxu0 0
    %6336 = vmatprep.subr.bf16.mxu0 0
    %6337 = vmatpush1.bf16.msra.mxu0 0
    %6338 = vmatprep.subr.bf16.mxu0 0
    %6339 = vmatpush1.bf16.msra.mxu0 0
    %6340 = vmatprep.subr.bf16.mxu0 0
    %6341 = vmatpush1.bf16.msra.mxu0 0
    %6342 = vmatprep.mubr.bf16.mxu0 0
    %6343 = vmatmul.mubr.bf16.gmra.mrb[0].mxu0 %v6308
    %v6344 = vpop.f32.mrb[0].mxu0
    %v6345 = vadd.f32 %v6193, %v6344
    %v6346 = vpop.f32.mrb[0].mxu0
    %v6347 = vpop.f32.mrb[0].mxu0
    %v6348 = vadd.f32 %v6196, %v6347
    %v6349 = vpop.f32.mrb[0].mxu0
    %6350 = vmatprep.mubr.bf16.mxu0 0
    %6351 = vmatmul.mubr.bf16.gmra.mrb[0].mxu0 %v6129
    %v6352 = vpop.f32.mrb[0].mxu0
    %v6353 = vadd.f32 %v6201, %v6352
    %v6354 = vpop.f32.mrb[0].mxu0
    %v6355 = vpop.f32.mrb[0].mxu0
    %v6356 = vadd.f32 %v6204, %v6355
    %v6357 = vpop.f32.mrb[0].mxu0
    %6358 = vmatprep.mubr.bf16.mxu0 0
    %6359 = vmatmul.mubr.bf16.gmra.mrb[0].mxu0 %v6132
    %v6360 = vpop.f32.mrb[0].mxu0
    %v6361 = vadd.f32 %v6209, %v6360
    %v6362 = vpop.f32.mrb[0].mxu0
    %v6363 = vpop.f32.mrb[0].mxu0
    %v6364 = vadd.f32 %v6212, %v6363
    %v6365 = vpop.f32.mrb[0].mxu0
    %6366 = vmatprep.mubr.bf16.mxu0 0
    %6367 = vmatmul.mubr.bf16.gmra.mrb[0].mxu0 %v6135
    %v6368 = vpop.f32.mrb[0].mxu0
    %v6369 = vadd.f32 %v6217, %v6368
    %v6370 = vpop.f32.mrb[0].mxu0
    %v6371 = vpop.f32.mrb[0].mxu0
    %v6372 = vadd.f32 %v6220, %v6371
    %v6373 = vpop.f32.mrb[0].mxu0
    %6374 = vmatprep.mubr.bf16.mxu0 0
    %6375 = vmatmul.mubr.bf16.gmra.mrb[0].mxu0 %v6138
    %v6376 = vpop.f32.mrb[0].mxu0
    %v6377 = vadd.f32 %v6225, %v6376
    %v6378 = vpop.f32.mrb[0].mxu0
    %v6379 = vpop.f32.mrb[0].mxu0
    %v6380 = vadd.f32 %v6228, %v6379
    %v6381 = vpop.f32.mrb[0].mxu0
    %6382 = vmatprep.mubr.bf16.mxu0 0
    %6383 = vmatmul.mubr.bf16.gmra.mrb[0].mxu0 %v6141
    %v6384 = vpop.f32.mrb[0].mxu0
    %v6385 = vadd.f32 %v6233, %v6384
    %v6386 = vpop.f32.mrb[0].mxu0
    %v6387 = vpop.f32.mrb[0].mxu0
    %v6388 = vadd.f32 %v6236, %v6387
    %v6389 = vpop.f32.mrb[0].mxu0
    %6390 = vmatprep.mubr.bf16.mxu0 0
    %6391 = vmatmul.mubr.bf16.gmra.mrb[0].mxu0 %v6144
    %v6392 = vpop.f32.mrb[0].mxu0
    %v6393 = vadd.f32 %v6241, %v6392
    %v6394 = vpop.f32.mrb[0].mxu0
    %v6395 = vpop.f32.mrb[0].mxu0
    %v6396 = vadd.f32 %v6244, %v6395
    %v6397 = vpop.f32.mrb[0].mxu0
    %6398 = vmatprep.mubr.bf16.mxu0 0
    %6399 = vmatmul.mubr.bf16.gmra.mrb[0].mxu0 %v6147
    %v6400 = vpop.f32.mrb[0].mxu0
    %v6401 = vadd.f32 %v6249, %v6400
    %v6402 = vpop.f32.mrb[0].mxu0
    %v6403 = vpop.f32.mrb[0].mxu0
    %v6404 = vadd.f32 %v6252, %v6403
    %v6405 = vpop.f32.mrb[0].mxu0
    %6406 = vmatprep.mubr.bf16.mxu0 0
    %6407 = vmatmul.mubr.bf16.gmra.mrb[0].mxu0 %v6150
    %v6408 = vpop.f32.mrb[0].mxu0
    %v6409 = vadd.f32 %v6257, %v6408
    %v6410 = vpop.f32.mrb[0].mxu0
    %v6411 = vpop.f32.mrb[0].mxu0
    %v6412 = vadd.f32 %v6260, %v6411
    %v6413 = vpop.f32.mrb[0].mxu0
    %6414 = vmatprep.mubr.bf16.mxu0 0
    %6415 = vmatmul.mubr.bf16.gmra.mrb[0].mxu0 %v6153
    %v6416 = vpop.f32.mrb[0].mxu0
    %v6417 = vadd.f32 %v6265, %v6416
    %v6418 = vpop.f32.mrb[0].mxu0
    %v6419 = vpop.f32.mrb[0].mxu0
    %v6420 = vadd.f32 %v6268, %v6419
    %v6421 = vpop.f32.mrb[0].mxu0
    %6422 = vdwg.mxu0
    %s6423 = scalar_lea.vmem [#allocation10], 96
    %v6424 = vld [vmem:[%s6423] sm:$0xf]
    %v6425 = vld [vmem:[%s6423 + $0x4] sm:$0xf]
    %v6426 = vld [vmem:[%s6423 + $0x8] sm:$0xf]
    %v6427 = vld [vmem:[%s6423 + $0xc] sm:$0xf]
    %v6428 = vld [vmem:[%s6423 + $0x10] sm:$0xf]
    %v6429 = vld [vmem:[%s6423 + $0x14] sm:$0xf]
    %v6430 = vld [vmem:[%s6423 + $0x18] sm:$0xf]
    %v6431 = vld [vmem:[%s6423 + $0x1c] sm:$0xf]
    %v6432 = vld [vmem:[%s6423 + $0x20] sm:$0xf]
    %v6433 = vld [vmem:[%s6423 + $0x24] sm:$0xf]
    %v6434 = vld [vmem:[%s6423 + $0x28] sm:$0xf]
    %v6435 = vld [vmem:[%s6423 + $0x2c] sm:$0xf]
    %v6448 = vunpack.c.l.b16 %v6424
    %v6449 = vunpack.c.l.b16 %v6425
    %v6450 = vunpack.c.l.b16 %v6426
    %v6451 = vunpack.c.l.b16 %v6427
    %v6452 = vunpack.c.l.b16 %v6428
    %v6453 = vunpack.c.l.b16 %v6429
    %v6454 = vunpack.c.l.b16 %v6430
    %v6455 = vunpack.c.l.b16 %v6431
    %v6456 = vunpack.c.l.b16 %v6432
    %v6457 = vunpack.c.l.b16 %v6433
    %v6458 = vunpack.c.l.b16 %v6434
    %v6459 = vunpack.c.l.b16 %v6435
    %v6460 = vpack.c.b16 %v6449, %v6448
    %v6461 = vpack.c.b16 %v6451, %v6450
    %v6462 = vpack.c.b16 %v6453, %v6452
    %v6463 = vpack.c.b16 %v6455, %v6454
    %v6464 = vpack.c.b16 %v6457, %v6456
    %v6465 = vpack.c.b16 %v6459, %v6458
    %v6473 = vsel %vm6127, %v6065, 0
    %6475 = vmatprep.subr.bf16.mxu0 0
    %6476 = vmatpush1.bf16.msra.mxu0 %v6460
    %6477 = vmatprep.subr.bf16.mxu0 0
    %6478 = vmatpush1.bf16.msra.mxu0 %v6461
    %6479 = vmatprep.subr.bf16.mxu0 0
    %6480 = vmatpush1.bf16.msra.mxu0 %v6462
    %6481 = vmatprep.subr.bf16.mxu0 0
    %6482 = vmatpush1.bf16.msra.mxu0 %v6463
    %6483 = vmatprep.subr.bf16.mxu0 0
    %6484 = vmatpush1.bf16.msra.mxu0 %v6464
    %6485 = vmatprep.subr.bf16.mxu0 0
    %6486 = vmatpush1.bf16.msra.mxu0 %v6465
    %6487 = vmatprep.subr.bf16.mxu0 0
    %6488 = vmatpush1.bf16.msra.mxu0 0
    %6489 = vmatprep.subr.bf16.mxu0 0
    %6490 = vmatpush1.bf16.msra.mxu0 0
    %6491 = vmatprep.subr.bf16.mxu0 0
    %6492 = vmatpush1.bf16.msra.mxu0 0
    %6493 = vmatprep.subr.bf16.mxu0 0
    %6494 = vmatpush1.bf16.msra.mxu0 0
    %6495 = vmatprep.subr.bf16.mxu0 0
    %6496 = vmatpush1.bf16.msra.mxu0 0
    %6497 = vmatprep.subr.bf16.mxu0 0
    %6498 = vmatpush1.bf16.msra.mxu0 0
    %6499 = vmatprep.subr.bf16.mxu0 0
    %6500 = vmatpush1.bf16.msra.mxu0 0
    %6501 = vmatprep.subr.bf16.mxu0 0
    %6502 = vmatpush1.bf16.msra.mxu0 0
    %6503 = vmatprep.subr.bf16.mxu0 0
    %6504 = vmatpush1.bf16.msra.mxu0 0
    %6505 = vmatprep.subr.bf16.mxu0 0
    %6506 = vmatpush1.bf16.msra.mxu0 0
    %6507 = vmatprep.mubr.bf16.mxu0 0
    %6508 = vmatmul.mubr.bf16.gmra.mrb[0].mxu0 %v6132
    %v6509 = vpop.f32.mrb[0].mxu0
    %v6510 = vadd.f32 0.0, %v6509
    %v6511 = vpop.f32.mrb[0].mxu0
    %v6512 = vpop.f32.mrb[0].mxu0
    %v6513 = vadd.f32 0.0, %v6512
    %v6514 = vpop.f32.mrb[0].mxu0
    %6515 = vmatprep.mubr.bf16.mxu0 0
    %6516 = vmatmul.mubr.bf16.gmra.mrb[0].mxu0 %v6135
    %v6517 = vpop.f32.mrb[0].mxu0
    %v6518 = vadd.f32 0.0, %v6517
    %v6519 = vpop.f32.mrb[0].mxu0
    %v6520 = vpop.f32.mrb[0].mxu0
    %v6521 = vadd.f32 0.0, %v6520
    %v6522 = vpop.f32.mrb[0].mxu0
    %6523 = vmatprep.mubr.bf16.mxu0 0
    %6524 = vmatmul.mubr.bf16.gmra.mrb[0].mxu0 %v6138
    %v6525 = vpop.f32.mrb[0].mxu0
    %v6526 = vadd.f32 0.0, %v6525
    %v6527 = vpop.f32.mrb[0].mxu0
    %v6528 = vpop.f32.mrb[0].mxu0
    %v6529 = vadd.f32 0.0, %v6528
    %v6530 = vpop.f32.mrb[0].mxu0
    %6531 = vmatprep.mubr.bf16.mxu0 0
    %6532 = vmatmul.mubr.bf16.gmra.mrb[0].mxu0 %v6141
    %v6533 = vpop.f32.mrb[0].mxu0
    %v6534 = vadd.f32 0.0, %v6533
    %v6535 = vpop.f32.mrb[0].mxu0
    %v6536 = vpop.f32.mrb[0].mxu0
    %v6537 = vadd.f32 0.0, %v6536
    %v6538 = vpop.f32.mrb[0].mxu0
    %6539 = vmatprep.mubr.bf16.mxu0 0
    %6540 = vmatmul.mubr.bf16.gmra.mrb[0].mxu0 %v6144
    %v6541 = vpop.f32.mrb[0].mxu0
    %v6542 = vadd.f32 0.0, %v6541
    %v6543 = vpop.f32.mrb[0].mxu0
    %v6544 = vpop.f32.mrb[0].mxu0
    %v6545 = vadd.f32 0.0, %v6544
    %v6546 = vpop.f32.mrb[0].mxu0
    %6547 = vmatprep.mubr.bf16.mxu0 0
    %6548 = vmatmul.mubr.bf16.gmra.mrb[0].mxu0 %v6147
    %v6549 = vpop.f32.mrb[0].mxu0
    %v6550 = vadd.f32 0.0, %v6549
    %v6551 = vpop.f32.mrb[0].mxu0
    %v6552 = vpop.f32.mrb[0].mxu0
    %v6553 = vadd.f32 0.0, %v6552
    %v6554 = vpop.f32.mrb[0].mxu0
    %6555 = vmatprep.mubr.bf16.mxu0 0
    %6556 = vmatmul.mubr.bf16.gmra.mrb[0].mxu0 %v6150
    %v6557 = vpop.f32.mrb[0].mxu0
    %v6558 = vadd.f32 0.0, %v6557
    %v6559 = vpop.f32.mrb[0].mxu0
    %v6560 = vpop.f32.mrb[0].mxu0
    %v6561 = vadd.f32 0.0, %v6560
    %v6562 = vpop.f32.mrb[0].mxu0
    %6563 = vmatprep.mubr.bf16.mxu0 0
    %6564 = vmatmul.mubr.bf16.gmra.mrb[0].mxu0 %v6153
    %v6565 = vpop.f32.mrb[0].mxu0
    %v6566 = vadd.f32 0.0, %v6565
    %v6567 = vpop.f32.mrb[0].mxu0
    %v6568 = vpop.f32.mrb[0].mxu0
    %v6569 = vadd.f32 0.0, %v6568
    %v6570 = vpop.f32.mrb[0].mxu0
    %6571 = vmatprep.mubr.bf16.mxu0 0
    %6572 = vmatmul.mubr.bf16.gmra.mrb[0].mxu0 %v6156
    %v6573 = vpop.f32.mrb[0].mxu0
    %v6574 = vadd.f32 0.0, %v6573
    %v6575 = vpop.f32.mrb[0].mxu0
    %v6576 = vpop.f32.mrb[0].mxu0
    %v6577 = vadd.f32 0.0, %v6576
    %v6578 = vpop.f32.mrb[0].mxu0
    %6579 = vmatprep.mubr.bf16.mxu0 0
    %6580 = vmatmul.mubr.bf16.gmra.mrb[0].mxu0 %v6473
    %v6581 = vpop.f32.mrb[0].mxu0
    %v6582 = vadd.f32 0.0, %v6581
    %v6583 = vpop.f32.mrb[0].mxu0
    %v6584 = vpop.f32.mrb[0].mxu0
    %v6585 = vadd.f32 0.0, %v6584
    %v6586 = vpop.f32.mrb[0].mxu0
    %6587 = vdwg.mxu0
    %v6588 = vadd.f32 %v6345, %v6510
    %v6589 = vadd.f32 %v6348, %v6513
    %v6590 = vadd.f32 %v6353, %v6518
    %v6591 = vadd.f32 %v6356, %v6521
    %v6592 = vadd.f32 %v6361, %v6526
    %v6593 = vadd.f32 %v6364, %v6529
    %v6594 = vadd.f32 %v6369, %v6534
    %v6595 = vadd.f32 %v6372, %v6537
    %v6596 = vadd.f32 %v6377, %v6542
    %v6597 = vadd.f32 %v6380, %v6545
    %v6598 = vadd.f32 %v6385, %v6550
    %v6599 = vadd.f32 %v6388, %v6553
    %v6600 = vadd.f32 %v6393, %v6558
    %v6601 = vadd.f32 %v6396, %v6561
    %v6602 = vadd.f32 %v6401, %v6566
    %v6603 = vadd.f32 %v6404, %v6569
    %v6604 = vadd.f32 %v6409, %v6574
    %v6605 = vadd.f32 %v6412, %v6577
    %v6606 = vadd.f32 %v6417, %v6582
    %v6607 = vadd.f32 %v6420, %v6585
    %v6608 = vld [vmem:[#allocation12] sm:$0x1]
    %v6610 = vlaneseq
    %v6611 = vshrl.u32 %v6610, 7
    %v6612 = vsub.s32 0, %v6611
    %v6613 = vrot.slane %v6608, %v6612
    %v6615 = vmul.f32 %v6588, %v6613
    %v6616 = vmul.f32 %v6589, %v6613
    %v6617 = vmul.f32 %v6590, %v6613
    %v6618 = vmul.f32 %v6591, %v6613
    %v6619 = vmul.f32 %v6592, %v6613
    %v6620 = vmul.f32 %v6593, %v6613
    %v6621 = vmul.f32 %v6594, %v6613
    %v6622 = vmul.f32 %v6595, %v6613
    %v6623 = vmul.f32 %v6596, %v6613
    %v6624 = vmul.f32 %v6597, %v6613
    %v6625 = vmul.f32 %v6598, %v6613
    %v6626 = vmul.f32 %v6599, %v6613
    %v6627 = vmul.f32 %v6600, %v6613
    %v6628 = vmul.f32 %v6601, %v6613
    %v6629 = vmul.f32 %v6602, %v6613
    %v6630 = vmul.f32 %v6603, %v6613
    %v6631 = vmul.f32 %v6604, %v6613
    %v6632 = vmul.f32 %v6605, %v6613
    %v6633 = vmul.f32 %v6606, %v6613
    %v6634 = vmul.f32 %v6607, %v6613
    %v6635 = vld [vmem:[%s12] sm:$0x1]
    %v6637 = vlaneseq
    %v6638 = vshrl.u32 %v6637, 7
    %v6639 = vsub.s32 0, %v6638
    %v6640 = vrot.slane %v6635, %v6639
    %v6642 = vadd.f32 %v6615, %v6640
    %v6643 = vadd.f32 %v6616, %v6640
    %v6644 = vadd.f32 %v6617, %v6640
    %v6645 = vadd.f32 %v6618, %v6640
    %v6646 = vadd.f32 %v6619, %v6640
    %v6647 = vadd.f32 %v6620, %v6640
    %v6648 = vadd.f32 %v6621, %v6640
    %v6649 = vadd.f32 %v6622, %v6640
    %v6650 = vadd.f32 %v6623, %v6640
    %v6651 = vadd.f32 %v6624, %v6640
    %v6652 = vadd.f32 %v6625, %v6640
    %v6653 = vadd.f32 %v6626, %v6640
    %v6654 = vadd.f32 %v6627, %v6640
    %v6655 = vadd.f32 %v6628, %v6640
    %v6656 = vadd.f32 %v6629, %v6640
    %v6657 = vadd.f32 %v6630, %v6640
    %v6658 = vadd.f32 %v6631, %v6640
    %v6659 = vadd.f32 %v6632, %v6640
    %v6660 = vadd.f32 %v6633, %v6640
    %v6661 = vadd.f32 %v6634, %v6640
    %v6662 = vmax.f32 %v6642, 0.0
    %v6663 = vmax.f32 %v6643, 0.0
    %v6664 = vmax.f32 %v6644, 0.0
    %v6665 = vmax.f32 %v6645, 0.0
    %v6666 = vmax.f32 %v6646, 0.0
    %v6667 = vmax.f32 %v6647, 0.0
    %v6668 = vmax.f32 %v6648, 0.0
    %v6669 = vmax.f32 %v6649, 0.0
    %v6670 = vmax.f32 %v6650, 0.0
    %v6671 = vmax.f32 %v6651, 0.0
    %v6672 = vmax.f32 %v6652, 0.0
    %v6673 = vmax.f32 %v6653, 0.0
    %v6674 = vmax.f32 %v6654, 0.0
    %v6675 = vmax.f32 %v6655, 0.0
    %v6676 = vmax.f32 %v6656, 0.0
    %v6677 = vmax.f32 %v6657, 0.0
    %v6678 = vmax.f32 %v6658, 0.0
    %v6679 = vmax.f32 %v6659, 0.0
    %v6680 = vmax.f32 %v6660, 0.0
    %v6681 = vmax.f32 %v6661, 0.0
    %v6682 = vpack.c.bf16 %v6663, %v6662
    %v6683 = vpack.c.bf16 %v6665, %v6664
    %v6684 = vpack.c.bf16 %v6667, %v6666
    %v6685 = vpack.c.bf16 %v6669, %v6668
    %v6686 = vpack.c.bf16 %v6671, %v6670
    %v6687 = vpack.c.bf16 %v6673, %v6672
    %v6688 = vpack.c.bf16 %v6675, %v6674
    %v6689 = vpack.c.bf16 %v6677, %v6676
    %v6690 = vpack.c.bf16 %v6679, %v6678
    %v6691 = vpack.c.bf16 %v6681, %v6680
    %v6692 = vld [vmem:[#allocation13] sm:$0xf]
    %v6693 = vld [vmem:[#allocation13 + $0x4] sm:$0xf]
    %v6694 = vld [vmem:[#allocation13 + $0x8] sm:$0xf]
    %v6695 = vld [vmem:[#allocation13 + $0xc] sm:$0xf]
    %v6696 = vld [vmem:[#allocation13 + $0x10] sm:$0xf]
    %v6697 = vld [vmem:[#allocation13 + $0x14] sm:$0xf]
    %v6698 = vld [vmem:[#allocation13 + $0x18] sm:$0xf]
    %v6699 = vld [vmem:[#allocation13 + $0x1c] sm:$0xf]
    %v6700 = vld [vmem:[#allocation13 + $0x20] sm:$0xf]
    %v6701 = vld [vmem:[#allocation13 + $0x24] sm:$0xf]
    %v6702 = vld [vmem:[#allocation13 + $0x28] sm:$0xf]
    %v6703 = vld [vmem:[#allocation13 + $0x2c] sm:$0xf]
    %v6704 = vld [vmem:[#allocation13 + $0x30] sm:$0xf]
    %v6705 = vld [vmem:[#allocation13 + $0x34] sm:$0xf]
    %v6706 = vld [vmem:[#allocation13 + $0x38] sm:$0xf]
    %s6707 = scalar_lea.vmem [#allocation13], 60
    %v6708 = vld [vmem:[%s6707] sm:$0xf]
    %v6709 = vld [vmem:[%s6707 + $0x4] sm:$0xf]
    %v6710 = vld [vmem:[%s6707 + $0x8] sm:$0xf]
    %v6711 = vld [vmem:[%s6707 + $0xc] sm:$0xf]
    %v6712 = vld [vmem:[%s6707 + $0x10] sm:$0xf]
    %v6713 = vld [vmem:[%s6707 + $0x14] sm:$0xf]
    %v6714 = vld [vmem:[%s6707 + $0x18] sm:$0xf]
    %v6715 = vld [vmem:[%s6707 + $0x1c] sm:$0xf]
    %v6716 = vld [vmem:[%s6707 + $0x20] sm:$0xf]
    %v6717 = vld [vmem:[%s6707 + $0x24] sm:$0xf]
    %v6718 = vld [vmem:[%s6707 + $0x28] sm:$0xf]
    %v6719 = vld [vmem:[%s6707 + $0x2c] sm:$0xf]
    %v6720 = vld [vmem:[%s6707 + $0x30] sm:$0xf]
    %v6721 = vld [vmem:[%s6707 + $0x34] sm:$0xf]
    %v6722 = vld [vmem:[%s6707 + $0x38] sm:$0xf]
    %v6738 = vunpack.c.l.b16 %v6708
    %v6739 = vunpack.c.l.b16 %v6709
    %v6740 = vunpack.c.l.b16 %v6710
    %v6741 = vunpack.c.l.b16 %v6711
    %v6742 = vunpack.c.l.b16 %v6712
    %v6743 = vunpack.c.l.b16 %v6713
    %v6744 = vunpack.c.l.b16 %v6714
    %v6745 = vunpack.c.l.b16 %v6715
    %v6746 = vunpack.c.l.b16 %v6716
    %v6747 = vunpack.c.l.b16 %v6717
    %v6748 = vunpack.c.l.b16 %v6718
    %v6749 = vunpack.c.l.b16 %v6719
    %v6750 = vunpack.c.l.b16 %v6720
    %v6751 = vunpack.c.l.b16 %v6721
    %v6752 = vunpack.c.l.b16 %v6722
    %v6753 = vpack.c.b16 %v6739, %v6738
    %v6754 = vpack.c.b16 %v6741, %v6740
    %v6755 = vpack.c.b16 %v6743, %v6742
    %v6756 = vpack.c.b16 %v6745, %v6744
    %v6757 = vpack.c.b16 %v6747, %v6746
    %v6758 = vpack.c.b16 %v6749, %v6748
    %v6759 = vpack.c.b16 %v6751, %v6750
    %v6760 = vpack.c.b16 %v6752, %v6752
    %vm6768 = vcmask 982016
    %v6770 = vsel %vm6768, %v6683, 0
    %v6773 = vsel %vm6768, %v6684, 0
    %v6776 = vsel %vm6768, %v6685, 0
    %v6779 = vsel %vm6768, %v6686, 0
    %v6782 = vsel %vm6768, %v6687, 0
    %v6785 = vsel %vm6768, %v6688, 0
    %v6788 = vsel %vm6768, %v6689, 0
    %v6791 = vsel %vm6768, %v6690, 0
    %vm6793 = vcmask 1043456
    %v6795 = vsel %vm6793, %v6760, 0
    %6797 = vmatprep.subr.bf16.mxu0 0
    %6798 = vmatpush1.bf16.msra.mxu0 %v6753
    %6799 = vmatprep.subr.bf16.mxu0 0
    %6800 = vmatpush1.bf16.msra.mxu0 %v6754
    %6801 = vmatprep.subr.bf16.mxu0 0
    %6802 = vmatpush1.bf16.msra.mxu0 %v6755
    %6803 = vmatprep.subr.bf16.mxu0 0
    %6804 = vmatpush1.bf16.msra.mxu0 %v6756
    %6805 = vmatprep.subr.bf16.mxu0 0
    %6806 = vmatpush1.bf16.msra.mxu0 %v6757
    %6807 = vmatprep.subr.bf16.mxu0 0
    %6808 = vmatpush1.bf16.msra.mxu0 %v6758
    %6809 = vmatprep.subr.bf16.mxu0 0
    %6810 = vmatpush1.bf16.msra.mxu0 %v6759
    %6811 = vmatprep.subr.bf16.mxu0 0
    %6812 = vmatpush1.bf16.msra.mxu0 %v6795
    %6813 = vmatprep.subr.bf16.mxu0 0
    %6814 = vmatpush1.bf16.msra.mxu0 0
    %6815 = vmatprep.subr.bf16.mxu0 0
    %6816 = vmatpush1.bf16.msra.mxu0 0
    %6817 = vmatprep.subr.bf16.mxu0 0
    %6818 = vmatpush1.bf16.msra.mxu0 0
    %6819 = vmatprep.subr.bf16.mxu0 0
    %6820 = vmatpush1.bf16.msra.mxu0 0
    %6821 = vmatprep.subr.bf16.mxu0 0
    %6822 = vmatpush1.bf16.msra.mxu0 0
    %6823 = vmatprep.subr.bf16.mxu0 0
    %6824 = vmatpush1.bf16.msra.mxu0 0
    %6825 = vmatprep.subr.bf16.mxu0 0
    %6826 = vmatpush1.bf16.msra.mxu0 0
    %6827 = vmatprep.subr.bf16.mxu0 0
    %6828 = vmatpush1.bf16.msra.mxu0 0
    %6829 = vmatprep.mubr.bf16.mxu0 0
    %6830 = vmatmul.mubr.bf16.gmra.mrb[0].mxu0 %v6770
    %v6831 = vpop.f32.mrb[0].mxu0
    %v6832 = vadd.f32 0.0, %v6831
    %v6833 = vpop.f32.mrb[0].mxu0
    %v6834 = vpop.f32.mrb[0].mxu0
    %v6835 = vadd.f32 0.0, %v6834
    %v6836 = vpop.f32.mrb[0].mxu0
    %6837 = vmatprep.mubr.bf16.mxu0 0
    %6838 = vmatmul.mubr.bf16.gmra.mrb[0].mxu0 %v6773
    %v6839 = vpop.f32.mrb[0].mxu0
    %v6840 = vadd.f32 0.0, %v6839
    %v6841 = vpop.f32.mrb[0].mxu0
    %v6842 = vpop.f32.mrb[0].mxu0
    %v6843 = vadd.f32 0.0, %v6842
    %v6844 = vpop.f32.mrb[0].mxu0
    %6845 = vmatprep.mubr.bf16.mxu0 0
    %6846 = vmatmul.mubr.bf16.gmra.mrb[0].mxu0 %v6776
    %v6847 = vpop.f32.mrb[0].mxu0
    %v6848 = vadd.f32 0.0, %v6847
    %v6849 = vpop.f32.mrb[0].mxu0
    %v6850 = vpop.f32.mrb[0].mxu0
    %v6851 = vadd.f32 0.0, %v6850
    %v6852 = vpop.f32.mrb[0].mxu0
    %6853 = vmatprep.mubr.bf16.mxu0 0
    %6854 = vmatmul.mubr.bf16.gmra.mrb[0].mxu0 %v6779
    %v6855 = vpop.f32.mrb[0].mxu0
    %v6856 = vadd.f32 0.0, %v6855
    %v6857 = vpop.f32.mrb[0].mxu0
    %v6858 = vpop.f32.mrb[0].mxu0
    %v6859 = vadd.f32 0.0, %v6858
    %v6860 = vpop.f32.mrb[0].mxu0
    %6861 = vmatprep.mubr.bf16.mxu0 0
    %6862 = vmatmul.mubr.bf16.gmra.mrb[0].mxu0 %v6782
    %v6863 = vpop.f32.mrb[0].mxu0
    %v6864 = vadd.f32 0.0, %v6863
    %v6865 = vpop.f32.mrb[0].mxu0
    %v6866 = vpop.f32.mrb[0].mxu0
    %v6867 = vadd.f32 0.0, %v6866
    %v6868 = vpop.f32.mrb[0].mxu0
    %6869 = vmatprep.mubr.bf16.mxu0 0
    %6870 = vmatmul.mubr.bf16.gmra.mrb[0].mxu0 %v6785
    %v6871 = vpop.f32.mrb[0].mxu0
    %v6872 = vadd.f32 0.0, %v6871
    %v6873 = vpop.f32.mrb[0].mxu0
    %v6874 = vpop.f32.mrb[0].mxu0
    %v6875 = vadd.f32 0.0, %v6874
    %v6876 = vpop.f32.mrb[0].mxu0
    %6877 = vmatprep.mubr.bf16.mxu0 0
    %6878 = vmatmul.mubr.bf16.gmra.mrb[0].mxu0 %v6788
    %v6879 = vpop.f32.mrb[0].mxu0
    %v6880 = vadd.f32 0.0, %v6879
    %v6881 = vpop.f32.mrb[0].mxu0
    %v6882 = vpop.f32.mrb[0].mxu0
    %v6883 = vadd.f32 0.0, %v6882
    %v6884 = vpop.f32.mrb[0].mxu0
    %6885 = vmatprep.mubr.bf16.mxu0 0
    %6886 = vmatmul.mubr.bf16.gmra.mrb[0].mxu0 %v6791
    %v6887 = vpop.f32.mrb[0].mxu0
    %v6888 = vadd.f32 0.0, %v6887
    %v6889 = vpop.f32.mrb[0].mxu0
    %v6890 = vpop.f32.mrb[0].mxu0
    %v6891 = vadd.f32 0.0, %v6890
    %v6892 = vpop.f32.mrb[0].mxu0
    %6893 = vdwg.mxu0
    %v6909 = vunpack.c.l.b16 %v6692
    %v6910 = vunpack.c.l.b16 %v6693
    %v6911 = vunpack.c.l.b16 %v6694
    %v6912 = vunpack.c.l.b16 %v6695
    %v6913 = vunpack.c.l.b16 %v6696
    %v6914 = vunpack.c.l.b16 %v6697
    %v6915 = vunpack.c.l.b16 %v6698
    %v6916 = vunpack.c.l.b16 %v6699
    %v6917 = vunpack.c.l.b16 %v6700
    %v6918 = vunpack.c.l.b16 %v6701
    %v6919 = vunpack.c.l.b16 %v6702
    %v6920 = vunpack.c.l.b16 %v6703
    %v6921 = vunpack.c.l.b16 %v6704
    %v6922 = vunpack.c.l.b16 %v6705
    %v6923 = vunpack.c.l.b16 %v6706
    %v6924 = vpack.c.b16 %v6910, %v6909
    %v6925 = vpack.c.b16 %v6912, %v6911
    %v6926 = vpack.c.b16 %v6914, %v6913
    %v6927 = vpack.c.b16 %v6916, %v6915
    %v6928 = vpack.c.b16 %v6918, %v6917
    %v6929 = vpack.c.b16 %v6920, %v6919
    %v6930 = vpack.c.b16 %v6922, %v6921
    %v6931 = vpack.c.b16 %v6923, %v6923
    %v6940 = vsel %vm6768, %v6682, 0
    %v6943 = vsel %vm6793, %v6931, 0
    %6945 = vmatprep.subr.bf16.mxu0 0
    %6946 = vmatpush1.bf16.msra.mxu0 %v6924
    %6947 = vmatprep.subr.bf16.mxu0 0
    %6948 = vmatpush1.bf16.msra.mxu0 %v6925
    %6949 = vmatprep.subr.bf16.mxu0 0
    %6950 = vmatpush1.bf16.msra.mxu0 %v6926
    %6951 = vmatprep.subr.bf16.mxu0 0
    %6952 = vmatpush1.bf16.msra.mxu0 %v6927
    %6953 = vmatprep.subr.bf16.mxu0 0
    %6954 = vmatpush1.bf16.msra.mxu0 %v6928
    %6955 = vmatprep.subr.bf16.mxu0 0
    %6956 = vmatpush1.bf16.msra.mxu0 %v6929
    %6957 = vmatprep.subr.bf16.mxu0 0
    %6958 = vmatpush1.bf16.msra.mxu0 %v6930
    %6959 = vmatprep.subr.bf16.mxu0 0
    %6960 = vmatpush1.bf16.msra.mxu0 %v6943
    %6961 = vmatprep.subr.bf16.mxu0 0
    %6962 = vmatpush1.bf16.msra.mxu0 0
    %6963 = vmatprep.subr.bf16.mxu0 0
    %6964 = vmatpush1.bf16.msra.mxu0 0
    %6965 = vmatprep.subr.bf16.mxu0 0
    %6966 = vmatpush1.bf16.msra.mxu0 0
    %6967 = vmatprep.subr.bf16.mxu0 0
    %6968 = vmatpush1.bf16.msra.mxu0 0
    %6969 = vmatprep.subr.bf16.mxu0 0
    %6970 = vmatpush1.bf16.msra.mxu0 0
    %6971 = vmatprep.subr.bf16.mxu0 0
    %6972 = vmatpush1.bf16.msra.mxu0 0
    %6973 = vmatprep.subr.bf16.mxu0 0
    %6974 = vmatpush1.bf16.msra.mxu0 0
    %6975 = vmatprep.subr.bf16.mxu0 0
    %6976 = vmatpush1.bf16.msra.mxu0 0
    %6977 = vmatprep.mubr.bf16.mxu0 0
    %6978 = vmatmul.mubr.bf16.gmra.mrb[0].mxu0 %v6940
    %v6979 = vpop.f32.mrb[0].mxu0
    %v6980 = vadd.f32 %v6832, %v6979
    %v6981 = vpop.f32.mrb[0].mxu0
    %v6982 = vpop.f32.mrb[0].mxu0
    %v6983 = vadd.f32 %v6835, %v6982
    %v6984 = vpop.f32.mrb[0].mxu0
    %6985 = vmatprep.mubr.bf16.mxu0 0
    %6986 = vmatmul.mubr.bf16.gmra.mrb[0].mxu0 %v6770
    %v6987 = vpop.f32.mrb[0].mxu0
    %v6988 = vadd.f32 %v6840, %v6987
    %v6989 = vpop.f32.mrb[0].mxu0
    %v6990 = vpop.f32.mrb[0].mxu0
    %v6991 = vadd.f32 %v6843, %v6990
    %v6992 = vpop.f32.mrb[0].mxu0
    %6993 = vmatprep.mubr.bf16.mxu0 0
    %6994 = vmatmul.mubr.bf16.gmra.mrb[0].mxu0 %v6773
    %v6995 = vpop.f32.mrb[0].mxu0
    %v6996 = vadd.f32 %v6848, %v6995
    %v6997 = vpop.f32.mrb[0].mxu0
    %v6998 = vpop.f32.mrb[0].mxu0
    %v6999 = vadd.f32 %v6851, %v6998
    %v7000 = vpop.f32.mrb[0].mxu0
    %7001 = vmatprep.mubr.bf16.mxu0 0
    %7002 = vmatmul.mubr.bf16.gmra.mrb[0].mxu0 %v6776
    %v7003 = vpop.f32.mrb[0].mxu0
    %v7004 = vadd.f32 %v6856, %v7003
    %v7005 = vpop.f32.mrb[0].mxu0
    %v7006 = vpop.f32.mrb[0].mxu0
    %v7007 = vadd.f32 %v6859, %v7006
    %v7008 = vpop.f32.mrb[0].mxu0
    %7009 = vmatprep.mubr.bf16.mxu0 0
    %7010 = vmatmul.mubr.bf16.gmra.mrb[0].mxu0 %v6779
    %v7011 = vpop.f32.mrb[0].mxu0
    %v7012 = vadd.f32 %v6864, %v7011
    %v7013 = vpop.f32.mrb[0].mxu0
    %v7014 = vpop.f32.mrb[0].mxu0
    %v7015 = vadd.f32 %v6867, %v7014
    %v7016 = vpop.f32.mrb[0].mxu0
    %7017 = vmatprep.mubr.bf16.mxu0 0
    %7018 = vmatmul.mubr.bf16.gmra.mrb[0].mxu0 %v6782
    %v7019 = vpop.f32.mrb[0].mxu0
    %v7020 = vadd.f32 %v6872, %v7019
    %v7021 = vpop.f32.mrb[0].mxu0
    %v7022 = vpop.f32.mrb[0].mxu0
    %v7023 = vadd.f32 %v6875, %v7022
    %v7024 = vpop.f32.mrb[0].mxu0
    %7025 = vmatprep.mubr.bf16.mxu0 0
    %7026 = vmatmul.mubr.bf16.gmra.mrb[0].mxu0 %v6785
    %v7027 = vpop.f32.mrb[0].mxu0
    %v7028 = vadd.f32 %v6880, %v7027
    %v7029 = vpop.f32.mrb[0].mxu0
    %v7030 = vpop.f32.mrb[0].mxu0
    %v7031 = vadd.f32 %v6883, %v7030
    %v7032 = vpop.f32.mrb[0].mxu0
    %7033 = vmatprep.mubr.bf16.mxu0 0
    %7034 = vmatmul.mubr.bf16.gmra.mrb[0].mxu0 %v6788
    %v7035 = vpop.f32.mrb[0].mxu0
    %v7036 = vadd.f32 %v6888, %v7035
    %v7037 = vpop.f32.mrb[0].mxu0
    %v7038 = vpop.f32.mrb[0].mxu0
    %v7039 = vadd.f32 %v6891, %v7038
    %v7040 = vpop.f32.mrb[0].mxu0
    %7041 = vdwg.mxu0
    %s7042 = scalar_lea.vmem [#allocation13], 120
    %v7043 = vld [vmem:[%s7042] sm:$0xf]
    %v7044 = vld [vmem:[%s7042 + $0x4] sm:$0xf]
    %v7045 = vld [vmem:[%s7042 + $0x8] sm:$0xf]
    %v7046 = vld [vmem:[%s7042 + $0xc] sm:$0xf]
    %v7047 = vld [vmem:[%s7042 + $0x10] sm:$0xf]
    %v7048 = vld [vmem:[%s7042 + $0x14] sm:$0xf]
    %v7049 = vld [vmem:[%s7042 + $0x18] sm:$0xf]
    %v7050 = vld [vmem:[%s7042 + $0x1c] sm:$0xf]
    %v7051 = vld [vmem:[%s7042 + $0x20] sm:$0xf]
    %v7052 = vld [vmem:[%s7042 + $0x24] sm:$0xf]
    %v7053 = vld [vmem:[%s7042 + $0x28] sm:$0xf]
    %v7054 = vld [vmem:[%s7042 + $0x2c] sm:$0xf]
    %v7055 = vld [vmem:[%s7042 + $0x30] sm:$0xf]
    %v7056 = vld [vmem:[%s7042 + $0x34] sm:$0xf]
    %v7057 = vld [vmem:[%s7042 + $0x38] sm:$0xf]
    %v7073 = vunpack.c.l.b16 %v7043
    %v7074 = vunpack.c.l.b16 %v7044
    %v7075 = vunpack.c.l.b16 %v7045
    %v7076 = vunpack.c.l.b16 %v7046
    %v7077 = vunpack.c.l.b16 %v7047
    %v7078 = vunpack.c.l.b16 %v7048
    %v7079 = vunpack.c.l.b16 %v7049
    %v7080 = vunpack.c.l.b16 %v7050
    %v7081 = vunpack.c.l.b16 %v7051
    %v7082 = vunpack.c.l.b16 %v7052
    %v7083 = vunpack.c.l.b16 %v7053
    %v7084 = vunpack.c.l.b16 %v7054
    %v7085 = vunpack.c.l.b16 %v7055
    %v7086 = vunpack.c.l.b16 %v7056
    %v7087 = vunpack.c.l.b16 %v7057
    %v7088 = vpack.c.b16 %v7074, %v7073
    %v7089 = vpack.c.b16 %v7076, %v7075
    %v7090 = vpack.c.b16 %v7078, %v7077
    %v7091 = vpack.c.b16 %v7080, %v7079
    %v7092 = vpack.c.b16 %v7082, %v7081
    %v7093 = vpack.c.b16 %v7084, %v7083
    %v7094 = vpack.c.b16 %v7086, %v7085
    %v7095 = vpack.c.b16 %v7087, %v7087
    %v7104 = vsel %vm6768, %v6691, 0
    %v7107 = vsel %vm6793, %v7095, 0
    %7109 = vmatprep.subr.bf16.mxu0 0
    %7110 = vmatpush1.bf16.msra.mxu0 %v7088
    %7111 = vmatprep.subr.bf16.mxu0 0
    %7112 = vmatpush1.bf16.msra.mxu0 %v7089
    %7113 = vmatprep.subr.bf16.mxu0 0
    %7114 = vmatpush1.bf16.msra.mxu0 %v7090
    %7115 = vmatprep.subr.bf16.mxu0 0
    %7116 = vmatpush1.bf16.msra.mxu0 %v7091
    %7117 = vmatprep.subr.bf16.mxu0 0
    %7118 = vmatpush1.bf16.msra.mxu0 %v7092
    %7119 = vmatprep.subr.bf16.mxu0 0
    %7120 = vmatpush1.bf16.msra.mxu0 %v7093
    %7121 = vmatprep.subr.bf16.mxu0 0
    %7122 = vmatpush1.bf16.msra.mxu0 %v7094
    %7123 = vmatprep.subr.bf16.mxu0 0
    %7124 = vmatpush1.bf16.msra.mxu0 %v7107
    %7125 = vmatprep.subr.bf16.mxu0 0
    %7126 = vmatpush1.bf16.msra.mxu0 0
    %7127 = vmatprep.subr.bf16.mxu0 0
    %7128 = vmatpush1.bf16.msra.mxu0 0
    %7129 = vmatprep.subr.bf16.mxu0 0
    %7130 = vmatpush1.bf16.msra.mxu0 0
    %7131 = vmatprep.subr.bf16.mxu0 0
    %7132 = vmatpush1.bf16.msra.mxu0 0
    %7133 = vmatprep.subr.bf16.mxu0 0
    %7134 = vmatpush1.bf16.msra.mxu0 0
    %7135 = vmatprep.subr.bf16.mxu0 0
    %7136 = vmatpush1.bf16.msra.mxu0 0
    %7137 = vmatprep.subr.bf16.mxu0 0
    %7138 = vmatpush1.bf16.msra.mxu0 0
    %7139 = vmatprep.subr.bf16.mxu0 0
    %7140 = vmatpush1.bf16.msra.mxu0 0
    %7141 = vmatprep.mubr.bf16.mxu0 0
    %7142 = vmatmul.mubr.bf16.gmra.mrb[0].mxu0 %v6773
    %v7143 = vpop.f32.mrb[0].mxu0
    %v7144 = vadd.f32 0.0, %v7143
    %v7145 = vpop.f32.mrb[0].mxu0
    %v7146 = vpop.f32.mrb[0].mxu0
    %v7147 = vadd.f32 0.0, %v7146
    %v7148 = vpop.f32.mrb[0].mxu0
    %7149 = vmatprep.mubr.bf16.mxu0 0
    %7150 = vmatmul.mubr.bf16.gmra.mrb[0].mxu0 %v6776
    %v7151 = vpop.f32.mrb[0].mxu0
    %v7152 = vadd.f32 0.0, %v7151
    %v7153 = vpop.f32.mrb[0].mxu0
    %v7154 = vpop.f32.mrb[0].mxu0
    %v7155 = vadd.f32 0.0, %v7154
    %v7156 = vpop.f32.mrb[0].mxu0
    %7157 = vmatprep.mubr.bf16.mxu0 0
    %7158 = vmatmul.mubr.bf16.gmra.mrb[0].mxu0 %v6779
    %v7159 = vpop.f32.mrb[0].mxu0
    %v7160 = vadd.f32 0.0, %v7159
    %v7161 = vpop.f32.mrb[0].mxu0
    %v7162 = vpop.f32.mrb[0].mxu0
    %v7163 = vadd.f32 0.0, %v7162
    %v7164 = vpop.f32.mrb[0].mxu0
    %7165 = vmatprep.mubr.bf16.mxu0 0
    %7166 = vmatmul.mubr.bf16.gmra.mrb[0].mxu0 %v6782
    %v7167 = vpop.f32.mrb[0].mxu0
    %v7168 = vadd.f32 0.0, %v7167
    %v7169 = vpop.f32.mrb[0].mxu0
    %v7170 = vpop.f32.mrb[0].mxu0
    %v7171 = vadd.f32 0.0, %v7170
    %v7172 = vpop.f32.mrb[0].mxu0
    %7173 = vmatprep.mubr.bf16.mxu0 0
    %7174 = vmatmul.mubr.bf16.gmra.mrb[0].mxu0 %v6785
    %v7175 = vpop.f32.mrb[0].mxu0
    %v7176 = vadd.f32 0.0, %v7175
    %v7177 = vpop.f32.mrb[0].mxu0
    %v7178 = vpop.f32.mrb[0].mxu0
    %v7179 = vadd.f32 0.0, %v7178
    %v7180 = vpop.f32.mrb[0].mxu0
    %7181 = vmatprep.mubr.bf16.mxu0 0
    %7182 = vmatmul.mubr.bf16.gmra.mrb[0].mxu0 %v6788
    %v7183 = vpop.f32.mrb[0].mxu0
    %v7184 = vadd.f32 0.0, %v7183
    %v7185 = vpop.f32.mrb[0].mxu0
    %v7186 = vpop.f32.mrb[0].mxu0
    %v7187 = vadd.f32 0.0, %v7186
    %v7188 = vpop.f32.mrb[0].mxu0
    %7189 = vmatprep.mubr.bf16.mxu0 0
    %7190 = vmatmul.mubr.bf16.gmra.mrb[0].mxu0 %v6791
    %v7191 = vpop.f32.mrb[0].mxu0
    %v7192 = vadd.f32 0.0, %v7191
    %v7193 = vpop.f32.mrb[0].mxu0
    %v7194 = vpop.f32.mrb[0].mxu0
    %v7195 = vadd.f32 0.0, %v7194
    %v7196 = vpop.f32.mrb[0].mxu0
    %7197 = vmatprep.mubr.bf16.mxu0 0
    %7198 = vmatmul.mubr.bf16.gmra.mrb[0].mxu0 %v7104
    %v7199 = vpop.f32.mrb[0].mxu0
    %v7200 = vadd.f32 0.0, %v7199
    %v7201 = vpop.f32.mrb[0].mxu0
    %v7202 = vpop.f32.mrb[0].mxu0
    %v7203 = vadd.f32 0.0, %v7202
    %v7204 = vpop.f32.mrb[0].mxu0
    %7205 = vdwg.mxu0
    %v7206 = vadd.f32 %v6980, %v7144
    %v7207 = vadd.f32 %v6983, %v7147
    %v7208 = vadd.f32 %v6988, %v7152
    %v7209 = vadd.f32 %v6991, %v7155
    %v7210 = vadd.f32 %v6996, %v7160
    %v7211 = vadd.f32 %v6999, %v7163
    %v7212 = vadd.f32 %v7004, %v7168
    %v7213 = vadd.f32 %v7007, %v7171
    %v7214 = vadd.f32 %v7012, %v7176
    %v7215 = vadd.f32 %v7015, %v7179
    %v7216 = vadd.f32 %v7020, %v7184
    %v7217 = vadd.f32 %v7023, %v7187
    %v7218 = vadd.f32 %v7028, %v7192
    %v7219 = vadd.f32 %v7031, %v7195
    %v7220 = vadd.f32 %v7036, %v7200
    %v7221 = vadd.f32 %v7039, %v7203
    %v7222 = vld [vmem:[#allocation15] sm:$0x1]
    %v7224 = vlaneseq
    %v7225 = vshrl.u32 %v7224, 7
    %v7226 = vsub.s32 0, %v7225
    %v7227 = vrot.slane %v7222, %v7226
    %v7229 = vmul.f32 %v7206, %v7227
    %v7230 = vmul.f32 %v7207, %v7227
    %v7231 = vmul.f32 %v7208, %v7227
    %v7232 = vmul.f32 %v7209, %v7227
    %v7233 = vmul.f32 %v7210, %v7227
    %v7234 = vmul.f32 %v7211, %v7227
    %v7235 = vmul.f32 %v7212, %v7227
    %v7236 = vmul.f32 %v7213, %v7227
    %v7237 = vmul.f32 %v7214, %v7227
    %v7238 = vmul.f32 %v7215, %v7227
    %v7239 = vmul.f32 %v7216, %v7227
    %v7240 = vmul.f32 %v7217, %v7227
    %v7241 = vmul.f32 %v7218, %v7227
    %v7242 = vmul.f32 %v7219, %v7227
    %v7243 = vmul.f32 %v7220, %v7227
    %v7244 = vmul.f32 %v7221, %v7227
    %v7245 = vld [vmem:[#allocation16] sm:$0x1]
    %v7247 = vlaneseq
    %v7248 = vshrl.u32 %v7247, 7
    %v7249 = vsub.s32 0, %v7248
    %v7250 = vrot.slane %v7245, %v7249
    %v7252 = vadd.f32 %v7229, %v7250
    %v7253 = vadd.f32 %v7230, %v7250
    %v7254 = vadd.f32 %v7231, %v7250
    %v7255 = vadd.f32 %v7232, %v7250
    %v7256 = vadd.f32 %v7233, %v7250
    %v7257 = vadd.f32 %v7234, %v7250
    %v7258 = vadd.f32 %v7235, %v7250
    %v7259 = vadd.f32 %v7236, %v7250
    %v7260 = vadd.f32 %v7237, %v7250
    %v7261 = vadd.f32 %v7238, %v7250
    %v7262 = vadd.f32 %v7239, %v7250
    %v7263 = vadd.f32 %v7240, %v7250
    %v7264 = vadd.f32 %v7241, %v7250
    %v7265 = vadd.f32 %v7242, %v7250
    %v7266 = vadd.f32 %v7243, %v7250
    %v7267 = vadd.f32 %v7244, %v7250
    %v7268 = vmax.f32 %v7252, 0.0
    %v7269 = vmax.f32 %v7253, 0.0
    %v7270 = vmax.f32 %v7254, 0.0
    %v7271 = vmax.f32 %v7255, 0.0
    %v7272 = vmax.f32 %v7256, 0.0
    %v7273 = vmax.f32 %v7257, 0.0
    %v7274 = vmax.f32 %v7258, 0.0
    %v7275 = vmax.f32 %v7259, 0.0
    %v7276 = vmax.f32 %v7260, 0.0
    %v7277 = vmax.f32 %v7261, 0.0
    %v7278 = vmax.f32 %v7262, 0.0
    %v7279 = vmax.f32 %v7263, 0.0
    %v7280 = vmax.f32 %v7264, 0.0
    %v7281 = vmax.f32 %v7265, 0.0
    %v7282 = vmax.f32 %v7266, 0.0
    %v7283 = vmax.f32 %v7267, 0.0
    %v7284 = vpack.c.bf16 %v7269, %v7268
    %v7285 = vpack.c.bf16 %v7271, %v7270
    %v7286 = vpack.c.bf16 %v7273, %v7272
    %v7287 = vpack.c.bf16 %v7275, %v7274
    %v7288 = vpack.c.bf16 %v7277, %v7276
    %v7289 = vpack.c.bf16 %v7279, %v7278
    %v7290 = vpack.c.bf16 %v7281, %v7280
    %v7291 = vpack.c.bf16 %v7283, %v7282
    %v7292 = vld [vmem:[%s16] sm:$0xf]
    %v7293 = vld [vmem:[%s16 + $0x4] sm:$0xf]
    %v7294 = vld [vmem:[%s16 + $0x8] sm:$0xf]
    %v7295 = vld [vmem:[%s16 + $0xc] sm:$0xf]
    %v7296 = vld [vmem:[%s16 + $0x10] sm:$0xf]
    %v7297 = vld [vmem:[%s16 + $0x14] sm:$0xf]
    %v7298 = vld [vmem:[%s16 + $0x18] sm:$0xf]
    %v7299 = vld [vmem:[%s16 + $0x1c] sm:$0xf]
    %v7300 = vld [vmem:[%s16 + $0x20] sm:$0xf]
    %v7301 = vld [vmem:[%s16 + $0x24] sm:$0xf]
    %v7302 = vld [vmem:[%s16 + $0x28] sm:$0xf]
    %v7303 = vld [vmem:[%s16 + $0x2c] sm:$0xf]
    %v7304 = vld [vmem:[%s16 + $0x30] sm:$0xf]
    %v7305 = vld [vmem:[%s16 + $0x34] sm:$0xf]
    %v7306 = vld [vmem:[%s16 + $0x38] sm:$0xf]
    %v7307 = vld [vmem:[%s16 + $0x3c] sm:$0xf]
    %s7308 = scalar_lea.vmem %s16, 64
    %v7309 = vld [vmem:[%s7308] sm:$0xf]
    %v7310 = vld [vmem:[%s7308 + $0x4] sm:$0xf]
    %v7311 = vld [vmem:[%s7308 + $0x8] sm:$0xf]
    %v7312 = vld [vmem:[%s7308 + $0xc] sm:$0xf]
    %v7313 = vld [vmem:[%s7308 + $0x10] sm:$0xf]
    %v7314 = vld [vmem:[%s7308 + $0x14] sm:$0xf]
    %v7315 = vld [vmem:[%s7308 + $0x18] sm:$0xf]
    %v7316 = vld [vmem:[%s7308 + $0x1c] sm:$0xf]
    %v7317 = vld [vmem:[%s7308 + $0x20] sm:$0xf]
    %v7318 = vld [vmem:[%s7308 + $0x24] sm:$0xf]
    %v7319 = vld [vmem:[%s7308 + $0x28] sm:$0xf]
    %v7320 = vld [vmem:[%s7308 + $0x2c] sm:$0xf]
    %v7321 = vld [vmem:[%s7308 + $0x30] sm:$0xf]
    %v7322 = vld [vmem:[%s7308 + $0x34] sm:$0xf]
    %v7323 = vld [vmem:[%s7308 + $0x38] sm:$0xf]
    %v7324 = vld [vmem:[%s7308 + $0x3c] sm:$0xf]
    %v7341 = vunpack.c.l.b16 %v7309
    %v7342 = vunpack.c.l.b16 %v7310
    %v7343 = vunpack.c.l.b16 %v7311
    %v7344 = vunpack.c.l.b16 %v7312
    %v7345 = vunpack.c.l.b16 %v7313
    %v7346 = vunpack.c.l.b16 %v7314
    %v7347 = vunpack.c.l.b16 %v7315
    %v7348 = vunpack.c.l.b16 %v7316
    %v7349 = vunpack.c.l.b16 %v7317
    %v7350 = vunpack.c.l.b16 %v7318
    %v7351 = vunpack.c.l.b16 %v7319
    %v7352 = vunpack.c.l.b16 %v7320
    %v7353 = vunpack.c.l.b16 %v7321
    %v7354 = vunpack.c.l.b16 %v7322
    %v7355 = vunpack.c.l.b16 %v7323
    %v7356 = vunpack.c.l.b16 %v7324
    %v7357 = vpack.c.b16 %v7342, %v7341
    %v7358 = vpack.c.b16 %v7344, %v7343
    %v7359 = vpack.c.b16 %v7346, %v7345
    %v7360 = vpack.c.b16 %v7348, %v7347
    %v7361 = vpack.c.b16 %v7350, %v7349
    %v7362 = vpack.c.b16 %v7352, %v7351
    %v7363 = vpack.c.b16 %v7354, %v7353
    %v7364 = vpack.c.b16 %v7356, %v7355
    %7373 = vmatprep.subr.bf16.mxu0 0
    %7374 = vmatpush1.bf16.msra.mxu0 %v7357
    %7375 = vmatprep.subr.bf16.mxu0 0
    %7376 = vmatpush1.bf16.msra.mxu0 %v7358
    %7377 = vmatprep.subr.bf16.mxu0 0
    %7378 = vmatpush1.bf16.msra.mxu0 %v7359
    %7379 = vmatprep.subr.bf16.mxu0 0
    %7380 = vmatpush1.bf16.msra.mxu0 %v7360
    %7381 = vmatprep.subr.bf16.mxu0 0
    %7382 = vmatpush1.bf16.msra.mxu0 %v7361
    %7383 = vmatprep.subr.bf16.mxu0 0
    %7384 = vmatpush1.bf16.msra.mxu0 %v7362
    %7385 = vmatprep.subr.bf16.mxu0 0
    %7386 = vmatpush1.bf16.msra.mxu0 %v7363
    %7387 = vmatprep.subr.bf16.mxu0 0
    %7388 = vmatpush1.bf16.msra.mxu0 %v7364
    %7389 = vmatprep.subr.bf16.mxu0 0
    %7390 = vmatpush1.bf16.msra.mxu0 0
    %7391 = vmatprep.subr.bf16.mxu0 0
    %7392 = vmatpush1.bf16.msra.mxu0 0
    %7393 = vmatprep.subr.bf16.mxu0 0
    %7394 = vmatpush1.bf16.msra.mxu0 0
    %7395 = vmatprep.subr.bf16.mxu0 0
    %7396 = vmatpush1.bf16.msra.mxu0 0
    %7397 = vmatprep.subr.bf16.mxu0 0
    %7398 = vmatpush1.bf16.msra.mxu0 0
    %7399 = vmatprep.subr.bf16.mxu0 0
    %7400 = vmatpush1.bf16.msra.mxu0 0
    %7401 = vmatprep.subr.bf16.mxu0 0
    %7402 = vmatpush1.bf16.msra.mxu0 0
    %7403 = vmatprep.subr.bf16.mxu0 0
    %7404 = vmatpush1.bf16.msra.mxu0 0
    %7405 = vmatprep.mubr.bf16.mxu0 0
    %7406 = vmatmul.mubr.bf16.gmra.mrb[0].mxu0 %v7285
    %v7407 = vpop.f32.mrb[0].mxu0
    %v7408 = vadd.f32 0.0, %v7407
    %v7409 = vpop.f32.mrb[0].mxu0
    %v7410 = vpop.f32.mrb[0].mxu0
    %v7411 = vadd.f32 0.0, %v7410
    %v7412 = vpop.f32.mrb[0].mxu0
    %7413 = vmatprep.mubr.bf16.mxu0 0
    %7414 = vmatmul.mubr.bf16.gmra.mrb[0].mxu0 %v7286
    %v7415 = vpop.f32.mrb[0].mxu0
    %v7416 = vadd.f32 0.0, %v7415
    %v7417 = vpop.f32.mrb[0].mxu0
    %v7418 = vpop.f32.mrb[0].mxu0
    %v7419 = vadd.f32 0.0, %v7418
    %v7420 = vpop.f32.mrb[0].mxu0
    %7421 = vmatprep.mubr.bf16.mxu0 0
    %7422 = vmatmul.mubr.bf16.gmra.mrb[0].mxu0 %v7287
    %v7423 = vpop.f32.mrb[0].mxu0
    %v7424 = vadd.f32 0.0, %v7423
    %v7425 = vpop.f32.mrb[0].mxu0
    %v7426 = vpop.f32.mrb[0].mxu0
    %v7427 = vadd.f32 0.0, %v7426
    %v7428 = vpop.f32.mrb[0].mxu0
    %7429 = vmatprep.mubr.bf16.mxu0 0
    %7430 = vmatmul.mubr.bf16.gmra.mrb[0].mxu0 %v7288
    %v7431 = vpop.f32.mrb[0].mxu0
    %v7432 = vadd.f32 0.0, %v7431
    %v7433 = vpop.f32.mrb[0].mxu0
    %v7434 = vpop.f32.mrb[0].mxu0
    %v7435 = vadd.f32 0.0, %v7434
    %v7436 = vpop.f32.mrb[0].mxu0
    %7437 = vmatprep.mubr.bf16.mxu0 0
    %7438 = vmatmul.mubr.bf16.gmra.mrb[0].mxu0 %v7289
    %v7439 = vpop.f32.mrb[0].mxu0
    %v7440 = vadd.f32 0.0, %v7439
    %v7441 = vpop.f32.mrb[0].mxu0
    %v7442 = vpop.f32.mrb[0].mxu0
    %v7443 = vadd.f32 0.0, %v7442
    %v7444 = vpop.f32.mrb[0].mxu0
    %7445 = vmatprep.mubr.bf16.mxu0 0
    %7446 = vmatmul.mubr.bf16.gmra.mrb[0].mxu0 %v7290
    %v7447 = vpop.f32.mrb[0].mxu0
    %v7448 = vadd.f32 0.0, %v7447
    %v7449 = vpop.f32.mrb[0].mxu0
    %v7450 = vpop.f32.mrb[0].mxu0
    %v7451 = vadd.f32 0.0, %v7450
    %v7452 = vpop.f32.mrb[0].mxu0
    %7453 = vdwg.mxu0
    %v7470 = vunpack.c.l.b16 %v7292
    %v7471 = vunpack.c.l.b16 %v7293
    %v7472 = vunpack.c.l.b16 %v7294
    %v7473 = vunpack.c.l.b16 %v7295
    %v7474 = vunpack.c.l.b16 %v7296
    %v7475 = vunpack.c.l.b16 %v7297
    %v7476 = vunpack.c.l.b16 %v7298
    %v7477 = vunpack.c.l.b16 %v7299
    %v7478 = vunpack.c.l.b16 %v7300
    %v7479 = vunpack.c.l.b16 %v7301
    %v7480 = vunpack.c.l.b16 %v7302
    %v7481 = vunpack.c.l.b16 %v7303
    %v7482 = vunpack.c.l.b16 %v7304
    %v7483 = vunpack.c.l.b16 %v7305
    %v7484 = vunpack.c.l.b16 %v7306
    %v7485 = vunpack.c.l.b16 %v7307
    %v7486 = vpack.c.b16 %v7471, %v7470
    %v7487 = vpack.c.b16 %v7473, %v7472
    %v7488 = vpack.c.b16 %v7475, %v7474
    %v7489 = vpack.c.b16 %v7477, %v7476
    %v7490 = vpack.c.b16 %v7479, %v7478
    %v7491 = vpack.c.b16 %v7481, %v7480
    %v7492 = vpack.c.b16 %v7483, %v7482
    %v7493 = vpack.c.b16 %v7485, %v7484
    %7502 = vmatprep.subr.bf16.mxu0 0
    %7503 = vmatpush1.bf16.msra.mxu0 %v7486
    %7504 = vmatprep.subr.bf16.mxu0 0
    %7505 = vmatpush1.bf16.msra.mxu0 %v7487
    %7506 = vmatprep.subr.bf16.mxu0 0
    %7507 = vmatpush1.bf16.msra.mxu0 %v7488
    %7508 = vmatprep.subr.bf16.mxu0 0
    %7509 = vmatpush1.bf16.msra.mxu0 %v7489
    %7510 = vmatprep.subr.bf16.mxu0 0
    %7511 = vmatpush1.bf16.msra.mxu0 %v7490
    %7512 = vmatprep.subr.bf16.mxu0 0
    %7513 = vmatpush1.bf16.msra.mxu0 %v7491
    %7514 = vmatprep.subr.bf16.mxu0 0
    %7515 = vmatpush1.bf16.msra.mxu0 %v7492
    %7516 = vmatprep.subr.bf16.mxu0 0
    %7517 = vmatpush1.bf16.msra.mxu0 %v7493
    %7518 = vmatprep.subr.bf16.mxu0 0
    %7519 = vmatpush1.bf16.msra.mxu0 0
    %7520 = vmatprep.subr.bf16.mxu0 0
    %7521 = vmatpush1.bf16.msra.mxu0 0
    %7522 = vmatprep.subr.bf16.mxu0 0
    %7523 = vmatpush1.bf16.msra.mxu0 0
    %7524 = vmatprep.subr.bf16.mxu0 0
    %7525 = vmatpush1.bf16.msra.mxu0 0
    %7526 = vmatprep.subr.bf16.mxu0 0
    %7527 = vmatpush1.bf16.msra.mxu0 0
    %7528 = vmatprep.subr.bf16.mxu0 0
    %7529 = vmatpush1.bf16.msra.mxu0 0
    %7530 = vmatprep.subr.bf16.mxu0 0
    %7531 = vmatpush1.bf16.msra.mxu0 0
    %7532 = vmatprep.subr.bf16.mxu0 0
    %7533 = vmatpush1.bf16.msra.mxu0 0
    %7534 = vmatprep.mubr.bf16.mxu0 0
    %7535 = vmatmul.mubr.bf16.gmra.mrb[0].mxu0 %v7284
    %v7536 = vpop.f32.mrb[0].mxu0
    %v7537 = vadd.f32 %v7408, %v7536
    %v7538 = vpop.f32.mrb[0].mxu0
    %v7539 = vpop.f32.mrb[0].mxu0
    %v7540 = vadd.f32 %v7411, %v7539
    %v7541 = vpop.f32.mrb[0].mxu0
    %7542 = vmatprep.mubr.bf16.mxu0 0
    %7543 = vmatmul.mubr.bf16.gmra.mrb[0].mxu0 %v7285
    %v7544 = vpop.f32.mrb[0].mxu0
    %v7545 = vadd.f32 %v7416, %v7544
    %v7546 = vpop.f32.mrb[0].mxu0
    %v7547 = vpop.f32.mrb[0].mxu0
    %v7548 = vadd.f32 %v7419, %v7547
    %v7549 = vpop.f32.mrb[0].mxu0
    %7550 = vmatprep.mubr.bf16.mxu0 0
    %7551 = vmatmul.mubr.bf16.gmra.mrb[0].mxu0 %v7286
    %v7552 = vpop.f32.mrb[0].mxu0
    %v7553 = vadd.f32 %v7424, %v7552
    %v7554 = vpop.f32.mrb[0].mxu0
    %v7555 = vpop.f32.mrb[0].mxu0
    %v7556 = vadd.f32 %v7427, %v7555
    %v7557 = vpop.f32.mrb[0].mxu0
    %7558 = vmatprep.mubr.bf16.mxu0 0
    %7559 = vmatmul.mubr.bf16.gmra.mrb[0].mxu0 %v7287
    %v7560 = vpop.f32.mrb[0].mxu0
    %v7561 = vadd.f32 %v7432, %v7560
    %v7562 = vpop.f32.mrb[0].mxu0
    %v7563 = vpop.f32.mrb[0].mxu0
    %v7564 = vadd.f32 %v7435, %v7563
    %v7565 = vpop.f32.mrb[0].mxu0
    %7566 = vmatprep.mubr.bf16.mxu0 0
    %7567 = vmatmul.mubr.bf16.gmra.mrb[0].mxu0 %v7288
    %v7568 = vpop.f32.mrb[0].mxu0
    %v7569 = vadd.f32 %v7440, %v7568
    %v7570 = vpop.f32.mrb[0].mxu0
    %v7571 = vpop.f32.mrb[0].mxu0
    %v7572 = vadd.f32 %v7443, %v7571
    %v7573 = vpop.f32.mrb[0].mxu0
    %7574 = vmatprep.mubr.bf16.mxu0 0
    %7575 = vmatmul.mubr.bf16.gmra.mrb[0].mxu0 %v7289
    %v7576 = vpop.f32.mrb[0].mxu0
    %v7577 = vadd.f32 %v7448, %v7576
    %v7578 = vpop.f32.mrb[0].mxu0
    %v7579 = vpop.f32.mrb[0].mxu0
    %v7580 = vadd.f32 %v7451, %v7579
    %v7581 = vpop.f32.mrb[0].mxu0
    %7582 = vdwg.mxu0
    %s7583 = scalar_lea.vmem %s16, 128
    %v7584 = vld [vmem:[%s7583] sm:$0xf]
    %v7585 = vld [vmem:[%s7583 + $0x4] sm:$0xf]
    %v7586 = vld [vmem:[%s7583 + $0x8] sm:$0xf]
    %v7587 = vld [vmem:[%s7583 + $0xc] sm:$0xf]
    %v7588 = vld [vmem:[%s7583 + $0x10] sm:$0xf]
    %v7589 = vld [vmem:[%s7583 + $0x14] sm:$0xf]
    %v7590 = vld [vmem:[%s7583 + $0x18] sm:$0xf]
    %v7591 = vld [vmem:[%s7583 + $0x1c] sm:$0xf]
    %v7592 = vld [vmem:[%s7583 + $0x20] sm:$0xf]
    %v7593 = vld [vmem:[%s7583 + $0x24] sm:$0xf]
    %v7594 = vld [vmem:[%s7583 + $0x28] sm:$0xf]
    %v7595 = vld [vmem:[%s7583 + $0x2c] sm:$0xf]
    %v7596 = vld [vmem:[%s7583 + $0x30] sm:$0xf]
    %v7597 = vld [vmem:[%s7583 + $0x34] sm:$0xf]
    %v7598 = vld [vmem:[%s7583 + $0x38] sm:$0xf]
    %v7599 = vld [vmem:[%s7583 + $0x3c] sm:$0xf]
    %v7616 = vunpack.c.l.b16 %v7584
    %v7617 = vunpack.c.l.b16 %v7585
    %v7618 = vunpack.c.l.b16 %v7586
    %v7619 = vunpack.c.l.b16 %v7587
    %v7620 = vunpack.c.l.b16 %v7588
    %v7621 = vunpack.c.l.b16 %v7589
    %v7622 = vunpack.c.l.b16 %v7590
    %v7623 = vunpack.c.l.b16 %v7591
    %v7624 = vunpack.c.l.b16 %v7592
    %v7625 = vunpack.c.l.b16 %v7593
    %v7626 = vunpack.c.l.b16 %v7594
    %v7627 = vunpack.c.l.b16 %v7595
    %v7628 = vunpack.c.l.b16 %v7596
    %v7629 = vunpack.c.l.b16 %v7597
    %v7630 = vunpack.c.l.b16 %v7598
    %v7631 = vunpack.c.l.b16 %v7599
    %v7632 = vpack.c.b16 %v7617, %v7616
    %v7633 = vpack.c.b16 %v7619, %v7618
    %v7634 = vpack.c.b16 %v7621, %v7620
    %v7635 = vpack.c.b16 %v7623, %v7622
    %v7636 = vpack.c.b16 %v7625, %v7624
    %v7637 = vpack.c.b16 %v7627, %v7626
    %v7638 = vpack.c.b16 %v7629, %v7628
    %v7639 = vpack.c.b16 %v7631, %v7630
    %7648 = vmatprep.subr.bf16.mxu0 0
    %7649 = vmatpush1.bf16.msra.mxu0 %v7632
    %7650 = vmatprep.subr.bf16.mxu0 0
    %7651 = vmatpush1.bf16.msra.mxu0 %v7633
    %7652 = vmatprep.subr.bf16.mxu0 0
    %7653 = vmatpush1.bf16.msra.mxu0 %v7634
    %7654 = vmatprep.subr.bf16.mxu0 0
    %7655 = vmatpush1.bf16.msra.mxu0 %v7635
    %7656 = vmatprep.subr.bf16.mxu0 0
    %7657 = vmatpush1.bf16.msra.mxu0 %v7636
    %7658 = vmatprep.subr.bf16.mxu0 0
    %7659 = vmatpush1.bf16.msra.mxu0 %v7637
    %7660 = vmatprep.subr.bf16.mxu0 0
    %7661 = vmatpush1.bf16.msra.mxu0 %v7638
    %7662 = vmatprep.subr.bf16.mxu0 0
    %7663 = vmatpush1.bf16.msra.mxu0 %v7639
    %7664 = vmatprep.subr.bf16.mxu0 0
    %7665 = vmatpush1.bf16.msra.mxu0 0
    %7666 = vmatprep.subr.bf16.mxu0 0
    %7667 = vmatpush1.bf16.msra.mxu0 0
    %7668 = vmatprep.subr.bf16.mxu0 0
    %7669 = vmatpush1.bf16.msra.mxu0 0
    %7670 = vmatprep.subr.bf16.mxu0 0
    %7671 = vmatpush1.bf16.msra.mxu0 0
    %7672 = vmatprep.subr.bf16.mxu0 0
    %7673 = vmatpush1.bf16.msra.mxu0 0
    %7674 = vmatprep.subr.bf16.mxu0 0
    %7675 = vmatpush1.bf16.msra.mxu0 0
    %7676 = vmatprep.subr.bf16.mxu0 0
    %7677 = vmatpush1.bf16.msra.mxu0 0
    %7678 = vmatprep.subr.bf16.mxu0 0
    %7679 = vmatpush1.bf16.msra.mxu0 0
    %7680 = vmatprep.mubr.bf16.mxu0 0
    %7681 = vmatmul.mubr.bf16.gmra.mrb[0].mxu0 %v7286
    %v7682 = vpop.f32.mrb[0].mxu0
    %v7683 = vadd.f32 0.0, %v7682
    %v7684 = vpop.f32.mrb[0].mxu0
    %v7685 = vpop.f32.mrb[0].mxu0
    %v7686 = vadd.f32 0.0, %v7685
    %v7687 = vpop.f32.mrb[0].mxu0
    %7688 = vmatprep.mubr.bf16.mxu0 0
    %7689 = vmatmul.mubr.bf16.gmra.mrb[0].mxu0 %v7287
    %v7690 = vpop.f32.mrb[0].mxu0
    %v7691 = vadd.f32 0.0, %v7690
    %v7692 = vpop.f32.mrb[0].mxu0
    %v7693 = vpop.f32.mrb[0].mxu0
    %v7694 = vadd.f32 0.0, %v7693
    %v7695 = vpop.f32.mrb[0].mxu0
    %7696 = vmatprep.mubr.bf16.mxu0 0
    %7697 = vmatmul.mubr.bf16.gmra.mrb[0].mxu0 %v7288
    %v7698 = vpop.f32.mrb[0].mxu0
    %v7699 = vadd.f32 0.0, %v7698
    %v7700 = vpop.f32.mrb[0].mxu0
    %v7701 = vpop.f32.mrb[0].mxu0
    %v7702 = vadd.f32 0.0, %v7701
    %v7703 = vpop.f32.mrb[0].mxu0
    %7704 = vmatprep.mubr.bf16.mxu0 0
    %7705 = vmatmul.mubr.bf16.gmra.mrb[0].mxu0 %v7289
    %v7706 = vpop.f32.mrb[0].mxu0
    %v7707 = vadd.f32 0.0, %v7706
    %v7708 = vpop.f32.mrb[0].mxu0
    %v7709 = vpop.f32.mrb[0].mxu0
    %v7710 = vadd.f32 0.0, %v7709
    %v7711 = vpop.f32.mrb[0].mxu0
    %7712 = vmatprep.mubr.bf16.mxu0 0
    %7713 = vmatmul.mubr.bf16.gmra.mrb[0].mxu0 %v7290
    %v7714 = vpop.f32.mrb[0].mxu0
    %v7715 = vadd.f32 0.0, %v7714
    %v7716 = vpop.f32.mrb[0].mxu0
    %v7717 = vpop.f32.mrb[0].mxu0
    %v7718 = vadd.f32 0.0, %v7717
    %v7719 = vpop.f32.mrb[0].mxu0
    %7720 = vmatprep.mubr.bf16.mxu0 0
    %7721 = vmatmul.mubr.bf16.gmra.mrb[0].mxu0 %v7291
    %v7722 = vpop.f32.mrb[0].mxu0
    %v7723 = vadd.f32 0.0, %v7722
    %v7724 = vpop.f32.mrb[0].mxu0
    %v7725 = vpop.f32.mrb[0].mxu0
    %v7726 = vadd.f32 0.0, %v7725
    %v7727 = vpop.f32.mrb[0].mxu0
    %7728 = vdwg.mxu0
    %v7729 = vadd.f32 %v7537, %v7683
    %v7730 = vadd.f32 %v7540, %v7686
    %v7731 = vadd.f32 %v7545, %v7691
    %v7732 = vadd.f32 %v7548, %v7694
    %v7733 = vadd.f32 %v7553, %v7699
    %v7734 = vadd.f32 %v7556, %v7702
    %v7735 = vadd.f32 %v7561, %v7707
    %v7736 = vadd.f32 %v7564, %v7710
    %v7737 = vadd.f32 %v7569, %v7715
    %v7738 = vadd.f32 %v7572, %v7718
    %v7739 = vadd.f32 %v7577, %v7723
    %v7740 = vadd.f32 %v7580, %v7726
    %v7741 = vld [vmem:[#allocation18] sm:$0x1]
    %v7743 = vlaneseq
    %v7744 = vshrl.u32 %v7743, 7
    %v7745 = vsub.s32 0, %v7744
    %v7746 = vrot.slane %v7741, %v7745
    %v7748 = vmul.f32 %v7729, %v7746
    %v7749 = vmul.f32 %v7730, %v7746
    %v7750 = vmul.f32 %v7731, %v7746
    %v7751 = vmul.f32 %v7732, %v7746
    %v7752 = vmul.f32 %v7733, %v7746
    %v7753 = vmul.f32 %v7734, %v7746
    %v7754 = vmul.f32 %v7735, %v7746
    %v7755 = vmul.f32 %v7736, %v7746
    %v7756 = vmul.f32 %v7737, %v7746
    %v7757 = vmul.f32 %v7738, %v7746
    %v7758 = vmul.f32 %v7739, %v7746
    %v7759 = vmul.f32 %v7740, %v7746
    %v7760 = vld [vmem:[#allocation19] sm:$0x1]
    %v7762 = vlaneseq
    %v7763 = vshrl.u32 %v7762, 7
    %v7764 = vsub.s32 0, %v7763
    %v7765 = vrot.slane %v7760, %v7764
    %v7767 = vadd.f32 %v7748, %v7765
    %v7768 = vadd.f32 %v7749, %v7765
    %v7769 = vadd.f32 %v7750, %v7765
    %v7770 = vadd.f32 %v7751, %v7765
    %v7771 = vadd.f32 %v7752, %v7765
    %v7772 = vadd.f32 %v7753, %v7765
    %v7773 = vadd.f32 %v7754, %v7765
    %v7774 = vadd.f32 %v7755, %v7765
    %v7775 = vadd.f32 %v7756, %v7765
    %v7776 = vadd.f32 %v7757, %v7765
    %v7777 = vadd.f32 %v7758, %v7765
    %v7778 = vadd.f32 %v7759, %v7765
    %v7779 = vmax.f32 %v7767, 0.0
    %v7780 = vmax.f32 %v7768, 0.0
    %v7781 = vmax.f32 %v7769, 0.0
    %v7782 = vmax.f32 %v7770, 0.0
    %v7783 = vmax.f32 %v7771, 0.0
    %v7784 = vmax.f32 %v7772, 0.0
    %v7785 = vmax.f32 %v7773, 0.0
    %v7786 = vmax.f32 %v7774, 0.0
    %v7787 = vmax.f32 %v7775, 0.0
    %v7788 = vmax.f32 %v7776, 0.0
    %v7789 = vmax.f32 %v7777, 0.0
    %v7790 = vmax.f32 %v7778, 0.0
    %v7791 = vld [vmem:[%s19] sm:$0xff]
    %v7792 = vld [vmem:[%s19 + $0x8] sm:$0xff]
    %v7793 = vld [vmem:[%s19 + $0x10] sm:$0xff]
    %v7794 = vld [vmem:[%s19 + $0x18] sm:$0xff]
    %v7795 = vld [vmem:[%s19 + $0x20] sm:$0xff]
    %v7796 = vld [vmem:[%s19 + $0x28] sm:$0xff]
    %v7797 = vld [vmem:[%s19 + $0x30] sm:$0xff]
    %v7798 = vld [vmem:[%s19 + $0x38] sm:$0xff]
    %v7799 = vld [vmem:[%s19 + $0x40] sm:$0xff]
    %v7800 = vld [vmem:[%s19 + $0x48] sm:$0xff]
    %v7801 = vld [vmem:[%s19 + $0x50] sm:$0xff]
    %v7802 = vld [vmem:[%s19 + $0x58] sm:$0xff]
    %v7803 = vld [vmem:[%s19 + $0x60] sm:$0xff]
    %v7804 = vld [vmem:[%s19 + $0x68] sm:$0xff]
    %v7805 = vld [vmem:[%s19 + $0x70] sm:$0xff]
    %v7807 = vsel %vm6768, %v7779, 0
    %v7810 = vsel %vm6768, %v7780, 0
    %v7813 = vsel %vm6768, %v7781, 0
    %v7816 = vsel %vm6768, %v7782, 0
    %v7819 = vsel %vm6768, %v7783, 0
    %v7822 = vsel %vm6768, %v7784, 0
    %v7825 = vsel %vm6768, %v7785, 0
    %v7828 = vsel %vm6768, %v7786, 0
    %v7831 = vsel %vm6768, %v7787, 0
    %v7834 = vsel %vm6768, %v7788, 0
    %v7837 = vsel %vm6768, %v7789, 0
    %v7840 = vsel %vm6768, %v7790, 0
    %7842 = vmatprep.subr.mxu0 0.0
    %7843 = vmatpush1.msra.mxu0 %v7791
    %7844 = vmatprep.subr.mxu0 0.0
    %7845 = vmatpush1.msra.mxu0 %v7792
    %7846 = vmatprep.subr.mxu0 0.0
    %7847 = vmatpush1.msra.mxu0 %v7793
    %7848 = vmatprep.subr.mxu0 0.0
    %7849 = vmatpush1.msra.mxu0 %v7794
    %7850 = vmatprep.subr.mxu0 0.0
    %7851 = vmatpush1.msra.mxu0 %v7795
    %7852 = vmatprep.subr.mxu0 0.0
    %7853 = vmatpush1.msra.mxu0 %v7796
    %7854 = vmatprep.subr.mxu0 0.0
    %7855 = vmatpush1.msra.mxu0 %v7797
    %7856 = vmatprep.subr.mxu0 0.0
    %7857 = vmatpush1.msra.mxu0 %v7798
    %7858 = vmatprep.subr.mxu0 0.0
    %7859 = vmatpush1.msra.mxu0 %v7799
    %7860 = vmatprep.subr.mxu0 0.0
    %7861 = vmatpush1.msra.mxu0 %v7800
    %7862 = vmatprep.subr.mxu0 0.0
    %7863 = vmatpush1.msra.mxu0 %v7801
    %7864 = vmatprep.subr.mxu0 0.0
    %7865 = vmatpush1.msra.mxu0 %v7802
    %7866 = vmatprep.subr.mxu0 0.0
    %7867 = vmatpush1.msra.mxu0 %v7803
    %7868 = vmatprep.subr.mxu0 0.0
    %7869 = vmatpush1.msra.mxu0 %v7804
    %7870 = vmatprep.subr.mxu0 0.0
    %7871 = vmatpush1.msra.mxu0 %v7805
    %7872 = vmatprep.subr.mxu0 0.0
    %7873 = vmatpush1.msra.mxu0 0.0
    %7874 = vmatprep.subr.mxu0 0.0
    %7875 = vmatpush1.msra.mxu0 0.0
    %7876 = vmatprep.subr.mxu0 0.0
    %7877 = vmatpush1.msra.mxu0 0.0
    %7878 = vmatprep.subr.mxu0 0.0
    %7879 = vmatpush1.msra.mxu0 0.0
    %7880 = vmatprep.subr.mxu0 0.0
    %7881 = vmatpush1.msra.mxu0 0.0
    %7882 = vmatprep.subr.mxu0 0.0
    %7883 = vmatpush1.msra.mxu0 0.0
    %7884 = vmatprep.subr.mxu0 0.0
    %7885 = vmatpush1.msra.mxu0 0.0
    %7886 = vmatprep.subr.mxu0 0.0
    %7887 = vmatpush1.msra.mxu0 0.0
    %7888 = vmatprep.subr.mxu0 0.0
    %7889 = vmatpush1.msra.mxu0 0.0
    %7890 = vmatprep.subr.mxu0 0.0
    %7891 = vmatpush1.msra.mxu0 0.0
    %7892 = vmatprep.subr.mxu0 0.0
    %7893 = vmatpush1.msra.mxu0 0.0
    %7894 = vmatprep.subr.mxu0 0.0
    %7895 = vmatpush1.msra.mxu0 0.0
    %7896 = vmatprep.subr.mxu0 0.0
    %7897 = vmatpush1.msra.mxu0 0.0
    %7898 = vmatprep.subr.mxu0 0.0
    %7899 = vmatpush1.msra.mxu0 0.0
    %7900 = vmatprep.subr.mxu0 0.0
    %7901 = vmatpush1.msra.mxu0 0.0
    %7902 = vmatprep.subr.mxu0 0.0
    %7903 = vmatpush1.msra.mxu0 0.0
    %7904 = vmatprep.subr.mxu0 0.0
    %7905 = vmatpush1.msra.mxu0 0.0
    %7906 = vmatprep.mubr.f32.mxu0 0.0
    %7907 = vmatmul.mubr.f32.gmra.mrb[0].mxu0 %v7807
    %v7908 = vpop.f32.mrb[0].mxu0
    %v7909 = vadd.f32 0.0, %v7908
    %v7910 = vpop.f32.mrb[0].mxu0
    %7911 = vmatprep.mubr.f32.mxu0 0.0
    %7912 = vmatmul.mubr.f32.gmra.mrb[0].mxu0 %v7810
    %v7913 = vpop.f32.mrb[0].mxu0
    %v7914 = vadd.f32 0.0, %v7913
    %v7915 = vpop.f32.mrb[0].mxu0
    %7916 = vmatprep.mubr.f32.mxu0 0.0
    %7917 = vmatmul.mubr.f32.gmra.mrb[0].mxu0 %v7813
    %v7918 = vpop.f32.mrb[0].mxu0
    %v7919 = vadd.f32 0.0, %v7918
    %v7920 = vpop.f32.mrb[0].mxu0
    %7921 = vmatprep.mubr.f32.mxu0 0.0
    %7922 = vmatmul.mubr.f32.gmra.mrb[0].mxu0 %v7816
    %v7923 = vpop.f32.mrb[0].mxu0
    %v7924 = vadd.f32 0.0, %v7923
    %v7925 = vpop.f32.mrb[0].mxu0
    %7926 = vmatprep.mubr.f32.mxu0 0.0
    %7927 = vmatmul.mubr.f32.gmra.mrb[0].mxu0 %v7819
    %v7928 = vpop.f32.mrb[0].mxu0
    %v7929 = vadd.f32 0.0, %v7928
    %v7930 = vpop.f32.mrb[0].mxu0
    %7931 = vmatprep.mubr.f32.mxu0 0.0
    %7932 = vmatmul.mubr.f32.gmra.mrb[0].mxu0 %v7822
    %v7933 = vpop.f32.mrb[0].mxu0
    %v7934 = vadd.f32 0.0, %v7933
    %v7935 = vpop.f32.mrb[0].mxu0
    %7936 = vmatprep.mubr.f32.mxu0 0.0
    %7937 = vmatmul.mubr.f32.gmra.mrb[0].mxu0 %v7825
    %v7938 = vpop.f32.mrb[0].mxu0
    %v7939 = vadd.f32 0.0, %v7938
    %v7940 = vpop.f32.mrb[0].mxu0
    %7941 = vmatprep.mubr.f32.mxu0 0.0
    %7942 = vmatmul.mubr.f32.gmra.mrb[0].mxu0 %v7828
    %v7943 = vpop.f32.mrb[0].mxu0
    %v7944 = vadd.f32 0.0, %v7943
    %v7945 = vpop.f32.mrb[0].mxu0
    %7946 = vmatprep.mubr.f32.mxu0 0.0
    %7947 = vmatmul.mubr.f32.gmra.mrb[0].mxu0 %v7831
    %v7948 = vpop.f32.mrb[0].mxu0
    %v7949 = vadd.f32 0.0, %v7948
    %v7950 = vpop.f32.mrb[0].mxu0
    %7951 = vmatprep.mubr.f32.mxu0 0.0
    %7952 = vmatmul.mubr.f32.gmra.mrb[0].mxu0 %v7834
    %v7953 = vpop.f32.mrb[0].mxu0
    %v7954 = vadd.f32 0.0, %v7953
    %v7955 = vpop.f32.mrb[0].mxu0
    %7956 = vmatprep.mubr.f32.mxu0 0.0
    %7957 = vmatmul.mubr.f32.gmra.mrb[0].mxu0 %v7837
    %v7958 = vpop.f32.mrb[0].mxu0
    %v7959 = vadd.f32 0.0, %v7958
    %v7960 = vpop.f32.mrb[0].mxu0
    %7961 = vmatprep.mubr.f32.mxu0 0.0
    %7962 = vmatmul.mubr.f32.gmra.mrb[0].mxu0 %v7840
    %v7963 = vpop.f32.mrb[0].mxu0
    %v7964 = vadd.f32 0.0, %v7963
    %v7965 = vpop.f32.mrb[0].mxu0
    %7966 = vdwg.mxu0
    %v7967 = vadd.f32 %v7909, %v7919
    %v7968 = vadd.f32 %v7914, %v7924
    %v7969 = vadd.f32 %v7967, %v7929
    %v7970 = vadd.f32 %v7968, %v7934
    %v7971 = vadd.f32 %v7969, %v7939
    %v7972 = vadd.f32 %v7970, %v7944
    %v7973 = vadd.f32 %v7971, %v7949
    %v7974 = vadd.f32 %v7972, %v7954
    %v7975 = vadd.f32 %v7973, %v7959
    %v7976 = vadd.f32 %v7974, %v7964
    %v7977 = vld [vmem:[#allocation21] sm:$0x1]
    %v7979 = vlaneseq
    %v7980 = vshrl.u32 %v7979, 7
    %v7981 = vsub.s32 0, %v7980
    %v7982 = vrot.slane %v7977, %v7981
    %v7984 = vmul.f32 %v7975, %v7982
    %v7985 = vmul.f32 %v7976, %v7982
    %v7986 = vld [vmem:[#allocation22] sm:$0x1]
    %v7988 = vlaneseq
    %v7989 = vshrl.u32 %v7988, 7
    %v7990 = vsub.s32 0, %v7989
    %v7991 = vrot.slane %v7986, %v7990
    %v7993 = vadd.f32 %v7984, %v7991
    %v7994 = vadd.f32 %v7985, %v7991
    %v7995 = vmax.f32 %v7993, 0.0
    %v7996 = vmax.f32 %v7994, 0.0
    %v7997 = vld [vmem:[#allocation24] sm:$0xff]
    %v7998 = vld [vmem:[#allocation24 + $0x8] sm:$0xff]
    %v7999 = vld [vmem:[#allocation25] sm:$0x1]
    %v8001 = vlaneseq
    %v8002 = vshrl.u32 %v8001, 7
    %v8003 = vsub.s32 0, %v8002
    %v8004 = vrot.slane %v7999, %v8003
    %vm8006 = vcmask 130048
    %v8008 = vsel %vm8006, %v7995, 0
    %v8011 = vsel %vm8006, %v7996, 0
    %8013 = vmatprep.subr.mxu0 0.0
    %8014 = vmatpush1.msra.mxu0 %v7997
    %8015 = vmatprep.subr.mxu0 0.0
    %8016 = vmatpush1.msra.mxu0 %v7998
    %8017 = vmatprep.subr.mxu0 0.0
    %8018 = vmatpush1.msra.mxu0 0.0
    %8019 = vmatprep.subr.mxu0 0.0
    %8020 = vmatpush1.msra.mxu0 0.0
    %8021 = vmatprep.subr.mxu0 0.0
    %8022 = vmatpush1.msra.mxu0 0.0
    %8023 = vmatprep.subr.mxu0 0.0
    %8024 = vmatpush1.msra.mxu0 0.0
    %8025 = vmatprep.subr.mxu0 0.0
    %8026 = vmatpush1.msra.mxu0 0.0
    %8027 = vmatprep.subr.mxu0 0.0
    %8028 = vmatpush1.msra.mxu0 0.0
    %8029 = vmatprep.subr.mxu0 0.0
    %8030 = vmatpush1.msra.mxu0 0.0
    %8031 = vmatprep.subr.mxu0 0.0
    %8032 = vmatpush1.msra.mxu0 0.0
    %8033 = vmatprep.subr.mxu0 0.0
    %8034 = vmatpush1.msra.mxu0 0.0
    %8035 = vmatprep.subr.mxu0 0.0
    %8036 = vmatpush1.msra.mxu0 0.0
    %8037 = vmatprep.subr.mxu0 0.0
    %8038 = vmatpush1.msra.mxu0 0.0
    %8039 = vmatprep.subr.mxu0 0.0
    %8040 = vmatpush1.msra.mxu0 0.0
    %8041 = vmatprep.subr.mxu0 0.0
    %8042 = vmatpush1.msra.mxu0 0.0
    %8043 = vmatprep.subr.mxu0 0.0
    %8044 = vmatpush1.msra.mxu0 0.0
    %8045 = vmatprep.subr.mxu0 0.0
    %8046 = vmatpush1.msra.mxu0 0.0
    %8047 = vmatprep.subr.mxu0 0.0
    %8048 = vmatpush1.msra.mxu0 0.0
    %8049 = vmatprep.subr.mxu0 0.0
    %8050 = vmatpush1.msra.mxu0 0.0
    %8051 = vmatprep.subr.mxu0 0.0
    %8052 = vmatpush1.msra.mxu0 0.0
    %8053 = vmatprep.subr.mxu0 0.0
    %8054 = vmatpush1.msra.mxu0 0.0
    %8055 = vmatprep.subr.mxu0 0.0
    %8056 = vmatpush1.msra.mxu0 0.0
    %8057 = vmatprep.subr.mxu0 0.0
    %8058 = vmatpush1.msra.mxu0 0.0
    %8059 = vmatprep.subr.mxu0 0.0
    %8060 = vmatpush1.msra.mxu0 0.0
    %8061 = vmatprep.subr.mxu0 0.0
    %8062 = vmatpush1.msra.mxu0 0.0
    %8063 = vmatprep.subr.mxu0 0.0
    %8064 = vmatpush1.msra.mxu0 0.0
    %8065 = vmatprep.subr.mxu0 0.0
    %8066 = vmatpush1.msra.mxu0 0.0
    %8067 = vmatprep.subr.mxu0 0.0
    %8068 = vmatpush1.msra.mxu0 0.0
    %8069 = vmatprep.subr.mxu0 0.0
    %8070 = vmatpush1.msra.mxu0 0.0
    %8071 = vmatprep.subr.mxu0 0.0
    %8072 = vmatpush1.msra.mxu0 0.0
    %8073 = vmatprep.subr.mxu0 0.0
    %8074 = vmatpush1.msra.mxu0 0.0
    %8075 = vmatprep.subr.mxu0 0.0
    %8076 = vmatpush1.msra.mxu0 0.0
    %8077 = vmatprep.mubr.f32.mxu0 0.0
    %8078 = vmatmul.mubr.f32.gmra.mrb[0].mxu0 %v8008
    %v8079 = vpop.f32.mrb[0].mxu0
    %v8080 = vadd.f32 %v8004, %v8079
    %v8081 = vpop.f32.mrb[0].mxu0
    %8082 = vmatprep.mubr.f32.mxu0 0.0
    %8083 = vmatmul.mubr.f32.gmra.mrb[0].mxu0 %v8011
    %v8084 = vpop.f32.mrb[0].mxu0
    %v8085 = vadd.f32 %v8004, %v8084
    %v8086 = vpop.f32.mrb[0].mxu0
    %8087 = vdwg.mxu0
    %vm8088 = vcmask 80896
    %v8089 = vsel %vm8088, %v8080, -inf
    %8090 = vmax.xlane.f32.xlu0 %v8089
    %v8091 = vpop.xlane.xlu0 %8090
    %v8092 = vsel %vm8088, %v8085, -inf
    %8093 = vmax.xlane.f32.xlu0 %v8092
    %v8094 = vpop.xlane.xlu0 %8093
    %v8095 = vsub.f32 %v8080, %v8091
    %v8096 = vsub.f32 %v8085, %v8094
    %v8097 = vmul.f32 %v8095, 1.442695
    %v8098 = vpow.pop %v8097
    %v8099 = vmul.f32 %v8096, 1.442695
    %v8100 = vpow.pop %v8099
    %v8101 = vsel %vm8088, %v8098, 0.0
    %8102 = vadd.xlane.f32.xlu0 %v8101
    %v8103 = vpop.xlane.xlu0 %8102
    %v8104 = vsel %vm8088, %v8100, 0.0
    %8105 = vadd.xlane.f32.xlu0 %v8104
    %v8106 = vpop.xlane.xlu0 %8105
    %v8107 = vlog2.pop %v8103
    %v8108 = vmul.f32 %v8107, 0.6931472
    %v8109 = vlog2.pop %v8106
    %v8110 = vmul.f32 %v8109, 0.6931472
    %v8111 = vadd.f32 %v8108, %v8091
    %v8112 = vadd.f32 %v8110, %v8094
    %v8113 = vsub.f32 %v8080, %v8111
    %v8114 = vsub.f32 %v8085, %v8112
    %8115 = vst.msk [vmem:[%s24] sm:$0xff] %vm8088, %v8113
    %8116 = vst.msk [vmem:[%s24 + $0x8] sm:$0xff] %vm8088, %v8114
    // Predicated region
    $region162: #{net_forward.1} parent=1 // pred_check
      _
    $region163: #{net_forward.1} parent=1 // pred_check_branch
      %8118 = sbr.rel (0) target = $region165
    $region164: #{net_forward.1} parent=1 // pred_region
      _
    $region165: #{net_forward.1} parent=1 // pred_fallthru
      _
    // Predicated region
    $region166: #{net_forward.1} parent=1 // pred_check
      _
    $region167: #{net_forward.1} parent=1 // pred_check_branch
      %8120 = sbr.rel (0) target = $region169
    $region168: #{net_forward.1} parent=1 // pred_region
      _
    $region169: #{net_forward.1} parent=1 // pred_fallthru
      _
    %8121 = vsyncpa [#allocation3], 1
    %8122 = vsyncpa [#allocation5], 1
    %8123 = vsyncpa [#allocation8], 1
    %8124 = vsyncpa [#allocation11], 1
    %8125 = vsyncpa [#allocation14], 1
    %8126 = vsyncpa [#allocation17], 1
    %8127 = vsyncpa [#allocation20], 1
    %8128 = vsyncpa [#allocation23], 1
    %8129 = vsyncpa [#allocation26], 1

</llo_original>
